<compile_context>
chip_gen: v7x
topology: tpu7x:2x2x1
jax: 0.10.0
libtpu: 0.0.40
codegen_flags: <defaults>
</compile_context>

<pallas_src>
import functools

import jax
import jax.numpy as jnp
from jax.experimental import pallas as pl
from jax.experimental.pallas import tpu as pltpu


def _round_up(x, m):
    return ((x + m - 1) // m) * m


# ----------------------------------------------------------------------------
# Pallas kernels
# ----------------------------------------------------------------------------

def _gemm_single_kernel(w_ref, p_ref, shift_ref, o_ref, *, activation):
    # w: (Cp, Kp) bf16 resident, p: (Kp, tm) bf16, shift: (Cp, 1) f32, o: (Cp, tm).
    y = jnp.dot(w_ref[...], p_ref[...], preferred_element_type=jnp.float32)
    y = y + shift_ref[...]
    if activation == "relu":
        y = jnp.maximum(y, 0.0)
    elif activation == "sigmoid":
        y = 1.0 / (1.0 + jnp.exp(-y))
    o_ref[...] = y.astype(o_ref.dtype)


def _gemm_ktiled_kernel(w_ref, p_ref, shift_ref, o_ref, acc_ref, *, activation):
    # Grid = (M tiles [parallel], K tiles [arbitrary]); acc lives across the K axis.
    @pl.when(pl.program_id(1) == 0)
    def _init():
        acc_ref[...] = jnp.zeros_like(acc_ref)

    acc_ref[...] += jnp.dot(w_ref[...], p_ref[...], preferred_element_type=jnp.float32)

    @pl.when(pl.program_id(1) == pl.num_programs(1) - 1)
    def _finalize():
        y = acc_ref[...] + shift_ref[...]
        if activation == "relu":
            y = jnp.maximum(y, 0.0)
        elif activation == "sigmoid":
            y = 1.0 / (1.0 + jnp.exp(-y))
        o_ref[...] = y.astype(o_ref.dtype)


def _pick_k_tiling(K):
    if K <= 2048:
        return K, K, 1                       # single full-extent K block (no constraints)
    kb = 1024                                # multiple of 128 (lane dim of the weight block)
    Kp = _round_up(K, kb)
    return kb, Kp, Kp // kb


def _pick_tm(M, Cp, kb, out_bytes, budget=40 * 1024 * 1024):
    """Largest lane tile that keeps the double-buffered working set under `budget`."""
    best = 128
    for tm in (128, 256, 512, 1024, 2048, 4096):
        if tm > max(M, 128):
            break
        vmem = (2 * kb * tm * 2              # P blocks (bf16, double-buffered)
                + 2 * Cp * kb * 2            # W blocks (bf16)
                + 2 * Cp * tm * out_bytes    # output blocks
                + Cp * tm * 4)               # f32 accumulator scratch
        if vmem <= budget:
            best = tm
    # prefer >= 2 M tiles so both v7x TensorCores get work on the "parallel" axis
    while best > 128 and (M + best - 1) // best < 2:
        best //= 2
    return best


def gemm_bias_act(p, wm, shift, activation="none", out_dtype=jnp.float32):
    """out(Cout, M) = wm(Cout, K) @ p(K, M) with fused shift + activation.

    p is the lane-dense (K, M) conv operand (M = N*D*H*W on lanes), wm is bf16 with the
    eval-mode BN scale already folded in, shift is f32 (bias + BN shift).  Accumulation is
    f32; the output dtype (bf16 for intermediate activations) is chosen by the caller.
    """
    K, M = p.shape
    Cout = wm.shape[0]
    Cp = _round_up(Cout, 16)                 # bf16 sublane packing for the weight block
    out_bytes = jnp.dtype(out_dtype).itemsize
    kb, Kp, nk = _pick_k_tiling(K)
    tm = _pick_tm(M, Cp, kb, out_bytes)
    Mp = _round_up(M, tm)
    nm = Mp // tm

    p_b = p.astype(jnp.bfloat16)
    if Kp != K or Mp != M:
        p_b = jnp.pad(p_b, ((0, Kp - K), (0, Mp - M)))
    w_b = jnp.pad(wm, ((0, Cp - Cout), (0, Kp - K)))
    sh = jnp.pad(shift.astype(jnp.float32).reshape(Cout, 1), ((0, Cp - Cout), (0, 0)))

    if nk == 1:
        kernel = functools.partial(_gemm_single_kernel, activation=activation)
        grid = (nm,)
        in_specs = [
            pl.BlockSpec((Cp, Kp), lambda m: (0, 0)),      # weight stays resident
            pl.BlockSpec((Kp, tm), lambda m: (0, m)),
            pl.BlockSpec((Cp, 1), lambda m: (0, 0)),
        ]
        out_specs = pl.BlockSpec((Cp, tm), lambda m: (0, m))
        scratch = []
        dims = ("parallel",)
    else:
        kernel = functools.partial(_gemm_ktiled_kernel, activation=activation)
        grid = (nm, nk)
        in_specs = [
            pl.BlockSpec((Cp, kb), lambda m, k: (0, k)),
            pl.BlockSpec((kb, tm), lambda m, k: (k, m)),
            pl.BlockSpec((Cp, 1), lambda m, k: (0, 0)),
        ]
        out_specs = pl.BlockSpec((Cp, tm), lambda m, k: (0, m))
        scratch = [pltpu.VMEM((Cp, tm), jnp.float32)]
        dims = ("parallel", "arbitrary")

    out = pl.pallas_call(
        kernel,
        out_shape=jax.ShapeDtypeStruct((Cp, Mp), out_dtype),
        grid_spec=pltpu.PrefetchScalarGridSpec(
            num_scalar_prefetch=0,
            grid=grid,
            in_specs=in_specs,
            out_specs=out_specs,
            scratch_shapes=scratch,
        ),
        compiler_params=pltpu.CompilerParams(
            dimension_semantics=dims,
            vmem_limit_bytes=48 * 1024 * 1024,   # safe on v7x (64 MiB physical per TC)
        ),
    )(w_b, p_b, sh)
    return out[:Cout, :M]


def _mask_deform_kernel(logits_ref, grid_ref, delta_ref, mask_ref, def_ref, *, num_k1):
    # logits: (K1, st) channel-major, grid: (3, st), delta: (1, 3, num_kp)
    # -> mask: (1, K1, st) batch-major, def: (1, 3, st)
    logits = logits_ref[...]
    m = jnp.max(logits, axis=0, keepdims=True)
    e = jnp.exp(logits - m)
    denom = jnp.sum(e, axis=0, keepdims=True)
    prob = e / denom                                   # exact: mask rows sum to 1
    mask_ref[0] = prob
    # Thresholded (un-renormalized) softmax drives the deformation; the returned mask stays
    # un-thresholded -- exactly the reference forward().
    p_thr = jnp.where(prob < 0.001, 0.0, prob)
    # sparse[k] = grid + delta[k-1] (delta[-1] := 0 for the identity slot), so
    # deformation = grid * sum_k p_thr[k] + sum_{k>=1} p_thr[k] * delta[k-1].
    acc = grid_ref[...] * jnp.sum(p_thr, axis=0, keepdims=True)        # (3, st)
    for k in range(1, num_k1):
        acc = acc + p_thr[k:k + 1, :] * delta_ref[0, :, k - 1:k]       # (1,st)*(3,1)
    def_ref[0] = acc


def mask_and_deformation(logits_cm, grid_cm, delta, bs, spatial):
    """logits_cm: (K1, bs*S) channel-major mask-conv output (no transpose needed);
    grid_cm: (3, S) identity grid (x,y,z rows); delta: (bs, 3, num_kp) = kp_source-kp_driving."""
    K1 = logits_cm.shape[0]
    d, h, w = spatial
    S = d * h * w
    num_kp = delta.shape[2]

    if S % 128 == 0:
        st = 128
        for cand in (16384, 8192, 4096, 2048, 1024, 512, 256, 128):
            if cand <= S and S % cand == 0:
                st = cand
                break
        Sp = S
        lg = logits_cm
        gr = grid_cm
    else:
        st = 128
        Sp = _round_up(S, st)
        lg = jnp.pad(logits_cm.reshape(K1, bs, S), ((0, 0), (0, 0), (0, Sp - S)))
        lg = lg.reshape(K1, bs * Sp)
        gr = jnp.pad(grid_cm, ((0, 0), (0, Sp - S)))
    ns = Sp // st

    mask, deform = pl.pallas_call(
        functools.partial(_mask_deform_kernel, num_k1=K1),
        out_shape=(
            jax.ShapeDtypeStruct((bs, K1, Sp), jnp.float32),
            jax.ShapeDtypeStruct((bs, 3, Sp), jnp.float32),
        ),
        grid_spec=pltpu.PrefetchScalarGridSpec(
            num_scalar_prefetch=0,
            grid=(bs, ns),
            in_specs=[
                pl.BlockSpec((K1, st), lambda b, s: (0, b * ns + s)),
                pl.BlockSpec((3, st), lambda b, s: (0, s)),
                pl.BlockSpec((1, 3, num_kp), lambda b, s: (b, 0, 0)),
            ],
            out_specs=[
                pl.BlockSpec((1, K1, st), lambda b, s: (b, 0, s)),
                pl.BlockSpec((1, 3, st), lambda b, s: (b, 0, s)),
            ],
        ),
        compiler_params=pltpu.CompilerParams(
            dimension_semantics=("parallel", "parallel"),
            vmem_limit_bytes=48 * 1024 * 1024,
        ),
    )(lg.astype(jnp.float32), gr.astype(jnp.float32), delta.astype(jnp.float32))

    mask = mask[:, :, :S].reshape(bs, K1, d, h, w)
    deform = deform[:, :, :S].reshape(bs, 3, d, h, w)
    return mask, deform


# ----------------------------------------------------------------------------
# Conv wrappers (channel-major, im2col in JAX glue, lane-dense GEMM in Pallas)
# ----------------------------------------------------------------------------

def _im2col_cm(x_cm, ksize, padding):
    """x_cm: (Cin, N, D, H, W) -> P: (Cin*kD*kH*kW, N*Do*Ho*Wo) bf16 (K ordering = Cin outer,
    tap inner, matching w.reshape(Cout, Cin*kD*kH*kW))."""
    # TODO(synk): replace with in-kernel tap accumulation (halo DMAs); this still
    #             materialises a (kD*kH*kW)-fold expanded operand in HBM.
    C, N, D, H, W = x_cm.shape
    kD, kH, kW = ksize
    pD, pH, pW = padding
    x = x_cm.astype(jnp.bfloat16)
    if ksize == (1, 1, 1) and padding == (0, 0, 0):
        return x.reshape(C, N * D * H * W), (D, H, W)
    xp = jnp.pad(x, ((0, 0), (0, 0), (pD, pD), (pH, pH), (pW, pW)))
    Do = D + 2 * pD - kD + 1
    Ho = H + 2 * pH - kH + 1
    Wo = W + 2 * pW - kW + 1
    cols = []
    for kz in range(kD):
        for ky in range(kH):
            for kx in range(kW):
                cols.append(xp[:, :, kz:kz + Do, ky:ky + Ho, kx:kx + Wo])
    p = jnp.stack(cols, axis=1).reshape(C * kD * kH * kW, N * Do * Ho * Wo)
    return p, (Do, Ho, Wo)


def conv3d_cm(x_cm, wm, shift, ksize, padding, activation="none", out_dtype=jnp.float32):
    """Channel-major conv3d: x_cm (Cin, N, D, H, W) -> (Cout, N, Do, Ho, Wo).
    wm: (Cout, Cin*kD*kH*kW) bf16 with eval-BN scale pre-folded; shift: (Cout,) f32 with
    bias + BN shift pre-folded.  Activation fused into the GEMM epilogue."""
    Cout = wm.shape[0]
    p, out_sp = _im2col_cm(x_cm, ksize, padding)
    out = gemm_bias_act(p, wm, shift, activation, out_dtype)
    N = x_cm.shape[1]
    return out.reshape((Cout, N) + out_sp)


def conv2d_cm(x_cm, wm, shift, ksize2, padding2, activation="none", out_dtype=jnp.float32):
    """x_cm: (Cin, N, H, W)."""
    y = conv3d_cm(x_cm[:, :, None], wm, shift, (1,) + tuple(ksize2),
                  (0,) + tuple(padding2), activation, out_dtype)
    return y[:, :, 0]


# ----------------------------------------------------------------------------
# Inference parameter preparation (BN folding, bf16 weight cast) -- done once.
# ----------------------------------------------------------------------------

def prepare_inference_params(params, cfg):
    def conv_entry(w, b, bn=None, eps=1e-5):
        Cout = w.shape[0]
        if bn is None:
            scale = jnp.ones((Cout,), jnp.float32)
            shift = jnp.zeros((Cout,), jnp.float32)
        else:
            g, bt, rm, rv = bn
            scale = g / jnp.sqrt(rv + eps)
            shift = bt - rm * scale
        w_f = w.astype(jnp.float32) * scale.reshape((Cout,) + (1,) * (w.ndim - 1))
        return dict(wm=w_f.reshape(Cout, -1).astype(jnp.bfloat16),
                    shift=b.astype(jnp.float32) * scale + shift)

    prep = {}
    prep['compress'] = conv_entry(
        params['compress_w'], params['compress_b'],
        (params['norm_g'], params['norm_bt'], params['norm_rm'], params['norm_rv']))
    for i in range(cfg['num_blocks']):
        prep[f'enc{i}'] = conv_entry(
            params[f'enc{i}_w'], params[f'enc{i}_b'],
            (params[f'enc{i}_g'], params[f'enc{i}_bt'], params[f'enc{i}_rm'], params[f'enc{i}_rv']))
        prep[f'dec{i}'] = conv_entry(
            params[f'dec{i}_w'], params[f'dec{i}_b'],
            (params[f'dec{i}_g'], params[f'dec{i}_bt'], params[f'dec{i}_rm'], params[f'dec{i}_rv']))
    prep['mask'] = conv_entry(params['mask_w'], params['mask_b'])
    prep['occ'] = conv_entry(params['occ_w'][:, :, None], params['occ_b'])   # treat as 1xkHxkW
    return prep


# ----------------------------------------------------------------------------
# Pure-JAX glue: coordinate grids, kp2gaussian, grid_sample, hourglass plumbing
# ----------------------------------------------------------------------------

def make_coordinate_grid(spatial_size, dtype=jnp.float32):
    d, h, w = spatial_size
    x = 2.0 * (jnp.arange(w, dtype=dtype) / (w - 1)) - 1.0
    y = 2.0 * (jnp.arange(h, dtype=dtype) / (h - 1)) - 1.0
    z = 2.0 * (jnp.arange(d, dtype=dtype) / (d - 1)) - 1.0
    zz = jnp.broadcast_to(z[:, None, None], (d, h, w))
    yy = jnp.broadcast_to(y[None, :, None], (d, h, w))
    xx = jnp.broadcast_to(x[None, None, :], (d, h, w))
    return jnp.stack([xx, yy, zz], axis=-1)                   # (d, h, w, 3), order (x, y, z)


def make_coordinate_grid_cm(spatial_size, dtype=jnp.float32):
    d, h, w = spatial_size
    g = make_coordinate_grid(spatial_size, dtype).reshape(d * h * w, 3)
    return jnp.transpose(g, (1, 0))                           # (3, S) -- tiny tensor


def kp2gaussian(kp_value, spatial_size, kp_variance):
    grid = make_coordinate_grid(spatial_size, jnp.float32)
    mean = kp_value[:, :, None, None, None, :]
    diff = grid[None, None] - mean
    return jnp.exp(-0.5 * jnp.sum(diff ** 2, axis=-1) / kp_variance)


def grid_sample_3d(inp, grid):
    """F.grid_sample (5D, trilinear, zeros padding, align_corners=False).
    inp: (N, C, D, H, W); grid: (N, ..., 3) with (x, y, z) in [-1, 1].
    Returns channels-last: (N, ..., C)."""
    # TODO(synk): data-dependent gather kept in plain JAX; channels-last rows keep each
    #             gathered index pulling a contiguous C-vector.
    N, C, D, H, W = inp.shape
    out_sp = grid.shape[1:-1]
    P = 1
    for s in out_sp:
        P *= s
    gx, gy, gz = grid[..., 0], grid[..., 1], grid[..., 2]
    ix = ((gx + 1.0) * W - 1.0) / 2.0
    iy = ((gy + 1.0) * H - 1.0) / 2.0
    iz = ((gz + 1.0) * D - 1.0) / 2.0
    ix0, iy0, iz0 = jnp.floor(ix), jnp.floor(iy), jnp.floor(iz)
    tx, ty, tz = ix - ix0, iy - iy0, iz - iz0

    flat_cl = jnp.transpose(inp, (0, 2, 3, 4, 1)).reshape(N, D * H * W, C)

    def flat(a):
        return a.reshape(N, P)

    tx_f, ty_f, tz_f = flat(tx), flat(ty), flat(tz)
    ix0_f, iy0_f, iz0_f = flat(ix0), flat(iy0), flat(iz0)
    take = jax.vmap(lambda a, i: jnp.take(a, i, axis=0))

    out = jnp.zeros((N, P, C), jnp.float32)
    for dz in (0, 1):
        for dy in (0, 1):
            for dx in (0, 1):
                cx, cy, cz = ix0_f + dx, iy0_f + dy, iz0_f + dz
                w8 = ((tx_f if dx else 1.0 - tx_f)
                      * (ty_f if dy else 1.0 - ty_f)
                      * (tz_f if dz else 1.0 - tz_f))
                valid = ((cx >= 0) & (cx < W) & (cy >= 0) & (cy < H)
                         & (cz >= 0) & (cz < D)).astype(jnp.float32)
                cxi = jnp.clip(cx, 0, W - 1).astype(jnp.int32)
                cyi = jnp.clip(cy, 0, H - 1).astype(jnp.int32)
                czi = jnp.clip(cz, 0, D - 1).astype(jnp.int32)
                idx = (czi * H + cyi) * W + cxi
                vals = take(flat_cl, idx)                     # (N, P, C), C contiguous
                out = out + vals.astype(jnp.float32) * (w8 * valid)[..., None]
    return out.reshape((N,) + out_sp + (C,)).astype(inp.dtype)


def down_block(x_cm, prep, i):
    x = conv3d_cm(x_cm, prep[f'enc{i}']['wm'], prep[f'enc{i}']['shift'],
                  (3, 3, 3), (1, 1, 1), "relu", jnp.bfloat16)
    C, N, D, H, W = x.shape
    # TODO(synk): fold AvgPool3d((1,2,2)) into the conv epilogue (assumes even H, W).
    return x.reshape(C, N, D, H // 2, 2, W // 2, 2).mean(axis=(4, 6))


def up_block(x_cm, prep, i):
    # TODO(synk): fold the nearest (1,2,2) upsample into the conv's input index_map.
    x = jnp.repeat(jnp.repeat(x_cm, 2, axis=3), 2, axis=4)
    return conv3d_cm(x, prep[f'dec{i}']['wm'], prep[f'dec{i}']['shift'],
                     (3, 3, 3), (1, 1, 1), "relu", jnp.bfloat16)


def hourglass(x_cm, prep, num_blocks):
    outs = [x_cm]
    for i in range(num_blocks):
        outs.append(down_block(outs[-1], prep, i))
    out = outs.pop()
    for i in reversed(range(num_blocks)):
        out = up_block(out, prep, i)
        skip = outs.pop()
        out = jnp.concatenate([out, skip], axis=0)            # channel axis = 0
    return out


# ----------------------------------------------------------------------------
# DenseMotionNetwork forward
# ----------------------------------------------------------------------------

def dense_motion_forward(prep, feature, kp_driving_value, kp_source_value, cfg):
    bs, _, d, h, w = feature.shape
    num_kp = cfg['num_kp']
    K1 = num_kp + 1
    S = d * h * w

    # compress conv (1x1x1) + eval-BN + ReLU fused into the GEMM epilogue; bf16 activations.
    x_cm = jnp.transpose(feature, (1, 0, 2, 3, 4))            # (Cin, N, d, h, w)
    feat_cm = conv3d_cm(x_cm, prep['compress']['wm'], prep['compress']['shift'],
                        (1, 1, 1), (0, 0, 0), "relu", jnp.bfloat16)
    feat = jnp.transpose(feat_cm, (1, 0, 2, 3, 4))            # (N, C, d, h, w)
    comp = feat.shape[1]

    # sparse motions (component-last layout, only consumed by grid_sample; the mask kernel
    # rebuilds them in-kernel from the identity grid + kp deltas).
    identity_grid = make_coordinate_grid((d, h, w))
    coord = identity_grid[None, None] - kp_driving_value[:, :, None, None, None, :]
    driving_to_source = coord + kp_source_value[:, :, None, None, None, :]
    sparse_motions = jnp.concatenate(
        [jnp.broadcast_to(identity_grid[None, None], (bs, 1, d, h, w, 3)),
         driving_to_source], axis=1)                          # (bs, K1, d, h, w, 3)

    # deformed feature via grid_sample; feature shared across K1 grids, channels-last.
    deformed_cl = grid_sample_3d(feat, sparse_motions)        # (bs, K1, d, h, w, C) bf16

    # heatmap representation
    g_d = kp2gaussian(kp_driving_value, (d, h, w), 0.01)
    g_s = kp2gaussian(kp_source_value, (d, h, w), 0.01)
    heatmap = g_d - g_s
    heatmap = jnp.concatenate([jnp.zeros((bs, 1, d, h, w), heatmap.dtype), heatmap], axis=1)

    # hourglass input in channel-major layout (k outer, [heat, feat...] inner) -- matches
    # torch's cat(dim=2).view(bs, -1, d, h, w) channel ordering.
    inp_cl = jnp.concatenate([heatmap[..., None].astype(jnp.bfloat16), deformed_cl], axis=-1)
    input_cm = jnp.transpose(inp_cl, (1, 5, 0, 2, 3, 4)).reshape(K1 * (comp + 1), bs, d, h, w)

    prediction_cm = hourglass(input_cm, prep, cfg['num_blocks'])   # (out_filters, bs, d, h, w)

    # mask conv (7^3, pad 3) -> fused softmax / threshold / deformation kernel, consuming the
    # channel-major logits directly (no HBM transpose).
    mask_logits_cm = conv3d_cm(prediction_cm, prep['mask']['wm'], prep['mask']['shift'],
                               (7, 7, 7), (3, 3, 3), "none", jnp.float32)   # (K1, bs, d, h, w)
    grid_cm = make_coordinate_grid_cm((d, h, w))                            # (3, S)
    delta = jnp.transpose(kp_source_value - kp_driving_value, (0, 2, 1))    # (bs, 3, num_kp)
    mask, deform = mask_and_deformation(mask_logits_cm.reshape(K1, bs * S),
                                        grid_cm, delta, bs, (d, h, w))
    deformation = jnp.transpose(deform, (0, 2, 3, 4, 1))                    # (bs, d, h, w, 3)

    out = {'mask': mask, 'deformation': deformation}

    # occlusion map (estimate_occlusion_map=True): sigmoid fused into the conv epilogue.
    C_pred = prediction_cm.shape[0]
    pred2d_cm = jnp.transpose(prediction_cm, (0, 2, 1, 3, 4)).reshape(C_pred * d, bs, h, w)
    occ_cm = conv2d_cm(pred2d_cm, prep['occ']['wm'], prep['occ']['shift'],
                       (7, 7), (3, 3), "sigmoid", jnp.float32)              # (1, bs, h, w)
    out['occlusion_map'] = jnp.transpose(occ_cm, (1, 0, 2, 3))
    return out


# ----------------------------------------------------------------------------
# Deterministic synthetic parameter init (matching module __init__ shapes)
# ----------------------------------------------------------------------------

def init_params(key, cfg):
    be, nb, mf = cfg['block_expansion'], cfg['num_blocks'], cfg['max_features']
    num_kp, fc, comp, rd = cfg['num_kp'], cfg['feature_channel'], cfg['compress'], cfg['reshape_depth']
    in_features = (num_kp + 1) * (comp + 1)
    keys = list(jax.random.split(key, 64))
    kit = iter(keys)

    def conv(shape, scale=0.05):
        return jax.random.normal(next(kit), shape, jnp.float32) * scale

    def bias(shape):
        return jax.random.normal(next(kit), shape, jnp.float32) * 0.01

    def bn(c):
        g = 1.0 + 0.1 * jax.random.normal(next(kit), (c,), jnp.float32)
        b = 0.1 * jax.random.normal(next(kit), (c,), jnp.float32)
        rm = 0.05 * jax.random.normal(next(kit), (c,), jnp.float32)
        rv = 1.0 + 0.2 * jax.random.uniform(next(kit), (c,), jnp.float32)
        return g, b, rm, rv

    p = {}
    p['compress_w'] = conv((comp, fc, 1, 1, 1))
    p['compress_b'] = bias((comp,))
    p['norm_g'], p['norm_bt'], p['norm_rm'], p['norm_rv'] = bn(comp)

    for i in range(nb):
        cin = in_features if i == 0 else min(mf, be * (2 ** i))
        cout = min(mf, be * (2 ** (i + 1)))
        p[f'enc{i}_w'] = conv((cout, cin, 3, 3, 3))
        p[f'enc{i}_b'] = bias((cout,))
        p[f'enc{i}_g'], p[f'enc{i}_bt'], p[f'enc{i}_rm'], p[f'enc{i}_rv'] = bn(cout)
    for i in range(nb):
        cin = (1 if i == nb - 1 else 2) * min(mf, be * (2 ** (i + 1)))
        cout = min(mf, be * (2 ** i))
        p[f'dec{i}_w'] = conv((cout, cin, 3, 3, 3))
        p[f'dec{i}_b'] = bias((cout,))
        p[f'dec{i}_g'], p[f'dec{i}_bt'], p[f'dec{i}_rm'], p[f'dec{i}_rv'] = bn(cout)

    out_filters = be + in_features
    p['mask_w'] = conv((num_kp + 1, out_filters, 7, 7, 7), 0.02)
    p['mask_b'] = bias((num_kp + 1,))
    p['occ_w'] = conv((1, out_filters * rd, 7, 7), 0.02)
    p['occ_b'] = bias((1,))
    return p


# ----------------------------------------------------------------------------
# Main
# ----------------------------------------------------------------------------

if __name__ == "__main__":
    cfg = dict(block_expansion=8, num_blocks=2, max_features=32,
               num_kp=4, feature_channel=4, reshape_depth=4, compress=2)
    bs, d, h, w = 2, 4, 8, 8

    key = jax.random.PRNGKey(0)
    k_feat, k_kd, k_ks, k_par = jax.random.split(key, 4)
    feature = jax.random.normal(k_feat, (bs, cfg['feature_channel'], d, h, w), jnp.float32)
    kp_driving = jax.random.uniform(k_kd, (bs, cfg['num_kp'], 3), jnp.float32, -0.8, 0.8)
    kp_source = jax.random.uniform(k_ks, (bs, cfg['num_kp'], 3), jnp.float32, -0.8, 0.8)
    params = init_params(k_par, cfg)
    prep = prepare_inference_params(params, cfg)   # BN folding + bf16 weight cast, done once

    fwd = jax.jit(lambda pr, f, kd, ks: dense_motion_forward(pr, f, kd, ks, cfg))
    out = fwd(prep, feature, kp_driving, kp_source)
    out = jax.block_until_ready(out)

    assert out['mask'].shape == (bs, cfg['num_kp'] + 1, d, h, w)
    assert out['deformation'].shape == (bs, d, h, w, 3)
    assert out['occlusion_map'].shape == (bs, 1, h, w)
    assert bool(jnp.all(jnp.isfinite(out['mask'])))
    assert bool(jnp.all(jnp.isfinite(out['deformation'])))
    assert bool(jnp.all(jnp.isfinite(out['occlusion_map'])))
    print("KERNEL_OK")
</pallas_src>

<mosaic_0001>
module attributes {stable_mosaic.version = 11 : i64} {
  func.func @_gemm_single_kernel(%arg0: i32, %arg1: memref<16x4xbf16, #tpu.memory_space<vmem>>, %arg2: memref<4x256xbf16, #tpu.memory_space<vmem>>, %arg3: memref<16x1xf32, #tpu.memory_space<vmem>>, %arg4: memref<16x256xbf16, #tpu.memory_space<vmem>>) attributes {dimension_semantics = [#tpu.dimension_semantics<parallel>], iteration_bounds = array<i64: 2>, scalar_prefetch = 0 : i64, scratch_operands = 0 : i64, tpu.core_type = #tpu.core_type<tc>, window_params = [{pipeline_mode = #tpu.pipeline_mode<synchronous>, transform_indices = @transform_0, window_bounds = array<i64: 16, 4>}, {transform_indices = @transform_1, window_bounds = array<i64: 4, 256>}, {pipeline_mode = #tpu.pipeline_mode<synchronous>, transform_indices = @transform_2, window_bounds = array<i64: 16, 1>}, {transform_indices = @transform_3, window_bounds = array<i64: 16, 256>}]} {
    %c0 = arith.constant 0 : index
    %c0_0 = arith.constant 0 : index
    %0 = vector.load %arg1[%c0, %c0_0] : memref<16x4xbf16, #tpu.memory_space<vmem>>, vector<16x4xbf16>
    %c0_1 = arith.constant 0 : index
    %c0_2 = arith.constant 0 : index
    %1 = vector.load %arg2[%c0_1, %c0_2] : memref<4x256xbf16, #tpu.memory_space<vmem>>, vector<4x256xbf16>
    %cst = arith.constant dense<0.000000e+00> : vector<16x256xf32>
    %2 = tpu.matmul %0, %1, %cst {dimension_numbers = #tpu.dot_dimension_numbers<[1], [0], [0], [1], [0, 0, 1, 1], [], []>} : vector<16x4xbf16>, vector<4x256xbf16>, vector<16x256xf32> -> vector<16x256xf32>
    %c0_3 = arith.constant 0 : index
    %c0_4 = arith.constant 0 : index
    %3 = vector.load %arg3[%c0_3, %c0_4] : memref<16x1xf32, #tpu.memory_space<vmem>>, vector<16x1xf32>
    %4 = vector.broadcast %3 : vector<16x1xf32> to vector<16x256xf32>
    %5 = arith.addf %2, %4 : vector<16x256xf32>
    %cst_5 = arith.constant 0.000000e+00 : f32
    %6 = vector.broadcast %cst_5 : f32 to vector<16x256xf32>
    %7 = arith.maximumf %5, %6 : vector<16x256xf32>
    %8 = arith.truncf %7 : vector<16x256xf32> to vector<16x256xbf16>
    %c0_6 = arith.constant 0 : index
    %c0_7 = arith.constant 0 : index
    %9 = vector.load %arg4[%c0_6, %c0_7] : memref<16x256xbf16, #tpu.memory_space<vmem>>, vector<16x256xbf16>
    tpu.vector_store %arg4[%c0_6, %c0_7], %8 {strides = array<i32>} : memref<16x256xbf16, #tpu.memory_space<vmem>>, vector<16x256xbf16>,
    return
  }
  func.func @transform_0(%arg0: i32) -> (i32, i32) {
    %c0_i32 = arith.constant 0 : i32
    %c0_i32_0 = arith.constant 0 : i32
    %c0_i32_1 = arith.constant 0 : i32
    return %c0_i32, %c0_i32_0 : i32, i32
  }
  func.func @transform_1(%arg0: i32) -> (i32, i32) {
    %c0_i32 = arith.constant 0 : i32
    %c0_i32_0 = arith.constant 0 : i32
    return %c0_i32, %arg0 : i32, i32
  }
  func.func @transform_2(%arg0: i32) -> (i32, i32) {
    %c0_i32 = arith.constant 0 : i32
    %c0_i32_0 = arith.constant 0 : i32
    %c0_i32_1 = arith.constant 0 : i32
    return %c0_i32, %c0_i32_0 : i32, i32
  }
  func.func @transform_3(%arg0: i32) -> (i32, i32) {
    %c0_i32 = arith.constant 0 : i32
    %c0_i32_0 = arith.constant 0 : i32
    return %c0_i32, %arg0 : i32, i32
  }
}

module attributes {stable_mosaic.version = 11 : i64} {
  func.func @_gemm_single_kernel(%arg0: i32, %arg1: memref<16x405xbf16, #tpu.memory_space<vmem>>, %arg2: memref<405x256xbf16, #tpu.memory_space<vmem>>, %arg3: memref<16x1xf32, #tpu.memory_space<vmem>>, %arg4: memref<16x256xbf16, #tpu.memory_space<vmem>>) attributes {dimension_semantics = [#tpu.dimension_semantics<parallel>], iteration_bounds = array<i64: 2>, scalar_prefetch = 0 : i64, scratch_operands = 0 : i64, tpu.core_type = #tpu.core_type<tc>, window_params = [{pipeline_mode = #tpu.pipeline_mode<synchronous>, transform_indices = @transform_0, window_bounds = array<i64: 16, 405>}, {transform_indices = @transform_1, window_bounds = array<i64: 405, 256>}, {pipeline_mode = #tpu.pipeline_mode<synchronous>, transform_indices = @transform_2, window_bounds = array<i64: 16, 1>}, {transform_indices = @transform_3, window_bounds = array<i64: 16, 256>}]} {
    %c0 = arith.constant 0 : index
    %c0_0 = arith.constant 0 : index
    %0 = vector.load %arg1[%c0, %c0_0] : memref<16x405xbf16, #tpu.memory_space<vmem>>, vector<16x405xbf16>
    %c0_1 = arith.constant 0 : index
    %c0_2 = arith.constant 0 : index
    %1 = vector.load %arg2[%c0_1, %c0_2] : memref<405x256xbf16, #tpu.memory_space<vmem>>, vector<405x256xbf16>
    %cst = arith.constant dense<0.000000e+00> : vector<16x256xf32>
    %2 = tpu.matmul %0, %1, %cst {dimension_numbers = #tpu.dot_dimension_numbers<[1], [0], [0], [1], [0, 0, 1, 1], [], []>} : vector<16x405xbf16>, vector<405x256xbf16>, vector<16x256xf32> -> vector<16x256xf32>
    %c0_3 = arith.constant 0 : index
    %c0_4 = arith.constant 0 : index
    %3 = vector.load %arg3[%c0_3, %c0_4] : memref<16x1xf32, #tpu.memory_space<vmem>>, vector<16x1xf32>
    %4 = vector.broadcast %3 : vector<16x1xf32> to vector<16x256xf32>
    %5 = arith.addf %2, %4 : vector<16x256xf32>
    %cst_5 = arith.constant 0.000000e+00 : f32
    %6 = vector.broadcast %cst_5 : f32 to vector<16x256xf32>
    %7 = arith.maximumf %5, %6 : vector<16x256xf32>
    %8 = arith.truncf %7 : vector<16x256xf32> to vector<16x256xbf16>
    %c0_6 = arith.constant 0 : index
    %c0_7 = arith.constant 0 : index
    %9 = vector.load %arg4[%c0_6, %c0_7] : memref<16x256xbf16, #tpu.memory_space<vmem>>, vector<16x256xbf16>
    tpu.vector_store %arg4[%c0_6, %c0_7], %8 {strides = array<i32>} : memref<16x256xbf16, #tpu.memory_space<vmem>>, vector<16x256xbf16>,
    return
  }
  func.func @transform_0(%arg0: i32) -> (i32, i32) {
    %c0_i32 = arith.constant 0 : i32
    %c0_i32_0 = arith.constant 0 : i32
    %c0_i32_1 = arith.constant 0 : i32
    return %c0_i32, %c0_i32_0 : i32, i32
  }
  func.func @transform_1(%arg0: i32) -> (i32, i32) {
    %c0_i32 = arith.constant 0 : i32
    %c0_i32_0 = arith.constant 0 : i32
    return %c0_i32, %arg0 : i32, i32
  }
  func.func @transform_2(%arg0: i32) -> (i32, i32) {
    %c0_i32 = arith.constant 0 : i32
    %c0_i32_0 = arith.constant 0 : i32
    %c0_i32_1 = arith.constant 0 : i32
    return %c0_i32, %c0_i32_0 : i32, i32
  }
  func.func @transform_3(%arg0: i32) -> (i32, i32) {
    %c0_i32 = arith.constant 0 : i32
    %c0_i32_0 = arith.constant 0 : i32
    return %c0_i32, %arg0 : i32, i32
  }
}

module attributes {stable_mosaic.version = 11 : i64} {
  func.func @_gemm_single_kernel(%arg0: i32, %arg1: memref<32x432xbf16, #tpu.memory_space<vmem>>, %arg2: memref<432x128xbf16, #tpu.memory_space<vmem>>, %arg3: memref<32x1xf32, #tpu.memory_space<vmem>>, %arg4: memref<32x128xbf16, #tpu.memory_space<vmem>>) attributes {dimension_semantics = [#tpu.dimension_semantics<parallel>], iteration_bounds = array<i64: 1>, scalar_prefetch = 0 : i64, scratch_operands = 0 : i64, tpu.core_type = #tpu.core_type<tc>, window_params = [{pipeline_mode = #tpu.pipeline_mode<synchronous>, transform_indices = @transform_0, window_bounds = array<i64: 32, 432>}, {transform_indices = @transform_1, window_bounds = array<i64: 432, 128>}, {pipeline_mode = #tpu.pipeline_mode<synchronous>, transform_indices = @transform_2, window_bounds = array<i64: 32, 1>}, {transform_indices = @transform_3, window_bounds = array<i64: 32, 128>}]} {
    %c0 = arith.constant 0 : index
    %c0_0 = arith.constant 0 : index
    %0 = vector.load %arg1[%c0, %c0_0] : memref<32x432xbf16, #tpu.memory_space<vmem>>, vector<32x432xbf16>
    %c0_1 = arith.constant 0 : index
    %c0_2 = arith.constant 0 : index
    %1 = vector.load %arg2[%c0_1, %c0_2] : memref<432x128xbf16, #tpu.memory_space<vmem>>, vector<432x128xbf16>
    %cst = arith.constant dense<0.000000e+00> : vector<32x128xf32>
    %2 = tpu.matmul %0, %1, %cst {dimension_numbers = #tpu.dot_dimension_numbers<[1], [0], [0], [1], [0, 0, 1, 1], [], []>} : vector<32x432xbf16>, vector<432x128xbf16>, vector<32x128xf32> -> vector<32x128xf32>
    %c0_3 = arith.constant 0 : index
    %c0_4 = arith.constant 0 : index
    %3 = vector.load %arg3[%c0_3, %c0_4] : memref<32x1xf32, #tpu.memory_space<vmem>>, vector<32x1xf32>
    %4 = vector.broadcast %3 : vector<32x1xf32> to vector<32x128xf32>
    %5 = arith.addf %2, %4 : vector<32x128xf32>
    %cst_5 = arith.constant 0.000000e+00 : f32
    %6 = vector.broadcast %cst_5 : f32 to vector<32x128xf32>
    %7 = arith.maximumf %5, %6 : vector<32x128xf32>
    %8 = arith.truncf %7 : vector<32x128xf32> to vector<32x128xbf16>
    %c0_6 = arith.constant 0 : index
    %c0_7 = arith.constant 0 : index
    %9 = vector.load %arg4[%c0_6, %c0_7] : memref<32x128xbf16, #tpu.memory_space<vmem>>, vector<32x128xbf16>
    tpu.vector_store %arg4[%c0_6, %c0_7], %8 {strides = array<i32>} : memref<32x128xbf16, #tpu.memory_space<vmem>>, vector<32x128xbf16>,
    return
  }
  func.func @transform_0(%arg0: i32) -> (i32, i32) {
    %c0_i32 = arith.constant 0 : i32
    %c0_i32_0 = arith.constant 0 : i32
    %c0_i32_1 = arith.constant 0 : i32
    return %c0_i32, %c0_i32_0 : i32, i32
  }
  func.func @transform_1(%arg0: i32) -> (i32, i32) {
    %c0_i32 = arith.constant 0 : i32
    %c0_i32_0 = arith.constant 0 : i32
    return %c0_i32, %arg0 : i32, i32
  }
  func.func @transform_2(%arg0: i32) -> (i32, i32) {
    %c0_i32 = arith.constant 0 : i32
    %c0_i32_0 = arith.constant 0 : i32
    %c0_i32_1 = arith.constant 0 : i32
    return %c0_i32, %c0_i32_0 : i32, i32
  }
  func.func @transform_3(%arg0: i32) -> (i32, i32) {
    %c0_i32 = arith.constant 0 : i32
    %c0_i32_0 = arith.constant 0 : i32
    return %c0_i32, %arg0 : i32, i32
  }
}

module attributes {stable_mosaic.version = 11 : i64} {
  func.func @_gemm_single_kernel(%arg0: i32, %arg1: memref<16x864xbf16, #tpu.memory_space<vmem>>, %arg2: memref<864x128xbf16, #tpu.memory_space<vmem>>, %arg3: memref<16x1xf32, #tpu.memory_space<vmem>>, %arg4: memref<16x128xbf16, #tpu.memory_space<vmem>>) attributes {dimension_semantics = [#tpu.dimension_semantics<parallel>], iteration_bounds = array<i64: 1>, scalar_prefetch = 0 : i64, scratch_operands = 0 : i64, tpu.core_type = #tpu.core_type<tc>, window_params = [{pipeline_mode = #tpu.pipeline_mode<synchronous>, transform_indices = @transform_0, window_bounds = array<i64: 16, 864>}, {transform_indices = @transform_1, window_bounds = array<i64: 864, 128>}, {pipeline_mode = #tpu.pipeline_mode<synchronous>, transform_indices = @transform_2, window_bounds = array<i64: 16, 1>}, {transform_indices = @transform_3, window_bounds = array<i64: 16, 128>}]} {
    %c0 = arith.constant 0 : index
    %c0_0 = arith.constant 0 : index
    %0 = vector.load %arg1[%c0, %c0_0] : memref<16x864xbf16, #tpu.memory_space<vmem>>, vector<16x864xbf16>
    %c0_1 = arith.constant 0 : index
    %c0_2 = arith.constant 0 : index
    %1 = vector.load %arg2[%c0_1, %c0_2] : memref<864x128xbf16, #tpu.memory_space<vmem>>, vector<864x128xbf16>
    %cst = arith.constant dense<0.000000e+00> : vector<16x128xf32>
    %2 = tpu.matmul %0, %1, %cst {dimension_numbers = #tpu.dot_dimension_numbers<[1], [0], [0], [1], [0, 0, 1, 1], [], []>} : vector<16x864xbf16>, vector<864x128xbf16>, vector<16x128xf32> -> vector<16x128xf32>
    %c0_3 = arith.constant 0 : index
    %c0_4 = arith.constant 0 : index
    %3 = vector.load %arg3[%c0_3, %c0_4] : memref<16x1xf32, #tpu.memory_space<vmem>>, vector<16x1xf32>
    %4 = vector.broadcast %3 : vector<16x1xf32> to vector<16x128xf32>
    %5 = arith.addf %2, %4 : vector<16x128xf32>
    %cst_5 = arith.constant 0.000000e+00 : f32
    %6 = vector.broadcast %cst_5 : f32 to vector<16x128xf32>
    %7 = arith.maximumf %5, %6 : vector<16x128xf32>
    %8 = arith.truncf %7 : vector<16x128xf32> to vector<16x128xbf16>
    %c0_6 = arith.constant 0 : index
    %c0_7 = arith.constant 0 : index
    %9 = vector.load %arg4[%c0_6, %c0_7] : memref<16x128xbf16, #tpu.memory_space<vmem>>, vector<16x128xbf16>
    tpu.vector_store %arg4[%c0_6, %c0_7], %8 {strides = array<i32>} : memref<16x128xbf16, #tpu.memory_space<vmem>>, vector<16x128xbf16>,
    return
  }
  func.func @transform_0(%arg0: i32) -> (i32, i32) {
    %c0_i32 = arith.constant 0 : i32
    %c0_i32_0 = arith.constant 0 : i32
    %c0_i32_1 = arith.constant 0 : i32
    return %c0_i32, %c0_i32_0 : i32, i32
  }
  func.func @transform_1(%arg0: i32) -> (i32, i32) {
    %c0_i32 = arith.constant 0 : i32
    %c0_i32_0 = arith.constant 0 : i32
    return %c0_i32, %arg0 : i32, i32
  }
  func.func @transform_2(%arg0: i32) -> (i32, i32) {
    %c0_i32 = arith.constant 0 : i32
    %c0_i32_0 = arith.constant 0 : i32
    %c0_i32_1 = arith.constant 0 : i32
    return %c0_i32, %c0_i32_0 : i32, i32
  }
  func.func @transform_3(%arg0: i32) -> (i32, i32) {
    %c0_i32 = arith.constant 0 : i32
    %c0_i32_0 = arith.constant 0 : i32
    return %c0_i32, %arg0 : i32, i32
  }
}

module attributes {stable_mosaic.version = 11 : i64} {
  func.func @_gemm_single_kernel(%arg0: i32, %arg1: memref<16x864xbf16, #tpu.memory_space<vmem>>, %arg2: memref<864x256xbf16, #tpu.memory_space<vmem>>, %arg3: memref<16x1xf32, #tpu.memory_space<vmem>>, %arg4: memref<16x256xbf16, #tpu.memory_space<vmem>>) attributes {dimension_semantics = [#tpu.dimension_semantics<parallel>], iteration_bounds = array<i64: 2>, scalar_prefetch = 0 : i64, scratch_operands = 0 : i64, tpu.core_type = #tpu.core_type<tc>, window_params = [{pipeline_mode = #tpu.pipeline_mode<synchronous>, transform_indices = @transform_0, window_bounds = array<i64: 16, 864>}, {transform_indices = @transform_1, window_bounds = array<i64: 864, 256>}, {pipeline_mode = #tpu.pipeline_mode<synchronous>, transform_indices = @transform_2, window_bounds = array<i64: 16, 1>}, {transform_indices = @transform_3, window_bounds = array<i64: 16, 256>}]} {
    %c0 = arith.constant 0 : index
    %c0_0 = arith.constant 0 : index
    %0 = vector.load %arg1[%c0, %c0_0] : memref<16x864xbf16, #tpu.memory_space<vmem>>, vector<16x864xbf16>
    %c0_1 = arith.constant 0 : index
    %c0_2 = arith.constant 0 : index
    %1 = vector.load %arg2[%c0_1, %c0_2] : memref<864x256xbf16, #tpu.memory_space<vmem>>, vector<864x256xbf16>
    %cst = arith.constant dense<0.000000e+00> : vector<16x256xf32>
    %2 = tpu.matmul %0, %1, %cst {dimension_numbers = #tpu.dot_dimension_numbers<[1], [0], [0], [1], [0, 0, 1, 1], [], []>} : vector<16x864xbf16>, vector<864x256xbf16>, vector<16x256xf32> -> vector<16x256xf32>
    %c0_3 = arith.constant 0 : index
    %c0_4 = arith.constant 0 : index
    %3 = vector.load %arg3[%c0_3, %c0_4] : memref<16x1xf32, #tpu.memory_space<vmem>>, vector<16x1xf32>
    %4 = vector.broadcast %3 : vector<16x1xf32> to vector<16x256xf32>
    %5 = arith.addf %2, %4 : vector<16x256xf32>
    %cst_5 = arith.constant 0.000000e+00 : f32
    %6 = vector.broadcast %cst_5 : f32 to vector<16x256xf32>
    %7 = arith.maximumf %5, %6 : vector<16x256xf32>
    %8 = arith.truncf %7 : vector<16x256xf32> to vector<16x256xbf16>
    %c0_6 = arith.constant 0 : index
    %c0_7 = arith.constant 0 : index
    %9 = vector.load %arg4[%c0_6, %c0_7] : memref<16x256xbf16, #tpu.memory_space<vmem>>, vector<16x256xbf16>
    tpu.vector_store %arg4[%c0_6, %c0_7], %8 {strides = array<i32>} : memref<16x256xbf16, #tpu.memory_space<vmem>>, vector<16x256xbf16>,
    return
  }
  func.func @transform_0(%arg0: i32) -> (i32, i32) {
    %c0_i32 = arith.constant 0 : i32
    %c0_i32_0 = arith.constant 0 : i32
    %c0_i32_1 = arith.constant 0 : i32
    return %c0_i32, %c0_i32_0 : i32, i32
  }
  func.func @transform_1(%arg0: i32) -> (i32, i32) {
    %c0_i32 = arith.constant 0 : i32
    %c0_i32_0 = arith.constant 0 : i32
    return %c0_i32, %arg0 : i32, i32
  }
  func.func @transform_2(%arg0: i32) -> (i32, i32) {
    %c0_i32 = arith.constant 0 : i32
    %c0_i32_0 = arith.constant 0 : i32
    %c0_i32_1 = arith.constant 0 : i32
    return %c0_i32, %c0_i32_0 : i32, i32
  }
  func.func @transform_3(%arg0: i32) -> (i32, i32) {
    %c0_i32 = arith.constant 0 : i32
    %c0_i32_0 = arith.constant 0 : i32
    return %c0_i32, %arg0 : i32, i32
  }
}

module attributes {stable_mosaic.version = 11 : i64} {
  func.func @_gemm_ktiled_kernel(%arg0: i32, %arg1: i32, %arg2: memref<16x1024xbf16, #tpu.memory_space<vmem>>, %arg3: memref<1024x128xbf16, #tpu.memory_space<vmem>>, %arg4: memref<16x1xf32, #tpu.memory_space<vmem>>, %arg5: memref<16x128xf32, #tpu.memory_space<vmem>>, %arg6: memref<16x128xf32, #tpu.memory_space<vmem>>) attributes {dimension_semantics = [#tpu.dimension_semantics<parallel>, #tpu.dimension_semantics<arbitrary>], iteration_bounds = array<i64: 1, 5>, scalar_prefetch = 0 : i64, scratch_operands = 1 : i64, tpu.core_type = #tpu.core_type<tc>, window_params = [{transform_indices = @transform_0, window_bounds = array<i64: 16, 1024>}, {transform_indices = @transform_1, window_bounds = array<i64: 1024, 128>}, {pipeline_mode = #tpu.pipeline_mode<synchronous>, transform_indices = @transform_2, window_bounds = array<i64: 16, 1>}, {transform_indices = @transform_3, window_bounds = array<i64: 16, 128>}]} {
    %c0_i32 = arith.constant 0 : i32
    %0 = arith.cmpi eq, %arg1, %c0_i32 : i32
    %1 = arith.extui %0 : i1 to i32
    %c0_i32_0 = arith.constant 0 : i32
    %2 = arith.cmpi ne, %1, %c0_i32_0 : i32
    scf.if %2 {
      %cst_9 = arith.constant 0.000000e+00 : f32
      %12 = vector.broadcast %cst_9 : f32 to vector<16x128xf32>
      %c0_10 = arith.constant 0 : index
      %c0_11 = arith.constant 0 : index
      %13 = vector.load %arg6[%c0_10, %c0_11] : memref<16x128xf32, #tpu.memory_space<vmem>>, vector<16x128xf32>
      tpu.vector_store %arg6[%c0_10, %c0_11], %12 {strides = array<i32>} : memref<16x128xf32, #tpu.memory_space<vmem>>, vector<16x128xf32>,
    } else {
    }
    %c0 = arith.constant 0 : index
    %c0_1 = arith.constant 0 : index
    %3 = vector.load %arg6[%c0, %c0_1] : memref<16x128xf32, #tpu.memory_space<vmem>>, vector<16x128xf32>
    %c0_2 = arith.constant 0 : index
    %c0_3 = arith.constant 0 : index
    %4 = vector.load %arg2[%c0_2, %c0_3] : memref<16x1024xbf16, #tpu.memory_space<vmem>>, vector<16x1024xbf16>
    %c0_4 = arith.constant 0 : index
    %c0_5 = arith.constant 0 : index
    %5 = vector.load %arg3[%c0_4, %c0_5] : memref<1024x128xbf16, #tpu.memory_space<vmem>>, vector<1024x128xbf16>
    %cst = arith.constant dense<0.000000e+00> : vector<16x128xf32>
    %6 = tpu.matmul %4, %5, %cst {dimension_numbers = #tpu.dot_dimension_numbers<[1], [0], [0], [1], [0, 0, 1, 1], [], []>} : vector<16x1024xbf16>, vector<1024x128xbf16>, vector<16x128xf32> -> vector<16x128xf32>
    %7 = arith.addf %3, %6 : vector<16x128xf32>
    %c0_6 = arith.constant 0 : index
    %c0_7 = arith.constant 0 : index
    %8 = vector.load %arg6[%c0_6, %c0_7] : memref<16x128xf32, #tpu.memory_space<vmem>>, vector<16x128xf32>
    tpu.vector_store %arg6[%c0_6, %c0_7], %7 {strides = array<i32>} : memref<16x128xf32, #tpu.memory_space<vmem>>, vector<16x128xf32>,
    %c4_i32 = arith.constant 4 : i32
    %9 = arith.cmpi eq, %arg1, %c4_i32 : i32
    %10 = arith.extui %9 : i1 to i32
    %c0_i32_8 = arith.constant 0 : i32
    %11 = arith.cmpi ne, %10, %c0_i32_8 : i32
    scf.if %11 {
      %c0_9 = arith.constant 0 : index
      %c0_10 = arith.constant 0 : index
      %12 = vector.load %arg6[%c0_9, %c0_10] : memref<16x128xf32, #tpu.memory_space<vmem>>, vector<16x128xf32>
      %c0_11 = arith.constant 0 : index
      %c0_12 = arith.constant 0 : index
      %13 = vector.load %arg4[%c0_11, %c0_12] : memref<16x1xf32, #tpu.memory_space<vmem>>, vector<16x1xf32>
      %14 = vector.broadcast %13 : vector<16x1xf32> to vector<16x128xf32>
      %15 = arith.addf %12, %14 : vector<16x128xf32>
      %cst_13 = arith.constant 0.000000e+00 : f32
      %16 = vector.broadcast %cst_13 : f32 to vector<16x128xf32>
      %17 = arith.subf %16, %15 : vector<16x128xf32>
      %18 = math.exp %17 : vector<16x128xf32>
      %cst_14 = arith.constant 1.000000e+00 : f32
      %19 = vector.broadcast %cst_14 : f32 to vector<16x128xf32>
      %20 = arith.addf %19, %18 : vector<16x128xf32>
      %cst_15 = arith.constant 1.000000e+00 : f32
      %21 = vector.broadcast %cst_15 : f32 to vector<16x128xf32>
      %22 = arith.divf %21, %20 : vector<16x128xf32>
      %c0_16 = arith.constant 0 : index
      %c0_17 = arith.constant 0 : index
      %23 = vector.load %arg5[%c0_16, %c0_17] : memref<16x128xf32, #tpu.memory_space<vmem>>, vector<16x128xf32>
      tpu.vector_store %arg5[%c0_16, %c0_17], %22 {strides = array<i32>} : memref<16x128xf32, #tpu.memory_space<vmem>>, vector<16x128xf32>,
    } else {
    }
    return
  }
  func.func @transform_0(%arg0: i32, %arg1: i32) -> (i32, i32) {
    %c0_i32 = arith.constant 0 : i32
    %c0_i32_0 = arith.constant 0 : i32
    return %c0_i32, %arg1 : i32, i32
  }
  func.func @transform_1(%arg0: i32, %arg1: i32) -> (i32, i32) {
    %c0_i32 = arith.constant 0 : i32
    return %arg1, %arg0 : i32, i32
  }
  func.func @transform_2(%arg0: i32, %arg1: i32) -> (i32, i32) {
    %c0_i32 = arith.constant 0 : i32
    %c0_i32_0 = arith.constant 0 : i32
    %c0_i32_1 = arith.constant 0 : i32
    return %c0_i32, %c0_i32_0 : i32, i32
  }
  func.func @transform_3(%arg0: i32, %arg1: i32) -> (i32, i32) {
    %c0_i32 = arith.constant 0 : i32
    %c0_i32_0 = arith.constant 0 : i32
    return %c0_i32, %arg0 : i32, i32
  }
}

module attributes {stable_mosaic.version = 11 : i64} {
  func.func @_gemm_ktiled_kernel(%arg0: i32, %arg1: i32, %arg2: memref<16x1024xbf16, #tpu.memory_space<vmem>>, %arg3: memref<1024x256xbf16, #tpu.memory_space<vmem>>, %arg4: memref<16x1xf32, #tpu.memory_space<vmem>>, %arg5: memref<16x256xf32, #tpu.memory_space<vmem>>, %arg6: memref<16x256xf32, #tpu.memory_space<vmem>>) attributes {dimension_semantics = [#tpu.dimension_semantics<parallel>, #tpu.dimension_semantics<arbitrary>], iteration_bounds = array<i64: 2, 8>, scalar_prefetch = 0 : i64, scratch_operands = 1 : i64, tpu.core_type = #tpu.core_type<tc>, window_params = [{transform_indices = @transform_0, window_bounds = array<i64: 16, 1024>}, {transform_indices = @transform_1, window_bounds = array<i64: 1024, 256>}, {pipeline_mode = #tpu.pipeline_mode<synchronous>, transform_indices = @transform_2, window_bounds = array<i64: 16, 1>}, {transform_indices = @transform_3, window_bounds = array<i64: 16, 256>}]} {
    %c0_i32 = arith.constant 0 : i32
    %0 = arith.cmpi eq, %arg1, %c0_i32 : i32
    %1 = arith.extui %0 : i1 to i32
    %c0_i32_0 = arith.constant 0 : i32
    %2 = arith.cmpi ne, %1, %c0_i32_0 : i32
    scf.if %2 {
      %cst_9 = arith.constant 0.000000e+00 : f32
      %12 = vector.broadcast %cst_9 : f32 to vector<16x256xf32>
      %c0_10 = arith.constant 0 : index
      %c0_11 = arith.constant 0 : index
      %13 = vector.load %arg6[%c0_10, %c0_11] : memref<16x256xf32, #tpu.memory_space<vmem>>, vector<16x256xf32>
      tpu.vector_store %arg6[%c0_10, %c0_11], %12 {strides = array<i32>} : memref<16x256xf32, #tpu.memory_space<vmem>>, vector<16x256xf32>,
    } else {
    }
    %c0 = arith.constant 0 : index
    %c0_1 = arith.constant 0 : index
    %3 = vector.load %arg6[%c0, %c0_1] : memref<16x256xf32, #tpu.memory_space<vmem>>, vector<16x256xf32>
    %c0_2 = arith.constant 0 : index
    %c0_3 = arith.constant 0 : index
    %4 = vector.load %arg2[%c0_2, %c0_3] : memref<16x1024xbf16, #tpu.memory_space<vmem>>, vector<16x1024xbf16>
    %c0_4 = arith.constant 0 : index
    %c0_5 = arith.constant 0 : index
    %5 = vector.load %arg3[%c0_4, %c0_5] : memref<1024x256xbf16, #tpu.memory_space<vmem>>, vector<1024x256xbf16>
    %cst = arith.constant dense<0.000000e+00> : vector<16x256xf32>
    %6 = tpu.matmul %4, %5, %cst {dimension_numbers = #tpu.dot_dimension_numbers<[1], [0], [0], [1], [0, 0, 1, 1], [], []>} : vector<16x1024xbf16>, vector<1024x256xbf16>, vector<16x256xf32> -> vector<16x256xf32>
    %7 = arith.addf %3, %6 : vector<16x256xf32>
    %c0_6 = arith.constant 0 : index
    %c0_7 = arith.constant 0 : index
    %8 = vector.load %arg6[%c0_6, %c0_7] : memref<16x256xf32, #tpu.memory_space<vmem>>, vector<16x256xf32>
    tpu.vector_store %arg6[%c0_6, %c0_7], %7 {strides = array<i32>} : memref<16x256xf32, #tpu.memory_space<vmem>>, vector<16x256xf32>,
    %c7_i32 = arith.constant 7 : i32
    %9 = arith.cmpi eq, %arg1, %c7_i32 : i32
    %10 = arith.extui %9 : i1 to i32
    %c0_i32_8 = arith.constant 0 : i32
    %11 = arith.cmpi ne, %10, %c0_i32_8 : i32
    scf.if %11 {
      %c0_9 = arith.constant 0 : index
      %c0_10 = arith.constant 0 : index
      %12 = vector.load %arg6[%c0_9, %c0_10] : memref<16x256xf32, #tpu.memory_space<vmem>>, vector<16x256xf32>
      %c0_11 = arith.constant 0 : index
      %c0_12 = arith.constant 0 : index
      %13 = vector.load %arg4[%c0_11, %c0_12] : memref<16x1xf32, #tpu.memory_space<vmem>>, vector<16x1xf32>
      %14 = vector.broadcast %13 : vector<16x1xf32> to vector<16x256xf32>
      %15 = arith.addf %12, %14 : vector<16x256xf32>
      %c0_13 = arith.constant 0 : index
      %c0_14 = arith.constant 0 : index
      %16 = vector.load %arg5[%c0_13, %c0_14] : memref<16x256xf32, #tpu.memory_space<vmem>>, vector<16x256xf32>
      tpu.vector_store %arg5[%c0_13, %c0_14], %15 {strides = array<i32>} : memref<16x256xf32, #tpu.memory_space<vmem>>, vector<16x256xf32>,
    } else {
    }
    return
  }
  func.func @transform_0(%arg0: i32, %arg1: i32) -> (i32, i32) {
    %c0_i32 = arith.constant 0 : i32
    %c0_i32_0 = arith.constant 0 : i32
    return %c0_i32, %arg1 : i32, i32
  }
  func.func @transform_1(%arg0: i32, %arg1: i32) -> (i32, i32) {
    %c0_i32 = arith.constant 0 : i32
    return %arg1, %arg0 : i32, i32
  }
  func.func @transform_2(%arg0: i32, %arg1: i32) -> (i32, i32) {
    %c0_i32 = arith.constant 0 : i32
    %c0_i32_0 = arith.constant 0 : i32
    %c0_i32_1 = arith.constant 0 : i32
    return %c0_i32, %c0_i32_0 : i32, i32
  }
  func.func @transform_3(%arg0: i32, %arg1: i32) -> (i32, i32) {
    %c0_i32 = arith.constant 0 : i32
    %c0_i32_0 = arith.constant 0 : i32
    return %c0_i32, %arg0 : i32, i32
  }
}

module attributes {stable_mosaic.version = 11 : i64} {
  func.func @_mask_deform_kernel(%arg0: i32, %arg1: i32, %arg2: memref<5x256xf32, #tpu.memory_space<vmem>>, %arg3: memref<3x256xf32, #tpu.memory_space<vmem>>, %arg4: memref<1x3x4xf32, #tpu.memory_space<vmem>>, %arg5: memref<1x5x256xf32, #tpu.memory_space<vmem>>, %arg6: memref<1x3x256xf32, #tpu.memory_space<vmem>>) attributes {dimension_semantics = [#tpu.dimension_semantics<parallel>, #tpu.dimension_semantics<parallel>], iteration_bounds = array<i64: 2, 1>, scalar_prefetch = 0 : i64, scratch_operands = 0 : i64, tpu.core_type = #tpu.core_type<tc>, window_params = [{transform_indices = @transform_0, window_bounds = array<i64: 5, 256>}, {transform_indices = @transform_1, window_bounds = array<i64: 3, 256>}, {transform_indices = @transform_2, window_bounds = array<i64: 1, 3, 4>}, {transform_indices = @transform_3, window_bounds = array<i64: 1, 5, 256>}, {transform_indices = @transform_4, window_bounds = array<i64: 1, 3, 256>}]} {
    %c0 = arith.constant 0 : index
    %c0_0 = arith.constant 0 : index
    %0 = vector.load %arg2[%c0, %c0_0] : memref<5x256xf32, #tpu.memory_space<vmem>>, vector<5x256xf32>
    %cst = arith.constant dense<0xFF800000> : vector<256xf32>
    %1 = vector.multi_reduction <maximumf>, %0, %cst [0] : vector<5x256xf32> to vector<256xf32>
    %2 = vector.shape_cast %1 : vector<256xf32> to vector<1x256xf32>
    %3 = vector.broadcast %2 : vector<1x256xf32> to vector<5x256xf32>
    %4 = arith.subf %0, %3 : vector<5x256xf32>
    %5 = math.exp %4 : vector<5x256xf32>
    %cst_1 = arith.constant dense<0.000000e+00> : vector<256xf32>
    %6 = vector.multi_reduction <add>, %5, %cst_1 [0] : vector<5x256xf32> to vector<256xf32>
    %7 = vector.shape_cast %6 : vector<256xf32> to vector<1x256xf32>
    %8 = vector.broadcast %7 : vector<1x256xf32> to vector<5x256xf32>
    %9 = arith.divf %5, %8 : vector<5x256xf32>
    %c0_2 = arith.constant 0 : index
    %c0_3 = arith.constant 0 : index
    %c0_4 = arith.constant 0 : index
    %10 = vector.load %arg5[%c0_2, %c0_3, %c0_4] : memref<1x5x256xf32, #tpu.memory_space<vmem>>, vector<1x5x256xf32>
    %11 = vector.shape_cast %10 : vector<1x5x256xf32> to vector<5x256xf32>
    %12 = vector.shape_cast %9 : vector<5x256xf32> to vector<1x5x256xf32>
    tpu.vector_store %arg5[%c0_2, %c0_3, %c0_4], %12 {strides = array<i32>} : memref<1x5x256xf32, #tpu.memory_space<vmem>>, vector<1x5x256xf32>,
    %cst_5 = arith.constant 1.000000e-03 : f32
    %13 = vector.broadcast %cst_5 : f32 to vector<5x256xf32>
    %14 = arith.cmpf olt, %9, %13 : vector<5x256xf32>
    %cst_6 = arith.constant 0.000000e+00 : f32
    %15 = vector.broadcast %cst_6 : f32 to vector<5x256xf32>
    %16 = arith.select %14, %15, %9 : vector<5x256xi1>, vector<5x256xf32>
    %c0_7 = arith.constant 0 : index
    %c0_8 = arith.constant 0 : index
    %17 = vector.load %arg3[%c0_7, %c0_8] : memref<3x256xf32, #tpu.memory_space<vmem>>, vector<3x256xf32>
    %cst_9 = arith.constant dense<0.000000e+00> : vector<256xf32>
    %18 = vector.multi_reduction <add>, %16, %cst_9 [0] : vector<5x256xf32> to vector<256xf32>
    %19 = vector.shape_cast %18 : vector<256xf32> to vector<1x256xf32>
    %20 = vector.broadcast %19 : vector<1x256xf32> to vector<3x256xf32>
    %21 = arith.mulf %17, %20 : vector<3x256xf32>
    %22 = vector.extract_strided_slice %16 {offsets = [1, 0], sizes = [1, 256], strides = [1, 1]} : vector<5x256xf32> to vector<1x256xf32>
    %c0_10 = arith.constant 0 : index
    %c0_11 = arith.constant 0 : index
    %c0_12 = arith.constant 0 : index
    %23 = vector.load %arg4[%c0_10, %c0_11, %c0_12] : memref<1x3x4xf32, #tpu.memory_space<vmem>>, vector<1x3x1xf32>
    %24 = vector.shape_cast %23 : vector<1x3x1xf32> to vector<3x1xf32>
    %25 = vector.broadcast %22 : vector<1x256xf32> to vector<3x256xf32>
    %26 = vector.broadcast %24 : vector<3x1xf32> to vector<3x256xf32>
    %27 = arith.mulf %25, %26 : vector<3x256xf32>
    %28 = arith.addf %21, %27 : vector<3x256xf32>
    %29 = vector.extract_strided_slice %16 {offsets = [2, 0], sizes = [1, 256], strides = [1, 1]} : vector<5x256xf32> to vector<1x256xf32>
    %c0_13 = arith.constant 0 : index
    %c0_14 = arith.constant 0 : index
    %c1 = arith.constant 1 : index
    %30 = vector.load %arg4[%c0_13, %c0_14, %c1] : memref<1x3x4xf32, #tpu.memory_space<vmem>>, vector<1x3x1xf32>
    %31 = vector.shape_cast %30 : vector<1x3x1xf32> to vector<3x1xf32>
    %32 = vector.broadcast %29 : vector<1x256xf32> to vector<3x256xf32>
    %33 = vector.broadcast %31 : vector<3x1xf32> to vector<3x256xf32>
    %34 = arith.mulf %32, %33 : vector<3x256xf32>
    %35 = arith.addf %28, %34 : vector<3x256xf32>
    %36 = vector.extract_strided_slice %16 {offsets = [3, 0], sizes = [1, 256], strides = [1, 1]} : vector<5x256xf32> to vector<1x256xf32>
    %c0_15 = arith.constant 0 : index
    %c0_16 = arith.constant 0 : index
    %c2 = arith.constant 2 : index
    %37 = vector.load %arg4[%c0_15, %c0_16, %c2] : memref<1x3x4xf32, #tpu.memory_space<vmem>>, vector<1x3x1xf32>
    %38 = vector.shape_cast %37 : vector<1x3x1xf32> to vector<3x1xf32>
    %39 = vector.broadcast %36 : vector<1x256xf32> to vector<3x256xf32>
    %40 = vector.broadcast %38 : vector<3x1xf32> to vector<3x256xf32>
    %41 = arith.mulf %39, %40 : vector<3x256xf32>
    %42 = arith.addf %35, %41 : vector<3x256xf32>
    %43 = vector.extract_strided_slice %16 {offsets = [4, 0], sizes = [1, 256], strides = [1, 1]} : vector<5x256xf32> to vector<1x256xf32>
    %c0_17 = arith.constant 0 : index
    %c0_18 = arith.constant 0 : index
    %c3 = arith.constant 3 : index
    %44 = vector.load %arg4[%c0_17, %c0_18, %c3] : memref<1x3x4xf32, #tpu.memory_space<vmem>>, vector<1x3x1xf32>
    %45 = vector.shape_cast %44 : vector<1x3x1xf32> to vector<3x1xf32>
    %46 = vector.broadcast %43 : vector<1x256xf32> to vector<3x256xf32>
    %47 = vector.broadcast %45 : vector<3x1xf32> to vector<3x256xf32>
    %48 = arith.mulf %46, %47 : vector<3x256xf32>
    %49 = arith.addf %42, %48 : vector<3x256xf32>
    %c0_19 = arith.constant 0 : index
    %c0_20 = arith.constant 0 : index
    %c0_21 = arith.constant 0 : index
    %50 = vector.load %arg6[%c0_19, %c0_20, %c0_21] : memref<1x3x256xf32, #tpu.memory_space<vmem>>, vector<1x3x256xf32>
    %51 = vector.shape_cast %50 : vector<1x3x256xf32> to vector<3x256xf32>
    %52 = vector.shape_cast %49 : vector<3x256xf32> to vector<1x3x256xf32>
    tpu.vector_store %arg6[%c0_19, %c0_20, %c0_21], %52 {strides = array<i32>} : memref<1x3x256xf32, #tpu.memory_space<vmem>>, vector<1x3x256xf32>,
    return
  }
  func.func @transform_0(%arg0: i32, %arg1: i32) -> (i32, i32) {
    %c1_i32 = arith.constant 1 : i32
    %0 = arith.muli %arg0, %c1_i32 : i32
    %1 = arith.addi %0, %arg1 : i32
    %c0_i32 = arith.constant 0 : i32
    %c0_i32_0 = arith.constant 0 : i32
    return %c0_i32, %1 : i32, i32
  }
  func.func @transform_1(%arg0: i32, %arg1: i32) -> (i32, i32) {
    %c0_i32 = arith.constant 0 : i32
    %c0_i32_0 = arith.constant 0 : i32
    return %c0_i32, %arg1 : i32, i32
  }
  func.func @transform_2(%arg0: i32, %arg1: i32) -> (i32, i32, i32) {
    %c0_i32 = arith.constant 0 : i32
    %c0_i32_0 = arith.constant 0 : i32
    %c0_i32_1 = arith.constant 0 : i32
    return %arg0, %c0_i32, %c0_i32_0 : i32, i32, i32
  }
  func.func @transform_3(%arg0: i32, %arg1: i32) -> (i32, i32, i32) {
    %c0_i32 = arith.constant 0 : i32
    %c0_i32_0 = arith.constant 0 : i32
    return %arg0, %c0_i32, %arg1 : i32, i32, i32
  }
  func.func @transform_4(%arg0: i32, %arg1: i32) -> (i32, i32, i32) {
    %c0_i32 = arith.constant 0 : i32
    %c0_i32_0 = arith.constant 0 : i32
    return %arg0, %c0_i32, %arg1 : i32, i32, i32
  }
}

</mosaic_0001>

<llo_original>
// kernel: _lambda_.8
$region0: #{_lambda_.8}
  #allocation0 [shape = 'u32[]', space=smem, size = 0x4, offset = 0x4, fixed_abs, tag = 'smem constant byte address 0x4 - core index']
  #allocation1 [shape = 'u32[144,128]{1,0:T(1,128)}', space=vmem, size = 0x12000, scoped, tag = 'internal scratch']
  %s0 = inlined_call_operand.vmem [shape: bf16[16,4], index: 0, kind: input, shape index: {}]
  %s1 = inlined_call_operand.vmem [shape: bf16[4,512], index: 1, kind: input, shape index: {}]
  %s2 = inlined_call_operand.vmem [shape: f32[16,1], index: 2, kind: input, shape index: {}]
  %s3 = inlined_call_operand.vmem [shape: bf16[16,512], index: 3, kind: output, shape index: {}]
  %s4 = sld [smem:[#allocation0]]
  $region79: #{_lambda_.8} parent=0
    _
  %s6 = ssub.s32 1, %s4
  %s7 = scalar_select 0, %s6, %s4
  $region1: #{_lambda_.8} parent=0
    #allocation2 [shape = 'u8[16384]{0}', space=vmem, size = 0x4000, scoped, tag = 'output window, operand 0']
    loop: start=0, step=1, limit=4
    $region2: #{_lambda_.8} parent=1 // loop_pre_header
      _
    $region3: #{_lambda_.8} parent=1 // loop_header
      %s9 = sphi 0, %s13
      %p10 = scmp.ge.s32.totalorder %s9, 4
      %s17 = sphi 0, %s17
      %s19 = sphi 0, %s17
      %s20 = sphi 0, %s19
      %s34 = sphi 0, %s20
      %s40 = sphi 0, %s42
      %s43 = sphi 0, %s40
      %s44 = sphi 0, %s43
      %s60 = sphi 0, %s44
      %s64 = sphi 0, %s64
      %s66 = sphi 0, %s64
      %s67 = sphi 0, %s66
      %s81 = sphi 0, %s67
      %s87 = sphi 0, %s89
      %s90 = sphi 0, %s87
      %s91 = sphi 0, %s90
      %s107 = sphi 0, %s91
    $region4: #{_lambda_.8} parent=1 // loop_header_branch
      %12 = sbr.rel (%p10) target = $region8
    $region5: #{_lambda_.8} parent=1 // loop_body
      %s14 = ssub.s32 %s9, 1
      %s15 = ssub.s32 %s9, 2
      %s16 = sadd.s32 %s9, 1
      %s18 = sadd.s32 %s17, 1
      %p21 = scmp.eq.s32.totalorder %s9, 1
      %p22 = scmp.ne.s32.totalorder %s17, %s19
      %p23 = scmp.eq.s32.totalorder %s9, 0
      %p24 = por %p22, %p23
      %p25 = scmp.ne.s32.totalorder %s17, %s19
      %p26 = scmp.eq.s32.totalorder %s14, 1
      %p27 = por %p25, %p26
      %p28 = scmp.ne.s32.totalorder %s19, %s20
      %p29 = scmp.eq.s32.totalorder %s14, 0
      %p30 = por %p28, %p29
      %p31 = scmp.ne.s32.totalorder %s19, %s20
      %p32 = scmp.eq.s32.totalorder %s15, 1
      %p33 = por %p31, %p32
      %p35 = scmp.ne.s32.totalorder %s20, %s34
      %p36 = scmp.eq.s32.totalorder %s15, 0
      %p37 = por %p35, %p36
      %s38 = ssub.s32 %s9, %s16
      %p39 = scmp.eq.s32.totalorder %s38, 0
      %s41 = sadd.s32 %s40, 1
      %s42 = scalar_select %p39, %s40, %s41
      %p45 = pneg %p39
      %p46 = scmp.eq.s32.totalorder %s9, 1
      %p47 = por %p45, %p46
      %p48 = scmp.ne.s32.totalorder %s40, %s43
      %p49 = scmp.eq.s32.totalorder %s9, 0
      %p50 = por %p48, %p49
      %p51 = scmp.ne.s32.totalorder %s40, %s43
      %p52 = scmp.eq.s32.totalorder %s14, 1
      %p53 = por %p51, %p52
      %p54 = scmp.ne.s32.totalorder %s43, %s44
      %p55 = scmp.eq.s32.totalorder %s14, 0
      %p56 = por %p54, %p55
      %p57 = scmp.ne.s32.totalorder %s43, %s44
      %p58 = scmp.eq.s32.totalorder %s15, 1
      %p59 = por %p57, %p58
      %p61 = scmp.ne.s32.totalorder %s44, %s60
      %p62 = scmp.eq.s32.totalorder %s15, 0
      %p63 = por %p61, %p62
      %s65 = sadd.s32 %s64, 1
      %p68 = scmp.eq.s32.totalorder %s9, 1
      %p69 = scmp.ne.s32.totalorder %s64, %s66
      %p70 = scmp.eq.s32.totalorder %s9, 0
      %p71 = por %p69, %p70
      %p72 = scmp.ne.s32.totalorder %s64, %s66
      %p73 = scmp.eq.s32.totalorder %s14, 1
      %p74 = por %p72, %p73
      %p75 = scmp.ne.s32.totalorder %s66, %s67
      %p76 = scmp.eq.s32.totalorder %s14, 0
      %p77 = por %p75, %p76
      %p78 = scmp.ne.s32.totalorder %s66, %s67
      %p79 = scmp.eq.s32.totalorder %s15, 1
      %p80 = por %p78, %p79
      %p82 = scmp.ne.s32.totalorder %s67, %s81
      %p83 = scmp.eq.s32.totalorder %s15, 0
      %p84 = por %p82, %p83
      %s85 = ssub.s32 %s9, %s16
      %p86 = scmp.eq.s32.totalorder %s85, 0
      %s88 = sadd.s32 %s87, 1
      %s89 = scalar_select %p86, %s87, %s88
      %p92 = pneg %p86
      %p93 = scmp.eq.s32.totalorder %s9, 1
      %p94 = por %p92, %p93
      %p95 = scmp.ne.s32.totalorder %s87, %s90
      %p96 = scmp.eq.s32.totalorder %s9, 0
      %p97 = por %p95, %p96
      %p98 = scmp.ne.s32.totalorder %s87, %s90
      %p99 = scmp.eq.s32.totalorder %s14, 1
      %p100 = por %p98, %p99
      %p101 = scmp.ne.s32.totalorder %s90, %s91
      %p102 = scmp.eq.s32.totalorder %s14, 0
      %p103 = por %p101, %p102
      %p104 = scmp.ne.s32.totalorder %s90, %s91
      %p105 = scmp.eq.s32.totalorder %s15, 1
      %p106 = por %p104, %p105
      %p108 = scmp.ne.s32.totalorder %s91, %s107
      %p109 = scmp.eq.s32.totalorder %s15, 0
      %p110 = por %p108, %p109
      %p111 = scmp.le.s32.totalorder 1, %s9
      %p112 = scmp.lt.s32.totalorder %s9, 3
      %p113 = pnand %p111, %p112
      %p114 = pneg %p113
      // Predicated region
      $region9: #{_lambda_.8} parent=5 // pred_check
        _
      $region10: #{_lambda_.8} parent=5 // pred_check_branch
        %116 = sbr.rel (%p113) target = $region12
      $region11: #{_lambda_.8} parent=5 // pred_region
        %s117 = ssub.s32 %s9, 1
        // Predicated region
        $region13: #{_lambda_.8} parent=11 // pred_check
          %p118 = pneg %p30
        $region14: #{_lambda_.8} parent=11 // pred_check_branch
          %120 = sbr.rel (%p118) target = $region16
        $region15: #{_lambda_.8} parent=11 // pred_region
          _
        $region16: #{_lambda_.8} parent=11 // pred_fallthru
          _
        // Predicated region
        $region17: #{_lambda_.8} parent=11 // pred_check
          %p121 = pneg %p77
        $region18: #{_lambda_.8} parent=11 // pred_check_branch
          %123 = sbr.rel (%p121) target = $region20
        $region19: #{_lambda_.8} parent=11 // pred_region
          _
        $region20: #{_lambda_.8} parent=11 // pred_fallthru
          _
      $region12: #{_lambda_.8} parent=5 // pred_fallthru
        _
      %p124 = scmp.lt.s32.totalorder %s9, 2
      // Predicated region
      $region21: #{_lambda_.8} parent=5 // pred_check
        %p125 = pneg %p124
      $region22: #{_lambda_.8} parent=5 // pred_check_branch
        %127 = sbr.rel (%p125) target = $region24
      $region23: #{_lambda_.8} parent=5 // pred_region
        // Predicated region
        $region25: #{_lambda_.8} parent=23 // pred_check
          %p128 = pneg %p50
        $region26: #{_lambda_.8} parent=23 // pred_check_branch
          %130 = sbr.rel (%p128) target = $region28
        $region27: #{_lambda_.8} parent=23 // pred_region
          %s131 = smul.u32 2, %s9
          %p132 = scmp.lt.s32.totalorder %s131, 3
          %s133 = scalar_select %p132, %s131, 3
          %s134 = smul.addr %s133, 2
          %s135 = scalar_lea.vmem %s1, %s134
          %s136 = smul.u32 2, %s9
        $region28: #{_lambda_.8} parent=23 // pred_fallthru
          _
      $region24: #{_lambda_.8} parent=5 // pred_fallthru
        _
      %p137 = scmp.le.s32.totalorder 1, %s9
      %p138 = scmp.lt.s32.totalorder %s9, 3
      %p139 = pnand %p137, %p138
      %p140 = pneg %p139
      // Predicated region
      $region29: #{_lambda_.8} parent=5 // pred_check
        _
      $region30: #{_lambda_.8} parent=5 // pred_check_branch
        %142 = sbr.rel (%p139) target = $region32
      $region31: #{_lambda_.8} parent=5 // pred_region
        %s143 = ssub.s32 %s9, 1
        %p144 = pneg %p30
        %p145 = pneg %p27
        %s146 = smul.u32 2, %s14
        %p147 = scmp.lt.s32.totalorder %s146, 3
        %s148 = scalar_select %p147, %s146, 3
        %s149 = smul.addr %s148, 2
        %s150 = scalar_lea.vmem %s1, %s149
        %p151 = pneg %p56
        %p152 = pneg %p53
        %p153 = pneg %p77
        %p154 = pneg %p74
        %p155 = pneg %p103
        %p156 = pneg %p100
        %s157 = sand.u32 %s90, 1
        %s158 = sand.u32 %s90, 1
        %s159 = smul.addr %s158, 16
        %s160 = scalar_lea.vmem [#allocation2], %s159
        %s161 = smul.u32 2, %s14
        %p162 = scmp.lt.s32.totalorder %s161, 3
        %s163 = scalar_select %p162, %s161, 3
        %s164 = smul.addr %s163, 2
        %s165 = scalar_lea.vmem %s1, %s164
        %s166 = smul.u32 2, %s14
        %s167 = smul.u32 2, %s14
        %v169 = vld [vmem:[%s0] sm:$0xf]
        %v170 = vld [vmem:[%s0 + $0x4] sm:$0xf]
        %v171 = vld [vmem:[%s165] sm:$0xf]
        %v172 = vld [vmem:[%s2] sm:$0xff]
        %v173 = vld [vmem:[%s2 + $0x8] sm:$0xff]
        %175 = vset.pattern.permute.xlu0 0
        %176 = vperm.xlu0 %175, %v172
        %v177 = vpop.permute.xlu0 %176
        %180 = vset.pattern.permute.xlu0 0
        %181 = vperm.xlu0 %180, %v173
        %v182 = vpop.permute.xlu0 %181
        %v186 = vunpack.c.l.b16 %v169
        %v187 = vunpack.c.l.b16 %v170
        %v188 = vpack.c.b16 %v187, %v186
        %v191 = vunpack.c.l.s4 1983009808
        %v192 = vunpack.c.0.s8 %v191
        %v193 = vlaneseq
        %v194 = vshrl.u32 %v193, 7
        %v195 = vsub.s32 %v192, %v194
        %v196 = vrot.slane %v171, %v195
        %v197 = vcombine.high %v196, %v196
        %vm198 = vcmask 31744
        %v200 = vsel %vm198, %v188, 0
        %vm202 = vcmask 1041408
        %v204 = vsel %vm202, %v196, 0
        %v207 = vsel %vm202, %v197, 0
        %209 = vmatprep.subr.bf16.mxu0 %v207
        %210 = vmatpush1.bf16.msra.mxu0 %v204
        %211 = vmatprep.subr.bf16.mxu0 0
        %212 = vmatpush1.bf16.msra.mxu0 0
        %213 = vmatprep.subr.bf16.mxu0 0
        %214 = vmatpush1.bf16.msra.mxu0 0
        %215 = vmatprep.subr.bf16.mxu0 0
        %216 = vmatpush1.bf16.msra.mxu0 0
        %217 = vmatprep.subr.bf16.mxu0 0
        %218 = vmatpush1.bf16.msra.mxu0 0
        %219 = vmatprep.subr.bf16.mxu0 0
        %220 = vmatpush1.bf16.msra.mxu0 0
        %221 = vmatprep.subr.bf16.mxu0 0
        %222 = vmatpush1.bf16.msra.mxu0 0
        %223 = vmatprep.subr.bf16.mxu0 0
        %224 = vmatpush1.bf16.msra.mxu0 0
        %225 = vmatprep.subr.bf16.mxu0 0
        %226 = vmatpush1.bf16.msra.mxu0 0
        %227 = vmatprep.subr.bf16.mxu0 0
        %228 = vmatpush1.bf16.msra.mxu0 0
        %229 = vmatprep.subr.bf16.mxu0 0
        %230 = vmatpush1.bf16.msra.mxu0 0
        %231 = vmatprep.subr.bf16.mxu0 0
        %232 = vmatpush1.bf16.msra.mxu0 0
        %233 = vmatprep.subr.bf16.mxu0 0
        %234 = vmatpush1.bf16.msra.mxu0 0
        %235 = vmatprep.subr.bf16.mxu0 0
        %236 = vmatpush1.bf16.msra.mxu0 0
        %237 = vmatprep.subr.bf16.mxu0 0
        %238 = vmatpush1.bf16.msra.mxu0 0
        %239 = vmatprep.subr.bf16.mxu0 0
        %240 = vmatpush1.bf16.msra.mxu0 0
        %241 = vmatprep.mubr.bf16.mxu0 0
        %242 = vmatmul.mubr.bf16.gmra.mrb[0].mxu0 %v200
        %v243 = vpop.f32.mrb[0].mxu0
        %v244 = vadd.f32 %v177, %v243
        %v245 = vpop.f32.mrb[0].mxu0
        %v246 = vadd.f32 %v177, %v245
        %v247 = vpop.f32.mrb[0].mxu0
        %v248 = vadd.f32 %v182, %v247
        %v249 = vpop.f32.mrb[0].mxu0
        %v250 = vadd.f32 %v182, %v249
        %251 = vdwg.mxu0
        %v252 = vmax.f32 %v244, 0.0
        %v253 = vmax.f32 %v246, 0.0
        %v254 = vmax.f32 %v248, 0.0
        %v255 = vmax.f32 %v250, 0.0
        %v256 = vpack.c.bf16 %v254, %v252
        %v257 = vpack.c.bf16 %v255, %v253
        %v260 = vunpack.c.l.b16 %v256
        %v261 = vunpack.c.l.b16 %v257
        %v262 = vunpack.c.h.b16 %v256
        %v263 = vunpack.c.h.b16 %v257
        %v264 = vpack.c.b16 %v261, %v260
        %v265 = vpack.c.b16 %v263, %v262
        %268 = vst [vmem:[%s160] sm:$0xff] %v264
        %269 = vst [vmem:[%s160 + $0x8] sm:$0xff] %v265
        %s270 = sand.u32 %s90, 1
        %s271 = sand.u32 %s90, 1
        %s272 = smul.addr %s271, 16
        %s273 = scalar_lea.vmem [#allocation2], %s272
        // Predicated region
        $region33: #{_lambda_.8} parent=31 // pred_check
          %p274 = pneg %p100
        $region34: #{_lambda_.8} parent=31 // pred_check_branch
          %276 = sbr.rel (%p274) target = $region36
        $region35: #{_lambda_.8} parent=31 // pred_region
          %s277 = smul.u32 2, %s14
          %s278 = smul.addr %s277, 4
          %s279 = scalar_lea.vmem %s3, %s278
          // Predicated region
          $region37: #{_lambda_.8} parent=35 // pred_check
            _
          $region38: #{_lambda_.8} parent=35 // pred_check_branch
            %281 = sbr.rel (0) target = $region40
          $region39: #{_lambda_.8} parent=35 // pred_region
            // Predicated region
            $region41: #{_lambda_.8} parent=39 // pred_check
              _
            $region42: #{_lambda_.8} parent=39 // pred_check_branch
              %283 = sbr.rel (0) target = $region44
            $region43: #{_lambda_.8} parent=39 // pred_region
              // Predicated region
              $region56: #{_lambda_.8} parent=43 // pred_check
                _
              $region57: #{_lambda_.8} parent=43 // pred_check_branch
                %300 = sbr.rel (0) target = $region59
              $region58: #{_lambda_.8} parent=43 // pred_region
                loop: start=0, step=1, limit=1
                $region60: #{_lambda_.8} parent=58 // loop_pre_header
                  _
                $region61: #{_lambda_.8} parent=58 // loop_header
                  %s302 = sphi 0, %s306
                  %p303 = scmp.ge.s32.totalorder %s302, 1
                  %s307 = sphi %s273, %s273
                  %s308 = sphi %s279, %s279
                $region62: #{_lambda_.8} parent=58 // loop_header_branch
                  %305 = sbr.rel (%p303) target = $region66
                $region63: #{_lambda_.8} parent=58 // loop_body
                  %v309 = vld [vmem:[%s307] sm:$0xff]
                  %310 = vst [vmem:[%s308] sm:$0xff] %v309
                  %v311 = vld [vmem:[%s307 + $0x8] sm:$0xff]
                  %312 = vst [vmem:[%s308 + $0x10] sm:$0xff] %v311
                $region64: #{_lambda_.8} parent=58 // loop_footer
                  %s306 = sadd.s32 1, %s302
                $region65: #{_lambda_.8} parent=58 // loop_footer_branch
                  %301 = sbr.rel target = $region61
                $region66: #{_lambda_.8} parent=58 // loop_exit
                  _
              $region59: #{_lambda_.8} parent=43 // pred_fallthru
                _
              // Predicated region
              $region67: #{_lambda_.8} parent=43 // pred_check
                _
              $region68: #{_lambda_.8} parent=43 // pred_check_branch
                %314 = sbr.rel target = $region70
              $region69: #{_lambda_.8} parent=43 // pred_region
                _
              $region70: #{_lambda_.8} parent=43 // pred_fallthru
                _
            $region44: #{_lambda_.8} parent=39 // pred_fallthru
              _
            // Predicated region
            $region45: #{_lambda_.8} parent=39 // pred_check
              _
            $region46: #{_lambda_.8} parent=39 // pred_check_branch
              %285 = sbr.rel target = $region48
            $region47: #{_lambda_.8} parent=39 // pred_region
              loop: start=0, step=1, limit=1
              $region49: #{_lambda_.8} parent=47 // loop_pre_header
                _
              $region50: #{_lambda_.8} parent=47 // loop_header
                %s288 = sphi 0, %s292
                %p289 = scmp.ge.s32.totalorder %s288, 1
                %s293 = sphi %s273, %s273
                %s294 = sphi %s279, %s279
              $region51: #{_lambda_.8} parent=47 // loop_header_branch
                %291 = sbr.rel (%p289) target = $region55
              $region52: #{_lambda_.8} parent=47 // loop_body
                %v295 = vld [vmem:[%s293] sm:$0xff]
                %296 = vst [vmem:[%s294] sm:$0xff] %v295
                %v297 = vld [vmem:[%s293 + $0x8] sm:$0xff]
                %298 = vst [vmem:[%s294 + $0x10] sm:$0xff] %v297
              $region53: #{_lambda_.8} parent=47 // loop_footer
                %s292 = sadd.s32 1, %s288
              $region54: #{_lambda_.8} parent=47 // loop_footer_branch
                %287 = sbr.rel target = $region50
              $region55: #{_lambda_.8} parent=47 // loop_exit
                _
            $region48: #{_lambda_.8} parent=39 // pred_fallthru
              _
          $region40: #{_lambda_.8} parent=35 // pred_fallthru
            _
          %315 = vnop
        $region36: #{_lambda_.8} parent=31 // pred_fallthru
          _
      $region32: #{_lambda_.8} parent=5 // pred_fallthru
        _
      %p316 = scmp.le.s32.totalorder 2, %s9
      // Predicated region
      $region71: #{_lambda_.8} parent=5 // pred_check
        %p317 = pneg %p316
      $region72: #{_lambda_.8} parent=5 // pred_check_branch
        %319 = sbr.rel (%p317) target = $region74
      $region73: #{_lambda_.8} parent=5 // pred_region
        %s320 = ssub.s32 %s9, 2
        // Predicated region
        $region75: #{_lambda_.8} parent=73 // pred_check
          %p321 = pneg %p106
        $region76: #{_lambda_.8} parent=73 // pred_check_branch
          %323 = sbr.rel (%p321) target = $region78
        $region77: #{_lambda_.8} parent=73 // pred_region
          %s324 = sand.u32 %s91, 1
          %s325 = sand.u32 %s91, 1
          %s326 = smul.addr %s325, 16
          %s327 = scalar_lea.vmem [#allocation2], %s326
        $region78: #{_lambda_.8} parent=73 // pred_fallthru
          _
      $region74: #{_lambda_.8} parent=5 // pred_fallthru
        _
    $region6: #{_lambda_.8} parent=1 // loop_footer
      %s13 = sadd.s32 1, %s9
    $region7: #{_lambda_.8} parent=1 // loop_footer_branch
      %8 = sbr.rel target = $region3
    $region8: #{_lambda_.8} parent=1 // loop_exit
      _

// kernel: _lambda_.9
$region0: #{_lambda_.9}
  #allocation0 [shape = 'u32[]', space=smem, size = 0x4, offset = 0x4, fixed_abs, tag = 'smem constant byte address 0x4 - core index']
  #allocation1 [shape = 'u32[144,128]{1,0:T(1,128)}', space=vmem, size = 0x12000, scoped, tag = 'internal scratch']
  %s0 = inlined_call_operand.vmem [shape: bf16[16,405], index: 0, kind: input, shape index: {}]
  %s1 = inlined_call_operand.vmem [shape: bf16[405,512], index: 1, kind: input, shape index: {}]
  %s2 = inlined_call_operand.vmem [shape: f32[16,1], index: 2, kind: input, shape index: {}]
  %s3 = inlined_call_operand.vmem [shape: bf16[16,512], index: 3, kind: output, shape index: {}]
  %s4 = sld [smem:[#allocation0]]
  $region117: #{_lambda_.9} parent=0
    _
  %s6 = ssub.s32 1, %s4
  %s7 = scalar_select 0, %s6, %s4
  $region1: #{_lambda_.9} parent=0
    #allocation2 [shape = 'u8[417792]{0}', space=vmem, size = 0x66000, scoped, tag = 'input window, operand 1']
    #allocation3 [shape = 'u8[16384]{0}', space=vmem, size = 0x4000, scoped, tag = 'output window, operand 0']
    loop: start=0, step=1, limit=4
    $region2: #{_lambda_.9} parent=1 // loop_pre_header
      _
    $region3: #{_lambda_.9} parent=1 // loop_header
      %s9 = sphi 0, %s13
      %p10 = scmp.ge.s32.totalorder %s9, 4
      %s17 = sphi 0, %s17
      %s19 = sphi 0, %s17
      %s20 = sphi 0, %s19
      %s34 = sphi 0, %s20
      %s40 = sphi 0, %s42
      %s43 = sphi 0, %s40
      %s44 = sphi 0, %s43
      %s60 = sphi 0, %s44
      %s64 = sphi 0, %s64
      %s66 = sphi 0, %s64
      %s67 = sphi 0, %s66
      %s81 = sphi 0, %s67
      %s87 = sphi 0, %s89
      %s90 = sphi 0, %s87
      %s91 = sphi 0, %s90
      %s107 = sphi 0, %s91
    $region4: #{_lambda_.9} parent=1 // loop_header_branch
      %12 = sbr.rel (%p10) target = $region8
    $region5: #{_lambda_.9} parent=1 // loop_body
      %s14 = ssub.s32 %s9, 1
      %s15 = ssub.s32 %s9, 2
      %s16 = sadd.s32 %s9, 1
      %s18 = sadd.s32 %s17, 1
      %p21 = scmp.eq.s32.totalorder %s9, 1
      %p22 = scmp.ne.s32.totalorder %s17, %s19
      %p23 = scmp.eq.s32.totalorder %s9, 0
      %p24 = por %p22, %p23
      %p25 = scmp.ne.s32.totalorder %s17, %s19
      %p26 = scmp.eq.s32.totalorder %s14, 1
      %p27 = por %p25, %p26
      %p28 = scmp.ne.s32.totalorder %s19, %s20
      %p29 = scmp.eq.s32.totalorder %s14, 0
      %p30 = por %p28, %p29
      %p31 = scmp.ne.s32.totalorder %s19, %s20
      %p32 = scmp.eq.s32.totalorder %s15, 1
      %p33 = por %p31, %p32
      %p35 = scmp.ne.s32.totalorder %s20, %s34
      %p36 = scmp.eq.s32.totalorder %s15, 0
      %p37 = por %p35, %p36
      %s38 = ssub.s32 %s9, %s16
      %p39 = scmp.eq.s32.totalorder %s38, 0
      %s41 = sadd.s32 %s40, 1
      %s42 = scalar_select %p39, %s40, %s41
      %p45 = pneg %p39
      %p46 = scmp.eq.s32.totalorder %s9, 1
      %p47 = por %p45, %p46
      %p48 = scmp.ne.s32.totalorder %s40, %s43
      %p49 = scmp.eq.s32.totalorder %s9, 0
      %p50 = por %p48, %p49
      %p51 = scmp.ne.s32.totalorder %s40, %s43
      %p52 = scmp.eq.s32.totalorder %s14, 1
      %p53 = por %p51, %p52
      %p54 = scmp.ne.s32.totalorder %s43, %s44
      %p55 = scmp.eq.s32.totalorder %s14, 0
      %p56 = por %p54, %p55
      %p57 = scmp.ne.s32.totalorder %s43, %s44
      %p58 = scmp.eq.s32.totalorder %s15, 1
      %p59 = por %p57, %p58
      %p61 = scmp.ne.s32.totalorder %s44, %s60
      %p62 = scmp.eq.s32.totalorder %s15, 0
      %p63 = por %p61, %p62
      %s65 = sadd.s32 %s64, 1
      %p68 = scmp.eq.s32.totalorder %s9, 1
      %p69 = scmp.ne.s32.totalorder %s64, %s66
      %p70 = scmp.eq.s32.totalorder %s9, 0
      %p71 = por %p69, %p70
      %p72 = scmp.ne.s32.totalorder %s64, %s66
      %p73 = scmp.eq.s32.totalorder %s14, 1
      %p74 = por %p72, %p73
      %p75 = scmp.ne.s32.totalorder %s66, %s67
      %p76 = scmp.eq.s32.totalorder %s14, 0
      %p77 = por %p75, %p76
      %p78 = scmp.ne.s32.totalorder %s66, %s67
      %p79 = scmp.eq.s32.totalorder %s15, 1
      %p80 = por %p78, %p79
      %p82 = scmp.ne.s32.totalorder %s67, %s81
      %p83 = scmp.eq.s32.totalorder %s15, 0
      %p84 = por %p82, %p83
      %s85 = ssub.s32 %s9, %s16
      %p86 = scmp.eq.s32.totalorder %s85, 0
      %s88 = sadd.s32 %s87, 1
      %s89 = scalar_select %p86, %s87, %s88
      %p92 = pneg %p86
      %p93 = scmp.eq.s32.totalorder %s9, 1
      %p94 = por %p92, %p93
      %p95 = scmp.ne.s32.totalorder %s87, %s90
      %p96 = scmp.eq.s32.totalorder %s9, 0
      %p97 = por %p95, %p96
      %p98 = scmp.ne.s32.totalorder %s87, %s90
      %p99 = scmp.eq.s32.totalorder %s14, 1
      %p100 = por %p98, %p99
      %p101 = scmp.ne.s32.totalorder %s90, %s91
      %p102 = scmp.eq.s32.totalorder %s14, 0
      %p103 = por %p101, %p102
      %p104 = scmp.ne.s32.totalorder %s90, %s91
      %p105 = scmp.eq.s32.totalorder %s15, 1
      %p106 = por %p104, %p105
      %p108 = scmp.ne.s32.totalorder %s91, %s107
      %p109 = scmp.eq.s32.totalorder %s15, 0
      %p110 = por %p108, %p109
      %p111 = scmp.le.s32.totalorder 1, %s9
      %p112 = scmp.lt.s32.totalorder %s9, 3
      %p113 = pnand %p111, %p112
      %p114 = pneg %p113
      // Predicated region
      $region9: #{_lambda_.9} parent=5 // pred_check
        _
      $region10: #{_lambda_.9} parent=5 // pred_check_branch
        %116 = sbr.rel (%p113) target = $region12
      $region11: #{_lambda_.9} parent=5 // pred_region
        %s117 = ssub.s32 %s9, 1
        // Predicated region
        $region13: #{_lambda_.9} parent=11 // pred_check
          %p118 = pneg %p30
        $region14: #{_lambda_.9} parent=11 // pred_check_branch
          %120 = sbr.rel (%p118) target = $region16
        $region15: #{_lambda_.9} parent=11 // pred_region
          _
        $region16: #{_lambda_.9} parent=11 // pred_fallthru
          _
        // Predicated region
        $region17: #{_lambda_.9} parent=11 // pred_check
          %p121 = pneg %p77
        $region18: #{_lambda_.9} parent=11 // pred_check_branch
          %123 = sbr.rel (%p121) target = $region20
        $region19: #{_lambda_.9} parent=11 // pred_region
          _
        $region20: #{_lambda_.9} parent=11 // pred_fallthru
          _
      $region12: #{_lambda_.9} parent=5 // pred_fallthru
        _
      %p124 = scmp.lt.s32.totalorder %s9, 2
      // Predicated region
      $region21: #{_lambda_.9} parent=5 // pred_check
        %p125 = pneg %p124
      $region22: #{_lambda_.9} parent=5 // pred_check_branch
        %127 = sbr.rel (%p125) target = $region24
      $region23: #{_lambda_.9} parent=5 // pred_region
        // Predicated region
        $region25: #{_lambda_.9} parent=23 // pred_check
          %p128 = pneg %p50
        $region26: #{_lambda_.9} parent=23 // pred_check_branch
          %130 = sbr.rel (%p128) target = $region28
        $region27: #{_lambda_.9} parent=23 // pred_region
          %s131 = sand.u32 %s40, 1
          %s132 = sand.u32 %s40, 1
          %s133 = smul.addr %s132, 408
          %s134 = scalar_lea.vmem [#allocation2], %s133
          %s135 = smul.u32 2, %s9
          %s136 = smul.addr %s135, 4
          %s137 = scalar_lea.vmem %s1, %s136
          // Predicated region
          $region29: #{_lambda_.9} parent=27 // pred_check
            _
          $region30: #{_lambda_.9} parent=27 // pred_check_branch
            %139 = sbr.rel (0) target = $region32
          $region31: #{_lambda_.9} parent=27 // pred_region
            // Predicated region
            $region33: #{_lambda_.9} parent=31 // pred_check
              _
            $region34: #{_lambda_.9} parent=31 // pred_check_branch
              %141 = sbr.rel (0) target = $region36
            $region35: #{_lambda_.9} parent=31 // pred_region
              // Predicated region
              $region48: #{_lambda_.9} parent=35 // pred_check
                _
              $region49: #{_lambda_.9} parent=35 // pred_check_branch
                %256 = sbr.rel (0) target = $region51
              $region50: #{_lambda_.9} parent=35 // pred_region
                loop: start=0, step=1, limit=1
                $region52: #{_lambda_.9} parent=50 // loop_pre_header
                  _
                $region53: #{_lambda_.9} parent=50 // loop_header
                  %s258 = sphi 0, %s262
                  %p259 = scmp.ge.s32.totalorder %s258, 1
                  %s263 = sphi %s137, %s137
                  %s264 = sphi %s134, %s134
                $region54: #{_lambda_.9} parent=50 // loop_header_branch
                  %261 = sbr.rel (%p259) target = $region58
                $region55: #{_lambda_.9} parent=50 // loop_body
                  %v265 = vld [vmem:[%s263] sm:$0xff]
                  %266 = vst [vmem:[%s264] sm:$0xff] %v265
                  %v267 = vld [vmem:[%s263 + $0x10] sm:$0xff]
                  %268 = vst [vmem:[%s264 + $0x8] sm:$0xff] %v267
                  %v269 = vld [vmem:[%s263 + $0x20] sm:$0xff]
                  %270 = vst [vmem:[%s264 + $0x10] sm:$0xff] %v269
                  %v271 = vld [vmem:[%s263 + $0x30] sm:$0xff]
                  %272 = vst [vmem:[%s264 + $0x18] sm:$0xff] %v271
                  %v273 = vld [vmem:[%s263 + $0x40] sm:$0xff]
                  %274 = vst [vmem:[%s264 + $0x20] sm:$0xff] %v273
                  %v275 = vld [vmem:[%s263 + $0x50] sm:$0xff]
                  %276 = vst [vmem:[%s264 + $0x28] sm:$0xff] %v275
                  %v277 = vld [vmem:[%s263 + $0x60] sm:$0xff]
                  %278 = vst [vmem:[%s264 + $0x30] sm:$0xff] %v277
                  %v279 = vld [vmem:[%s263 + $0x70] sm:$0xff]
                  %280 = vst [vmem:[%s264 + $0x38] sm:$0xff] %v279
                  %v281 = vld [vmem:[%s263 + $0x80] sm:$0xff]
                  %282 = vst [vmem:[%s264 + $0x40] sm:$0xff] %v281
                  %v283 = vld [vmem:[%s263 + $0x90] sm:$0xff]
                  %284 = vst [vmem:[%s264 + $0x48] sm:$0xff] %v283
                  %v285 = vld [vmem:[%s263 + $0xa0] sm:$0xff]
                  %286 = vst [vmem:[%s264 + $0x50] sm:$0xff] %v285
                  %v287 = vld [vmem:[%s263 + $0xb0] sm:$0xff]
                  %288 = vst [vmem:[%s264 + $0x58] sm:$0xff] %v287
                  %v289 = vld [vmem:[%s263 + $0xc0] sm:$0xff]
                  %290 = vst [vmem:[%s264 + $0x60] sm:$0xff] %v289
                  %v291 = vld [vmem:[%s263 + $0xd0] sm:$0xff]
                  %292 = vst [vmem:[%s264 + $0x68] sm:$0xff] %v291
                  %v293 = vld [vmem:[%s263 + $0xe0] sm:$0xff]
                  %294 = vst [vmem:[%s264 + $0x70] sm:$0xff] %v293
                  %v295 = vld [vmem:[%s263 + $0xf0] sm:$0xff]
                  %296 = vst [vmem:[%s264 + $0x78] sm:$0xff] %v295
                  %v297 = vld [vmem:[%s263 + $0x100] sm:$0xff]
                  %298 = vst [vmem:[%s264 + $0x80] sm:$0xff] %v297
                  %v299 = vld [vmem:[%s263 + $0x110] sm:$0xff]
                  %300 = vst [vmem:[%s264 + $0x88] sm:$0xff] %v299
                  %v301 = vld [vmem:[%s263 + $0x120] sm:$0xff]
                  %302 = vst [vmem:[%s264 + $0x90] sm:$0xff] %v301
                  %v303 = vld [vmem:[%s263 + $0x130] sm:$0xff]
                  %304 = vst [vmem:[%s264 + $0x98] sm:$0xff] %v303
                  %v305 = vld [vmem:[%s263 + $0x140] sm:$0xff]
                  %306 = vst [vmem:[%s264 + $0xa0] sm:$0xff] %v305
                  %v307 = vld [vmem:[%s263 + $0x150] sm:$0xff]
                  %308 = vst [vmem:[%s264 + $0xa8] sm:$0xff] %v307
                  %v309 = vld [vmem:[%s263 + $0x160] sm:$0xff]
                  %310 = vst [vmem:[%s264 + $0xb0] sm:$0xff] %v309
                  %v311 = vld [vmem:[%s263 + $0x170] sm:$0xff]
                  %312 = vst [vmem:[%s264 + $0xb8] sm:$0xff] %v311
                  %v313 = vld [vmem:[%s263 + $0x180] sm:$0xff]
                  %314 = vst [vmem:[%s264 + $0xc0] sm:$0xff] %v313
                  %v315 = vld [vmem:[%s263 + $0x190] sm:$0xff]
                  %316 = vst [vmem:[%s264 + $0xc8] sm:$0xff] %v315
                  %v317 = vld [vmem:[%s263 + $0x1a0] sm:$0xff]
                  %318 = vst [vmem:[%s264 + $0xd0] sm:$0xff] %v317
                  %v319 = vld [vmem:[%s263 + $0x1b0] sm:$0xff]
                  %320 = vst [vmem:[%s264 + $0xd8] sm:$0xff] %v319
                  %v321 = vld [vmem:[%s263 + $0x1c0] sm:$0xff]
                  %322 = vst [vmem:[%s264 + $0xe0] sm:$0xff] %v321
                  %v323 = vld [vmem:[%s263 + $0x1d0] sm:$0xff]
                  %324 = vst [vmem:[%s264 + $0xe8] sm:$0xff] %v323
                  %v325 = vld [vmem:[%s263 + $0x1e0] sm:$0xff]
                  %326 = vst [vmem:[%s264 + $0xf0] sm:$0xff] %v325
                  %v327 = vld [vmem:[%s263 + $0x1f0] sm:$0xff]
                  %328 = vst [vmem:[%s264 + $0xf8] sm:$0xff] %v327
                  %v329 = vld [vmem:[%s263 + $0x200] sm:$0xff]
                  %330 = vst [vmem:[%s264 + $0x100] sm:$0xff] %v329
                  %v331 = vld [vmem:[%s263 + $0x210] sm:$0xff]
                  %332 = vst [vmem:[%s264 + $0x108] sm:$0xff] %v331
                  %v333 = vld [vmem:[%s263 + $0x220] sm:$0xff]
                  %334 = vst [vmem:[%s264 + $0x110] sm:$0xff] %v333
                  %v335 = vld [vmem:[%s263 + $0x230] sm:$0xff]
                  %336 = vst [vmem:[%s264 + $0x118] sm:$0xff] %v335
                  %v337 = vld [vmem:[%s263 + $0x240] sm:$0xff]
                  %338 = vst [vmem:[%s264 + $0x120] sm:$0xff] %v337
                  %v339 = vld [vmem:[%s263 + $0x250] sm:$0xff]
                  %340 = vst [vmem:[%s264 + $0x128] sm:$0xff] %v339
                  %v341 = vld [vmem:[%s263 + $0x260] sm:$0xff]
                  %342 = vst [vmem:[%s264 + $0x130] sm:$0xff] %v341
                  %v343 = vld [vmem:[%s263 + $0x270] sm:$0xff]
                  %344 = vst [vmem:[%s264 + $0x138] sm:$0xff] %v343
                  %v345 = vld [vmem:[%s263 + $0x280] sm:$0xff]
                  %346 = vst [vmem:[%s264 + $0x140] sm:$0xff] %v345
                  %v347 = vld [vmem:[%s263 + $0x290] sm:$0xff]
                  %348 = vst [vmem:[%s264 + $0x148] sm:$0xff] %v347
                  %v349 = vld [vmem:[%s263 + $0x2a0] sm:$0xff]
                  %350 = vst [vmem:[%s264 + $0x150] sm:$0xff] %v349
                  %v351 = vld [vmem:[%s263 + $0x2b0] sm:$0xff]
                  %352 = vst [vmem:[%s264 + $0x158] sm:$0xff] %v351
                  %v353 = vld [vmem:[%s263 + $0x2c0] sm:$0xff]
                  %354 = vst [vmem:[%s264 + $0x160] sm:$0xff] %v353
                  %v355 = vld [vmem:[%s263 + $0x2d0] sm:$0xff]
                  %356 = vst [vmem:[%s264 + $0x168] sm:$0xff] %v355
                  %v357 = vld [vmem:[%s263 + $0x2e0] sm:$0xff]
                  %358 = vst [vmem:[%s264 + $0x170] sm:$0xff] %v357
                  %v359 = vld [vmem:[%s263 + $0x2f0] sm:$0xff]
                  %360 = vst [vmem:[%s264 + $0x178] sm:$0xff] %v359
                  %v361 = vld [vmem:[%s263 + $0x300] sm:$0xff]
                  %362 = vst [vmem:[%s264 + $0x180] sm:$0xff] %v361
                  %v363 = vld [vmem:[%s263 + $0x310] sm:$0xff]
                  %364 = vst [vmem:[%s264 + $0x188] sm:$0xff] %v363
                  %v365 = vld [vmem:[%s263 + $0x320] sm:$0xff]
                  %366 = vst [vmem:[%s264 + $0x190] sm:$0xff] %v365
                $region56: #{_lambda_.9} parent=50 // loop_footer
                  %s262 = sadd.s32 1, %s258
                $region57: #{_lambda_.9} parent=50 // loop_footer_branch
                  %257 = sbr.rel target = $region53
                $region58: #{_lambda_.9} parent=50 // loop_exit
                  _
              $region51: #{_lambda_.9} parent=35 // pred_fallthru
                _
              // Predicated region
              $region59: #{_lambda_.9} parent=35 // pred_check
                _
              $region60: #{_lambda_.9} parent=35 // pred_check_branch
                %368 = sbr.rel target = $region62
              $region61: #{_lambda_.9} parent=35 // pred_region
                _
              $region62: #{_lambda_.9} parent=35 // pred_fallthru
                _
            $region36: #{_lambda_.9} parent=31 // pred_fallthru
              _
            // Predicated region
            $region37: #{_lambda_.9} parent=31 // pred_check
              _
            $region38: #{_lambda_.9} parent=31 // pred_check_branch
              %143 = sbr.rel target = $region40
            $region39: #{_lambda_.9} parent=31 // pred_region
              loop: start=0, step=1, limit=1
              $region41: #{_lambda_.9} parent=39 // loop_pre_header
                _
              $region42: #{_lambda_.9} parent=39 // loop_header
                %s146 = sphi 0, %s150
                %p147 = scmp.ge.s32.totalorder %s146, 1
                %s151 = sphi %s137, %s137
                %s152 = sphi %s134, %s134
              $region43: #{_lambda_.9} parent=39 // loop_header_branch
                %149 = sbr.rel (%p147) target = $region47
              $region44: #{_lambda_.9} parent=39 // loop_body
                %v153 = vld [vmem:[%s151] sm:$0xff]
                %154 = vst [vmem:[%s152] sm:$0xff] %v153
                %v155 = vld [vmem:[%s151 + $0x10] sm:$0xff]
                %156 = vst [vmem:[%s152 + $0x8] sm:$0xff] %v155
                %v157 = vld [vmem:[%s151 + $0x20] sm:$0xff]
                %158 = vst [vmem:[%s152 + $0x10] sm:$0xff] %v157
                %v159 = vld [vmem:[%s151 + $0x30] sm:$0xff]
                %160 = vst [vmem:[%s152 + $0x18] sm:$0xff] %v159
                %v161 = vld [vmem:[%s151 + $0x40] sm:$0xff]
                %162 = vst [vmem:[%s152 + $0x20] sm:$0xff] %v161
                %v163 = vld [vmem:[%s151 + $0x50] sm:$0xff]
                %164 = vst [vmem:[%s152 + $0x28] sm:$0xff] %v163
                %v165 = vld [vmem:[%s151 + $0x60] sm:$0xff]
                %166 = vst [vmem:[%s152 + $0x30] sm:$0xff] %v165
                %v167 = vld [vmem:[%s151 + $0x70] sm:$0xff]
                %168 = vst [vmem:[%s152 + $0x38] sm:$0xff] %v167
                %v169 = vld [vmem:[%s151 + $0x80] sm:$0xff]
                %170 = vst [vmem:[%s152 + $0x40] sm:$0xff] %v169
                %v171 = vld [vmem:[%s151 + $0x90] sm:$0xff]
                %172 = vst [vmem:[%s152 + $0x48] sm:$0xff] %v171
                %v173 = vld [vmem:[%s151 + $0xa0] sm:$0xff]
                %174 = vst [vmem:[%s152 + $0x50] sm:$0xff] %v173
                %v175 = vld [vmem:[%s151 + $0xb0] sm:$0xff]
                %176 = vst [vmem:[%s152 + $0x58] sm:$0xff] %v175
                %v177 = vld [vmem:[%s151 + $0xc0] sm:$0xff]
                %178 = vst [vmem:[%s152 + $0x60] sm:$0xff] %v177
                %v179 = vld [vmem:[%s151 + $0xd0] sm:$0xff]
                %180 = vst [vmem:[%s152 + $0x68] sm:$0xff] %v179
                %v181 = vld [vmem:[%s151 + $0xe0] sm:$0xff]
                %182 = vst [vmem:[%s152 + $0x70] sm:$0xff] %v181
                %v183 = vld [vmem:[%s151 + $0xf0] sm:$0xff]
                %184 = vst [vmem:[%s152 + $0x78] sm:$0xff] %v183
                %v185 = vld [vmem:[%s151 + $0x100] sm:$0xff]
                %186 = vst [vmem:[%s152 + $0x80] sm:$0xff] %v185
                %v187 = vld [vmem:[%s151 + $0x110] sm:$0xff]
                %188 = vst [vmem:[%s152 + $0x88] sm:$0xff] %v187
                %v189 = vld [vmem:[%s151 + $0x120] sm:$0xff]
                %190 = vst [vmem:[%s152 + $0x90] sm:$0xff] %v189
                %v191 = vld [vmem:[%s151 + $0x130] sm:$0xff]
                %192 = vst [vmem:[%s152 + $0x98] sm:$0xff] %v191
                %v193 = vld [vmem:[%s151 + $0x140] sm:$0xff]
                %194 = vst [vmem:[%s152 + $0xa0] sm:$0xff] %v193
                %v195 = vld [vmem:[%s151 + $0x150] sm:$0xff]
                %196 = vst [vmem:[%s152 + $0xa8] sm:$0xff] %v195
                %v197 = vld [vmem:[%s151 + $0x160] sm:$0xff]
                %198 = vst [vmem:[%s152 + $0xb0] sm:$0xff] %v197
                %v199 = vld [vmem:[%s151 + $0x170] sm:$0xff]
                %200 = vst [vmem:[%s152 + $0xb8] sm:$0xff] %v199
                %v201 = vld [vmem:[%s151 + $0x180] sm:$0xff]
                %202 = vst [vmem:[%s152 + $0xc0] sm:$0xff] %v201
                %v203 = vld [vmem:[%s151 + $0x190] sm:$0xff]
                %204 = vst [vmem:[%s152 + $0xc8] sm:$0xff] %v203
                %v205 = vld [vmem:[%s151 + $0x1a0] sm:$0xff]
                %206 = vst [vmem:[%s152 + $0xd0] sm:$0xff] %v205
                %v207 = vld [vmem:[%s151 + $0x1b0] sm:$0xff]
                %208 = vst [vmem:[%s152 + $0xd8] sm:$0xff] %v207
                %v209 = vld [vmem:[%s151 + $0x1c0] sm:$0xff]
                %210 = vst [vmem:[%s152 + $0xe0] sm:$0xff] %v209
                %v211 = vld [vmem:[%s151 + $0x1d0] sm:$0xff]
                %212 = vst [vmem:[%s152 + $0xe8] sm:$0xff] %v211
                %v213 = vld [vmem:[%s151 + $0x1e0] sm:$0xff]
                %214 = vst [vmem:[%s152 + $0xf0] sm:$0xff] %v213
                %v215 = vld [vmem:[%s151 + $0x1f0] sm:$0xff]
                %216 = vst [vmem:[%s152 + $0xf8] sm:$0xff] %v215
                %v217 = vld [vmem:[%s151 + $0x200] sm:$0xff]
                %218 = vst [vmem:[%s152 + $0x100] sm:$0xff] %v217
                %v219 = vld [vmem:[%s151 + $0x210] sm:$0xff]
                %220 = vst [vmem:[%s152 + $0x108] sm:$0xff] %v219
                %v221 = vld [vmem:[%s151 + $0x220] sm:$0xff]
                %222 = vst [vmem:[%s152 + $0x110] sm:$0xff] %v221
                %v223 = vld [vmem:[%s151 + $0x230] sm:$0xff]
                %224 = vst [vmem:[%s152 + $0x118] sm:$0xff] %v223
                %v225 = vld [vmem:[%s151 + $0x240] sm:$0xff]
                %226 = vst [vmem:[%s152 + $0x120] sm:$0xff] %v225
                %v227 = vld [vmem:[%s151 + $0x250] sm:$0xff]
                %228 = vst [vmem:[%s152 + $0x128] sm:$0xff] %v227
                %v229 = vld [vmem:[%s151 + $0x260] sm:$0xff]
                %230 = vst [vmem:[%s152 + $0x130] sm:$0xff] %v229
                %v231 = vld [vmem:[%s151 + $0x270] sm:$0xff]
                %232 = vst [vmem:[%s152 + $0x138] sm:$0xff] %v231
                %v233 = vld [vmem:[%s151 + $0x280] sm:$0xff]
                %234 = vst [vmem:[%s152 + $0x140] sm:$0xff] %v233
                %v235 = vld [vmem:[%s151 + $0x290] sm:$0xff]
                %236 = vst [vmem:[%s152 + $0x148] sm:$0xff] %v235
                %v237 = vld [vmem:[%s151 + $0x2a0] sm:$0xff]
                %238 = vst [vmem:[%s152 + $0x150] sm:$0xff] %v237
                %v239 = vld [vmem:[%s151 + $0x2b0] sm:$0xff]
                %240 = vst [vmem:[%s152 + $0x158] sm:$0xff] %v239
                %v241 = vld [vmem:[%s151 + $0x2c0] sm:$0xff]
                %242 = vst [vmem:[%s152 + $0x160] sm:$0xff] %v241
                %v243 = vld [vmem:[%s151 + $0x2d0] sm:$0xff]
                %244 = vst [vmem:[%s152 + $0x168] sm:$0xff] %v243
                %v245 = vld [vmem:[%s151 + $0x2e0] sm:$0xff]
                %246 = vst [vmem:[%s152 + $0x170] sm:$0xff] %v245
                %v247 = vld [vmem:[%s151 + $0x2f0] sm:$0xff]
                %248 = vst [vmem:[%s152 + $0x178] sm:$0xff] %v247
                %v249 = vld [vmem:[%s151 + $0x300] sm:$0xff]
                %250 = vst [vmem:[%s152 + $0x180] sm:$0xff] %v249
                %v251 = vld [vmem:[%s151 + $0x310] sm:$0xff]
                %252 = vst [vmem:[%s152 + $0x188] sm:$0xff] %v251
                %v253 = vld [vmem:[%s151 + $0x320] sm:$0xff]
                %254 = vst [vmem:[%s152 + $0x190] sm:$0xff] %v253
              $region45: #{_lambda_.9} parent=39 // loop_footer
                %s150 = sadd.s32 1, %s146
              $region46: #{_lambda_.9} parent=39 // loop_footer_branch
                %145 = sbr.rel target = $region42
              $region47: #{_lambda_.9} parent=39 // loop_exit
                _
            $region40: #{_lambda_.9} parent=31 // pred_fallthru
              _
          $region32: #{_lambda_.9} parent=27 // pred_fallthru
            _
          %369 = vnop
        $region28: #{_lambda_.9} parent=23 // pred_fallthru
          _
      $region24: #{_lambda_.9} parent=5 // pred_fallthru
        _
      %p370 = scmp.le.s32.totalorder 1, %s9
      %p371 = scmp.lt.s32.totalorder %s9, 3
      %p372 = pnand %p370, %p371
      %p373 = pneg %p372
      // Predicated region
      $region63: #{_lambda_.9} parent=5 // pred_check
        _
      $region64: #{_lambda_.9} parent=5 // pred_check_branch
        %375 = sbr.rel (%p372) target = $region66
      $region65: #{_lambda_.9} parent=5 // pred_region
        %s376 = ssub.s32 %s9, 1
        %s377 = sand.u32 %s43, 1
        %s378 = sand.u32 %s43, 1
        %s379 = smul.addr %s378, 408
        %s380 = scalar_lea.vmem [#allocation2], %s379
        // Predicated region
        $region67: #{_lambda_.9} parent=65 // pred_check
          %p381 = pneg %p56
        $region68: #{_lambda_.9} parent=65 // pred_check_branch
          %383 = sbr.rel (%p381) target = $region70
        $region69: #{_lambda_.9} parent=65 // pred_region
          _
        $region70: #{_lambda_.9} parent=65 // pred_fallthru
          _
        %p384 = pneg %p30
        %p385 = pneg %p27
        %s386 = sand.u32 %s43, 1
        %s387 = sand.u32 %s43, 1
        %s388 = smul.addr %s387, 408
        %s389 = scalar_lea.vmem [#allocation2], %s388
        %p390 = pneg %p56
        %p391 = pneg %p53
        %p392 = pneg %p77
        %p393 = pneg %p74
        %p394 = pneg %p103
        %p395 = pneg %p100
        %s396 = sand.u32 %s90, 1
        %s397 = sand.u32 %s90, 1
        %s398 = smul.addr %s397, 16
        %s399 = scalar_lea.vmem [#allocation3], %s398
        %s400 = smul.u32 2, %s14
        %s401 = smul.u32 2, %s14
        %v403 = vld [vmem:[%s0] sm:$0xff]
        %v404 = vld [vmem:[%s0 + $0x8] sm:$0xff]
        %v405 = vld [vmem:[%s0 + $0x10] sm:$0xff]
        %v406 = vld [vmem:[%s0 + $0x18] sm:$0xff]
        %v407 = vld [vmem:[%s380] sm:$0xff]
        %v408 = vld [vmem:[%s380 + $0x8] sm:$0xff]
        %v409 = vld [vmem:[%s380 + $0x10] sm:$0xff]
        %v410 = vld [vmem:[%s380 + $0x18] sm:$0xff]
        %v411 = vld [vmem:[%s380 + $0x20] sm:$0xff]
        %v412 = vld [vmem:[%s380 + $0x28] sm:$0xff]
        %v413 = vld [vmem:[%s380 + $0x30] sm:$0xff]
        %v414 = vld [vmem:[%s380 + $0x38] sm:$0xff]
        %v415 = vld [vmem:[%s380 + $0x40] sm:$0xff]
        %v416 = vld [vmem:[%s380 + $0x48] sm:$0xff]
        %v417 = vld [vmem:[%s380 + $0x50] sm:$0xff]
        %v418 = vld [vmem:[%s380 + $0x58] sm:$0xff]
        %v419 = vld [vmem:[%s380 + $0x60] sm:$0xff]
        %v420 = vld [vmem:[%s380 + $0x68] sm:$0xff]
        %v421 = vld [vmem:[%s380 + $0x70] sm:$0xff]
        %v422 = vld [vmem:[%s380 + $0x78] sm:$0xff]
        %v423 = vld [vmem:[%s380 + $0x80] sm:$0xff]
        %v424 = vld [vmem:[%s380 + $0x88] sm:$0xff]
        %v425 = vld [vmem:[%s380 + $0x90] sm:$0xff]
        %v426 = vld [vmem:[%s380 + $0x98] sm:$0xff]
        %v427 = vld [vmem:[%s380 + $0xa0] sm:$0xff]
        %v428 = vld [vmem:[%s380 + $0xa8] sm:$0xff]
        %v429 = vld [vmem:[%s380 + $0xb0] sm:$0xff]
        %v430 = vld [vmem:[%s380 + $0xb8] sm:$0xff]
        %v431 = vld [vmem:[%s380 + $0xc0] sm:$0xff]
        %v432 = vld [vmem:[%s380 + $0xc8] sm:$0xff]
        %v433 = vld [vmem:[%s380 + $0xd0] sm:$0xff]
        %v434 = vld [vmem:[%s380 + $0xd8] sm:$0xff]
        %v435 = vld [vmem:[%s380 + $0xe0] sm:$0xff]
        %v436 = vld [vmem:[%s380 + $0xe8] sm:$0xff]
        %v437 = vld [vmem:[%s380 + $0xf0] sm:$0xff]
        %v438 = vld [vmem:[%s380 + $0xf8] sm:$0xff]
        %v439 = vld [vmem:[%s380 + $0x100] sm:$0xff]
        %v440 = vld [vmem:[%s380 + $0x108] sm:$0xff]
        %v441 = vld [vmem:[%s380 + $0x110] sm:$0xff]
        %v442 = vld [vmem:[%s380 + $0x118] sm:$0xff]
        %v443 = vld [vmem:[%s380 + $0x120] sm:$0xff]
        %v444 = vld [vmem:[%s380 + $0x128] sm:$0xff]
        %v445 = vld [vmem:[%s380 + $0x130] sm:$0xff]
        %v446 = vld [vmem:[%s380 + $0x138] sm:$0xff]
        %v447 = vld [vmem:[%s380 + $0x140] sm:$0xff]
        %v448 = vld [vmem:[%s380 + $0x148] sm:$0xff]
        %v449 = vld [vmem:[%s380 + $0x150] sm:$0xff]
        %v450 = vld [vmem:[%s380 + $0x158] sm:$0xff]
        %v451 = vld [vmem:[%s380 + $0x160] sm:$0xff]
        %v452 = vld [vmem:[%s380 + $0x168] sm:$0xff]
        %v453 = vld [vmem:[%s380 + $0x170] sm:$0xff]
        %v454 = vld [vmem:[%s380 + $0x178] sm:$0xff]
        %v455 = vld [vmem:[%s380 + $0x180] sm:$0xff]
        %v456 = vld [vmem:[%s380 + $0x188] sm:$0xff]
        %v457 = vld [vmem:[%s380 + $0x190] sm:$0x77]
        %v458 = vld [vmem:[%s2] sm:$0xff]
        %v459 = vld [vmem:[%s2 + $0x8] sm:$0xff]
        %461 = vset.pattern.permute.xlu0 0
        %462 = vperm.xlu0 %461, %v458
        %v463 = vpop.permute.xlu0 %462
        %466 = vset.pattern.permute.xlu0 0
        %467 = vperm.xlu0 %466, %v459
        %v468 = vpop.permute.xlu0 %467
        %v474 = vunpack.c.l.b16 %v403
        %v475 = vunpack.c.h.b16 %v403
        %v476 = vunpack.c.l.b16 %v404
        %v477 = vunpack.c.h.b16 %v404
        %v478 = vunpack.c.l.b16 %v405
        %v479 = vunpack.c.h.b16 %v405
        %v480 = vunpack.c.l.b16 %v406
        %v481 = vunpack.c.h.b16 %v406
        %v482 = vpack.c.b16 %v478, %v474
        %v483 = vpack.c.b16 %v479, %v475
        %v484 = vpack.c.b16 %v480, %v476
        %v485 = vpack.c.b16 %v481, %v477
        %v540 = vunpack.c.l.b16 %v407
        %v541 = vunpack.c.h.b16 %v407
        %v542 = vunpack.c.l.b16 %v408
        %v543 = vunpack.c.h.b16 %v408
        %v544 = vunpack.c.l.b16 %v409
        %v545 = vunpack.c.h.b16 %v409
        %v546 = vunpack.c.l.b16 %v410
        %v547 = vunpack.c.h.b16 %v410
        %v548 = vunpack.c.l.b16 %v411
        %v549 = vunpack.c.h.b16 %v411
        %v550 = vunpack.c.l.b16 %v412
        %v551 = vunpack.c.h.b16 %v412
        %v552 = vunpack.c.l.b16 %v413
        %v553 = vunpack.c.h.b16 %v413
        %v554 = vunpack.c.l.b16 %v414
        %v555 = vunpack.c.h.b16 %v414
        %v556 = vunpack.c.l.b16 %v415
        %v557 = vunpack.c.h.b16 %v415
        %v558 = vunpack.c.l.b16 %v416
        %v559 = vunpack.c.h.b16 %v416
        %v560 = vunpack.c.l.b16 %v417
        %v561 = vunpack.c.h.b16 %v417
        %v562 = vunpack.c.l.b16 %v418
        %v563 = vunpack.c.h.b16 %v418
        %v564 = vunpack.c.l.b16 %v419
        %v565 = vunpack.c.h.b16 %v419
        %v566 = vunpack.c.l.b16 %v420
        %v567 = vunpack.c.h.b16 %v420
        %v568 = vunpack.c.l.b16 %v421
        %v569 = vunpack.c.h.b16 %v421
        %v570 = vunpack.c.l.b16 %v422
        %v571 = vunpack.c.h.b16 %v422
        %v572 = vunpack.c.l.b16 %v423
        %v573 = vunpack.c.h.b16 %v423
        %v574 = vunpack.c.l.b16 %v424
        %v575 = vunpack.c.h.b16 %v424
        %v576 = vunpack.c.l.b16 %v425
        %v577 = vunpack.c.h.b16 %v425
        %v578 = vunpack.c.l.b16 %v426
        %v579 = vunpack.c.h.b16 %v426
        %v580 = vunpack.c.l.b16 %v427
        %v581 = vunpack.c.h.b16 %v427
        %v582 = vunpack.c.l.b16 %v428
        %v583 = vunpack.c.h.b16 %v428
        %v584 = vunpack.c.l.b16 %v429
        %v585 = vunpack.c.h.b16 %v429
        %v586 = vunpack.c.l.b16 %v430
        %v587 = vunpack.c.h.b16 %v430
        %v588 = vunpack.c.l.b16 %v431
        %v589 = vunpack.c.h.b16 %v431
        %v590 = vunpack.c.l.b16 %v432
        %v591 = vunpack.c.h.b16 %v432
        %v592 = vunpack.c.l.b16 %v433
        %v593 = vunpack.c.h.b16 %v433
        %v594 = vunpack.c.l.b16 %v434
        %v595 = vunpack.c.h.b16 %v434
        %v596 = vunpack.c.l.b16 %v435
        %v597 = vunpack.c.h.b16 %v435
        %v598 = vunpack.c.l.b16 %v436
        %v599 = vunpack.c.h.b16 %v436
        %v600 = vunpack.c.l.b16 %v437
        %v601 = vunpack.c.h.b16 %v437
        %v602 = vunpack.c.l.b16 %v438
        %v603 = vunpack.c.h.b16 %v438
        %v604 = vunpack.c.l.b16 %v439
        %v605 = vunpack.c.h.b16 %v439
        %v606 = vunpack.c.l.b16 %v440
        %v607 = vunpack.c.h.b16 %v440
        %v608 = vunpack.c.l.b16 %v441
        %v609 = vunpack.c.h.b16 %v441
        %v610 = vunpack.c.l.b16 %v442
        %v611 = vunpack.c.h.b16 %v442
        %v612 = vunpack.c.l.b16 %v443
        %v613 = vunpack.c.h.b16 %v443
        %v614 = vunpack.c.l.b16 %v444
        %v615 = vunpack.c.h.b16 %v444
        %v616 = vunpack.c.l.b16 %v445
        %v617 = vunpack.c.h.b16 %v445
        %v618 = vunpack.c.l.b16 %v446
        %v619 = vunpack.c.h.b16 %v446
        %v620 = vunpack.c.l.b16 %v447
        %v621 = vunpack.c.h.b16 %v447
        %v622 = vunpack.c.l.b16 %v448
        %v623 = vunpack.c.h.b16 %v448
        %v624 = vunpack.c.l.b16 %v449
        %v625 = vunpack.c.h.b16 %v449
        %v626 = vunpack.c.l.b16 %v450
        %v627 = vunpack.c.h.b16 %v450
        %v628 = vunpack.c.l.b16 %v451
        %v629 = vunpack.c.h.b16 %v451
        %v630 = vunpack.c.l.b16 %v452
        %v631 = vunpack.c.h.b16 %v452
        %v632 = vunpack.c.l.b16 %v453
        %v633 = vunpack.c.h.b16 %v453
        %v634 = vunpack.c.l.b16 %v454
        %v635 = vunpack.c.h.b16 %v454
        %v636 = vunpack.c.l.b16 %v455
        %v637 = vunpack.c.h.b16 %v455
        %v638 = vunpack.c.l.b16 %v456
        %v639 = vunpack.c.h.b16 %v456
        %v640 = vunpack.c.l.b16 %v457
        %v641 = vunpack.c.h.b16 %v457
        %v642 = vpack.c.b16 %v542, %v540
        %v643 = vpack.c.b16 %v543, %v541
        %v644 = vpack.c.b16 %v546, %v544
        %v645 = vpack.c.b16 %v547, %v545
        %v646 = vpack.c.b16 %v550, %v548
        %v647 = vpack.c.b16 %v551, %v549
        %v648 = vpack.c.b16 %v554, %v552
        %v649 = vpack.c.b16 %v555, %v553
        %v650 = vpack.c.b16 %v558, %v556
        %v651 = vpack.c.b16 %v559, %v557
        %v652 = vpack.c.b16 %v562, %v560
        %v653 = vpack.c.b16 %v563, %v561
        %v654 = vpack.c.b16 %v566, %v564
        %v655 = vpack.c.b16 %v567, %v565
        %v656 = vpack.c.b16 %v570, %v568
        %v657 = vpack.c.b16 %v571, %v569
        %v658 = vpack.c.b16 %v574, %v572
        %v659 = vpack.c.b16 %v575, %v573
        %v660 = vpack.c.b16 %v578, %v576
        %v661 = vpack.c.b16 %v579, %v577
        %v662 = vpack.c.b16 %v582, %v580
        %v663 = vpack.c.b16 %v583, %v581
        %v664 = vpack.c.b16 %v586, %v584
        %v665 = vpack.c.b16 %v587, %v585
        %v666 = vpack.c.b16 %v590, %v588
        %v667 = vpack.c.b16 %v591, %v589
        %v668 = vpack.c.b16 %v594, %v592
        %v669 = vpack.c.b16 %v595, %v593
        %v670 = vpack.c.b16 %v598, %v596
        %v671 = vpack.c.b16 %v599, %v597
        %v672 = vpack.c.b16 %v602, %v600
        %v673 = vpack.c.b16 %v603, %v601
        %v674 = vpack.c.b16 %v606, %v604
        %v675 = vpack.c.b16 %v607, %v605
        %v676 = vpack.c.b16 %v610, %v608
        %v677 = vpack.c.b16 %v611, %v609
        %v678 = vpack.c.b16 %v614, %v612
        %v679 = vpack.c.b16 %v615, %v613
        %v680 = vpack.c.b16 %v618, %v616
        %v681 = vpack.c.b16 %v619, %v617
        %v682 = vpack.c.b16 %v622, %v620
        %v683 = vpack.c.b16 %v623, %v621
        %v684 = vpack.c.b16 %v626, %v624
        %v685 = vpack.c.b16 %v627, %v625
        %v686 = vpack.c.b16 %v630, %v628
        %v687 = vpack.c.b16 %v631, %v629
        %v688 = vpack.c.b16 %v634, %v632
        %v689 = vpack.c.b16 %v635, %v633
        %v690 = vpack.c.b16 %v638, %v636
        %v691 = vpack.c.b16 %v639, %v637
        %v692 = vpack.c.b16 %v640, %v640
        %v693 = vpack.c.b16 %v641, %v641
        %vm744 = vcmask 171008
        %v746 = vsel %vm744, %v485, 0
        %vm748 = vcmask 1041408
        %vm749 = vcmask 1042432
        %v750 = vsel %vm748, 4294967295, 65535
        %v751 = vsel %vm749, %v750, 0
        %v753 = vand.u32 %v692, %v751
        %v756 = vand.u32 %v693, %v751
        %758 = vmatprep.subr.bf16.mxu0 %v643
        %759 = vmatpush1.bf16.msra.mxu0 %v642
        %760 = vmatprep.subr.bf16.mxu0 %v645
        %761 = vmatpush1.bf16.msra.mxu0 %v644
        %762 = vmatprep.subr.bf16.mxu0 %v647
        %763 = vmatpush1.bf16.msra.mxu0 %v646
        %764 = vmatprep.subr.bf16.mxu0 %v649
        %765 = vmatpush1.bf16.msra.mxu0 %v648
        %766 = vmatprep.subr.bf16.mxu0 %v651
        %767 = vmatpush1.bf16.msra.mxu0 %v650
        %768 = vmatprep.subr.bf16.mxu0 %v653
        %769 = vmatpush1.bf16.msra.mxu0 %v652
        %770 = vmatprep.subr.bf16.mxu0 %v655
        %771 = vmatpush1.bf16.msra.mxu0 %v654
        %772 = vmatprep.subr.bf16.mxu0 %v657
        %773 = vmatpush1.bf16.msra.mxu0 %v656
        %774 = vmatprep.subr.bf16.mxu0 %v659
        %775 = vmatpush1.bf16.msra.mxu0 %v658
        %776 = vmatprep.subr.bf16.mxu0 %v661
        %777 = vmatpush1.bf16.msra.mxu0 %v660
        %778 = vmatprep.subr.bf16.mxu0 %v663
        %779 = vmatpush1.bf16.msra.mxu0 %v662
        %780 = vmatprep.subr.bf16.mxu0 %v665
        %781 = vmatpush1.bf16.msra.mxu0 %v664
        %782 = vmatprep.subr.bf16.mxu0 %v667
        %783 = vmatpush1.bf16.msra.mxu0 %v666
        %784 = vmatprep.subr.bf16.mxu0 %v669
        %785 = vmatpush1.bf16.msra.mxu0 %v668
        %786 = vmatprep.subr.bf16.mxu0 %v671
        %787 = vmatpush1.bf16.msra.mxu0 %v670
        %788 = vmatprep.subr.bf16.mxu0 %v673
        %789 = vmatpush1.bf16.msra.mxu0 %v672
        %790 = vmatprep.mubr.bf16.mxu0 %v483
        %791 = vmatmul.mubr.bf16.gmra.mrb[0].mxu0 %v482
        %v792 = vpop.f32.mrb[0].mxu0
        %v793 = vadd.f32 %v463, %v792
        %v794 = vpop.f32.mrb[0].mxu0
        %v795 = vadd.f32 %v463, %v794
        %v796 = vpop.f32.mrb[0].mxu0
        %v797 = vadd.f32 %v468, %v796
        %v798 = vpop.f32.mrb[0].mxu0
        %v799 = vadd.f32 %v468, %v798
        %800 = vdwg.mxu0
        %801 = vmatprep.subr.bf16.mxu0 %v675
        %802 = vmatpush1.bf16.msra.mxu0 %v674
        %803 = vmatprep.subr.bf16.mxu0 %v677
        %804 = vmatpush1.bf16.msra.mxu0 %v676
        %805 = vmatprep.subr.bf16.mxu0 %v679
        %806 = vmatpush1.bf16.msra.mxu0 %v678
        %807 = vmatprep.subr.bf16.mxu0 %v681
        %808 = vmatpush1.bf16.msra.mxu0 %v680
        %809 = vmatprep.subr.bf16.mxu0 %v683
        %810 = vmatpush1.bf16.msra.mxu0 %v682
        %811 = vmatprep.subr.bf16.mxu0 %v685
        %812 = vmatpush1.bf16.msra.mxu0 %v684
        %813 = vmatprep.subr.bf16.mxu0 %v687
        %814 = vmatpush1.bf16.msra.mxu0 %v686
        %815 = vmatprep.subr.bf16.mxu0 %v689
        %816 = vmatpush1.bf16.msra.mxu0 %v688
        %817 = vmatprep.subr.bf16.mxu0 %v691
        %818 = vmatpush1.bf16.msra.mxu0 %v690
        %819 = vmatprep.subr.bf16.mxu0 %v756
        %820 = vmatpush1.bf16.msra.mxu0 %v753
        %821 = vmatprep.subr.bf16.mxu0 0
        %822 = vmatpush1.bf16.msra.mxu0 0
        %823 = vmatprep.subr.bf16.mxu0 0
        %824 = vmatpush1.bf16.msra.mxu0 0
        %825 = vmatprep.subr.bf16.mxu0 0
        %826 = vmatpush1.bf16.msra.mxu0 0
        %827 = vmatprep.subr.bf16.mxu0 0
        %828 = vmatpush1.bf16.msra.mxu0 0
        %829 = vmatprep.subr.bf16.mxu0 0
        %830 = vmatpush1.bf16.msra.mxu0 0
        %831 = vmatprep.subr.bf16.mxu0 0
        %832 = vmatpush1.bf16.msra.mxu0 0
        %833 = vmatprep.mubr.bf16.mxu0 %v746
        %834 = vmatmul.mubr.bf16.gmra.mrb[0].mxu0 %v484
        %v835 = vpop.f32.mrb[0].mxu0
        %v836 = vadd.f32 %v793, %v835
        %v837 = vpop.f32.mrb[0].mxu0
        %v838 = vadd.f32 %v795, %v837
        %v839 = vpop.f32.mrb[0].mxu0
        %v840 = vadd.f32 %v797, %v839
        %v841 = vpop.f32.mrb[0].mxu0
        %v842 = vadd.f32 %v799, %v841
        %843 = vdwg.mxu0
        %v844 = vmax.f32 %v836, 0.0
        %v845 = vmax.f32 %v838, 0.0
        %v846 = vmax.f32 %v840, 0.0
        %v847 = vmax.f32 %v842, 0.0
        %v848 = vpack.c.bf16 %v846, %v844
        %v849 = vpack.c.bf16 %v847, %v845
        %v852 = vunpack.c.l.b16 %v848
        %v853 = vunpack.c.l.b16 %v849
        %v854 = vunpack.c.h.b16 %v848
        %v855 = vunpack.c.h.b16 %v849
        %v856 = vpack.c.b16 %v853, %v852
        %v857 = vpack.c.b16 %v855, %v854
        %860 = vst [vmem:[%s399] sm:$0xff] %v856
        %861 = vst [vmem:[%s399 + $0x8] sm:$0xff] %v857
        %s862 = sand.u32 %s90, 1
        %s863 = sand.u32 %s90, 1
        %s864 = smul.addr %s863, 16
        %s865 = scalar_lea.vmem [#allocation3], %s864
        // Predicated region
        $region71: #{_lambda_.9} parent=65 // pred_check
          %p866 = pneg %p100
        $region72: #{_lambda_.9} parent=65 // pred_check_branch
          %868 = sbr.rel (%p866) target = $region74
        $region73: #{_lambda_.9} parent=65 // pred_region
          %s869 = smul.u32 2, %s14
          %s870 = smul.addr %s869, 4
          %s871 = scalar_lea.vmem %s3, %s870
          // Predicated region
          $region75: #{_lambda_.9} parent=73 // pred_check
            _
          $region76: #{_lambda_.9} parent=73 // pred_check_branch
            %873 = sbr.rel (0) target = $region78
          $region77: #{_lambda_.9} parent=73 // pred_region
            // Predicated region
            $region79: #{_lambda_.9} parent=77 // pred_check
              _
            $region80: #{_lambda_.9} parent=77 // pred_check_branch
              %875 = sbr.rel (0) target = $region82
            $region81: #{_lambda_.9} parent=77 // pred_region
              // Predicated region
              $region94: #{_lambda_.9} parent=81 // pred_check
                _
              $region95: #{_lambda_.9} parent=81 // pred_check_branch
                %892 = sbr.rel (0) target = $region97
              $region96: #{_lambda_.9} parent=81 // pred_region
                loop: start=0, step=1, limit=1
                $region98: #{_lambda_.9} parent=96 // loop_pre_header
                  _
                $region99: #{_lambda_.9} parent=96 // loop_header
                  %s894 = sphi 0, %s898
                  %p895 = scmp.ge.s32.totalorder %s894, 1
                  %s899 = sphi %s865, %s865
                  %s900 = sphi %s871, %s871
                $region100: #{_lambda_.9} parent=96 // loop_header_branch
                  %897 = sbr.rel (%p895) target = $region104
                $region101: #{_lambda_.9} parent=96 // loop_body
                  %v901 = vld [vmem:[%s899] sm:$0xff]
                  %902 = vst [vmem:[%s900] sm:$0xff] %v901
                  %v903 = vld [vmem:[%s899 + $0x8] sm:$0xff]
                  %904 = vst [vmem:[%s900 + $0x10] sm:$0xff] %v903
                $region102: #{_lambda_.9} parent=96 // loop_footer
                  %s898 = sadd.s32 1, %s894
                $region103: #{_lambda_.9} parent=96 // loop_footer_branch
                  %893 = sbr.rel target = $region99
                $region104: #{_lambda_.9} parent=96 // loop_exit
                  _
              $region97: #{_lambda_.9} parent=81 // pred_fallthru
                _
              // Predicated region
              $region105: #{_lambda_.9} parent=81 // pred_check
                _
              $region106: #{_lambda_.9} parent=81 // pred_check_branch
                %906 = sbr.rel target = $region108
              $region107: #{_lambda_.9} parent=81 // pred_region
                _
              $region108: #{_lambda_.9} parent=81 // pred_fallthru
                _
            $region82: #{_lambda_.9} parent=77 // pred_fallthru
              _
            // Predicated region
            $region83: #{_lambda_.9} parent=77 // pred_check
              _
            $region84: #{_lambda_.9} parent=77 // pred_check_branch
              %877 = sbr.rel target = $region86
            $region85: #{_lambda_.9} parent=77 // pred_region
              loop: start=0, step=1, limit=1
              $region87: #{_lambda_.9} parent=85 // loop_pre_header
                _
              $region88: #{_lambda_.9} parent=85 // loop_header
                %s880 = sphi 0, %s884
                %p881 = scmp.ge.s32.totalorder %s880, 1
                %s885 = sphi %s865, %s865
                %s886 = sphi %s871, %s871
              $region89: #{_lambda_.9} parent=85 // loop_header_branch
                %883 = sbr.rel (%p881) target = $region93
              $region90: #{_lambda_.9} parent=85 // loop_body
                %v887 = vld [vmem:[%s885] sm:$0xff]
                %888 = vst [vmem:[%s886] sm:$0xff] %v887
                %v889 = vld [vmem:[%s885 + $0x8] sm:$0xff]
                %890 = vst [vmem:[%s886 + $0x10] sm:$0xff] %v889
              $region91: #{_lambda_.9} parent=85 // loop_footer
                %s884 = sadd.s32 1, %s880
              $region92: #{_lambda_.9} parent=85 // loop_footer_branch
                %879 = sbr.rel target = $region88
              $region93: #{_lambda_.9} parent=85 // loop_exit
                _
            $region86: #{_lambda_.9} parent=77 // pred_fallthru
              _
          $region78: #{_lambda_.9} parent=73 // pred_fallthru
            _
          %907 = vnop
        $region74: #{_lambda_.9} parent=65 // pred_fallthru
          _
      $region66: #{_lambda_.9} parent=5 // pred_fallthru
        _
      %p908 = scmp.le.s32.totalorder 2, %s9
      // Predicated region
      $region109: #{_lambda_.9} parent=5 // pred_check
        %p909 = pneg %p908
      $region110: #{_lambda_.9} parent=5 // pred_check_branch
        %911 = sbr.rel (%p909) target = $region112
      $region111: #{_lambda_.9} parent=5 // pred_region
        %s912 = ssub.s32 %s9, 2
        // Predicated region
        $region113: #{_lambda_.9} parent=111 // pred_check
          %p913 = pneg %p106
        $region114: #{_lambda_.9} parent=111 // pred_check_branch
          %915 = sbr.rel (%p913) target = $region116
        $region115: #{_lambda_.9} parent=111 // pred_region
          %s916 = sand.u32 %s91, 1
          %s917 = sand.u32 %s91, 1
          %s918 = smul.addr %s917, 16
          %s919 = scalar_lea.vmem [#allocation3], %s918
        $region116: #{_lambda_.9} parent=111 // pred_fallthru
          _
      $region112: #{_lambda_.9} parent=5 // pred_fallthru
        _
    $region6: #{_lambda_.9} parent=1 // loop_footer
      %s13 = sadd.s32 1, %s9
    $region7: #{_lambda_.9} parent=1 // loop_footer_branch
      %8 = sbr.rel target = $region3
    $region8: #{_lambda_.9} parent=1 // loop_exit
      _

// kernel: _lambda_.10
$region0: #{_lambda_.10}
  #allocation0 [shape = 'u32[]', space=smem, size = 0x4, offset = 0x4, fixed_abs, tag = 'smem constant byte address 0x4 - core index']
  #allocation1 [shape = 'u32[144,128]{1,0:T(1,128)}', space=vmem, size = 0x12000, scoped, tag = 'internal scratch']
  %s0 = inlined_call_operand.vmem [shape: bf16[32,432], index: 0, kind: input, shape index: {}]
  %s1 = inlined_call_operand.vmem [shape: bf16[432,128], index: 1, kind: input, shape index: {}]
  %s2 = inlined_call_operand.vmem [shape: f32[32,1], index: 2, kind: input, shape index: {}]
  %s3 = inlined_call_operand.vmem [shape: bf16[32,128], index: 3, kind: output, shape index: {}]
  %s4 = sld [smem:[#allocation0]]
  $region22: #{_lambda_.10} parent=0
    _
  %s6 = ssub.s32 1, %s4
  %s7 = scalar_select 0, %s6, %s4
  // Predicated region
  $region2: #{_lambda_.10} parent=0 // pred_check
    _
  $region3: #{_lambda_.10} parent=0 // pred_check_branch
    %9 = sbr.rel (0) target = $region5
  $region4: #{_lambda_.10} parent=0 // pred_region
    _
  $region5: #{_lambda_.10} parent=0 // pred_fallthru
    _
  // Predicated region
  $region6: #{_lambda_.10} parent=0 // pred_check
    _
  $region7: #{_lambda_.10} parent=0 // pred_check_branch
    %11 = sbr.rel (0) target = $region9
  $region8: #{_lambda_.10} parent=0 // pred_region
    _
  $region9: #{_lambda_.10} parent=0 // pred_fallthru
    _
  // Predicated region
  $region10: #{_lambda_.10} parent=0 // pred_check
    _
  $region11: #{_lambda_.10} parent=0 // pred_check_branch
    %13 = sbr.rel (0) target = $region13
  $region12: #{_lambda_.10} parent=0 // pred_region
    _
  $region13: #{_lambda_.10} parent=0 // pred_fallthru
    _
  %v15 = vld [vmem:[%s0] sm:$0xff]
  %v16 = vld [vmem:[%s0 + $0x8] sm:$0xff]
  %v17 = vld [vmem:[%s0 + $0x10] sm:$0xff]
  %v18 = vld [vmem:[%s0 + $0x18] sm:$0xff]
  %v19 = vld [vmem:[%s0 + $0x20] sm:$0xff]
  %v20 = vld [vmem:[%s0 + $0x28] sm:$0xff]
  %v21 = vld [vmem:[%s0 + $0x30] sm:$0xff]
  %v22 = vld [vmem:[%s0 + $0x38] sm:$0xff]
  %v23 = vld [vmem:[%s1] sm:$0xf]
  %v24 = vld [vmem:[%s1 + $0x4] sm:$0xf]
  %v25 = vld [vmem:[%s1 + $0x8] sm:$0xf]
  %v26 = vld [vmem:[%s1 + $0xc] sm:$0xf]
  %v27 = vld [vmem:[%s1 + $0x10] sm:$0xf]
  %v28 = vld [vmem:[%s1 + $0x14] sm:$0xf]
  %v29 = vld [vmem:[%s1 + $0x18] sm:$0xf]
  %v30 = vld [vmem:[%s1 + $0x1c] sm:$0xf]
  %v31 = vld [vmem:[%s1 + $0x20] sm:$0xf]
  %v32 = vld [vmem:[%s1 + $0x24] sm:$0xf]
  %v33 = vld [vmem:[%s1 + $0x28] sm:$0xf]
  %v34 = vld [vmem:[%s1 + $0x2c] sm:$0xf]
  %v35 = vld [vmem:[%s1 + $0x30] sm:$0xf]
  %v36 = vld [vmem:[%s1 + $0x34] sm:$0xf]
  %v37 = vld [vmem:[%s1 + $0x38] sm:$0xf]
  %v38 = vld [vmem:[%s1 + $0x3c] sm:$0xf]
  %v39 = vld [vmem:[%s1 + $0x40] sm:$0xf]
  %v40 = vld [vmem:[%s1 + $0x44] sm:$0xf]
  %v41 = vld [vmem:[%s1 + $0x48] sm:$0xf]
  %v42 = vld [vmem:[%s1 + $0x4c] sm:$0xf]
  %v43 = vld [vmem:[%s1 + $0x50] sm:$0xf]
  %v44 = vld [vmem:[%s1 + $0x54] sm:$0xf]
  %v45 = vld [vmem:[%s1 + $0x58] sm:$0xf]
  %v46 = vld [vmem:[%s1 + $0x5c] sm:$0xf]
  %v47 = vld [vmem:[%s1 + $0x60] sm:$0xf]
  %v48 = vld [vmem:[%s1 + $0x64] sm:$0xf]
  %v49 = vld [vmem:[%s1 + $0x68] sm:$0xf]
  %v50 = vld [vmem:[%s1 + $0x6c] sm:$0xf]
  %v51 = vld [vmem:[%s1 + $0x70] sm:$0xf]
  %v52 = vld [vmem:[%s1 + $0x74] sm:$0xf]
  %v53 = vld [vmem:[%s1 + $0x78] sm:$0xf]
  %v54 = vld [vmem:[%s1 + $0x7c] sm:$0xf]
  %v55 = vld [vmem:[%s1 + $0x80] sm:$0xf]
  %v56 = vld [vmem:[%s1 + $0x84] sm:$0xf]
  %v57 = vld [vmem:[%s1 + $0x88] sm:$0xf]
  %v58 = vld [vmem:[%s1 + $0x8c] sm:$0xf]
  %v59 = vld [vmem:[%s1 + $0x90] sm:$0xf]
  %v60 = vld [vmem:[%s1 + $0x94] sm:$0xf]
  %v61 = vld [vmem:[%s1 + $0x98] sm:$0xf]
  %v62 = vld [vmem:[%s1 + $0x9c] sm:$0xf]
  %v63 = vld [vmem:[%s1 + $0xa0] sm:$0xf]
  %v64 = vld [vmem:[%s1 + $0xa4] sm:$0xf]
  %v65 = vld [vmem:[%s1 + $0xa8] sm:$0xf]
  %v66 = vld [vmem:[%s1 + $0xac] sm:$0xf]
  %v67 = vld [vmem:[%s1 + $0xb0] sm:$0xf]
  %v68 = vld [vmem:[%s1 + $0xb4] sm:$0xf]
  %v69 = vld [vmem:[%s1 + $0xb8] sm:$0xf]
  %v70 = vld [vmem:[%s1 + $0xbc] sm:$0xf]
  %v71 = vld [vmem:[%s1 + $0xc0] sm:$0xf]
  %v72 = vld [vmem:[%s1 + $0xc4] sm:$0xf]
  %v73 = vld [vmem:[%s1 + $0xc8] sm:$0xf]
  %v74 = vld [vmem:[%s1 + $0xcc] sm:$0xf]
  %v75 = vld [vmem:[%s1 + $0xd0] sm:$0xf]
  %v76 = vld [vmem:[%s1 + $0xd4] sm:$0xf]
  %v77 = vld [vmem:[%s2] sm:$0xff]
  %v78 = vld [vmem:[%s2 + $0x8] sm:$0xff]
  %v79 = vld [vmem:[%s2 + $0x10] sm:$0xff]
  %v80 = vld [vmem:[%s2 + $0x18] sm:$0xff]
  %82 = vset.pattern.permute.xlu0 0
  %83 = vperm.xlu0 %82, %v77
  %v84 = vpop.permute.xlu0 %83
  %87 = vset.pattern.permute.xlu0 0
  %88 = vperm.xlu0 %87, %v78
  %v89 = vpop.permute.xlu0 %88
  %92 = vset.pattern.permute.xlu0 0
  %93 = vperm.xlu0 %92, %v79
  %v94 = vpop.permute.xlu0 %93
  %97 = vset.pattern.permute.xlu0 0
  %98 = vperm.xlu0 %97, %v80
  %v99 = vpop.permute.xlu0 %98
  %v109 = vunpack.c.l.b16 %v15
  %v110 = vunpack.c.h.b16 %v15
  %v111 = vunpack.c.l.b16 %v16
  %v112 = vunpack.c.h.b16 %v16
  %v113 = vunpack.c.l.b16 %v17
  %v114 = vunpack.c.h.b16 %v17
  %v115 = vunpack.c.l.b16 %v18
  %v116 = vunpack.c.h.b16 %v18
  %v117 = vunpack.c.l.b16 %v19
  %v118 = vunpack.c.h.b16 %v19
  %v119 = vunpack.c.l.b16 %v20
  %v120 = vunpack.c.h.b16 %v20
  %v121 = vunpack.c.l.b16 %v21
  %v122 = vunpack.c.h.b16 %v21
  %v123 = vunpack.c.l.b16 %v22
  %v124 = vunpack.c.h.b16 %v22
  %v125 = vpack.c.b16 %v113, %v109
  %v126 = vpack.c.b16 %v114, %v110
  %v127 = vpack.c.b16 %v115, %v111
  %v128 = vpack.c.b16 %v116, %v112
  %v129 = vpack.c.b16 %v121, %v117
  %v130 = vpack.c.b16 %v122, %v118
  %v131 = vpack.c.b16 %v123, %v119
  %v132 = vpack.c.b16 %v124, %v120
  %v193 = vunpack.c.l.b16 %v23
  %v194 = vunpack.c.l.b16 %v24
  %v195 = vunpack.c.l.b16 %v25
  %v196 = vunpack.c.l.b16 %v26
  %v197 = vunpack.c.l.b16 %v27
  %v198 = vunpack.c.l.b16 %v28
  %v199 = vunpack.c.l.b16 %v29
  %v200 = vunpack.c.l.b16 %v30
  %v201 = vunpack.c.l.b16 %v31
  %v202 = vunpack.c.l.b16 %v32
  %v203 = vunpack.c.l.b16 %v33
  %v204 = vunpack.c.l.b16 %v34
  %v205 = vunpack.c.l.b16 %v35
  %v206 = vunpack.c.l.b16 %v36
  %v207 = vunpack.c.l.b16 %v37
  %v208 = vunpack.c.l.b16 %v38
  %v209 = vunpack.c.l.b16 %v39
  %v210 = vunpack.c.l.b16 %v40
  %v211 = vunpack.c.l.b16 %v41
  %v212 = vunpack.c.l.b16 %v42
  %v213 = vunpack.c.l.b16 %v43
  %v214 = vunpack.c.l.b16 %v44
  %v215 = vunpack.c.l.b16 %v45
  %v216 = vunpack.c.l.b16 %v46
  %v217 = vunpack.c.l.b16 %v47
  %v218 = vunpack.c.l.b16 %v48
  %v219 = vunpack.c.l.b16 %v49
  %v220 = vunpack.c.l.b16 %v50
  %v221 = vunpack.c.l.b16 %v51
  %v222 = vunpack.c.l.b16 %v52
  %v223 = vunpack.c.l.b16 %v53
  %v224 = vunpack.c.l.b16 %v54
  %v225 = vunpack.c.l.b16 %v55
  %v226 = vunpack.c.l.b16 %v56
  %v227 = vunpack.c.l.b16 %v57
  %v228 = vunpack.c.l.b16 %v58
  %v229 = vunpack.c.l.b16 %v59
  %v230 = vunpack.c.l.b16 %v60
  %v231 = vunpack.c.l.b16 %v61
  %v232 = vunpack.c.l.b16 %v62
  %v233 = vunpack.c.l.b16 %v63
  %v234 = vunpack.c.l.b16 %v64
  %v235 = vunpack.c.l.b16 %v65
  %v236 = vunpack.c.l.b16 %v66
  %v237 = vunpack.c.l.b16 %v67
  %v238 = vunpack.c.l.b16 %v68
  %v239 = vunpack.c.l.b16 %v69
  %v240 = vunpack.c.l.b16 %v70
  %v241 = vunpack.c.l.b16 %v71
  %v242 = vunpack.c.l.b16 %v72
  %v243 = vunpack.c.l.b16 %v73
  %v244 = vunpack.c.l.b16 %v74
  %v245 = vunpack.c.l.b16 %v75
  %v246 = vunpack.c.l.b16 %v76
  %v247 = vpack.c.b16 %v194, %v193
  %v248 = vpack.c.b16 %v196, %v195
  %v249 = vpack.c.b16 %v198, %v197
  %v250 = vpack.c.b16 %v200, %v199
  %v251 = vpack.c.b16 %v202, %v201
  %v252 = vpack.c.b16 %v204, %v203
  %v253 = vpack.c.b16 %v206, %v205
  %v254 = vpack.c.b16 %v208, %v207
  %v255 = vpack.c.b16 %v210, %v209
  %v256 = vpack.c.b16 %v212, %v211
  %v257 = vpack.c.b16 %v214, %v213
  %v258 = vpack.c.b16 %v216, %v215
  %v259 = vpack.c.b16 %v218, %v217
  %v260 = vpack.c.b16 %v220, %v219
  %v261 = vpack.c.b16 %v222, %v221
  %v262 = vpack.c.b16 %v224, %v223
  %v263 = vpack.c.b16 %v226, %v225
  %v264 = vpack.c.b16 %v228, %v227
  %v265 = vpack.c.b16 %v230, %v229
  %v266 = vpack.c.b16 %v232, %v231
  %v267 = vpack.c.b16 %v234, %v233
  %v268 = vpack.c.b16 %v236, %v235
  %v269 = vpack.c.b16 %v238, %v237
  %v270 = vpack.c.b16 %v240, %v239
  %v271 = vpack.c.b16 %v242, %v241
  %v272 = vpack.c.b16 %v244, %v243
  %v273 = vpack.c.b16 %v246, %v245
  %vm301 = vcmask 392192
  %v303 = vsel %vm301, %v128, 0
  %v306 = vsel %vm301, %v132, 0
  %308 = vmatprep.subr.bf16.mxu0 0
  %309 = vmatpush1.bf16.msra.mxu0 %v247
  %310 = vmatprep.subr.bf16.mxu0 0
  %311 = vmatpush1.bf16.msra.mxu0 %v248
  %312 = vmatprep.subr.bf16.mxu0 0
  %313 = vmatpush1.bf16.msra.mxu0 %v249
  %314 = vmatprep.subr.bf16.mxu0 0
  %315 = vmatpush1.bf16.msra.mxu0 %v250
  %316 = vmatprep.subr.bf16.mxu0 0
  %317 = vmatpush1.bf16.msra.mxu0 %v251
  %318 = vmatprep.subr.bf16.mxu0 0
  %319 = vmatpush1.bf16.msra.mxu0 %v252
  %320 = vmatprep.subr.bf16.mxu0 0
  %321 = vmatpush1.bf16.msra.mxu0 %v253
  %322 = vmatprep.subr.bf16.mxu0 0
  %323 = vmatpush1.bf16.msra.mxu0 %v254
  %324 = vmatprep.subr.bf16.mxu0 0
  %325 = vmatpush1.bf16.msra.mxu0 %v255
  %326 = vmatprep.subr.bf16.mxu0 0
  %327 = vmatpush1.bf16.msra.mxu0 %v256
  %328 = vmatprep.subr.bf16.mxu0 0
  %329 = vmatpush1.bf16.msra.mxu0 %v257
  %330 = vmatprep.subr.bf16.mxu0 0
  %331 = vmatpush1.bf16.msra.mxu0 %v258
  %332 = vmatprep.subr.bf16.mxu0 0
  %333 = vmatpush1.bf16.msra.mxu0 %v259
  %334 = vmatprep.subr.bf16.mxu0 0
  %335 = vmatpush1.bf16.msra.mxu0 %v260
  %336 = vmatprep.subr.bf16.mxu0 0
  %337 = vmatpush1.bf16.msra.mxu0 %v261
  %338 = vmatprep.subr.bf16.mxu0 0
  %339 = vmatpush1.bf16.msra.mxu0 %v262
  %340 = vmatprep.mubr.bf16.mxu0 %v126
  %341 = vmatmul.mubr.bf16.gmra.mrb[0].mxu0 %v125
  %v342 = vpop.f32.mrb[0].mxu0
  %v343 = vadd.f32 %v84, %v342
  %v344 = vpop.f32.mrb[0].mxu0
  %v345 = vpop.f32.mrb[0].mxu0
  %v346 = vadd.f32 %v89, %v345
  %v347 = vpop.f32.mrb[0].mxu0
  %348 = vmatprep.mubr.bf16.mxu0 %v130
  %349 = vmatmul.mubr.bf16.gmra.mrb[0].mxu0 %v129
  %v350 = vpop.f32.mrb[0].mxu0
  %v351 = vadd.f32 %v94, %v350
  %v352 = vpop.f32.mrb[0].mxu0
  %v353 = vpop.f32.mrb[0].mxu0
  %v354 = vadd.f32 %v99, %v353
  %v355 = vpop.f32.mrb[0].mxu0
  %356 = vdwg.mxu0
  %357 = vmatprep.subr.bf16.mxu0 0
  %358 = vmatpush1.bf16.msra.mxu0 %v263
  %359 = vmatprep.subr.bf16.mxu0 0
  %360 = vmatpush1.bf16.msra.mxu0 %v264
  %361 = vmatprep.subr.bf16.mxu0 0
  %362 = vmatpush1.bf16.msra.mxu0 %v265
  %363 = vmatprep.subr.bf16.mxu0 0
  %364 = vmatpush1.bf16.msra.mxu0 %v266
  %365 = vmatprep.subr.bf16.mxu0 0
  %366 = vmatpush1.bf16.msra.mxu0 %v267
  %367 = vmatprep.subr.bf16.mxu0 0
  %368 = vmatpush1.bf16.msra.mxu0 %v268
  %369 = vmatprep.subr.bf16.mxu0 0
  %370 = vmatpush1.bf16.msra.mxu0 %v269
  %371 = vmatprep.subr.bf16.mxu0 0
  %372 = vmatpush1.bf16.msra.mxu0 %v270
  %373 = vmatprep.subr.bf16.mxu0 0
  %374 = vmatpush1.bf16.msra.mxu0 %v271
  %375 = vmatprep.subr.bf16.mxu0 0
  %376 = vmatpush1.bf16.msra.mxu0 %v272
  %377 = vmatprep.subr.bf16.mxu0 0
  %378 = vmatpush1.bf16.msra.mxu0 %v273
  %379 = vmatprep.subr.bf16.mxu0 0
  %380 = vmatpush1.bf16.msra.mxu0 0
  %381 = vmatprep.subr.bf16.mxu0 0
  %382 = vmatpush1.bf16.msra.mxu0 0
  %383 = vmatprep.subr.bf16.mxu0 0
  %384 = vmatpush1.bf16.msra.mxu0 0
  %385 = vmatprep.subr.bf16.mxu0 0
  %386 = vmatpush1.bf16.msra.mxu0 0
  %387 = vmatprep.subr.bf16.mxu0 0
  %388 = vmatpush1.bf16.msra.mxu0 0
  %389 = vmatprep.mubr.bf16.mxu0 %v303
  %390 = vmatmul.mubr.bf16.gmra.mrb[0].mxu0 %v127
  %v391 = vpop.f32.mrb[0].mxu0
  %v392 = vadd.f32 %v343, %v391
  %v393 = vpop.f32.mrb[0].mxu0
  %v394 = vpop.f32.mrb[0].mxu0
  %v395 = vadd.f32 %v346, %v394
  %v396 = vpop.f32.mrb[0].mxu0
  %397 = vmatprep.mubr.bf16.mxu0 %v306
  %398 = vmatmul.mubr.bf16.gmra.mrb[0].mxu0 %v131
  %v399 = vpop.f32.mrb[0].mxu0
  %v400 = vadd.f32 %v351, %v399
  %v401 = vpop.f32.mrb[0].mxu0
  %v402 = vpop.f32.mrb[0].mxu0
  %v403 = vadd.f32 %v354, %v402
  %v404 = vpop.f32.mrb[0].mxu0
  %405 = vdwg.mxu0
  %v406 = vmax.f32 %v392, 0.0
  %v407 = vmax.f32 %v395, 0.0
  %v408 = vmax.f32 %v400, 0.0
  %v409 = vmax.f32 %v403, 0.0
  %v410 = vpack.c.bf16 %v407, %v406
  %v411 = vpack.c.bf16 %v409, %v408
  %v414 = vunpack.c.l.b16 %v410
  %v415 = vunpack.c.h.b16 %v410
  %v416 = vunpack.c.l.b16 %v411
  %v417 = vunpack.c.h.b16 %v411
  %v418 = vpack.c.b16 %v414, %v414
  %v419 = vpack.c.b16 %v415, %v415
  %v420 = vpack.c.b16 %v416, %v416
  %v421 = vpack.c.b16 %v417, %v417
  %426 = vst [vmem:[%s3] sm:$0xf] %v418
  %427 = vst [vmem:[%s3 + $0x4] sm:$0xf] %v419
  %428 = vst [vmem:[%s3 + $0x8] sm:$0xf] %v420
  %429 = vst [vmem:[%s3 + $0xc] sm:$0xf] %v421
  // Predicated region
  $region14: #{_lambda_.10} parent=0 // pred_check
    _
  $region15: #{_lambda_.10} parent=0 // pred_check_branch
    %431 = sbr.rel (0) target = $region17
  $region16: #{_lambda_.10} parent=0 // pred_region
    _
  $region17: #{_lambda_.10} parent=0 // pred_fallthru
    _
  // Predicated region
  $region18: #{_lambda_.10} parent=0 // pred_check
    _
  $region19: #{_lambda_.10} parent=0 // pred_check_branch
    %433 = sbr.rel (0) target = $region21
  $region20: #{_lambda_.10} parent=0 // pred_region
    _
  $region21: #{_lambda_.10} parent=0 // pred_fallthru
    _

// kernel: _lambda_.11
$region0: #{_lambda_.11}
  #allocation0 [shape = 'u32[]', space=smem, size = 0x4, offset = 0x4, fixed_abs, tag = 'smem constant byte address 0x4 - core index']
  #allocation1 [shape = 'u32[144,128]{1,0:T(1,128)}', space=vmem, size = 0x12000, scoped, tag = 'internal scratch']
  %s0 = inlined_call_operand.vmem [shape: bf16[16,864], index: 0, kind: input, shape index: {}]
  %s1 = inlined_call_operand.vmem [shape: bf16[864,128], index: 1, kind: input, shape index: {}]
  %s2 = inlined_call_operand.vmem [shape: f32[16,1], index: 2, kind: input, shape index: {}]
  %s3 = inlined_call_operand.vmem [shape: bf16[16,128], index: 3, kind: output, shape index: {}]
  %s4 = sld [smem:[#allocation0]]
  $region22: #{_lambda_.11} parent=0
    _
  %s6 = ssub.s32 1, %s4
  %s7 = scalar_select 0, %s6, %s4
  // Predicated region
  $region2: #{_lambda_.11} parent=0 // pred_check
    _
  $region3: #{_lambda_.11} parent=0 // pred_check_branch
    %9 = sbr.rel (0) target = $region5
  $region4: #{_lambda_.11} parent=0 // pred_region
    _
  $region5: #{_lambda_.11} parent=0 // pred_fallthru
    _
  // Predicated region
  $region6: #{_lambda_.11} parent=0 // pred_check
    _
  $region7: #{_lambda_.11} parent=0 // pred_check_branch
    %11 = sbr.rel (0) target = $region9
  $region8: #{_lambda_.11} parent=0 // pred_region
    _
  $region9: #{_lambda_.11} parent=0 // pred_fallthru
    _
  // Predicated region
  $region10: #{_lambda_.11} parent=0 // pred_check
    _
  $region11: #{_lambda_.11} parent=0 // pred_check_branch
    %13 = sbr.rel (0) target = $region13
  $region12: #{_lambda_.11} parent=0 // pred_region
    _
  $region13: #{_lambda_.11} parent=0 // pred_fallthru
    _
  %v15 = vld [vmem:[%s0] sm:$0xff]
  %v16 = vld [vmem:[%s0 + $0x8] sm:$0xff]
  %v17 = vld [vmem:[%s0 + $0x10] sm:$0xff]
  %v18 = vld [vmem:[%s0 + $0x18] sm:$0xf]
  %v19 = vld [vmem:[%s0 + $0x1c] sm:$0xff]
  %v20 = vld [vmem:[%s0 + $0x24] sm:$0xff]
  %v21 = vld [vmem:[%s0 + $0x2c] sm:$0xff]
  %v22 = vld [vmem:[%s0 + $0x34] sm:$0xf]
  %v23 = vld [vmem:[%s1] sm:$0xf]
  %v24 = vld [vmem:[%s1 + $0x4] sm:$0xf]
  %v25 = vld [vmem:[%s1 + $0x8] sm:$0xf]
  %v26 = vld [vmem:[%s1 + $0xc] sm:$0xf]
  %v27 = vld [vmem:[%s1 + $0x10] sm:$0xf]
  %v28 = vld [vmem:[%s1 + $0x14] sm:$0xf]
  %v29 = vld [vmem:[%s1 + $0x18] sm:$0xf]
  %v30 = vld [vmem:[%s1 + $0x1c] sm:$0xf]
  %v31 = vld [vmem:[%s1 + $0x20] sm:$0xf]
  %v32 = vld [vmem:[%s1 + $0x24] sm:$0xf]
  %v33 = vld [vmem:[%s1 + $0x28] sm:$0xf]
  %v34 = vld [vmem:[%s1 + $0x2c] sm:$0xf]
  %v35 = vld [vmem:[%s1 + $0x30] sm:$0xf]
  %v36 = vld [vmem:[%s1 + $0x34] sm:$0xf]
  %v37 = vld [vmem:[%s1 + $0x38] sm:$0xf]
  %v38 = vld [vmem:[%s1 + $0x3c] sm:$0xf]
  %v39 = vld [vmem:[%s1 + $0x40] sm:$0xf]
  %v40 = vld [vmem:[%s1 + $0x44] sm:$0xf]
  %v41 = vld [vmem:[%s1 + $0x48] sm:$0xf]
  %v42 = vld [vmem:[%s1 + $0x4c] sm:$0xf]
  %v43 = vld [vmem:[%s1 + $0x50] sm:$0xf]
  %v44 = vld [vmem:[%s1 + $0x54] sm:$0xf]
  %v45 = vld [vmem:[%s1 + $0x58] sm:$0xf]
  %v46 = vld [vmem:[%s1 + $0x5c] sm:$0xf]
  %v47 = vld [vmem:[%s1 + $0x60] sm:$0xf]
  %v48 = vld [vmem:[%s1 + $0x64] sm:$0xf]
  %v49 = vld [vmem:[%s1 + $0x68] sm:$0xf]
  %v50 = vld [vmem:[%s1 + $0x6c] sm:$0xf]
  %v51 = vld [vmem:[%s1 + $0x70] sm:$0xf]
  %v52 = vld [vmem:[%s1 + $0x74] sm:$0xf]
  %v53 = vld [vmem:[%s1 + $0x78] sm:$0xf]
  %v54 = vld [vmem:[%s1 + $0x7c] sm:$0xf]
  %v55 = vld [vmem:[%s1 + $0x80] sm:$0xf]
  %v56 = vld [vmem:[%s1 + $0x84] sm:$0xf]
  %v57 = vld [vmem:[%s1 + $0x88] sm:$0xf]
  %v58 = vld [vmem:[%s1 + $0x8c] sm:$0xf]
  %v59 = vld [vmem:[%s1 + $0x90] sm:$0xf]
  %v60 = vld [vmem:[%s1 + $0x94] sm:$0xf]
  %v61 = vld [vmem:[%s1 + $0x98] sm:$0xf]
  %v62 = vld [vmem:[%s1 + $0x9c] sm:$0xf]
  %v63 = vld [vmem:[%s1 + $0xa0] sm:$0xf]
  %v64 = vld [vmem:[%s1 + $0xa4] sm:$0xf]
  %v65 = vld [vmem:[%s1 + $0xa8] sm:$0xf]
  %v66 = vld [vmem:[%s1 + $0xac] sm:$0xf]
  %v67 = vld [vmem:[%s1 + $0xb0] sm:$0xf]
  %v68 = vld [vmem:[%s1 + $0xb4] sm:$0xf]
  %v69 = vld [vmem:[%s1 + $0xb8] sm:$0xf]
  %v70 = vld [vmem:[%s1 + $0xbc] sm:$0xf]
  %v71 = vld [vmem:[%s1 + $0xc0] sm:$0xf]
  %v72 = vld [vmem:[%s1 + $0xc4] sm:$0xf]
  %v73 = vld [vmem:[%s1 + $0xc8] sm:$0xf]
  %v74 = vld [vmem:[%s1 + $0xcc] sm:$0xf]
  %v75 = vld [vmem:[%s1 + $0xd0] sm:$0xf]
  %v76 = vld [vmem:[%s1 + $0xd4] sm:$0xf]
  %v77 = vld [vmem:[%s1 + $0xd8] sm:$0xf]
  %v78 = vld [vmem:[%s1 + $0xdc] sm:$0xf]
  %v79 = vld [vmem:[%s1 + $0xe0] sm:$0xf]
  %v80 = vld [vmem:[%s1 + $0xe4] sm:$0xf]
  %v81 = vld [vmem:[%s1 + $0xe8] sm:$0xf]
  %v82 = vld [vmem:[%s1 + $0xec] sm:$0xf]
  %v83 = vld [vmem:[%s1 + $0xf0] sm:$0xf]
  %v84 = vld [vmem:[%s1 + $0xf4] sm:$0xf]
  %v85 = vld [vmem:[%s1 + $0xf8] sm:$0xf]
  %v86 = vld [vmem:[%s1 + $0xfc] sm:$0xf]
  %v87 = vld [vmem:[%s1 + $0x100] sm:$0xf]
  %v88 = vld [vmem:[%s1 + $0x104] sm:$0xf]
  %v89 = vld [vmem:[%s1 + $0x108] sm:$0xf]
  %v90 = vld [vmem:[%s1 + $0x10c] sm:$0xf]
  %v91 = vld [vmem:[%s1 + $0x110] sm:$0xf]
  %v92 = vld [vmem:[%s1 + $0x114] sm:$0xf]
  %v93 = vld [vmem:[%s1 + $0x118] sm:$0xf]
  %v94 = vld [vmem:[%s1 + $0x11c] sm:$0xf]
  %v95 = vld [vmem:[%s1 + $0x120] sm:$0xf]
  %v96 = vld [vmem:[%s1 + $0x124] sm:$0xf]
  %v97 = vld [vmem:[%s1 + $0x128] sm:$0xf]
  %v98 = vld [vmem:[%s1 + $0x12c] sm:$0xf]
  %v99 = vld [vmem:[%s1 + $0x130] sm:$0xf]
  %v100 = vld [vmem:[%s1 + $0x134] sm:$0xf]
  %v101 = vld [vmem:[%s1 + $0x138] sm:$0xf]
  %v102 = vld [vmem:[%s1 + $0x13c] sm:$0xf]
  %v103 = vld [vmem:[%s1 + $0x140] sm:$0xf]
  %v104 = vld [vmem:[%s1 + $0x144] sm:$0xf]
  %v105 = vld [vmem:[%s1 + $0x148] sm:$0xf]
  %v106 = vld [vmem:[%s1 + $0x14c] sm:$0xf]
  %v107 = vld [vmem:[%s1 + $0x150] sm:$0xf]
  %v108 = vld [vmem:[%s1 + $0x154] sm:$0xf]
  %v109 = vld [vmem:[%s1 + $0x158] sm:$0xf]
  %v110 = vld [vmem:[%s1 + $0x15c] sm:$0xf]
  %v111 = vld [vmem:[%s1 + $0x160] sm:$0xf]
  %v112 = vld [vmem:[%s1 + $0x164] sm:$0xf]
  %v113 = vld [vmem:[%s1 + $0x168] sm:$0xf]
  %v114 = vld [vmem:[%s1 + $0x16c] sm:$0xf]
  %v115 = vld [vmem:[%s1 + $0x170] sm:$0xf]
  %v116 = vld [vmem:[%s1 + $0x174] sm:$0xf]
  %v117 = vld [vmem:[%s1 + $0x178] sm:$0xf]
  %v118 = vld [vmem:[%s1 + $0x17c] sm:$0xf]
  %v119 = vld [vmem:[%s1 + $0x180] sm:$0xf]
  %v120 = vld [vmem:[%s1 + $0x184] sm:$0xf]
  %v121 = vld [vmem:[%s1 + $0x188] sm:$0xf]
  %v122 = vld [vmem:[%s1 + $0x18c] sm:$0xf]
  %v123 = vld [vmem:[%s1 + $0x190] sm:$0xf]
  %v124 = vld [vmem:[%s1 + $0x194] sm:$0xf]
  %v125 = vld [vmem:[%s1 + $0x198] sm:$0xf]
  %v126 = vld [vmem:[%s1 + $0x19c] sm:$0xf]
  %v127 = vld [vmem:[%s1 + $0x1a0] sm:$0xf]
  %v128 = vld [vmem:[%s1 + $0x1a4] sm:$0xf]
  %v129 = vld [vmem:[%s1 + $0x1a8] sm:$0xf]
  %v130 = vld [vmem:[%s1 + $0x1ac] sm:$0xf]
  %v131 = vld [vmem:[%s2] sm:$0xff]
  %v132 = vld [vmem:[%s2 + $0x8] sm:$0xff]
  %134 = vset.pattern.permute.xlu0 0
  %135 = vperm.xlu0 %134, %v131
  %v136 = vpop.permute.xlu0 %135
  %139 = vset.pattern.permute.xlu0 0
  %140 = vperm.xlu0 %139, %v132
  %v141 = vpop.permute.xlu0 %140
  %v151 = vunpack.c.l.b16 %v15
  %v152 = vunpack.c.h.b16 %v15
  %v153 = vunpack.c.l.b16 %v16
  %v154 = vunpack.c.h.b16 %v16
  %v155 = vunpack.c.l.b16 %v17
  %v156 = vunpack.c.h.b16 %v17
  %v157 = vunpack.c.l.b16 %v18
  %v158 = vunpack.c.l.b16 %v19
  %v159 = vunpack.c.h.b16 %v19
  %v160 = vunpack.c.l.b16 %v20
  %v161 = vunpack.c.h.b16 %v20
  %v162 = vunpack.c.l.b16 %v21
  %v163 = vunpack.c.h.b16 %v21
  %v164 = vunpack.c.l.b16 %v22
  %v165 = vpack.c.b16 %v158, %v151
  %v166 = vpack.c.b16 %v159, %v152
  %v167 = vpack.c.b16 %v160, %v153
  %v168 = vpack.c.b16 %v161, %v154
  %v169 = vpack.c.b16 %v162, %v155
  %v170 = vpack.c.b16 %v163, %v156
  %v171 = vpack.c.b16 %v164, %v157
  %v286 = vunpack.c.l.b16 %v23
  %v287 = vunpack.c.l.b16 %v24
  %v288 = vunpack.c.l.b16 %v25
  %v289 = vunpack.c.l.b16 %v26
  %v290 = vunpack.c.l.b16 %v27
  %v291 = vunpack.c.l.b16 %v28
  %v292 = vunpack.c.l.b16 %v29
  %v293 = vunpack.c.l.b16 %v30
  %v294 = vunpack.c.l.b16 %v31
  %v295 = vunpack.c.l.b16 %v32
  %v296 = vunpack.c.l.b16 %v33
  %v297 = vunpack.c.l.b16 %v34
  %v298 = vunpack.c.l.b16 %v35
  %v299 = vunpack.c.l.b16 %v36
  %v300 = vunpack.c.l.b16 %v37
  %v301 = vunpack.c.l.b16 %v38
  %v302 = vunpack.c.l.b16 %v39
  %v303 = vunpack.c.l.b16 %v40
  %v304 = vunpack.c.l.b16 %v41
  %v305 = vunpack.c.l.b16 %v42
  %v306 = vunpack.c.l.b16 %v43
  %v307 = vunpack.c.l.b16 %v44
  %v308 = vunpack.c.l.b16 %v45
  %v309 = vunpack.c.l.b16 %v46
  %v310 = vunpack.c.l.b16 %v47
  %v311 = vunpack.c.l.b16 %v48
  %v312 = vunpack.c.l.b16 %v49
  %v313 = vunpack.c.l.b16 %v50
  %v314 = vunpack.c.l.b16 %v51
  %v315 = vunpack.c.l.b16 %v52
  %v316 = vunpack.c.l.b16 %v53
  %v317 = vunpack.c.l.b16 %v54
  %v318 = vunpack.c.l.b16 %v55
  %v319 = vunpack.c.l.b16 %v56
  %v320 = vunpack.c.l.b16 %v57
  %v321 = vunpack.c.l.b16 %v58
  %v322 = vunpack.c.l.b16 %v59
  %v323 = vunpack.c.l.b16 %v60
  %v324 = vunpack.c.l.b16 %v61
  %v325 = vunpack.c.l.b16 %v62
  %v326 = vunpack.c.l.b16 %v63
  %v327 = vunpack.c.l.b16 %v64
  %v328 = vunpack.c.l.b16 %v65
  %v329 = vunpack.c.l.b16 %v66
  %v330 = vunpack.c.l.b16 %v67
  %v331 = vunpack.c.l.b16 %v68
  %v332 = vunpack.c.l.b16 %v69
  %v333 = vunpack.c.l.b16 %v70
  %v334 = vunpack.c.l.b16 %v71
  %v335 = vunpack.c.l.b16 %v72
  %v336 = vunpack.c.l.b16 %v73
  %v337 = vunpack.c.l.b16 %v74
  %v338 = vunpack.c.l.b16 %v75
  %v339 = vunpack.c.l.b16 %v76
  %v340 = vunpack.c.l.b16 %v77
  %v341 = vunpack.c.l.b16 %v78
  %v342 = vunpack.c.l.b16 %v79
  %v343 = vunpack.c.l.b16 %v80
  %v344 = vunpack.c.l.b16 %v81
  %v345 = vunpack.c.l.b16 %v82
  %v346 = vunpack.c.l.b16 %v83
  %v347 = vunpack.c.l.b16 %v84
  %v348 = vunpack.c.l.b16 %v85
  %v349 = vunpack.c.l.b16 %v86
  %v350 = vunpack.c.l.b16 %v87
  %v351 = vunpack.c.l.b16 %v88
  %v352 = vunpack.c.l.b16 %v89
  %v353 = vunpack.c.l.b16 %v90
  %v354 = vunpack.c.l.b16 %v91
  %v355 = vunpack.c.l.b16 %v92
  %v356 = vunpack.c.l.b16 %v93
  %v357 = vunpack.c.l.b16 %v94
  %v358 = vunpack.c.l.b16 %v95
  %v359 = vunpack.c.l.b16 %v96
  %v360 = vunpack.c.l.b16 %v97
  %v361 = vunpack.c.l.b16 %v98
  %v362 = vunpack.c.l.b16 %v99
  %v363 = vunpack.c.l.b16 %v100
  %v364 = vunpack.c.l.b16 %v101
  %v365 = vunpack.c.l.b16 %v102
  %v366 = vunpack.c.l.b16 %v103
  %v367 = vunpack.c.l.b16 %v104
  %v368 = vunpack.c.l.b16 %v105
  %v369 = vunpack.c.l.b16 %v106
  %v370 = vunpack.c.l.b16 %v107
  %v371 = vunpack.c.l.b16 %v108
  %v372 = vunpack.c.l.b16 %v109
  %v373 = vunpack.c.l.b16 %v110
  %v374 = vunpack.c.l.b16 %v111
  %v375 = vunpack.c.l.b16 %v112
  %v376 = vunpack.c.l.b16 %v113
  %v377 = vunpack.c.l.b16 %v114
  %v378 = vunpack.c.l.b16 %v115
  %v379 = vunpack.c.l.b16 %v116
  %v380 = vunpack.c.l.b16 %v117
  %v381 = vunpack.c.l.b16 %v118
  %v382 = vunpack.c.l.b16 %v119
  %v383 = vunpack.c.l.b16 %v120
  %v384 = vunpack.c.l.b16 %v121
  %v385 = vunpack.c.l.b16 %v122
  %v386 = vunpack.c.l.b16 %v123
  %v387 = vunpack.c.l.b16 %v124
  %v388 = vunpack.c.l.b16 %v125
  %v389 = vunpack.c.l.b16 %v126
  %v390 = vunpack.c.l.b16 %v127
  %v391 = vunpack.c.l.b16 %v128
  %v392 = vunpack.c.l.b16 %v129
  %v393 = vunpack.c.l.b16 %v130
  %v394 = vpack.c.b16 %v287, %v286
  %v395 = vpack.c.b16 %v289, %v288
  %v396 = vpack.c.b16 %v291, %v290
  %v397 = vpack.c.b16 %v293, %v292
  %v398 = vpack.c.b16 %v295, %v294
  %v399 = vpack.c.b16 %v297, %v296
  %v400 = vpack.c.b16 %v299, %v298
  %v401 = vpack.c.b16 %v301, %v300
  %v402 = vpack.c.b16 %v303, %v302
  %v403 = vpack.c.b16 %v305, %v304
  %v404 = vpack.c.b16 %v307, %v306
  %v405 = vpack.c.b16 %v309, %v308
  %v406 = vpack.c.b16 %v311, %v310
  %v407 = vpack.c.b16 %v313, %v312
  %v408 = vpack.c.b16 %v315, %v314
  %v409 = vpack.c.b16 %v317, %v316
  %v410 = vpack.c.b16 %v319, %v318
  %v411 = vpack.c.b16 %v321, %v320
  %v412 = vpack.c.b16 %v323, %v322
  %v413 = vpack.c.b16 %v325, %v324
  %v414 = vpack.c.b16 %v327, %v326
  %v415 = vpack.c.b16 %v329, %v328
  %v416 = vpack.c.b16 %v331, %v330
  %v417 = vpack.c.b16 %v333, %v332
  %v418 = vpack.c.b16 %v335, %v334
  %v419 = vpack.c.b16 %v337, %v336
  %v420 = vpack.c.b16 %v339, %v338
  %v421 = vpack.c.b16 %v341, %v340
  %v422 = vpack.c.b16 %v343, %v342
  %v423 = vpack.c.b16 %v345, %v344
  %v424 = vpack.c.b16 %v347, %v346
  %v425 = vpack.c.b16 %v349, %v348
  %v426 = vpack.c.b16 %v351, %v350
  %v427 = vpack.c.b16 %v353, %v352
  %v428 = vpack.c.b16 %v355, %v354
  %v429 = vpack.c.b16 %v357, %v356
  %v430 = vpack.c.b16 %v359, %v358
  %v431 = vpack.c.b16 %v361, %v360
  %v432 = vpack.c.b16 %v363, %v362
  %v433 = vpack.c.b16 %v365, %v364
  %v434 = vpack.c.b16 %v367, %v366
  %v435 = vpack.c.b16 %v369, %v368
  %v436 = vpack.c.b16 %v371, %v370
  %v437 = vpack.c.b16 %v373, %v372
  %v438 = vpack.c.b16 %v375, %v374
  %v439 = vpack.c.b16 %v377, %v376
  %v440 = vpack.c.b16 %v379, %v378
  %v441 = vpack.c.b16 %v381, %v380
  %v442 = vpack.c.b16 %v383, %v382
  %v443 = vpack.c.b16 %v385, %v384
  %v444 = vpack.c.b16 %v387, %v386
  %v445 = vpack.c.b16 %v389, %v388
  %v446 = vpack.c.b16 %v391, %v390
  %v447 = vpack.c.b16 %v393, %v392
  %vm502 = vcmask 785408
  %v504 = vsel %vm502, %v171, 0
  %506 = vmatprep.subr.bf16.mxu0 0
  %507 = vmatpush1.bf16.msra.mxu0 %v394
  %508 = vmatprep.subr.bf16.mxu0 0
  %509 = vmatpush1.bf16.msra.mxu0 %v395
  %510 = vmatprep.subr.bf16.mxu0 0
  %511 = vmatpush1.bf16.msra.mxu0 %v396
  %512 = vmatprep.subr.bf16.mxu0 0
  %513 = vmatpush1.bf16.msra.mxu0 %v397
  %514 = vmatprep.subr.bf16.mxu0 0
  %515 = vmatpush1.bf16.msra.mxu0 %v398
  %516 = vmatprep.subr.bf16.mxu0 0
  %517 = vmatpush1.bf16.msra.mxu0 %v399
  %518 = vmatprep.subr.bf16.mxu0 0
  %519 = vmatpush1.bf16.msra.mxu0 %v400
  %520 = vmatprep.subr.bf16.mxu0 0
  %521 = vmatpush1.bf16.msra.mxu0 %v401
  %522 = vmatprep.subr.bf16.mxu0 0
  %523 = vmatpush1.bf16.msra.mxu0 %v402
  %524 = vmatprep.subr.bf16.mxu0 0
  %525 = vmatpush1.bf16.msra.mxu0 %v403
  %526 = vmatprep.subr.bf16.mxu0 0
  %527 = vmatpush1.bf16.msra.mxu0 %v404
  %528 = vmatprep.subr.bf16.mxu0 0
  %529 = vmatpush1.bf16.msra.mxu0 %v405
  %530 = vmatprep.subr.bf16.mxu0 0
  %531 = vmatpush1.bf16.msra.mxu0 %v406
  %532 = vmatprep.subr.bf16.mxu0 0
  %533 = vmatpush1.bf16.msra.mxu0 %v407
  %534 = vmatprep.subr.bf16.mxu0 0
  %535 = vmatpush1.bf16.msra.mxu0 %v408
  %536 = vmatprep.subr.bf16.mxu0 0
  %537 = vmatpush1.bf16.msra.mxu0 %v409
  %538 = vmatprep.mubr.bf16.mxu0 %v166
  %539 = vmatmul.mubr.bf16.gmra.mrb[0].mxu0 %v165
  %v540 = vpop.f32.mrb[0].mxu0
  %v541 = vadd.f32 %v136, %v540
  %v542 = vpop.f32.mrb[0].mxu0
  %v543 = vpop.f32.mrb[0].mxu0
  %v544 = vadd.f32 %v141, %v543
  %v545 = vpop.f32.mrb[0].mxu0
  %546 = vdwg.mxu0
  %547 = vmatprep.subr.bf16.mxu0 0
  %548 = vmatpush1.bf16.msra.mxu0 %v410
  %549 = vmatprep.subr.bf16.mxu0 0
  %550 = vmatpush1.bf16.msra.mxu0 %v411
  %551 = vmatprep.subr.bf16.mxu0 0
  %552 = vmatpush1.bf16.msra.mxu0 %v412
  %553 = vmatprep.subr.bf16.mxu0 0
  %554 = vmatpush1.bf16.msra.mxu0 %v413
  %555 = vmatprep.subr.bf16.mxu0 0
  %556 = vmatpush1.bf16.msra.mxu0 %v414
  %557 = vmatprep.subr.bf16.mxu0 0
  %558 = vmatpush1.bf16.msra.mxu0 %v415
  %559 = vmatprep.subr.bf16.mxu0 0
  %560 = vmatpush1.bf16.msra.mxu0 %v416
  %561 = vmatprep.subr.bf16.mxu0 0
  %562 = vmatpush1.bf16.msra.mxu0 %v417
  %563 = vmatprep.subr.bf16.mxu0 0
  %564 = vmatpush1.bf16.msra.mxu0 %v418
  %565 = vmatprep.subr.bf16.mxu0 0
  %566 = vmatpush1.bf16.msra.mxu0 %v419
  %567 = vmatprep.subr.bf16.mxu0 0
  %568 = vmatpush1.bf16.msra.mxu0 %v420
  %569 = vmatprep.subr.bf16.mxu0 0
  %570 = vmatpush1.bf16.msra.mxu0 %v421
  %571 = vmatprep.subr.bf16.mxu0 0
  %572 = vmatpush1.bf16.msra.mxu0 %v422
  %573 = vmatprep.subr.bf16.mxu0 0
  %574 = vmatpush1.bf16.msra.mxu0 %v423
  %575 = vmatprep.subr.bf16.mxu0 0
  %576 = vmatpush1.bf16.msra.mxu0 %v424
  %577 = vmatprep.subr.bf16.mxu0 0
  %578 = vmatpush1.bf16.msra.mxu0 %v425
  %579 = vmatprep.mubr.bf16.mxu0 %v168
  %580 = vmatmul.mubr.bf16.gmra.mrb[0].mxu0 %v167
  %v581 = vpop.f32.mrb[0].mxu0
  %v582 = vadd.f32 %v541, %v581
  %v583 = vpop.f32.mrb[0].mxu0
  %v584 = vpop.f32.mrb[0].mxu0
  %v585 = vadd.f32 %v544, %v584
  %v586 = vpop.f32.mrb[0].mxu0
  %587 = vdwg.mxu0
  %588 = vmatprep.subr.bf16.mxu0 0
  %589 = vmatpush1.bf16.msra.mxu0 %v426
  %590 = vmatprep.subr.bf16.mxu0 0
  %591 = vmatpush1.bf16.msra.mxu0 %v427
  %592 = vmatprep.subr.bf16.mxu0 0
  %593 = vmatpush1.bf16.msra.mxu0 %v428
  %594 = vmatprep.subr.bf16.mxu0 0
  %595 = vmatpush1.bf16.msra.mxu0 %v429
  %596 = vmatprep.subr.bf16.mxu0 0
  %597 = vmatpush1.bf16.msra.mxu0 %v430
  %598 = vmatprep.subr.bf16.mxu0 0
  %599 = vmatpush1.bf16.msra.mxu0 %v431
  %600 = vmatprep.subr.bf16.mxu0 0
  %601 = vmatpush1.bf16.msra.mxu0 %v432
  %602 = vmatprep.subr.bf16.mxu0 0
  %603 = vmatpush1.bf16.msra.mxu0 %v433
  %604 = vmatprep.subr.bf16.mxu0 0
  %605 = vmatpush1.bf16.msra.mxu0 %v434
  %606 = vmatprep.subr.bf16.mxu0 0
  %607 = vmatpush1.bf16.msra.mxu0 %v435
  %608 = vmatprep.subr.bf16.mxu0 0
  %609 = vmatpush1.bf16.msra.mxu0 %v436
  %610 = vmatprep.subr.bf16.mxu0 0
  %611 = vmatpush1.bf16.msra.mxu0 %v437
  %612 = vmatprep.subr.bf16.mxu0 0
  %613 = vmatpush1.bf16.msra.mxu0 %v438
  %614 = vmatprep.subr.bf16.mxu0 0
  %615 = vmatpush1.bf16.msra.mxu0 %v439
  %616 = vmatprep.subr.bf16.mxu0 0
  %617 = vmatpush1.bf16.msra.mxu0 %v440
  %618 = vmatprep.subr.bf16.mxu0 0
  %619 = vmatpush1.bf16.msra.mxu0 %v441
  %620 = vmatprep.mubr.bf16.mxu0 %v170
  %621 = vmatmul.mubr.bf16.gmra.mrb[0].mxu0 %v169
  %v622 = vpop.f32.mrb[0].mxu0
  %v623 = vadd.f32 %v582, %v622
  %v624 = vpop.f32.mrb[0].mxu0
  %v625 = vpop.f32.mrb[0].mxu0
  %v626 = vadd.f32 %v585, %v625
  %v627 = vpop.f32.mrb[0].mxu0
  %628 = vdwg.mxu0
  %629 = vmatprep.subr.bf16.mxu0 0
  %630 = vmatpush1.bf16.msra.mxu0 %v442
  %631 = vmatprep.subr.bf16.mxu0 0
  %632 = vmatpush1.bf16.msra.mxu0 %v443
  %633 = vmatprep.subr.bf16.mxu0 0
  %634 = vmatpush1.bf16.msra.mxu0 %v444
  %635 = vmatprep.subr.bf16.mxu0 0
  %636 = vmatpush1.bf16.msra.mxu0 %v445
  %637 = vmatprep.subr.bf16.mxu0 0
  %638 = vmatpush1.bf16.msra.mxu0 %v446
  %639 = vmatprep.subr.bf16.mxu0 0
  %640 = vmatpush1.bf16.msra.mxu0 %v447
  %641 = vmatprep.subr.bf16.mxu0 0
  %642 = vmatpush1.bf16.msra.mxu0 0
  %643 = vmatprep.subr.bf16.mxu0 0
  %644 = vmatpush1.bf16.msra.mxu0 0
  %645 = vmatprep.subr.bf16.mxu0 0
  %646 = vmatpush1.bf16.msra.mxu0 0
  %647 = vmatprep.subr.bf16.mxu0 0
  %648 = vmatpush1.bf16.msra.mxu0 0
  %649 = vmatprep.subr.bf16.mxu0 0
  %650 = vmatpush1.bf16.msra.mxu0 0
  %651 = vmatprep.subr.bf16.mxu0 0
  %652 = vmatpush1.bf16.msra.mxu0 0
  %653 = vmatprep.subr.bf16.mxu0 0
  %654 = vmatpush1.bf16.msra.mxu0 0
  %655 = vmatprep.subr.bf16.mxu0 0
  %656 = vmatpush1.bf16.msra.mxu0 0
  %657 = vmatprep.subr.bf16.mxu0 0
  %658 = vmatpush1.bf16.msra.mxu0 0
  %659 = vmatprep.subr.bf16.mxu0 0
  %660 = vmatpush1.bf16.msra.mxu0 0
  %661 = vmatprep.mubr.bf16.mxu0 0
  %662 = vmatmul.mubr.bf16.gmra.mrb[0].mxu0 %v504
  %v663 = vpop.f32.mrb[0].mxu0
  %v664 = vadd.f32 %v623, %v663
  %v665 = vpop.f32.mrb[0].mxu0
  %v666 = vpop.f32.mrb[0].mxu0
  %v667 = vadd.f32 %v626, %v666
  %v668 = vpop.f32.mrb[0].mxu0
  %669 = vdwg.mxu0
  %v670 = vmax.f32 %v664, 0.0
  %v671 = vmax.f32 %v667, 0.0
  %v672 = vpack.c.bf16 %v671, %v670
  %v674 = vunpack.c.l.b16 %v672
  %v675 = vunpack.c.h.b16 %v672
  %v676 = vpack.c.b16 %v674, %v674
  %v677 = vpack.c.b16 %v675, %v675
  %680 = vst [vmem:[%s3] sm:$0xf] %v676
  %681 = vst [vmem:[%s3 + $0x4] sm:$0xf] %v677
  // Predicated region
  $region14: #{_lambda_.11} parent=0 // pred_check
    _
  $region15: #{_lambda_.11} parent=0 // pred_check_branch
    %683 = sbr.rel (0) target = $region17
  $region16: #{_lambda_.11} parent=0 // pred_region
    _
  $region17: #{_lambda_.11} parent=0 // pred_fallthru
    _
  // Predicated region
  $region18: #{_lambda_.11} parent=0 // pred_check
    _
  $region19: #{_lambda_.11} parent=0 // pred_check_branch
    %685 = sbr.rel (0) target = $region21
  $region20: #{_lambda_.11} parent=0 // pred_region
    _
  $region21: #{_lambda_.11} parent=0 // pred_fallthru
    _

// kernel: _lambda_.12
$region0: #{_lambda_.12}
  #allocation0 [shape = 'u32[]', space=smem, size = 0x4, offset = 0x4, fixed_abs, tag = 'smem constant byte address 0x4 - core index']
  #allocation1 [shape = 'u32[144,128]{1,0:T(1,128)}', space=vmem, size = 0x12000, scoped, tag = 'internal scratch']
  %s0 = inlined_call_operand.vmem [shape: bf16[16,864], index: 0, kind: input, shape index: {}]
  %s1 = inlined_call_operand.vmem [shape: bf16[864,512], index: 1, kind: input, shape index: {}]
  %s2 = inlined_call_operand.vmem [shape: f32[16,1], index: 2, kind: input, shape index: {}]
  %s3 = inlined_call_operand.vmem [shape: bf16[16,512], index: 3, kind: output, shape index: {}]
  %s4 = sld [smem:[#allocation0]]
  $region117: #{_lambda_.12} parent=0
    _
  %s6 = ssub.s32 1, %s4
  %s7 = scalar_select 0, %s6, %s4
  $region1: #{_lambda_.12} parent=0
    #allocation2 [shape = 'u8[884736]{0}', space=vmem, size = 0xd8000, scoped, tag = 'input window, operand 1']
    #allocation3 [shape = 'u8[16384]{0}', space=vmem, size = 0x4000, scoped, tag = 'output window, operand 0']
    loop: start=0, step=1, limit=4
    $region2: #{_lambda_.12} parent=1 // loop_pre_header
      _
    $region3: #{_lambda_.12} parent=1 // loop_header
      %s9 = sphi 0, %s13
      %p10 = scmp.ge.s32.totalorder %s9, 4
      %s17 = sphi 0, %s17
      %s19 = sphi 0, %s17
      %s20 = sphi 0, %s19
      %s34 = sphi 0, %s20
      %s40 = sphi 0, %s42
      %s43 = sphi 0, %s40
      %s44 = sphi 0, %s43
      %s60 = sphi 0, %s44
      %s64 = sphi 0, %s64
      %s66 = sphi 0, %s64
      %s67 = sphi 0, %s66
      %s81 = sphi 0, %s67
      %s87 = sphi 0, %s89
      %s90 = sphi 0, %s87
      %s91 = sphi 0, %s90
      %s107 = sphi 0, %s91
    $region4: #{_lambda_.12} parent=1 // loop_header_branch
      %12 = sbr.rel (%p10) target = $region8
    $region5: #{_lambda_.12} parent=1 // loop_body
      %s14 = ssub.s32 %s9, 1
      %s15 = ssub.s32 %s9, 2
      %s16 = sadd.s32 %s9, 1
      %s18 = sadd.s32 %s17, 1
      %p21 = scmp.eq.s32.totalorder %s9, 1
      %p22 = scmp.ne.s32.totalorder %s17, %s19
      %p23 = scmp.eq.s32.totalorder %s9, 0
      %p24 = por %p22, %p23
      %p25 = scmp.ne.s32.totalorder %s17, %s19
      %p26 = scmp.eq.s32.totalorder %s14, 1
      %p27 = por %p25, %p26
      %p28 = scmp.ne.s32.totalorder %s19, %s20
      %p29 = scmp.eq.s32.totalorder %s14, 0
      %p30 = por %p28, %p29
      %p31 = scmp.ne.s32.totalorder %s19, %s20
      %p32 = scmp.eq.s32.totalorder %s15, 1
      %p33 = por %p31, %p32
      %p35 = scmp.ne.s32.totalorder %s20, %s34
      %p36 = scmp.eq.s32.totalorder %s15, 0
      %p37 = por %p35, %p36
      %s38 = ssub.s32 %s9, %s16
      %p39 = scmp.eq.s32.totalorder %s38, 0
      %s41 = sadd.s32 %s40, 1
      %s42 = scalar_select %p39, %s40, %s41
      %p45 = pneg %p39
      %p46 = scmp.eq.s32.totalorder %s9, 1
      %p47 = por %p45, %p46
      %p48 = scmp.ne.s32.totalorder %s40, %s43
      %p49 = scmp.eq.s32.totalorder %s9, 0
      %p50 = por %p48, %p49
      %p51 = scmp.ne.s32.totalorder %s40, %s43
      %p52 = scmp.eq.s32.totalorder %s14, 1
      %p53 = por %p51, %p52
      %p54 = scmp.ne.s32.totalorder %s43, %s44
      %p55 = scmp.eq.s32.totalorder %s14, 0
      %p56 = por %p54, %p55
      %p57 = scmp.ne.s32.totalorder %s43, %s44
      %p58 = scmp.eq.s32.totalorder %s15, 1
      %p59 = por %p57, %p58
      %p61 = scmp.ne.s32.totalorder %s44, %s60
      %p62 = scmp.eq.s32.totalorder %s15, 0
      %p63 = por %p61, %p62
      %s65 = sadd.s32 %s64, 1
      %p68 = scmp.eq.s32.totalorder %s9, 1
      %p69 = scmp.ne.s32.totalorder %s64, %s66
      %p70 = scmp.eq.s32.totalorder %s9, 0
      %p71 = por %p69, %p70
      %p72 = scmp.ne.s32.totalorder %s64, %s66
      %p73 = scmp.eq.s32.totalorder %s14, 1
      %p74 = por %p72, %p73
      %p75 = scmp.ne.s32.totalorder %s66, %s67
      %p76 = scmp.eq.s32.totalorder %s14, 0
      %p77 = por %p75, %p76
      %p78 = scmp.ne.s32.totalorder %s66, %s67
      %p79 = scmp.eq.s32.totalorder %s15, 1
      %p80 = por %p78, %p79
      %p82 = scmp.ne.s32.totalorder %s67, %s81
      %p83 = scmp.eq.s32.totalorder %s15, 0
      %p84 = por %p82, %p83
      %s85 = ssub.s32 %s9, %s16
      %p86 = scmp.eq.s32.totalorder %s85, 0
      %s88 = sadd.s32 %s87, 1
      %s89 = scalar_select %p86, %s87, %s88
      %p92 = pneg %p86
      %p93 = scmp.eq.s32.totalorder %s9, 1
      %p94 = por %p92, %p93
      %p95 = scmp.ne.s32.totalorder %s87, %s90
      %p96 = scmp.eq.s32.totalorder %s9, 0
      %p97 = por %p95, %p96
      %p98 = scmp.ne.s32.totalorder %s87, %s90
      %p99 = scmp.eq.s32.totalorder %s14, 1
      %p100 = por %p98, %p99
      %p101 = scmp.ne.s32.totalorder %s90, %s91
      %p102 = scmp.eq.s32.totalorder %s14, 0
      %p103 = por %p101, %p102
      %p104 = scmp.ne.s32.totalorder %s90, %s91
      %p105 = scmp.eq.s32.totalorder %s15, 1
      %p106 = por %p104, %p105
      %p108 = scmp.ne.s32.totalorder %s91, %s107
      %p109 = scmp.eq.s32.totalorder %s15, 0
      %p110 = por %p108, %p109
      %p111 = scmp.le.s32.totalorder 1, %s9
      %p112 = scmp.lt.s32.totalorder %s9, 3
      %p113 = pnand %p111, %p112
      %p114 = pneg %p113
      // Predicated region
      $region9: #{_lambda_.12} parent=5 // pred_check
        _
      $region10: #{_lambda_.12} parent=5 // pred_check_branch
        %116 = sbr.rel (%p113) target = $region12
      $region11: #{_lambda_.12} parent=5 // pred_region
        %s117 = ssub.s32 %s9, 1
        // Predicated region
        $region13: #{_lambda_.12} parent=11 // pred_check
          %p118 = pneg %p30
        $region14: #{_lambda_.12} parent=11 // pred_check_branch
          %120 = sbr.rel (%p118) target = $region16
        $region15: #{_lambda_.12} parent=11 // pred_region
          _
        $region16: #{_lambda_.12} parent=11 // pred_fallthru
          _
        // Predicated region
        $region17: #{_lambda_.12} parent=11 // pred_check
          %p121 = pneg %p77
        $region18: #{_lambda_.12} parent=11 // pred_check_branch
          %123 = sbr.rel (%p121) target = $region20
        $region19: #{_lambda_.12} parent=11 // pred_region
          _
        $region20: #{_lambda_.12} parent=11 // pred_fallthru
          _
      $region12: #{_lambda_.12} parent=5 // pred_fallthru
        _
      %p124 = scmp.lt.s32.totalorder %s9, 2
      // Predicated region
      $region21: #{_lambda_.12} parent=5 // pred_check
        %p125 = pneg %p124
      $region22: #{_lambda_.12} parent=5 // pred_check_branch
        %127 = sbr.rel (%p125) target = $region24
      $region23: #{_lambda_.12} parent=5 // pred_region
        // Predicated region
        $region25: #{_lambda_.12} parent=23 // pred_check
          %p128 = pneg %p50
        $region26: #{_lambda_.12} parent=23 // pred_check_branch
          %130 = sbr.rel (%p128) target = $region28
        $region27: #{_lambda_.12} parent=23 // pred_region
          %s131 = sand.u32 %s40, 1
          %s132 = sand.u32 %s40, 1
          %s133 = smul.addr %s132, 864
          %s134 = scalar_lea.vmem [#allocation2], %s133
          %s135 = smul.u32 2, %s9
          %s136 = smul.addr %s135, 4
          %s137 = scalar_lea.vmem %s1, %s136
          // Predicated region
          $region29: #{_lambda_.12} parent=27 // pred_check
            _
          $region30: #{_lambda_.12} parent=27 // pred_check_branch
            %139 = sbr.rel (0) target = $region32
          $region31: #{_lambda_.12} parent=27 // pred_region
            // Predicated region
            $region33: #{_lambda_.12} parent=31 // pred_check
              _
            $region34: #{_lambda_.12} parent=31 // pred_check_branch
              %141 = sbr.rel (0) target = $region36
            $region35: #{_lambda_.12} parent=31 // pred_region
              // Predicated region
              $region48: #{_lambda_.12} parent=35 // pred_check
                _
              $region49: #{_lambda_.12} parent=35 // pred_check_branch
                %370 = sbr.rel (0) target = $region51
              $region50: #{_lambda_.12} parent=35 // pred_region
                loop: start=0, step=1, limit=1
                $region52: #{_lambda_.12} parent=50 // loop_pre_header
                  _
                $region53: #{_lambda_.12} parent=50 // loop_header
                  %s372 = sphi 0, %s376
                  %p373 = scmp.ge.s32.totalorder %s372, 1
                  %s377 = sphi %s137, %s137
                  %s378 = sphi %s134, %s134
                $region54: #{_lambda_.12} parent=50 // loop_header_branch
                  %375 = sbr.rel (%p373) target = $region58
                $region55: #{_lambda_.12} parent=50 // loop_body
                  %v379 = vld [vmem:[%s377] sm:$0xff]
                  %380 = vst [vmem:[%s378] sm:$0xff] %v379
                  %v381 = vld [vmem:[%s377 + $0x10] sm:$0xff]
                  %382 = vst [vmem:[%s378 + $0x8] sm:$0xff] %v381
                  %v383 = vld [vmem:[%s377 + $0x20] sm:$0xff]
                  %384 = vst [vmem:[%s378 + $0x10] sm:$0xff] %v383
                  %v385 = vld [vmem:[%s377 + $0x30] sm:$0xff]
                  %386 = vst [vmem:[%s378 + $0x18] sm:$0xff] %v385
                  %v387 = vld [vmem:[%s377 + $0x40] sm:$0xff]
                  %388 = vst [vmem:[%s378 + $0x20] sm:$0xff] %v387
                  %v389 = vld [vmem:[%s377 + $0x50] sm:$0xff]
                  %390 = vst [vmem:[%s378 + $0x28] sm:$0xff] %v389
                  %v391 = vld [vmem:[%s377 + $0x60] sm:$0xff]
                  %392 = vst [vmem:[%s378 + $0x30] sm:$0xff] %v391
                  %v393 = vld [vmem:[%s377 + $0x70] sm:$0xff]
                  %394 = vst [vmem:[%s378 + $0x38] sm:$0xff] %v393
                  %v395 = vld [vmem:[%s377 + $0x80] sm:$0xff]
                  %396 = vst [vmem:[%s378 + $0x40] sm:$0xff] %v395
                  %v397 = vld [vmem:[%s377 + $0x90] sm:$0xff]
                  %398 = vst [vmem:[%s378 + $0x48] sm:$0xff] %v397
                  %v399 = vld [vmem:[%s377 + $0xa0] sm:$0xff]
                  %400 = vst [vmem:[%s378 + $0x50] sm:$0xff] %v399
                  %v401 = vld [vmem:[%s377 + $0xb0] sm:$0xff]
                  %402 = vst [vmem:[%s378 + $0x58] sm:$0xff] %v401
                  %v403 = vld [vmem:[%s377 + $0xc0] sm:$0xff]
                  %404 = vst [vmem:[%s378 + $0x60] sm:$0xff] %v403
                  %v405 = vld [vmem:[%s377 + $0xd0] sm:$0xff]
                  %406 = vst [vmem:[%s378 + $0x68] sm:$0xff] %v405
                  %v407 = vld [vmem:[%s377 + $0xe0] sm:$0xff]
                  %408 = vst [vmem:[%s378 + $0x70] sm:$0xff] %v407
                  %v409 = vld [vmem:[%s377 + $0xf0] sm:$0xff]
                  %410 = vst [vmem:[%s378 + $0x78] sm:$0xff] %v409
                  %v411 = vld [vmem:[%s377 + $0x100] sm:$0xff]
                  %412 = vst [vmem:[%s378 + $0x80] sm:$0xff] %v411
                  %v413 = vld [vmem:[%s377 + $0x110] sm:$0xff]
                  %414 = vst [vmem:[%s378 + $0x88] sm:$0xff] %v413
                  %v415 = vld [vmem:[%s377 + $0x120] sm:$0xff]
                  %416 = vst [vmem:[%s378 + $0x90] sm:$0xff] %v415
                  %v417 = vld [vmem:[%s377 + $0x130] sm:$0xff]
                  %418 = vst [vmem:[%s378 + $0x98] sm:$0xff] %v417
                  %v419 = vld [vmem:[%s377 + $0x140] sm:$0xff]
                  %420 = vst [vmem:[%s378 + $0xa0] sm:$0xff] %v419
                  %v421 = vld [vmem:[%s377 + $0x150] sm:$0xff]
                  %422 = vst [vmem:[%s378 + $0xa8] sm:$0xff] %v421
                  %v423 = vld [vmem:[%s377 + $0x160] sm:$0xff]
                  %424 = vst [vmem:[%s378 + $0xb0] sm:$0xff] %v423
                  %v425 = vld [vmem:[%s377 + $0x170] sm:$0xff]
                  %426 = vst [vmem:[%s378 + $0xb8] sm:$0xff] %v425
                  %v427 = vld [vmem:[%s377 + $0x180] sm:$0xff]
                  %428 = vst [vmem:[%s378 + $0xc0] sm:$0xff] %v427
                  %v429 = vld [vmem:[%s377 + $0x190] sm:$0xff]
                  %430 = vst [vmem:[%s378 + $0xc8] sm:$0xff] %v429
                  %v431 = vld [vmem:[%s377 + $0x1a0] sm:$0xff]
                  %432 = vst [vmem:[%s378 + $0xd0] sm:$0xff] %v431
                  %v433 = vld [vmem:[%s377 + $0x1b0] sm:$0xff]
                  %434 = vst [vmem:[%s378 + $0xd8] sm:$0xff] %v433
                  %v435 = vld [vmem:[%s377 + $0x1c0] sm:$0xff]
                  %436 = vst [vmem:[%s378 + $0xe0] sm:$0xff] %v435
                  %v437 = vld [vmem:[%s377 + $0x1d0] sm:$0xff]
                  %438 = vst [vmem:[%s378 + $0xe8] sm:$0xff] %v437
                  %v439 = vld [vmem:[%s377 + $0x1e0] sm:$0xff]
                  %440 = vst [vmem:[%s378 + $0xf0] sm:$0xff] %v439
                  %v441 = vld [vmem:[%s377 + $0x1f0] sm:$0xff]
                  %442 = vst [vmem:[%s378 + $0xf8] sm:$0xff] %v441
                  %v443 = vld [vmem:[%s377 + $0x200] sm:$0xff]
                  %444 = vst [vmem:[%s378 + $0x100] sm:$0xff] %v443
                  %v445 = vld [vmem:[%s377 + $0x210] sm:$0xff]
                  %446 = vst [vmem:[%s378 + $0x108] sm:$0xff] %v445
                  %v447 = vld [vmem:[%s377 + $0x220] sm:$0xff]
                  %448 = vst [vmem:[%s378 + $0x110] sm:$0xff] %v447
                  %v449 = vld [vmem:[%s377 + $0x230] sm:$0xff]
                  %450 = vst [vmem:[%s378 + $0x118] sm:$0xff] %v449
                  %v451 = vld [vmem:[%s377 + $0x240] sm:$0xff]
                  %452 = vst [vmem:[%s378 + $0x120] sm:$0xff] %v451
                  %v453 = vld [vmem:[%s377 + $0x250] sm:$0xff]
                  %454 = vst [vmem:[%s378 + $0x128] sm:$0xff] %v453
                  %v455 = vld [vmem:[%s377 + $0x260] sm:$0xff]
                  %456 = vst [vmem:[%s378 + $0x130] sm:$0xff] %v455
                  %v457 = vld [vmem:[%s377 + $0x270] sm:$0xff]
                  %458 = vst [vmem:[%s378 + $0x138] sm:$0xff] %v457
                  %v459 = vld [vmem:[%s377 + $0x280] sm:$0xff]
                  %460 = vst [vmem:[%s378 + $0x140] sm:$0xff] %v459
                  %v461 = vld [vmem:[%s377 + $0x290] sm:$0xff]
                  %462 = vst [vmem:[%s378 + $0x148] sm:$0xff] %v461
                  %v463 = vld [vmem:[%s377 + $0x2a0] sm:$0xff]
                  %464 = vst [vmem:[%s378 + $0x150] sm:$0xff] %v463
                  %v465 = vld [vmem:[%s377 + $0x2b0] sm:$0xff]
                  %466 = vst [vmem:[%s378 + $0x158] sm:$0xff] %v465
                  %v467 = vld [vmem:[%s377 + $0x2c0] sm:$0xff]
                  %468 = vst [vmem:[%s378 + $0x160] sm:$0xff] %v467
                  %v469 = vld [vmem:[%s377 + $0x2d0] sm:$0xff]
                  %470 = vst [vmem:[%s378 + $0x168] sm:$0xff] %v469
                  %v471 = vld [vmem:[%s377 + $0x2e0] sm:$0xff]
                  %472 = vst [vmem:[%s378 + $0x170] sm:$0xff] %v471
                  %v473 = vld [vmem:[%s377 + $0x2f0] sm:$0xff]
                  %474 = vst [vmem:[%s378 + $0x178] sm:$0xff] %v473
                  %v475 = vld [vmem:[%s377 + $0x300] sm:$0xff]
                  %476 = vst [vmem:[%s378 + $0x180] sm:$0xff] %v475
                  %v477 = vld [vmem:[%s377 + $0x310] sm:$0xff]
                  %478 = vst [vmem:[%s378 + $0x188] sm:$0xff] %v477
                  %v479 = vld [vmem:[%s377 + $0x320] sm:$0xff]
                  %480 = vst [vmem:[%s378 + $0x190] sm:$0xff] %v479
                  %v481 = vld [vmem:[%s377 + $0x330] sm:$0xff]
                  %482 = vst [vmem:[%s378 + $0x198] sm:$0xff] %v481
                  %v483 = vld [vmem:[%s377 + $0x340] sm:$0xff]
                  %484 = vst [vmem:[%s378 + $0x1a0] sm:$0xff] %v483
                  %v485 = vld [vmem:[%s377 + $0x350] sm:$0xff]
                  %486 = vst [vmem:[%s378 + $0x1a8] sm:$0xff] %v485
                  %v487 = vld [vmem:[%s377 + $0x360] sm:$0xff]
                  %488 = vst [vmem:[%s378 + $0x1b0] sm:$0xff] %v487
                  %v489 = vld [vmem:[%s377 + $0x370] sm:$0xff]
                  %490 = vst [vmem:[%s378 + $0x1b8] sm:$0xff] %v489
                  %v491 = vld [vmem:[%s377 + $0x380] sm:$0xff]
                  %492 = vst [vmem:[%s378 + $0x1c0] sm:$0xff] %v491
                  %v493 = vld [vmem:[%s377 + $0x390] sm:$0xff]
                  %494 = vst [vmem:[%s378 + $0x1c8] sm:$0xff] %v493
                  %v495 = vld [vmem:[%s377 + $0x3a0] sm:$0xff]
                  %496 = vst [vmem:[%s378 + $0x1d0] sm:$0xff] %v495
                  %v497 = vld [vmem:[%s377 + $0x3b0] sm:$0xff]
                  %498 = vst [vmem:[%s378 + $0x1d8] sm:$0xff] %v497
                  %v499 = vld [vmem:[%s377 + $0x3c0] sm:$0xff]
                  %500 = vst [vmem:[%s378 + $0x1e0] sm:$0xff] %v499
                  %v501 = vld [vmem:[%s377 + $0x3d0] sm:$0xff]
                  %502 = vst [vmem:[%s378 + $0x1e8] sm:$0xff] %v501
                  %v503 = vld [vmem:[%s377 + $0x3e0] sm:$0xff]
                  %504 = vst [vmem:[%s378 + $0x1f0] sm:$0xff] %v503
                  %v505 = vld [vmem:[%s377 + $0x3f0] sm:$0xff]
                  %506 = vst [vmem:[%s378 + $0x1f8] sm:$0xff] %v505
                  %v507 = vld [vmem:[%s377 + $0x400] sm:$0xff]
                  %508 = vst [vmem:[%s378 + $0x200] sm:$0xff] %v507
                  %v509 = vld [vmem:[%s377 + $0x410] sm:$0xff]
                  %510 = vst [vmem:[%s378 + $0x208] sm:$0xff] %v509
                  %v511 = vld [vmem:[%s377 + $0x420] sm:$0xff]
                  %512 = vst [vmem:[%s378 + $0x210] sm:$0xff] %v511
                  %v513 = vld [vmem:[%s377 + $0x430] sm:$0xff]
                  %514 = vst [vmem:[%s378 + $0x218] sm:$0xff] %v513
                  %v515 = vld [vmem:[%s377 + $0x440] sm:$0xff]
                  %516 = vst [vmem:[%s378 + $0x220] sm:$0xff] %v515
                  %v517 = vld [vmem:[%s377 + $0x450] sm:$0xff]
                  %518 = vst [vmem:[%s378 + $0x228] sm:$0xff] %v517
                  %v519 = vld [vmem:[%s377 + $0x460] sm:$0xff]
                  %520 = vst [vmem:[%s378 + $0x230] sm:$0xff] %v519
                  %v521 = vld [vmem:[%s377 + $0x470] sm:$0xff]
                  %522 = vst [vmem:[%s378 + $0x238] sm:$0xff] %v521
                  %v523 = vld [vmem:[%s377 + $0x480] sm:$0xff]
                  %524 = vst [vmem:[%s378 + $0x240] sm:$0xff] %v523
                  %v525 = vld [vmem:[%s377 + $0x490] sm:$0xff]
                  %526 = vst [vmem:[%s378 + $0x248] sm:$0xff] %v525
                  %v527 = vld [vmem:[%s377 + $0x4a0] sm:$0xff]
                  %528 = vst [vmem:[%s378 + $0x250] sm:$0xff] %v527
                  %v529 = vld [vmem:[%s377 + $0x4b0] sm:$0xff]
                  %530 = vst [vmem:[%s378 + $0x258] sm:$0xff] %v529
                  %v531 = vld [vmem:[%s377 + $0x4c0] sm:$0xff]
                  %532 = vst [vmem:[%s378 + $0x260] sm:$0xff] %v531
                  %v533 = vld [vmem:[%s377 + $0x4d0] sm:$0xff]
                  %534 = vst [vmem:[%s378 + $0x268] sm:$0xff] %v533
                  %v535 = vld [vmem:[%s377 + $0x4e0] sm:$0xff]
                  %536 = vst [vmem:[%s378 + $0x270] sm:$0xff] %v535
                  %v537 = vld [vmem:[%s377 + $0x4f0] sm:$0xff]
                  %538 = vst [vmem:[%s378 + $0x278] sm:$0xff] %v537
                  %v539 = vld [vmem:[%s377 + $0x500] sm:$0xff]
                  %540 = vst [vmem:[%s378 + $0x280] sm:$0xff] %v539
                  %v541 = vld [vmem:[%s377 + $0x510] sm:$0xff]
                  %542 = vst [vmem:[%s378 + $0x288] sm:$0xff] %v541
                  %v543 = vld [vmem:[%s377 + $0x520] sm:$0xff]
                  %544 = vst [vmem:[%s378 + $0x290] sm:$0xff] %v543
                  %v545 = vld [vmem:[%s377 + $0x530] sm:$0xff]
                  %546 = vst [vmem:[%s378 + $0x298] sm:$0xff] %v545
                  %v547 = vld [vmem:[%s377 + $0x540] sm:$0xff]
                  %548 = vst [vmem:[%s378 + $0x2a0] sm:$0xff] %v547
                  %v549 = vld [vmem:[%s377 + $0x550] sm:$0xff]
                  %550 = vst [vmem:[%s378 + $0x2a8] sm:$0xff] %v549
                  %v551 = vld [vmem:[%s377 + $0x560] sm:$0xff]
                  %552 = vst [vmem:[%s378 + $0x2b0] sm:$0xff] %v551
                  %v553 = vld [vmem:[%s377 + $0x570] sm:$0xff]
                  %554 = vst [vmem:[%s378 + $0x2b8] sm:$0xff] %v553
                  %v555 = vld [vmem:[%s377 + $0x580] sm:$0xff]
                  %556 = vst [vmem:[%s378 + $0x2c0] sm:$0xff] %v555
                  %v557 = vld [vmem:[%s377 + $0x590] sm:$0xff]
                  %558 = vst [vmem:[%s378 + $0x2c8] sm:$0xff] %v557
                  %v559 = vld [vmem:[%s377 + $0x5a0] sm:$0xff]
                  %560 = vst [vmem:[%s378 + $0x2d0] sm:$0xff] %v559
                  %v561 = vld [vmem:[%s377 + $0x5b0] sm:$0xff]
                  %562 = vst [vmem:[%s378 + $0x2d8] sm:$0xff] %v561
                  %v563 = vld [vmem:[%s377 + $0x5c0] sm:$0xff]
                  %564 = vst [vmem:[%s378 + $0x2e0] sm:$0xff] %v563
                  %v565 = vld [vmem:[%s377 + $0x5d0] sm:$0xff]
                  %566 = vst [vmem:[%s378 + $0x2e8] sm:$0xff] %v565
                  %v567 = vld [vmem:[%s377 + $0x5e0] sm:$0xff]
                  %568 = vst [vmem:[%s378 + $0x2f0] sm:$0xff] %v567
                  %v569 = vld [vmem:[%s377 + $0x5f0] sm:$0xff]
                  %570 = vst [vmem:[%s378 + $0x2f8] sm:$0xff] %v569
                  %v571 = vld [vmem:[%s377 + $0x600] sm:$0xff]
                  %572 = vst [vmem:[%s378 + $0x300] sm:$0xff] %v571
                  %v573 = vld [vmem:[%s377 + $0x610] sm:$0xff]
                  %574 = vst [vmem:[%s378 + $0x308] sm:$0xff] %v573
                  %v575 = vld [vmem:[%s377 + $0x620] sm:$0xff]
                  %576 = vst [vmem:[%s378 + $0x310] sm:$0xff] %v575
                  %v577 = vld [vmem:[%s377 + $0x630] sm:$0xff]
                  %578 = vst [vmem:[%s378 + $0x318] sm:$0xff] %v577
                  %v579 = vld [vmem:[%s377 + $0x640] sm:$0xff]
                  %580 = vst [vmem:[%s378 + $0x320] sm:$0xff] %v579
                  %v581 = vld [vmem:[%s377 + $0x650] sm:$0xff]
                  %582 = vst [vmem:[%s378 + $0x328] sm:$0xff] %v581
                  %v583 = vld [vmem:[%s377 + $0x660] sm:$0xff]
                  %584 = vst [vmem:[%s378 + $0x330] sm:$0xff] %v583
                  %v585 = vld [vmem:[%s377 + $0x670] sm:$0xff]
                  %586 = vst [vmem:[%s378 + $0x338] sm:$0xff] %v585
                  %v587 = vld [vmem:[%s377 + $0x680] sm:$0xff]
                  %588 = vst [vmem:[%s378 + $0x340] sm:$0xff] %v587
                  %v589 = vld [vmem:[%s377 + $0x690] sm:$0xff]
                  %590 = vst [vmem:[%s378 + $0x348] sm:$0xff] %v589
                  %v591 = vld [vmem:[%s377 + $0x6a0] sm:$0xff]
                  %592 = vst [vmem:[%s378 + $0x350] sm:$0xff] %v591
                  %v593 = vld [vmem:[%s377 + $0x6b0] sm:$0xff]
                  %594 = vst [vmem:[%s378 + $0x358] sm:$0xff] %v593
                $region56: #{_lambda_.12} parent=50 // loop_footer
                  %s376 = sadd.s32 1, %s372
                $region57: #{_lambda_.12} parent=50 // loop_footer_branch
                  %371 = sbr.rel target = $region53
                $region58: #{_lambda_.12} parent=50 // loop_exit
                  _
              $region51: #{_lambda_.12} parent=35 // pred_fallthru
                _
              // Predicated region
              $region59: #{_lambda_.12} parent=35 // pred_check
                _
              $region60: #{_lambda_.12} parent=35 // pred_check_branch
                %596 = sbr.rel target = $region62
              $region61: #{_lambda_.12} parent=35 // pred_region
                _
              $region62: #{_lambda_.12} parent=35 // pred_fallthru
                _
            $region36: #{_lambda_.12} parent=31 // pred_fallthru
              _
            // Predicated region
            $region37: #{_lambda_.12} parent=31 // pred_check
              _
            $region38: #{_lambda_.12} parent=31 // pred_check_branch
              %143 = sbr.rel target = $region40
            $region39: #{_lambda_.12} parent=31 // pred_region
              loop: start=0, step=1, limit=1
              $region41: #{_lambda_.12} parent=39 // loop_pre_header
                _
              $region42: #{_lambda_.12} parent=39 // loop_header
                %s146 = sphi 0, %s150
                %p147 = scmp.ge.s32.totalorder %s146, 1
                %s151 = sphi %s137, %s137
                %s152 = sphi %s134, %s134
              $region43: #{_lambda_.12} parent=39 // loop_header_branch
                %149 = sbr.rel (%p147) target = $region47
              $region44: #{_lambda_.12} parent=39 // loop_body
                %v153 = vld [vmem:[%s151] sm:$0xff]
                %154 = vst [vmem:[%s152] sm:$0xff] %v153
                %v155 = vld [vmem:[%s151 + $0x10] sm:$0xff]
                %156 = vst [vmem:[%s152 + $0x8] sm:$0xff] %v155
                %v157 = vld [vmem:[%s151 + $0x20] sm:$0xff]
                %158 = vst [vmem:[%s152 + $0x10] sm:$0xff] %v157
                %v159 = vld [vmem:[%s151 + $0x30] sm:$0xff]
                %160 = vst [vmem:[%s152 + $0x18] sm:$0xff] %v159
                %v161 = vld [vmem:[%s151 + $0x40] sm:$0xff]
                %162 = vst [vmem:[%s152 + $0x20] sm:$0xff] %v161
                %v163 = vld [vmem:[%s151 + $0x50] sm:$0xff]
                %164 = vst [vmem:[%s152 + $0x28] sm:$0xff] %v163
                %v165 = vld [vmem:[%s151 + $0x60] sm:$0xff]
                %166 = vst [vmem:[%s152 + $0x30] sm:$0xff] %v165
                %v167 = vld [vmem:[%s151 + $0x70] sm:$0xff]
                %168 = vst [vmem:[%s152 + $0x38] sm:$0xff] %v167
                %v169 = vld [vmem:[%s151 + $0x80] sm:$0xff]
                %170 = vst [vmem:[%s152 + $0x40] sm:$0xff] %v169
                %v171 = vld [vmem:[%s151 + $0x90] sm:$0xff]
                %172 = vst [vmem:[%s152 + $0x48] sm:$0xff] %v171
                %v173 = vld [vmem:[%s151 + $0xa0] sm:$0xff]
                %174 = vst [vmem:[%s152 + $0x50] sm:$0xff] %v173
                %v175 = vld [vmem:[%s151 + $0xb0] sm:$0xff]
                %176 = vst [vmem:[%s152 + $0x58] sm:$0xff] %v175
                %v177 = vld [vmem:[%s151 + $0xc0] sm:$0xff]
                %178 = vst [vmem:[%s152 + $0x60] sm:$0xff] %v177
                %v179 = vld [vmem:[%s151 + $0xd0] sm:$0xff]
                %180 = vst [vmem:[%s152 + $0x68] sm:$0xff] %v179
                %v181 = vld [vmem:[%s151 + $0xe0] sm:$0xff]
                %182 = vst [vmem:[%s152 + $0x70] sm:$0xff] %v181
                %v183 = vld [vmem:[%s151 + $0xf0] sm:$0xff]
                %184 = vst [vmem:[%s152 + $0x78] sm:$0xff] %v183
                %v185 = vld [vmem:[%s151 + $0x100] sm:$0xff]
                %186 = vst [vmem:[%s152 + $0x80] sm:$0xff] %v185
                %v187 = vld [vmem:[%s151 + $0x110] sm:$0xff]
                %188 = vst [vmem:[%s152 + $0x88] sm:$0xff] %v187
                %v189 = vld [vmem:[%s151 + $0x120] sm:$0xff]
                %190 = vst [vmem:[%s152 + $0x90] sm:$0xff] %v189
                %v191 = vld [vmem:[%s151 + $0x130] sm:$0xff]
                %192 = vst [vmem:[%s152 + $0x98] sm:$0xff] %v191
                %v193 = vld [vmem:[%s151 + $0x140] sm:$0xff]
                %194 = vst [vmem:[%s152 + $0xa0] sm:$0xff] %v193
                %v195 = vld [vmem:[%s151 + $0x150] sm:$0xff]
                %196 = vst [vmem:[%s152 + $0xa8] sm:$0xff] %v195
                %v197 = vld [vmem:[%s151 + $0x160] sm:$0xff]
                %198 = vst [vmem:[%s152 + $0xb0] sm:$0xff] %v197
                %v199 = vld [vmem:[%s151 + $0x170] sm:$0xff]
                %200 = vst [vmem:[%s152 + $0xb8] sm:$0xff] %v199
                %v201 = vld [vmem:[%s151 + $0x180] sm:$0xff]
                %202 = vst [vmem:[%s152 + $0xc0] sm:$0xff] %v201
                %v203 = vld [vmem:[%s151 + $0x190] sm:$0xff]
                %204 = vst [vmem:[%s152 + $0xc8] sm:$0xff] %v203
                %v205 = vld [vmem:[%s151 + $0x1a0] sm:$0xff]
                %206 = vst [vmem:[%s152 + $0xd0] sm:$0xff] %v205
                %v207 = vld [vmem:[%s151 + $0x1b0] sm:$0xff]
                %208 = vst [vmem:[%s152 + $0xd8] sm:$0xff] %v207
                %v209 = vld [vmem:[%s151 + $0x1c0] sm:$0xff]
                %210 = vst [vmem:[%s152 + $0xe0] sm:$0xff] %v209
                %v211 = vld [vmem:[%s151 + $0x1d0] sm:$0xff]
                %212 = vst [vmem:[%s152 + $0xe8] sm:$0xff] %v211
                %v213 = vld [vmem:[%s151 + $0x1e0] sm:$0xff]
                %214 = vst [vmem:[%s152 + $0xf0] sm:$0xff] %v213
                %v215 = vld [vmem:[%s151 + $0x1f0] sm:$0xff]
                %216 = vst [vmem:[%s152 + $0xf8] sm:$0xff] %v215
                %v217 = vld [vmem:[%s151 + $0x200] sm:$0xff]
                %218 = vst [vmem:[%s152 + $0x100] sm:$0xff] %v217
                %v219 = vld [vmem:[%s151 + $0x210] sm:$0xff]
                %220 = vst [vmem:[%s152 + $0x108] sm:$0xff] %v219
                %v221 = vld [vmem:[%s151 + $0x220] sm:$0xff]
                %222 = vst [vmem:[%s152 + $0x110] sm:$0xff] %v221
                %v223 = vld [vmem:[%s151 + $0x230] sm:$0xff]
                %224 = vst [vmem:[%s152 + $0x118] sm:$0xff] %v223
                %v225 = vld [vmem:[%s151 + $0x240] sm:$0xff]
                %226 = vst [vmem:[%s152 + $0x120] sm:$0xff] %v225
                %v227 = vld [vmem:[%s151 + $0x250] sm:$0xff]
                %228 = vst [vmem:[%s152 + $0x128] sm:$0xff] %v227
                %v229 = vld [vmem:[%s151 + $0x260] sm:$0xff]
                %230 = vst [vmem:[%s152 + $0x130] sm:$0xff] %v229
                %v231 = vld [vmem:[%s151 + $0x270] sm:$0xff]
                %232 = vst [vmem:[%s152 + $0x138] sm:$0xff] %v231
                %v233 = vld [vmem:[%s151 + $0x280] sm:$0xff]
                %234 = vst [vmem:[%s152 + $0x140] sm:$0xff] %v233
                %v235 = vld [vmem:[%s151 + $0x290] sm:$0xff]
                %236 = vst [vmem:[%s152 + $0x148] sm:$0xff] %v235
                %v237 = vld [vmem:[%s151 + $0x2a0] sm:$0xff]
                %238 = vst [vmem:[%s152 + $0x150] sm:$0xff] %v237
                %v239 = vld [vmem:[%s151 + $0x2b0] sm:$0xff]
                %240 = vst [vmem:[%s152 + $0x158] sm:$0xff] %v239
                %v241 = vld [vmem:[%s151 + $0x2c0] sm:$0xff]
                %242 = vst [vmem:[%s152 + $0x160] sm:$0xff] %v241
                %v243 = vld [vmem:[%s151 + $0x2d0] sm:$0xff]
                %244 = vst [vmem:[%s152 + $0x168] sm:$0xff] %v243
                %v245 = vld [vmem:[%s151 + $0x2e0] sm:$0xff]
                %246 = vst [vmem:[%s152 + $0x170] sm:$0xff] %v245
                %v247 = vld [vmem:[%s151 + $0x2f0] sm:$0xff]
                %248 = vst [vmem:[%s152 + $0x178] sm:$0xff] %v247
                %v249 = vld [vmem:[%s151 + $0x300] sm:$0xff]
                %250 = vst [vmem:[%s152 + $0x180] sm:$0xff] %v249
                %v251 = vld [vmem:[%s151 + $0x310] sm:$0xff]
                %252 = vst [vmem:[%s152 + $0x188] sm:$0xff] %v251
                %v253 = vld [vmem:[%s151 + $0x320] sm:$0xff]
                %254 = vst [vmem:[%s152 + $0x190] sm:$0xff] %v253
                %v255 = vld [vmem:[%s151 + $0x330] sm:$0xff]
                %256 = vst [vmem:[%s152 + $0x198] sm:$0xff] %v255
                %v257 = vld [vmem:[%s151 + $0x340] sm:$0xff]
                %258 = vst [vmem:[%s152 + $0x1a0] sm:$0xff] %v257
                %v259 = vld [vmem:[%s151 + $0x350] sm:$0xff]
                %260 = vst [vmem:[%s152 + $0x1a8] sm:$0xff] %v259
                %v261 = vld [vmem:[%s151 + $0x360] sm:$0xff]
                %262 = vst [vmem:[%s152 + $0x1b0] sm:$0xff] %v261
                %v263 = vld [vmem:[%s151 + $0x370] sm:$0xff]
                %264 = vst [vmem:[%s152 + $0x1b8] sm:$0xff] %v263
                %v265 = vld [vmem:[%s151 + $0x380] sm:$0xff]
                %266 = vst [vmem:[%s152 + $0x1c0] sm:$0xff] %v265
                %v267 = vld [vmem:[%s151 + $0x390] sm:$0xff]
                %268 = vst [vmem:[%s152 + $0x1c8] sm:$0xff] %v267
                %v269 = vld [vmem:[%s151 + $0x3a0] sm:$0xff]
                %270 = vst [vmem:[%s152 + $0x1d0] sm:$0xff] %v269
                %v271 = vld [vmem:[%s151 + $0x3b0] sm:$0xff]
                %272 = vst [vmem:[%s152 + $0x1d8] sm:$0xff] %v271
                %v273 = vld [vmem:[%s151 + $0x3c0] sm:$0xff]
                %274 = vst [vmem:[%s152 + $0x1e0] sm:$0xff] %v273
                %v275 = vld [vmem:[%s151 + $0x3d0] sm:$0xff]
                %276 = vst [vmem:[%s152 + $0x1e8] sm:$0xff] %v275
                %v277 = vld [vmem:[%s151 + $0x3e0] sm:$0xff]
                %278 = vst [vmem:[%s152 + $0x1f0] sm:$0xff] %v277
                %v279 = vld [vmem:[%s151 + $0x3f0] sm:$0xff]
                %280 = vst [vmem:[%s152 + $0x1f8] sm:$0xff] %v279
                %v281 = vld [vmem:[%s151 + $0x400] sm:$0xff]
                %282 = vst [vmem:[%s152 + $0x200] sm:$0xff] %v281
                %v283 = vld [vmem:[%s151 + $0x410] sm:$0xff]
                %284 = vst [vmem:[%s152 + $0x208] sm:$0xff] %v283
                %v285 = vld [vmem:[%s151 + $0x420] sm:$0xff]
                %286 = vst [vmem:[%s152 + $0x210] sm:$0xff] %v285
                %v287 = vld [vmem:[%s151 + $0x430] sm:$0xff]
                %288 = vst [vmem:[%s152 + $0x218] sm:$0xff] %v287
                %v289 = vld [vmem:[%s151 + $0x440] sm:$0xff]
                %290 = vst [vmem:[%s152 + $0x220] sm:$0xff] %v289
                %v291 = vld [vmem:[%s151 + $0x450] sm:$0xff]
                %292 = vst [vmem:[%s152 + $0x228] sm:$0xff] %v291
                %v293 = vld [vmem:[%s151 + $0x460] sm:$0xff]
                %294 = vst [vmem:[%s152 + $0x230] sm:$0xff] %v293
                %v295 = vld [vmem:[%s151 + $0x470] sm:$0xff]
                %296 = vst [vmem:[%s152 + $0x238] sm:$0xff] %v295
                %v297 = vld [vmem:[%s151 + $0x480] sm:$0xff]
                %298 = vst [vmem:[%s152 + $0x240] sm:$0xff] %v297
                %v299 = vld [vmem:[%s151 + $0x490] sm:$0xff]
                %300 = vst [vmem:[%s152 + $0x248] sm:$0xff] %v299
                %v301 = vld [vmem:[%s151 + $0x4a0] sm:$0xff]
                %302 = vst [vmem:[%s152 + $0x250] sm:$0xff] %v301
                %v303 = vld [vmem:[%s151 + $0x4b0] sm:$0xff]
                %304 = vst [vmem:[%s152 + $0x258] sm:$0xff] %v303
                %v305 = vld [vmem:[%s151 + $0x4c0] sm:$0xff]
                %306 = vst [vmem:[%s152 + $0x260] sm:$0xff] %v305
                %v307 = vld [vmem:[%s151 + $0x4d0] sm:$0xff]
                %308 = vst [vmem:[%s152 + $0x268] sm:$0xff] %v307
                %v309 = vld [vmem:[%s151 + $0x4e0] sm:$0xff]
                %310 = vst [vmem:[%s152 + $0x270] sm:$0xff] %v309
                %v311 = vld [vmem:[%s151 + $0x4f0] sm:$0xff]
                %312 = vst [vmem:[%s152 + $0x278] sm:$0xff] %v311
                %v313 = vld [vmem:[%s151 + $0x500] sm:$0xff]
                %314 = vst [vmem:[%s152 + $0x280] sm:$0xff] %v313
                %v315 = vld [vmem:[%s151 + $0x510] sm:$0xff]
                %316 = vst [vmem:[%s152 + $0x288] sm:$0xff] %v315
                %v317 = vld [vmem:[%s151 + $0x520] sm:$0xff]
                %318 = vst [vmem:[%s152 + $0x290] sm:$0xff] %v317
                %v319 = vld [vmem:[%s151 + $0x530] sm:$0xff]
                %320 = vst [vmem:[%s152 + $0x298] sm:$0xff] %v319
                %v321 = vld [vmem:[%s151 + $0x540] sm:$0xff]
                %322 = vst [vmem:[%s152 + $0x2a0] sm:$0xff] %v321
                %v323 = vld [vmem:[%s151 + $0x550] sm:$0xff]
                %324 = vst [vmem:[%s152 + $0x2a8] sm:$0xff] %v323
                %v325 = vld [vmem:[%s151 + $0x560] sm:$0xff]
                %326 = vst [vmem:[%s152 + $0x2b0] sm:$0xff] %v325
                %v327 = vld [vmem:[%s151 + $0x570] sm:$0xff]
                %328 = vst [vmem:[%s152 + $0x2b8] sm:$0xff] %v327
                %v329 = vld [vmem:[%s151 + $0x580] sm:$0xff]
                %330 = vst [vmem:[%s152 + $0x2c0] sm:$0xff] %v329
                %v331 = vld [vmem:[%s151 + $0x590] sm:$0xff]
                %332 = vst [vmem:[%s152 + $0x2c8] sm:$0xff] %v331
                %v333 = vld [vmem:[%s151 + $0x5a0] sm:$0xff]
                %334 = vst [vmem:[%s152 + $0x2d0] sm:$0xff] %v333
                %v335 = vld [vmem:[%s151 + $0x5b0] sm:$0xff]
                %336 = vst [vmem:[%s152 + $0x2d8] sm:$0xff] %v335
                %v337 = vld [vmem:[%s151 + $0x5c0] sm:$0xff]
                %338 = vst [vmem:[%s152 + $0x2e0] sm:$0xff] %v337
                %v339 = vld [vmem:[%s151 + $0x5d0] sm:$0xff]
                %340 = vst [vmem:[%s152 + $0x2e8] sm:$0xff] %v339
                %v341 = vld [vmem:[%s151 + $0x5e0] sm:$0xff]
                %342 = vst [vmem:[%s152 + $0x2f0] sm:$0xff] %v341
                %v343 = vld [vmem:[%s151 + $0x5f0] sm:$0xff]
                %344 = vst [vmem:[%s152 + $0x2f8] sm:$0xff] %v343
                %v345 = vld [vmem:[%s151 + $0x600] sm:$0xff]
                %346 = vst [vmem:[%s152 + $0x300] sm:$0xff] %v345
                %v347 = vld [vmem:[%s151 + $0x610] sm:$0xff]
                %348 = vst [vmem:[%s152 + $0x308] sm:$0xff] %v347
                %v349 = vld [vmem:[%s151 + $0x620] sm:$0xff]
                %350 = vst [vmem:[%s152 + $0x310] sm:$0xff] %v349
                %v351 = vld [vmem:[%s151 + $0x630] sm:$0xff]
                %352 = vst [vmem:[%s152 + $0x318] sm:$0xff] %v351
                %v353 = vld [vmem:[%s151 + $0x640] sm:$0xff]
                %354 = vst [vmem:[%s152 + $0x320] sm:$0xff] %v353
                %v355 = vld [vmem:[%s151 + $0x650] sm:$0xff]
                %356 = vst [vmem:[%s152 + $0x328] sm:$0xff] %v355
                %v357 = vld [vmem:[%s151 + $0x660] sm:$0xff]
                %358 = vst [vmem:[%s152 + $0x330] sm:$0xff] %v357
                %v359 = vld [vmem:[%s151 + $0x670] sm:$0xff]
                %360 = vst [vmem:[%s152 + $0x338] sm:$0xff] %v359
                %v361 = vld [vmem:[%s151 + $0x680] sm:$0xff]
                %362 = vst [vmem:[%s152 + $0x340] sm:$0xff] %v361
                %v363 = vld [vmem:[%s151 + $0x690] sm:$0xff]
                %364 = vst [vmem:[%s152 + $0x348] sm:$0xff] %v363
                %v365 = vld [vmem:[%s151 + $0x6a0] sm:$0xff]
                %366 = vst [vmem:[%s152 + $0x350] sm:$0xff] %v365
                %v367 = vld [vmem:[%s151 + $0x6b0] sm:$0xff]
                %368 = vst [vmem:[%s152 + $0x358] sm:$0xff] %v367
              $region45: #{_lambda_.12} parent=39 // loop_footer
                %s150 = sadd.s32 1, %s146
              $region46: #{_lambda_.12} parent=39 // loop_footer_branch
                %145 = sbr.rel target = $region42
              $region47: #{_lambda_.12} parent=39 // loop_exit
                _
            $region40: #{_lambda_.12} parent=31 // pred_fallthru
              _
          $region32: #{_lambda_.12} parent=27 // pred_fallthru
            _
          %597 = vnop
        $region28: #{_lambda_.12} parent=23 // pred_fallthru
          _
      $region24: #{_lambda_.12} parent=5 // pred_fallthru
        _
      %p598 = scmp.le.s32.totalorder 1, %s9
      %p599 = scmp.lt.s32.totalorder %s9, 3
      %p600 = pnand %p598, %p599
      %p601 = pneg %p600
      // Predicated region
      $region63: #{_lambda_.12} parent=5 // pred_check
        _
      $region64: #{_lambda_.12} parent=5 // pred_check_branch
        %603 = sbr.rel (%p600) target = $region66
      $region65: #{_lambda_.12} parent=5 // pred_region
        %s604 = ssub.s32 %s9, 1
        %s605 = sand.u32 %s43, 1
        %s606 = sand.u32 %s43, 1
        %s607 = smul.addr %s606, 864
        %s608 = scalar_lea.vmem [#allocation2], %s607
        // Predicated region
        $region67: #{_lambda_.12} parent=65 // pred_check
          %p609 = pneg %p56
        $region68: #{_lambda_.12} parent=65 // pred_check_branch
          %611 = sbr.rel (%p609) target = $region70
        $region69: #{_lambda_.12} parent=65 // pred_region
          _
        $region70: #{_lambda_.12} parent=65 // pred_fallthru
          _
        %p612 = pneg %p30
        %p613 = pneg %p27
        %s614 = sand.u32 %s43, 1
        %s615 = sand.u32 %s43, 1
        %s616 = smul.addr %s615, 864
        %s617 = scalar_lea.vmem [#allocation2], %s616
        %p618 = pneg %p56
        %p619 = pneg %p53
        %p620 = pneg %p77
        %p621 = pneg %p74
        %p622 = pneg %p103
        %p623 = pneg %p100
        %s624 = sand.u32 %s90, 1
        %s625 = sand.u32 %s90, 1
        %s626 = smul.addr %s625, 16
        %s627 = scalar_lea.vmem [#allocation3], %s626
        %s628 = smul.u32 2, %s14
        %s629 = smul.u32 2, %s14
        %v631 = vld [vmem:[%s0] sm:$0xff]
        %v632 = vld [vmem:[%s0 + $0x8] sm:$0xff]
        %v633 = vld [vmem:[%s0 + $0x10] sm:$0xff]
        %v634 = vld [vmem:[%s0 + $0x18] sm:$0xf]
        %v635 = vld [vmem:[%s0 + $0x1c] sm:$0xff]
        %v636 = vld [vmem:[%s0 + $0x24] sm:$0xff]
        %v637 = vld [vmem:[%s0 + $0x2c] sm:$0xff]
        %v638 = vld [vmem:[%s0 + $0x34] sm:$0xf]
        %v639 = vld [vmem:[%s608] sm:$0xff]
        %v640 = vld [vmem:[%s608 + $0x8] sm:$0xff]
        %v641 = vld [vmem:[%s608 + $0x10] sm:$0xff]
        %v642 = vld [vmem:[%s608 + $0x18] sm:$0xff]
        %v643 = vld [vmem:[%s608 + $0x20] sm:$0xff]
        %v644 = vld [vmem:[%s608 + $0x28] sm:$0xff]
        %v645 = vld [vmem:[%s608 + $0x30] sm:$0xff]
        %v646 = vld [vmem:[%s608 + $0x38] sm:$0xff]
        %v647 = vld [vmem:[%s608 + $0x40] sm:$0xff]
        %v648 = vld [vmem:[%s608 + $0x48] sm:$0xff]
        %v649 = vld [vmem:[%s608 + $0x50] sm:$0xff]
        %v650 = vld [vmem:[%s608 + $0x58] sm:$0xff]
        %v651 = vld [vmem:[%s608 + $0x60] sm:$0xff]
        %v652 = vld [vmem:[%s608 + $0x68] sm:$0xff]
        %v653 = vld [vmem:[%s608 + $0x70] sm:$0xff]
        %v654 = vld [vmem:[%s608 + $0x78] sm:$0xff]
        %v655 = vld [vmem:[%s608 + $0x80] sm:$0xff]
        %v656 = vld [vmem:[%s608 + $0x88] sm:$0xff]
        %v657 = vld [vmem:[%s608 + $0x90] sm:$0xff]
        %v658 = vld [vmem:[%s608 + $0x98] sm:$0xff]
        %v659 = vld [vmem:[%s608 + $0xa0] sm:$0xff]
        %v660 = vld [vmem:[%s608 + $0xa8] sm:$0xff]
        %v661 = vld [vmem:[%s608 + $0xb0] sm:$0xff]
        %v662 = vld [vmem:[%s608 + $0xb8] sm:$0xff]
        %v663 = vld [vmem:[%s608 + $0xc0] sm:$0xff]
        %v664 = vld [vmem:[%s608 + $0xc8] sm:$0xff]
        %v665 = vld [vmem:[%s608 + $0xd0] sm:$0xff]
        %v666 = vld [vmem:[%s608 + $0xd8] sm:$0xff]
        %v667 = vld [vmem:[%s608 + $0xe0] sm:$0xff]
        %v668 = vld [vmem:[%s608 + $0xe8] sm:$0xff]
        %v669 = vld [vmem:[%s608 + $0xf0] sm:$0xff]
        %v670 = vld [vmem:[%s608 + $0xf8] sm:$0xff]
        %v671 = vld [vmem:[%s608 + $0x100] sm:$0xff]
        %v672 = vld [vmem:[%s608 + $0x108] sm:$0xff]
        %v673 = vld [vmem:[%s608 + $0x110] sm:$0xff]
        %v674 = vld [vmem:[%s608 + $0x118] sm:$0xff]
        %v675 = vld [vmem:[%s608 + $0x120] sm:$0xff]
        %v676 = vld [vmem:[%s608 + $0x128] sm:$0xff]
        %v677 = vld [vmem:[%s608 + $0x130] sm:$0xff]
        %v678 = vld [vmem:[%s608 + $0x138] sm:$0xff]
        %v679 = vld [vmem:[%s608 + $0x140] sm:$0xff]
        %v680 = vld [vmem:[%s608 + $0x148] sm:$0xff]
        %v681 = vld [vmem:[%s608 + $0x150] sm:$0xff]
        %v682 = vld [vmem:[%s608 + $0x158] sm:$0xff]
        %v683 = vld [vmem:[%s608 + $0x160] sm:$0xff]
        %v684 = vld [vmem:[%s608 + $0x168] sm:$0xff]
        %v685 = vld [vmem:[%s608 + $0x170] sm:$0xff]
        %v686 = vld [vmem:[%s608 + $0x178] sm:$0xff]
        %v687 = vld [vmem:[%s608 + $0x180] sm:$0xff]
        %v688 = vld [vmem:[%s608 + $0x188] sm:$0xff]
        %v689 = vld [vmem:[%s608 + $0x190] sm:$0xff]
        %v690 = vld [vmem:[%s608 + $0x198] sm:$0xff]
        %v691 = vld [vmem:[%s608 + $0x1a0] sm:$0xff]
        %v692 = vld [vmem:[%s608 + $0x1a8] sm:$0xff]
        %v693 = vld [vmem:[%s608 + $0x1b0] sm:$0xff]
        %v694 = vld [vmem:[%s608 + $0x1b8] sm:$0xff]
        %v695 = vld [vmem:[%s608 + $0x1c0] sm:$0xff]
        %v696 = vld [vmem:[%s608 + $0x1c8] sm:$0xff]
        %v697 = vld [vmem:[%s608 + $0x1d0] sm:$0xff]
        %v698 = vld [vmem:[%s608 + $0x1d8] sm:$0xff]
        %v699 = vld [vmem:[%s608 + $0x1e0] sm:$0xff]
        %v700 = vld [vmem:[%s608 + $0x1e8] sm:$0xff]
        %v701 = vld [vmem:[%s608 + $0x1f0] sm:$0xff]
        %v702 = vld [vmem:[%s608 + $0x1f8] sm:$0xff]
        %v703 = vld [vmem:[%s608 + $0x200] sm:$0xff]
        %v704 = vld [vmem:[%s608 + $0x208] sm:$0xff]
        %v705 = vld [vmem:[%s608 + $0x210] sm:$0xff]
        %v706 = vld [vmem:[%s608 + $0x218] sm:$0xff]
        %v707 = vld [vmem:[%s608 + $0x220] sm:$0xff]
        %v708 = vld [vmem:[%s608 + $0x228] sm:$0xff]
        %v709 = vld [vmem:[%s608 + $0x230] sm:$0xff]
        %v710 = vld [vmem:[%s608 + $0x238] sm:$0xff]
        %v711 = vld [vmem:[%s608 + $0x240] sm:$0xff]
        %v712 = vld [vmem:[%s608 + $0x248] sm:$0xff]
        %v713 = vld [vmem:[%s608 + $0x250] sm:$0xff]
        %v714 = vld [vmem:[%s608 + $0x258] sm:$0xff]
        %v715 = vld [vmem:[%s608 + $0x260] sm:$0xff]
        %v716 = vld [vmem:[%s608 + $0x268] sm:$0xff]
        %v717 = vld [vmem:[%s608 + $0x270] sm:$0xff]
        %v718 = vld [vmem:[%s608 + $0x278] sm:$0xff]
        %v719 = vld [vmem:[%s608 + $0x280] sm:$0xff]
        %v720 = vld [vmem:[%s608 + $0x288] sm:$0xff]
        %v721 = vld [vmem:[%s608 + $0x290] sm:$0xff]
        %v722 = vld [vmem:[%s608 + $0x298] sm:$0xff]
        %v723 = vld [vmem:[%s608 + $0x2a0] sm:$0xff]
        %v724 = vld [vmem:[%s608 + $0x2a8] sm:$0xff]
        %v725 = vld [vmem:[%s608 + $0x2b0] sm:$0xff]
        %v726 = vld [vmem:[%s608 + $0x2b8] sm:$0xff]
        %v727 = vld [vmem:[%s608 + $0x2c0] sm:$0xff]
        %v728 = vld [vmem:[%s608 + $0x2c8] sm:$0xff]
        %v729 = vld [vmem:[%s608 + $0x2d0] sm:$0xff]
        %v730 = vld [vmem:[%s608 + $0x2d8] sm:$0xff]
        %v731 = vld [vmem:[%s608 + $0x2e0] sm:$0xff]
        %v732 = vld [vmem:[%s608 + $0x2e8] sm:$0xff]
        %v733 = vld [vmem:[%s608 + $0x2f0] sm:$0xff]
        %v734 = vld [vmem:[%s608 + $0x2f8] sm:$0xff]
        %v735 = vld [vmem:[%s608 + $0x300] sm:$0xff]
        %v736 = vld [vmem:[%s608 + $0x308] sm:$0xff]
        %v737 = vld [vmem:[%s608 + $0x310] sm:$0xff]
        %v738 = vld [vmem:[%s608 + $0x318] sm:$0xff]
        %v739 = vld [vmem:[%s608 + $0x320] sm:$0xff]
        %v740 = vld [vmem:[%s608 + $0x328] sm:$0xff]
        %v741 = vld [vmem:[%s608 + $0x330] sm:$0xff]
        %v742 = vld [vmem:[%s608 + $0x338] sm:$0xff]
        %v743 = vld [vmem:[%s608 + $0x340] sm:$0xff]
        %v744 = vld [vmem:[%s608 + $0x348] sm:$0xff]
        %v745 = vld [vmem:[%s608 + $0x350] sm:$0xff]
        %v746 = vld [vmem:[%s608 + $0x358] sm:$0xff]
        %v747 = vld [vmem:[%s2] sm:$0xff]
        %v748 = vld [vmem:[%s2 + $0x8] sm:$0xff]
        %750 = vset.pattern.permute.xlu0 0
        %751 = vperm.xlu0 %750, %v747
        %v752 = vpop.permute.xlu0 %751
        %755 = vset.pattern.permute.xlu0 0
        %756 = vperm.xlu0 %755, %v748
        %v757 = vpop.permute.xlu0 %756
        %v767 = vunpack.c.l.b16 %v631
        %v768 = vunpack.c.h.b16 %v631
        %v769 = vunpack.c.l.b16 %v632
        %v770 = vunpack.c.h.b16 %v632
        %v771 = vunpack.c.l.b16 %v633
        %v772 = vunpack.c.h.b16 %v633
        %v773 = vunpack.c.l.b16 %v634
        %v774 = vunpack.c.l.b16 %v635
        %v775 = vunpack.c.h.b16 %v635
        %v776 = vunpack.c.l.b16 %v636
        %v777 = vunpack.c.h.b16 %v636
        %v778 = vunpack.c.l.b16 %v637
        %v779 = vunpack.c.h.b16 %v637
        %v780 = vunpack.c.l.b16 %v638
        %v781 = vpack.c.b16 %v774, %v767
        %v782 = vpack.c.b16 %v775, %v768
        %v783 = vpack.c.b16 %v776, %v769
        %v784 = vpack.c.b16 %v777, %v770
        %v785 = vpack.c.b16 %v778, %v771
        %v786 = vpack.c.b16 %v779, %v772
        %v787 = vpack.c.b16 %v780, %v773
        %v902 = vunpack.c.l.b16 %v639
        %v903 = vunpack.c.h.b16 %v639
        %v904 = vunpack.c.l.b16 %v640
        %v905 = vunpack.c.h.b16 %v640
        %v906 = vunpack.c.l.b16 %v641
        %v907 = vunpack.c.h.b16 %v641
        %v908 = vunpack.c.l.b16 %v642
        %v909 = vunpack.c.h.b16 %v642
        %v910 = vunpack.c.l.b16 %v643
        %v911 = vunpack.c.h.b16 %v643
        %v912 = vunpack.c.l.b16 %v644
        %v913 = vunpack.c.h.b16 %v644
        %v914 = vunpack.c.l.b16 %v645
        %v915 = vunpack.c.h.b16 %v645
        %v916 = vunpack.c.l.b16 %v646
        %v917 = vunpack.c.h.b16 %v646
        %v918 = vunpack.c.l.b16 %v647
        %v919 = vunpack.c.h.b16 %v647
        %v920 = vunpack.c.l.b16 %v648
        %v921 = vunpack.c.h.b16 %v648
        %v922 = vunpack.c.l.b16 %v649
        %v923 = vunpack.c.h.b16 %v649
        %v924 = vunpack.c.l.b16 %v650
        %v925 = vunpack.c.h.b16 %v650
        %v926 = vunpack.c.l.b16 %v651
        %v927 = vunpack.c.h.b16 %v651
        %v928 = vunpack.c.l.b16 %v652
        %v929 = vunpack.c.h.b16 %v652
        %v930 = vunpack.c.l.b16 %v653
        %v931 = vunpack.c.h.b16 %v653
        %v932 = vunpack.c.l.b16 %v654
        %v933 = vunpack.c.h.b16 %v654
        %v934 = vunpack.c.l.b16 %v655
        %v935 = vunpack.c.h.b16 %v655
        %v936 = vunpack.c.l.b16 %v656
        %v937 = vunpack.c.h.b16 %v656
        %v938 = vunpack.c.l.b16 %v657
        %v939 = vunpack.c.h.b16 %v657
        %v940 = vunpack.c.l.b16 %v658
        %v941 = vunpack.c.h.b16 %v658
        %v942 = vunpack.c.l.b16 %v659
        %v943 = vunpack.c.h.b16 %v659
        %v944 = vunpack.c.l.b16 %v660
        %v945 = vunpack.c.h.b16 %v660
        %v946 = vunpack.c.l.b16 %v661
        %v947 = vunpack.c.h.b16 %v661
        %v948 = vunpack.c.l.b16 %v662
        %v949 = vunpack.c.h.b16 %v662
        %v950 = vunpack.c.l.b16 %v663
        %v951 = vunpack.c.h.b16 %v663
        %v952 = vunpack.c.l.b16 %v664
        %v953 = vunpack.c.h.b16 %v664
        %v954 = vunpack.c.l.b16 %v665
        %v955 = vunpack.c.h.b16 %v665
        %v956 = vunpack.c.l.b16 %v666
        %v957 = vunpack.c.h.b16 %v666
        %v958 = vunpack.c.l.b16 %v667
        %v959 = vunpack.c.h.b16 %v667
        %v960 = vunpack.c.l.b16 %v668
        %v961 = vunpack.c.h.b16 %v668
        %v962 = vunpack.c.l.b16 %v669
        %v963 = vunpack.c.h.b16 %v669
        %v964 = vunpack.c.l.b16 %v670
        %v965 = vunpack.c.h.b16 %v670
        %v966 = vunpack.c.l.b16 %v671
        %v967 = vunpack.c.h.b16 %v671
        %v968 = vunpack.c.l.b16 %v672
        %v969 = vunpack.c.h.b16 %v672
        %v970 = vunpack.c.l.b16 %v673
        %v971 = vunpack.c.h.b16 %v673
        %v972 = vunpack.c.l.b16 %v674
        %v973 = vunpack.c.h.b16 %v674
        %v974 = vunpack.c.l.b16 %v675
        %v975 = vunpack.c.h.b16 %v675
        %v976 = vunpack.c.l.b16 %v676
        %v977 = vunpack.c.h.b16 %v676
        %v978 = vunpack.c.l.b16 %v677
        %v979 = vunpack.c.h.b16 %v677
        %v980 = vunpack.c.l.b16 %v678
        %v981 = vunpack.c.h.b16 %v678
        %v982 = vunpack.c.l.b16 %v679
        %v983 = vunpack.c.h.b16 %v679
        %v984 = vunpack.c.l.b16 %v680
        %v985 = vunpack.c.h.b16 %v680
        %v986 = vunpack.c.l.b16 %v681
        %v987 = vunpack.c.h.b16 %v681
        %v988 = vunpack.c.l.b16 %v682
        %v989 = vunpack.c.h.b16 %v682
        %v990 = vunpack.c.l.b16 %v683
        %v991 = vunpack.c.h.b16 %v683
        %v992 = vunpack.c.l.b16 %v684
        %v993 = vunpack.c.h.b16 %v684
        %v994 = vunpack.c.l.b16 %v685
        %v995 = vunpack.c.h.b16 %v685
        %v996 = vunpack.c.l.b16 %v686
        %v997 = vunpack.c.h.b16 %v686
        %v998 = vunpack.c.l.b16 %v687
        %v999 = vunpack.c.h.b16 %v687
        %v1000 = vunpack.c.l.b16 %v688
        %v1001 = vunpack.c.h.b16 %v688
        %v1002 = vunpack.c.l.b16 %v689
        %v1003 = vunpack.c.h.b16 %v689
        %v1004 = vunpack.c.l.b16 %v690
        %v1005 = vunpack.c.h.b16 %v690
        %v1006 = vunpack.c.l.b16 %v691
        %v1007 = vunpack.c.h.b16 %v691
        %v1008 = vunpack.c.l.b16 %v692
        %v1009 = vunpack.c.h.b16 %v692
        %v1010 = vunpack.c.l.b16 %v693
        %v1011 = vunpack.c.h.b16 %v693
        %v1012 = vunpack.c.l.b16 %v694
        %v1013 = vunpack.c.h.b16 %v694
        %v1014 = vunpack.c.l.b16 %v695
        %v1015 = vunpack.c.h.b16 %v695
        %v1016 = vunpack.c.l.b16 %v696
        %v1017 = vunpack.c.h.b16 %v696
        %v1018 = vunpack.c.l.b16 %v697
        %v1019 = vunpack.c.h.b16 %v697
        %v1020 = vunpack.c.l.b16 %v698
        %v1021 = vunpack.c.h.b16 %v698
        %v1022 = vunpack.c.l.b16 %v699
        %v1023 = vunpack.c.h.b16 %v699
        %v1024 = vunpack.c.l.b16 %v700
        %v1025 = vunpack.c.h.b16 %v700
        %v1026 = vunpack.c.l.b16 %v701
        %v1027 = vunpack.c.h.b16 %v701
        %v1028 = vunpack.c.l.b16 %v702
        %v1029 = vunpack.c.h.b16 %v702
        %v1030 = vunpack.c.l.b16 %v703
        %v1031 = vunpack.c.h.b16 %v703
        %v1032 = vunpack.c.l.b16 %v704
        %v1033 = vunpack.c.h.b16 %v704
        %v1034 = vunpack.c.l.b16 %v705
        %v1035 = vunpack.c.h.b16 %v705
        %v1036 = vunpack.c.l.b16 %v706
        %v1037 = vunpack.c.h.b16 %v706
        %v1038 = vunpack.c.l.b16 %v707
        %v1039 = vunpack.c.h.b16 %v707
        %v1040 = vunpack.c.l.b16 %v708
        %v1041 = vunpack.c.h.b16 %v708
        %v1042 = vunpack.c.l.b16 %v709
        %v1043 = vunpack.c.h.b16 %v709
        %v1044 = vunpack.c.l.b16 %v710
        %v1045 = vunpack.c.h.b16 %v710
        %v1046 = vunpack.c.l.b16 %v711
        %v1047 = vunpack.c.h.b16 %v711
        %v1048 = vunpack.c.l.b16 %v712
        %v1049 = vunpack.c.h.b16 %v712
        %v1050 = vunpack.c.l.b16 %v713
        %v1051 = vunpack.c.h.b16 %v713
        %v1052 = vunpack.c.l.b16 %v714
        %v1053 = vunpack.c.h.b16 %v714
        %v1054 = vunpack.c.l.b16 %v715
        %v1055 = vunpack.c.h.b16 %v715
        %v1056 = vunpack.c.l.b16 %v716
        %v1057 = vunpack.c.h.b16 %v716
        %v1058 = vunpack.c.l.b16 %v717
        %v1059 = vunpack.c.h.b16 %v717
        %v1060 = vunpack.c.l.b16 %v718
        %v1061 = vunpack.c.h.b16 %v718
        %v1062 = vunpack.c.l.b16 %v719
        %v1063 = vunpack.c.h.b16 %v719
        %v1064 = vunpack.c.l.b16 %v720
        %v1065 = vunpack.c.h.b16 %v720
        %v1066 = vunpack.c.l.b16 %v721
        %v1067 = vunpack.c.h.b16 %v721
        %v1068 = vunpack.c.l.b16 %v722
        %v1069 = vunpack.c.h.b16 %v722
        %v1070 = vunpack.c.l.b16 %v723
        %v1071 = vunpack.c.h.b16 %v723
        %v1072 = vunpack.c.l.b16 %v724
        %v1073 = vunpack.c.h.b16 %v724
        %v1074 = vunpack.c.l.b16 %v725
        %v1075 = vunpack.c.h.b16 %v725
        %v1076 = vunpack.c.l.b16 %v726
        %v1077 = vunpack.c.h.b16 %v726
        %v1078 = vunpack.c.l.b16 %v727
        %v1079 = vunpack.c.h.b16 %v727
        %v1080 = vunpack.c.l.b16 %v728
        %v1081 = vunpack.c.h.b16 %v728
        %v1082 = vunpack.c.l.b16 %v729
        %v1083 = vunpack.c.h.b16 %v729
        %v1084 = vunpack.c.l.b16 %v730
        %v1085 = vunpack.c.h.b16 %v730
        %v1086 = vunpack.c.l.b16 %v731
        %v1087 = vunpack.c.h.b16 %v731
        %v1088 = vunpack.c.l.b16 %v732
        %v1089 = vunpack.c.h.b16 %v732
        %v1090 = vunpack.c.l.b16 %v733
        %v1091 = vunpack.c.h.b16 %v733
        %v1092 = vunpack.c.l.b16 %v734
        %v1093 = vunpack.c.h.b16 %v734
        %v1094 = vunpack.c.l.b16 %v735
        %v1095 = vunpack.c.h.b16 %v735
        %v1096 = vunpack.c.l.b16 %v736
        %v1097 = vunpack.c.h.b16 %v736
        %v1098 = vunpack.c.l.b16 %v737
        %v1099 = vunpack.c.h.b16 %v737
        %v1100 = vunpack.c.l.b16 %v738
        %v1101 = vunpack.c.h.b16 %v738
        %v1102 = vunpack.c.l.b16 %v739
        %v1103 = vunpack.c.h.b16 %v739
        %v1104 = vunpack.c.l.b16 %v740
        %v1105 = vunpack.c.h.b16 %v740
        %v1106 = vunpack.c.l.b16 %v741
        %v1107 = vunpack.c.h.b16 %v741
        %v1108 = vunpack.c.l.b16 %v742
        %v1109 = vunpack.c.h.b16 %v742
        %v1110 = vunpack.c.l.b16 %v743
        %v1111 = vunpack.c.h.b16 %v743
        %v1112 = vunpack.c.l.b16 %v744
        %v1113 = vunpack.c.h.b16 %v744
        %v1114 = vunpack.c.l.b16 %v745
        %v1115 = vunpack.c.h.b16 %v745
        %v1116 = vunpack.c.l.b16 %v746
        %v1117 = vunpack.c.h.b16 %v746
        %v1118 = vpack.c.b16 %v904, %v902
        %v1119 = vpack.c.b16 %v905, %v903
        %v1120 = vpack.c.b16 %v908, %v906
        %v1121 = vpack.c.b16 %v909, %v907
        %v1122 = vpack.c.b16 %v912, %v910
        %v1123 = vpack.c.b16 %v913, %v911
        %v1124 = vpack.c.b16 %v916, %v914
        %v1125 = vpack.c.b16 %v917, %v915
        %v1126 = vpack.c.b16 %v920, %v918
        %v1127 = vpack.c.b16 %v921, %v919
        %v1128 = vpack.c.b16 %v924, %v922
        %v1129 = vpack.c.b16 %v925, %v923
        %v1130 = vpack.c.b16 %v928, %v926
        %v1131 = vpack.c.b16 %v929, %v927
        %v1132 = vpack.c.b16 %v932, %v930
        %v1133 = vpack.c.b16 %v933, %v931
        %v1134 = vpack.c.b16 %v936, %v934
        %v1135 = vpack.c.b16 %v937, %v935
        %v1136 = vpack.c.b16 %v940, %v938
        %v1137 = vpack.c.b16 %v941, %v939
        %v1138 = vpack.c.b16 %v944, %v942
        %v1139 = vpack.c.b16 %v945, %v943
        %v1140 = vpack.c.b16 %v948, %v946
        %v1141 = vpack.c.b16 %v949, %v947
        %v1142 = vpack.c.b16 %v952, %v950
        %v1143 = vpack.c.b16 %v953, %v951
        %v1144 = vpack.c.b16 %v956, %v954
        %v1145 = vpack.c.b16 %v957, %v955
        %v1146 = vpack.c.b16 %v960, %v958
        %v1147 = vpack.c.b16 %v961, %v959
        %v1148 = vpack.c.b16 %v964, %v962
        %v1149 = vpack.c.b16 %v965, %v963
        %v1150 = vpack.c.b16 %v968, %v966
        %v1151 = vpack.c.b16 %v969, %v967
        %v1152 = vpack.c.b16 %v972, %v970
        %v1153 = vpack.c.b16 %v973, %v971
        %v1154 = vpack.c.b16 %v976, %v974
        %v1155 = vpack.c.b16 %v977, %v975
        %v1156 = vpack.c.b16 %v980, %v978
        %v1157 = vpack.c.b16 %v981, %v979
        %v1158 = vpack.c.b16 %v984, %v982
        %v1159 = vpack.c.b16 %v985, %v983
        %v1160 = vpack.c.b16 %v988, %v986
        %v1161 = vpack.c.b16 %v989, %v987
        %v1162 = vpack.c.b16 %v992, %v990
        %v1163 = vpack.c.b16 %v993, %v991
        %v1164 = vpack.c.b16 %v996, %v994
        %v1165 = vpack.c.b16 %v997, %v995
        %v1166 = vpack.c.b16 %v1000, %v998
        %v1167 = vpack.c.b16 %v1001, %v999
        %v1168 = vpack.c.b16 %v1004, %v1002
        %v1169 = vpack.c.b16 %v1005, %v1003
        %v1170 = vpack.c.b16 %v1008, %v1006
        %v1171 = vpack.c.b16 %v1009, %v1007
        %v1172 = vpack.c.b16 %v1012, %v1010
        %v1173 = vpack.c.b16 %v1013, %v1011
        %v1174 = vpack.c.b16 %v1016, %v1014
        %v1175 = vpack.c.b16 %v1017, %v1015
        %v1176 = vpack.c.b16 %v1020, %v1018
        %v1177 = vpack.c.b16 %v1021, %v1019
        %v1178 = vpack.c.b16 %v1024, %v1022
        %v1179 = vpack.c.b16 %v1025, %v1023
        %v1180 = vpack.c.b16 %v1028, %v1026
        %v1181 = vpack.c.b16 %v1029, %v1027
        %v1182 = vpack.c.b16 %v1032, %v1030
        %v1183 = vpack.c.b16 %v1033, %v1031
        %v1184 = vpack.c.b16 %v1036, %v1034
        %v1185 = vpack.c.b16 %v1037, %v1035
        %v1186 = vpack.c.b16 %v1040, %v1038
        %v1187 = vpack.c.b16 %v1041, %v1039
        %v1188 = vpack.c.b16 %v1044, %v1042
        %v1189 = vpack.c.b16 %v1045, %v1043
        %v1190 = vpack.c.b16 %v1048, %v1046
        %v1191 = vpack.c.b16 %v1049, %v1047
        %v1192 = vpack.c.b16 %v1052, %v1050
        %v1193 = vpack.c.b16 %v1053, %v1051
        %v1194 = vpack.c.b16 %v1056, %v1054
        %v1195 = vpack.c.b16 %v1057, %v1055
        %v1196 = vpack.c.b16 %v1060, %v1058
        %v1197 = vpack.c.b16 %v1061, %v1059
        %v1198 = vpack.c.b16 %v1064, %v1062
        %v1199 = vpack.c.b16 %v1065, %v1063
        %v1200 = vpack.c.b16 %v1068, %v1066
        %v1201 = vpack.c.b16 %v1069, %v1067
        %v1202 = vpack.c.b16 %v1072, %v1070
        %v1203 = vpack.c.b16 %v1073, %v1071
        %v1204 = vpack.c.b16 %v1076, %v1074
        %v1205 = vpack.c.b16 %v1077, %v1075
        %v1206 = vpack.c.b16 %v1080, %v1078
        %v1207 = vpack.c.b16 %v1081, %v1079
        %v1208 = vpack.c.b16 %v1084, %v1082
        %v1209 = vpack.c.b16 %v1085, %v1083
        %v1210 = vpack.c.b16 %v1088, %v1086
        %v1211 = vpack.c.b16 %v1089, %v1087
        %v1212 = vpack.c.b16 %v1092, %v1090
        %v1213 = vpack.c.b16 %v1093, %v1091
        %v1214 = vpack.c.b16 %v1096, %v1094
        %v1215 = vpack.c.b16 %v1097, %v1095
        %v1216 = vpack.c.b16 %v1100, %v1098
        %v1217 = vpack.c.b16 %v1101, %v1099
        %v1218 = vpack.c.b16 %v1104, %v1102
        %v1219 = vpack.c.b16 %v1105, %v1103
        %v1220 = vpack.c.b16 %v1108, %v1106
        %v1221 = vpack.c.b16 %v1109, %v1107
        %v1222 = vpack.c.b16 %v1112, %v1110
        %v1223 = vpack.c.b16 %v1113, %v1111
        %v1224 = vpack.c.b16 %v1116, %v1114
        %v1225 = vpack.c.b16 %v1117, %v1115
        %vm1334 = vcmask 785408
        %v1336 = vsel %vm1334, %v787, 0
        %1338 = vmatprep.subr.bf16.mxu0 %v1119
        %1339 = vmatpush1.bf16.msra.mxu0 %v1118
        %1340 = vmatprep.subr.bf16.mxu0 %v1121
        %1341 = vmatpush1.bf16.msra.mxu0 %v1120
        %1342 = vmatprep.subr.bf16.mxu0 %v1123
        %1343 = vmatpush1.bf16.msra.mxu0 %v1122
        %1344 = vmatprep.subr.bf16.mxu0 %v1125
        %1345 = vmatpush1.bf16.msra.mxu0 %v1124
        %1346 = vmatprep.subr.bf16.mxu0 %v1127
        %1347 = vmatpush1.bf16.msra.mxu0 %v1126
        %1348 = vmatprep.subr.bf16.mxu0 %v1129
        %1349 = vmatpush1.bf16.msra.mxu0 %v1128
        %1350 = vmatprep.subr.bf16.mxu0 %v1131
        %1351 = vmatpush1.bf16.msra.mxu0 %v1130
        %1352 = vmatprep.subr.bf16.mxu0 %v1133
        %1353 = vmatpush1.bf16.msra.mxu0 %v1132
        %1354 = vmatprep.subr.bf16.mxu0 %v1135
        %1355 = vmatpush1.bf16.msra.mxu0 %v1134
        %1356 = vmatprep.subr.bf16.mxu0 %v1137
        %1357 = vmatpush1.bf16.msra.mxu0 %v1136
        %1358 = vmatprep.subr.bf16.mxu0 %v1139
        %1359 = vmatpush1.bf16.msra.mxu0 %v1138
        %1360 = vmatprep.subr.bf16.mxu0 %v1141
        %1361 = vmatpush1.bf16.msra.mxu0 %v1140
        %1362 = vmatprep.subr.bf16.mxu0 %v1143
        %1363 = vmatpush1.bf16.msra.mxu0 %v1142
        %1364 = vmatprep.subr.bf16.mxu0 %v1145
        %1365 = vmatpush1.bf16.msra.mxu0 %v1144
        %1366 = vmatprep.subr.bf16.mxu0 %v1147
        %1367 = vmatpush1.bf16.msra.mxu0 %v1146
        %1368 = vmatprep.subr.bf16.mxu0 %v1149
        %1369 = vmatpush1.bf16.msra.mxu0 %v1148
        %1370 = vmatprep.mubr.bf16.mxu0 %v782
        %1371 = vmatmul.mubr.bf16.gmra.mrb[0].mxu0 %v781
        %v1372 = vpop.f32.mrb[0].mxu0
        %v1373 = vadd.f32 %v752, %v1372
        %v1374 = vpop.f32.mrb[0].mxu0
        %v1375 = vadd.f32 %v752, %v1374
        %v1376 = vpop.f32.mrb[0].mxu0
        %v1377 = vadd.f32 %v757, %v1376
        %v1378 = vpop.f32.mrb[0].mxu0
        %v1379 = vadd.f32 %v757, %v1378
        %1380 = vdwg.mxu0
        %1381 = vmatprep.subr.bf16.mxu0 %v1151
        %1382 = vmatpush1.bf16.msra.mxu0 %v1150
        %1383 = vmatprep.subr.bf16.mxu0 %v1153
        %1384 = vmatpush1.bf16.msra.mxu0 %v1152
        %1385 = vmatprep.subr.bf16.mxu0 %v1155
        %1386 = vmatpush1.bf16.msra.mxu0 %v1154
        %1387 = vmatprep.subr.bf16.mxu0 %v1157
        %1388 = vmatpush1.bf16.msra.mxu0 %v1156
        %1389 = vmatprep.subr.bf16.mxu0 %v1159
        %1390 = vmatpush1.bf16.msra.mxu0 %v1158
        %1391 = vmatprep.subr.bf16.mxu0 %v1161
        %1392 = vmatpush1.bf16.msra.mxu0 %v1160
        %1393 = vmatprep.subr.bf16.mxu0 %v1163
        %1394 = vmatpush1.bf16.msra.mxu0 %v1162
        %1395 = vmatprep.subr.bf16.mxu0 %v1165
        %1396 = vmatpush1.bf16.msra.mxu0 %v1164
        %1397 = vmatprep.subr.bf16.mxu0 %v1167
        %1398 = vmatpush1.bf16.msra.mxu0 %v1166
        %1399 = vmatprep.subr.bf16.mxu0 %v1169
        %1400 = vmatpush1.bf16.msra.mxu0 %v1168
        %1401 = vmatprep.subr.bf16.mxu0 %v1171
        %1402 = vmatpush1.bf16.msra.mxu0 %v1170
        %1403 = vmatprep.subr.bf16.mxu0 %v1173
        %1404 = vmatpush1.bf16.msra.mxu0 %v1172
        %1405 = vmatprep.subr.bf16.mxu0 %v1175
        %1406 = vmatpush1.bf16.msra.mxu0 %v1174
        %1407 = vmatprep.subr.bf16.mxu0 %v1177
        %1408 = vmatpush1.bf16.msra.mxu0 %v1176
        %1409 = vmatprep.subr.bf16.mxu0 %v1179
        %1410 = vmatpush1.bf16.msra.mxu0 %v1178
        %1411 = vmatprep.subr.bf16.mxu0 %v1181
        %1412 = vmatpush1.bf16.msra.mxu0 %v1180
        %1413 = vmatprep.mubr.bf16.mxu0 %v784
        %1414 = vmatmul.mubr.bf16.gmra.mrb[0].mxu0 %v783
        %v1415 = vpop.f32.mrb[0].mxu0
        %v1416 = vadd.f32 %v1373, %v1415
        %v1417 = vpop.f32.mrb[0].mxu0
        %v1418 = vadd.f32 %v1375, %v1417
        %v1419 = vpop.f32.mrb[0].mxu0
        %v1420 = vadd.f32 %v1377, %v1419
        %v1421 = vpop.f32.mrb[0].mxu0
        %v1422 = vadd.f32 %v1379, %v1421
        %1423 = vdwg.mxu0
        %1424 = vmatprep.subr.bf16.mxu0 %v1183
        %1425 = vmatpush1.bf16.msra.mxu0 %v1182
        %1426 = vmatprep.subr.bf16.mxu0 %v1185
        %1427 = vmatpush1.bf16.msra.mxu0 %v1184
        %1428 = vmatprep.subr.bf16.mxu0 %v1187
        %1429 = vmatpush1.bf16.msra.mxu0 %v1186
        %1430 = vmatprep.subr.bf16.mxu0 %v1189
        %1431 = vmatpush1.bf16.msra.mxu0 %v1188
        %1432 = vmatprep.subr.bf16.mxu0 %v1191
        %1433 = vmatpush1.bf16.msra.mxu0 %v1190
        %1434 = vmatprep.subr.bf16.mxu0 %v1193
        %1435 = vmatpush1.bf16.msra.mxu0 %v1192
        %1436 = vmatprep.subr.bf16.mxu0 %v1195
        %1437 = vmatpush1.bf16.msra.mxu0 %v1194
        %1438 = vmatprep.subr.bf16.mxu0 %v1197
        %1439 = vmatpush1.bf16.msra.mxu0 %v1196
        %1440 = vmatprep.subr.bf16.mxu0 %v1199
        %1441 = vmatpush1.bf16.msra.mxu0 %v1198
        %1442 = vmatprep.subr.bf16.mxu0 %v1201
        %1443 = vmatpush1.bf16.msra.mxu0 %v1200
        %1444 = vmatprep.subr.bf16.mxu0 %v1203
        %1445 = vmatpush1.bf16.msra.mxu0 %v1202
        %1446 = vmatprep.subr.bf16.mxu0 %v1205
        %1447 = vmatpush1.bf16.msra.mxu0 %v1204
        %1448 = vmatprep.subr.bf16.mxu0 %v1207
        %1449 = vmatpush1.bf16.msra.mxu0 %v1206
        %1450 = vmatprep.subr.bf16.mxu0 %v1209
        %1451 = vmatpush1.bf16.msra.mxu0 %v1208
        %1452 = vmatprep.subr.bf16.mxu0 %v1211
        %1453 = vmatpush1.bf16.msra.mxu0 %v1210
        %1454 = vmatprep.subr.bf16.mxu0 %v1213
        %1455 = vmatpush1.bf16.msra.mxu0 %v1212
        %1456 = vmatprep.mubr.bf16.mxu0 %v786
        %1457 = vmatmul.mubr.bf16.gmra.mrb[0].mxu0 %v785
        %v1458 = vpop.f32.mrb[0].mxu0
        %v1459 = vadd.f32 %v1416, %v1458
        %v1460 = vpop.f32.mrb[0].mxu0
        %v1461 = vadd.f32 %v1418, %v1460
        %v1462 = vpop.f32.mrb[0].mxu0
        %v1463 = vadd.f32 %v1420, %v1462
        %v1464 = vpop.f32.mrb[0].mxu0
        %v1465 = vadd.f32 %v1422, %v1464
        %1466 = vdwg.mxu0
        %1467 = vmatprep.subr.bf16.mxu0 %v1215
        %1468 = vmatpush1.bf16.msra.mxu0 %v1214
        %1469 = vmatprep.subr.bf16.mxu0 %v1217
        %1470 = vmatpush1.bf16.msra.mxu0 %v1216
        %1471 = vmatprep.subr.bf16.mxu0 %v1219
        %1472 = vmatpush1.bf16.msra.mxu0 %v1218
        %1473 = vmatprep.subr.bf16.mxu0 %v1221
        %1474 = vmatpush1.bf16.msra.mxu0 %v1220
        %1475 = vmatprep.subr.bf16.mxu0 %v1223
        %1476 = vmatpush1.bf16.msra.mxu0 %v1222
        %1477 = vmatprep.subr.bf16.mxu0 %v1225
        %1478 = vmatpush1.bf16.msra.mxu0 %v1224
        %1479 = vmatprep.subr.bf16.mxu0 0
        %1480 = vmatpush1.bf16.msra.mxu0 0
        %1481 = vmatprep.subr.bf16.mxu0 0
        %1482 = vmatpush1.bf16.msra.mxu0 0
        %1483 = vmatprep.subr.bf16.mxu0 0
        %1484 = vmatpush1.bf16.msra.mxu0 0
        %1485 = vmatprep.subr.bf16.mxu0 0
        %1486 = vmatpush1.bf16.msra.mxu0 0
        %1487 = vmatprep.subr.bf16.mxu0 0
        %1488 = vmatpush1.bf16.msra.mxu0 0
        %1489 = vmatprep.subr.bf16.mxu0 0
        %1490 = vmatpush1.bf16.msra.mxu0 0
        %1491 = vmatprep.subr.bf16.mxu0 0
        %1492 = vmatpush1.bf16.msra.mxu0 0
        %1493 = vmatprep.subr.bf16.mxu0 0
        %1494 = vmatpush1.bf16.msra.mxu0 0
        %1495 = vmatprep.subr.bf16.mxu0 0
        %1496 = vmatpush1.bf16.msra.mxu0 0
        %1497 = vmatprep.subr.bf16.mxu0 0
        %1498 = vmatpush1.bf16.msra.mxu0 0
        %1499 = vmatprep.mubr.bf16.mxu0 0
        %1500 = vmatmul.mubr.bf16.gmra.mrb[0].mxu0 %v1336
        %v1501 = vpop.f32.mrb[0].mxu0
        %v1502 = vadd.f32 %v1459, %v1501
        %v1503 = vpop.f32.mrb[0].mxu0
        %v1504 = vadd.f32 %v1461, %v1503
        %v1505 = vpop.f32.mrb[0].mxu0
        %v1506 = vadd.f32 %v1463, %v1505
        %v1507 = vpop.f32.mrb[0].mxu0
        %v1508 = vadd.f32 %v1465, %v1507
        %1509 = vdwg.mxu0
        %v1510 = vmax.f32 %v1502, 0.0
        %v1511 = vmax.f32 %v1504, 0.0
        %v1512 = vmax.f32 %v1506, 0.0
        %v1513 = vmax.f32 %v1508, 0.0
        %v1514 = vpack.c.bf16 %v1512, %v1510
        %v1515 = vpack.c.bf16 %v1513, %v1511
        %v1518 = vunpack.c.l.b16 %v1514
        %v1519 = vunpack.c.l.b16 %v1515
        %v1520 = vunpack.c.h.b16 %v1514
        %v1521 = vunpack.c.h.b16 %v1515
        %v1522 = vpack.c.b16 %v1519, %v1518
        %v1523 = vpack.c.b16 %v1521, %v1520
        %1526 = vst [vmem:[%s627] sm:$0xff] %v1522
        %1527 = vst [vmem:[%s627 + $0x8] sm:$0xff] %v1523
        %s1528 = sand.u32 %s90, 1
        %s1529 = sand.u32 %s90, 1
        %s1530 = smul.addr %s1529, 16
        %s1531 = scalar_lea.vmem [#allocation3], %s1530
        // Predicated region
        $region71: #{_lambda_.12} parent=65 // pred_check
          %p1532 = pneg %p100
        $region72: #{_lambda_.12} parent=65 // pred_check_branch
          %1534 = sbr.rel (%p1532) target = $region74
        $region73: #{_lambda_.12} parent=65 // pred_region
          %s1535 = smul.u32 2, %s14
          %s1536 = smul.addr %s1535, 4
          %s1537 = scalar_lea.vmem %s3, %s1536
          // Predicated region
          $region75: #{_lambda_.12} parent=73 // pred_check
            _
          $region76: #{_lambda_.12} parent=73 // pred_check_branch
            %1539 = sbr.rel (0) target = $region78
          $region77: #{_lambda_.12} parent=73 // pred_region
            // Predicated region
            $region79: #{_lambda_.12} parent=77 // pred_check
              _
            $region80: #{_lambda_.12} parent=77 // pred_check_branch
              %1541 = sbr.rel (0) target = $region82
            $region81: #{_lambda_.12} parent=77 // pred_region
              // Predicated region
              $region94: #{_lambda_.12} parent=81 // pred_check
                _
              $region95: #{_lambda_.12} parent=81 // pred_check_branch
                %1558 = sbr.rel (0) target = $region97
              $region96: #{_lambda_.12} parent=81 // pred_region
                loop: start=0, step=1, limit=1
                $region98: #{_lambda_.12} parent=96 // loop_pre_header
                  _
                $region99: #{_lambda_.12} parent=96 // loop_header
                  %s1560 = sphi 0, %s1564
                  %p1561 = scmp.ge.s32.totalorder %s1560, 1
                  %s1565 = sphi %s1531, %s1531
                  %s1566 = sphi %s1537, %s1537
                $region100: #{_lambda_.12} parent=96 // loop_header_branch
                  %1563 = sbr.rel (%p1561) target = $region104
                $region101: #{_lambda_.12} parent=96 // loop_body
                  %v1567 = vld [vmem:[%s1565] sm:$0xff]
                  %1568 = vst [vmem:[%s1566] sm:$0xff] %v1567
                  %v1569 = vld [vmem:[%s1565 + $0x8] sm:$0xff]
                  %1570 = vst [vmem:[%s1566 + $0x10] sm:$0xff] %v1569
                $region102: #{_lambda_.12} parent=96 // loop_footer
                  %s1564 = sadd.s32 1, %s1560
                $region103: #{_lambda_.12} parent=96 // loop_footer_branch
                  %1559 = sbr.rel target = $region99
                $region104: #{_lambda_.12} parent=96 // loop_exit
                  _
              $region97: #{_lambda_.12} parent=81 // pred_fallthru
                _
              // Predicated region
              $region105: #{_lambda_.12} parent=81 // pred_check
                _
              $region106: #{_lambda_.12} parent=81 // pred_check_branch
                %1572 = sbr.rel target = $region108
              $region107: #{_lambda_.12} parent=81 // pred_region
                _
              $region108: #{_lambda_.12} parent=81 // pred_fallthru
                _
            $region82: #{_lambda_.12} parent=77 // pred_fallthru
              _
            // Predicated region
            $region83: #{_lambda_.12} parent=77 // pred_check
              _
            $region84: #{_lambda_.12} parent=77 // pred_check_branch
              %1543 = sbr.rel target = $region86
            $region85: #{_lambda_.12} parent=77 // pred_region
              loop: start=0, step=1, limit=1
              $region87: #{_lambda_.12} parent=85 // loop_pre_header
                _
              $region88: #{_lambda_.12} parent=85 // loop_header
                %s1546 = sphi 0, %s1550
                %p1547 = scmp.ge.s32.totalorder %s1546, 1
                %s1551 = sphi %s1531, %s1531
                %s1552 = sphi %s1537, %s1537
              $region89: #{_lambda_.12} parent=85 // loop_header_branch
                %1549 = sbr.rel (%p1547) target = $region93
              $region90: #{_lambda_.12} parent=85 // loop_body
                %v1553 = vld [vmem:[%s1551] sm:$0xff]
                %1554 = vst [vmem:[%s1552] sm:$0xff] %v1553
                %v1555 = vld [vmem:[%s1551 + $0x8] sm:$0xff]
                %1556 = vst [vmem:[%s1552 + $0x10] sm:$0xff] %v1555
              $region91: #{_lambda_.12} parent=85 // loop_footer
                %s1550 = sadd.s32 1, %s1546
              $region92: #{_lambda_.12} parent=85 // loop_footer_branch
                %1545 = sbr.rel target = $region88
              $region93: #{_lambda_.12} parent=85 // loop_exit
                _
            $region86: #{_lambda_.12} parent=77 // pred_fallthru
              _
          $region78: #{_lambda_.12} parent=73 // pred_fallthru
            _
          %1573 = vnop
        $region74: #{_lambda_.12} parent=65 // pred_fallthru
          _
      $region66: #{_lambda_.12} parent=5 // pred_fallthru
        _
      %p1574 = scmp.le.s32.totalorder 2, %s9
      // Predicated region
      $region109: #{_lambda_.12} parent=5 // pred_check
        %p1575 = pneg %p1574
      $region110: #{_lambda_.12} parent=5 // pred_check_branch
        %1577 = sbr.rel (%p1575) target = $region112
      $region111: #{_lambda_.12} parent=5 // pred_region
        %s1578 = ssub.s32 %s9, 2
        // Predicated region
        $region113: #{_lambda_.12} parent=111 // pred_check
          %p1579 = pneg %p106
        $region114: #{_lambda_.12} parent=111 // pred_check_branch
          %1581 = sbr.rel (%p1579) target = $region116
        $region115: #{_lambda_.12} parent=111 // pred_region
          %s1582 = sand.u32 %s91, 1
          %s1583 = sand.u32 %s91, 1
          %s1584 = smul.addr %s1583, 16
          %s1585 = scalar_lea.vmem [#allocation3], %s1584
        $region116: #{_lambda_.12} parent=111 // pred_fallthru
          _
      $region112: #{_lambda_.12} parent=5 // pred_fallthru
        _
    $region6: #{_lambda_.12} parent=1 // loop_footer
      %s13 = sadd.s32 1, %s9
    $region7: #{_lambda_.12} parent=1 // loop_footer_branch
      %8 = sbr.rel target = $region3
    $region8: #{_lambda_.12} parent=1 // loop_exit
      _

// kernel: _lambda_.15
$region0: #{_lambda_.15}
  #allocation0 [shape = 'u32[]', space=smem, size = 0x4, offset = 0x4, fixed_abs, tag = 'smem constant byte address 0x4 - core index']
  #allocation1 [shape = 'u32[144,128]{1,0:T(1,128)}', space=vmem, size = 0x12000, scoped, tag = 'internal scratch']
  #allocation2 [shape = 'f32[16,128]{1,0:T(8,128)}', space=vmem, size = 0x2000, scoped, tag = 'scratch operand']
  %s0 = inlined_call_operand.vmem [shape: bf16[16,5120], index: 0, kind: input, shape index: {}]
  %s1 = inlined_call_operand.vmem [shape: bf16[5120,128], index: 1, kind: input, shape index: {}]
  %s2 = inlined_call_operand.vmem [shape: f32[16,1], index: 2, kind: input, shape index: {}]
  %s3 = inlined_call_operand.vmem [shape: f32[16,128], index: 3, kind: output, shape index: {}]
  %s4 = sld [smem:[#allocation0]]
  $region76: #{_lambda_.15} parent=0
    _
  %s6 = ssub.s32 1, %s4
  %s7 = scalar_select 0, %s6, %s4
  $region1: #{_lambda_.15} parent=0
    #allocation3 [shape = 'u8[65536]{0}', space=vmem, size = 0x10000, scoped, tag = 'input window, operand 0']
    loop: start=0, step=1, limit=7
    $region2: #{_lambda_.15} parent=1 // loop_pre_header
      _
    $region3: #{_lambda_.15} parent=1 // loop_header
      %s9 = sphi 0, %s13
      %p10 = scmp.ge.s32.totalorder %s9, 7
      %s16 = sphi 0, %s28
      %s17 = sphi 0, %s24
      %s18 = sphi 0, %s16
      %s19 = sphi 0, %s17
      %s20 = sphi 0, %s18
      %s21 = sphi 0, %s19
      %s31 = sphi 0, %s33
      %s34 = sphi 0, %s31
      %s35 = sphi 0, %s34
      %s51 = sphi 0, %s35
      %s59 = sphi 0, %s61
      %s62 = sphi 0, %s59
      %s63 = sphi 0, %s62
      %s79 = sphi 0, %s63
      %s83 = sphi 0, %s83
      %s85 = sphi 0, %s83
      %s86 = sphi 0, %s85
      %s100 = sphi 0, %s86
      %s106 = sphi 0, %s108
      %s109 = sphi 0, %s106
      %s110 = sphi 0, %s109
      %s126 = sphi 0, %s110
    $region4: #{_lambda_.15} parent=1 // loop_header_branch
      %12 = sbr.rel (%p10) target = $region8
    $region5: #{_lambda_.15} parent=1 // loop_body
      %s14 = ssub.s32 %s9, 1
      %s15 = ssub.s32 %s9, 2
      %s22 = sadd.s32 1, %s17
      %p23 = scmp.ge.s32.totalorder %s22, 5
      %s24 = scalar_select %p23, 0, %s22
      %s25 = sadd.s32 1, %s16
      %s26 = scalar_select %p23, %s25, %s16
      %p27 = scmp.ge.s32.totalorder %s26, 1
      %s28 = scalar_select %p27, 0, %s26
      %s29 = ssub.s32 %s17, %s24
      %p30 = scmp.eq.s32.totalorder %s29, 0
      %s32 = sadd.s32 %s31, 1
      %s33 = scalar_select %p30, %s31, %s32
      %p36 = pneg %p30
      %p37 = scmp.eq.s32.totalorder %s9, 4
      %p38 = por %p36, %p37
      %p39 = scmp.ne.s32.totalorder %s31, %s34
      %p40 = scmp.eq.s32.totalorder %s9, 0
      %p41 = por %p39, %p40
      %p42 = scmp.ne.s32.totalorder %s31, %s34
      %p43 = scmp.eq.s32.totalorder %s14, 4
      %p44 = por %p42, %p43
      %p45 = scmp.ne.s32.totalorder %s34, %s35
      %p46 = scmp.eq.s32.totalorder %s14, 0
      %p47 = por %p45, %p46
      %p48 = scmp.ne.s32.totalorder %s34, %s35
      %p49 = scmp.eq.s32.totalorder %s15, 4
      %p50 = por %p48, %p49
      %p52 = scmp.ne.s32.totalorder %s35, %s51
      %p53 = scmp.eq.s32.totalorder %s15, 0
      %p54 = por %p52, %p53
      %s55 = ssub.s32 %s17, %s24
      %s56 = ssub.s32 %s16, %s28
      %s57 = sor.u32 %s55, %s56
      %p58 = scmp.eq.s32.totalorder %s57, 0
      %s60 = sadd.s32 %s59, 1
      %s61 = scalar_select %p58, %s59, %s60
      %p64 = pneg %p58
      %p65 = scmp.eq.s32.totalorder %s9, 4
      %p66 = por %p64, %p65
      %p67 = scmp.ne.s32.totalorder %s59, %s62
      %p68 = scmp.eq.s32.totalorder %s9, 0
      %p69 = por %p67, %p68
      %p70 = scmp.ne.s32.totalorder %s59, %s62
      %p71 = scmp.eq.s32.totalorder %s14, 4
      %p72 = por %p70, %p71
      %p73 = scmp.ne.s32.totalorder %s62, %s63
      %p74 = scmp.eq.s32.totalorder %s14, 0
      %p75 = por %p73, %p74
      %p76 = scmp.ne.s32.totalorder %s62, %s63
      %p77 = scmp.eq.s32.totalorder %s15, 4
      %p78 = por %p76, %p77
      %p80 = scmp.ne.s32.totalorder %s63, %s79
      %p81 = scmp.eq.s32.totalorder %s15, 0
      %p82 = por %p80, %p81
      %s84 = sadd.s32 %s83, 1
      %p87 = scmp.eq.s32.totalorder %s9, 4
      %p88 = scmp.ne.s32.totalorder %s83, %s85
      %p89 = scmp.eq.s32.totalorder %s9, 0
      %p90 = por %p88, %p89
      %p91 = scmp.ne.s32.totalorder %s83, %s85
      %p92 = scmp.eq.s32.totalorder %s14, 4
      %p93 = por %p91, %p92
      %p94 = scmp.ne.s32.totalorder %s85, %s86
      %p95 = scmp.eq.s32.totalorder %s14, 0
      %p96 = por %p94, %p95
      %p97 = scmp.ne.s32.totalorder %s85, %s86
      %p98 = scmp.eq.s32.totalorder %s15, 4
      %p99 = por %p97, %p98
      %p101 = scmp.ne.s32.totalorder %s86, %s100
      %p102 = scmp.eq.s32.totalorder %s15, 0
      %p103 = por %p101, %p102
      %s104 = ssub.s32 %s16, %s28
      %p105 = scmp.eq.s32.totalorder %s104, 0
      %s107 = sadd.s32 %s106, 1
      %s108 = scalar_select %p105, %s106, %s107
      %p111 = pneg %p105
      %p112 = scmp.eq.s32.totalorder %s9, 4
      %p113 = por %p111, %p112
      %p114 = scmp.ne.s32.totalorder %s106, %s109
      %p115 = scmp.eq.s32.totalorder %s9, 0
      %p116 = por %p114, %p115
      %p117 = scmp.ne.s32.totalorder %s106, %s109
      %p118 = scmp.eq.s32.totalorder %s14, 4
      %p119 = por %p117, %p118
      %p120 = scmp.ne.s32.totalorder %s109, %s110
      %p121 = scmp.eq.s32.totalorder %s14, 0
      %p122 = por %p120, %p121
      %p123 = scmp.ne.s32.totalorder %s109, %s110
      %p124 = scmp.eq.s32.totalorder %s15, 4
      %p125 = por %p123, %p124
      %p127 = scmp.ne.s32.totalorder %s110, %s126
      %p128 = scmp.eq.s32.totalorder %s15, 0
      %p129 = por %p127, %p128
      %p130 = scmp.le.s32.totalorder 1, %s9
      %p131 = scmp.lt.s32.totalorder %s9, 6
      %p132 = pnand %p130, %p131
      %p133 = pneg %p132
      // Predicated region
      $region9: #{_lambda_.15} parent=5 // pred_check
        _
      $region10: #{_lambda_.15} parent=5 // pred_check_branch
        %135 = sbr.rel (%p132) target = $region12
      $region11: #{_lambda_.15} parent=5 // pred_region
        %s136 = ssub.s32 %s9, 1
        // Predicated region
        $region13: #{_lambda_.15} parent=11 // pred_check
          %p137 = pneg %p96
        $region14: #{_lambda_.15} parent=11 // pred_check_branch
          %139 = sbr.rel (%p137) target = $region16
        $region15: #{_lambda_.15} parent=11 // pred_region
          _
        $region16: #{_lambda_.15} parent=11 // pred_fallthru
          _
      $region12: #{_lambda_.15} parent=5 // pred_fallthru
        _
      %p140 = scmp.lt.s32.totalorder %s9, 5
      // Predicated region
      $region17: #{_lambda_.15} parent=5 // pred_check
        %p141 = pneg %p140
      $region18: #{_lambda_.15} parent=5 // pred_check_branch
        %143 = sbr.rel (%p141) target = $region20
      $region19: #{_lambda_.15} parent=5 // pred_region
        // Predicated region
        $region21: #{_lambda_.15} parent=19 // pred_check
          %p144 = pneg %p41
        $region22: #{_lambda_.15} parent=19 // pred_check_branch
          %146 = sbr.rel (%p144) target = $region24
        $region23: #{_lambda_.15} parent=19 // pred_region
          %s147 = sand.u32 %s31, 1
          %s148 = sand.u32 %s31, 1
          %s149 = smul.addr %s148, 64
          %s150 = scalar_lea.vmem [#allocation3], %s149
          %s151 = smul.u32 8, %s17
          %s152 = smul.addr %s151, 4
          %s153 = scalar_lea.vmem %s0, %s152
          // Predicated region
          $region25: #{_lambda_.15} parent=23 // pred_check
            _
          $region26: #{_lambda_.15} parent=23 // pred_check_branch
            %155 = sbr.rel (0) target = $region28
          $region27: #{_lambda_.15} parent=23 // pred_region
            // Predicated region
            $region29: #{_lambda_.15} parent=27 // pred_check
              _
            $region30: #{_lambda_.15} parent=27 // pred_check_branch
              %157 = sbr.rel (0) target = $region32
            $region31: #{_lambda_.15} parent=27 // pred_region
              loop: start=0, step=1, limit=1
              $region33: #{_lambda_.15} parent=31 // loop_pre_header
                _
              $region34: #{_lambda_.15} parent=31 // loop_header
                %s159 = sphi 0, %s163
                %p160 = scmp.ge.s32.totalorder %s159, 1
                %s164 = sphi %s153, %s153
                %s165 = sphi %s150, %s150
              $region35: #{_lambda_.15} parent=31 // loop_header_branch
                %162 = sbr.rel (%p160) target = $region39
              $region36: #{_lambda_.15} parent=31 // loop_body
                %v166 = vld [vmem:[%s164] sm:$0xff]
                %167 = vst [vmem:[%s165] sm:$0xff] %v166
                %v168 = vld [vmem:[%s164 + $0x8] sm:$0xff]
                %169 = vst [vmem:[%s165 + $0x8] sm:$0xff] %v168
                %v170 = vld [vmem:[%s164 + $0x10] sm:$0xff]
                %171 = vst [vmem:[%s165 + $0x10] sm:$0xff] %v170
                %v172 = vld [vmem:[%s164 + $0x18] sm:$0xff]
                %173 = vst [vmem:[%s165 + $0x18] sm:$0xff] %v172
                %v174 = vld [vmem:[%s164 + $0xa0] sm:$0xff]
                %175 = vst [vmem:[%s165 + $0x20] sm:$0xff] %v174
                %v176 = vld [vmem:[%s164 + $0xa8] sm:$0xff]
                %177 = vst [vmem:[%s165 + $0x28] sm:$0xff] %v176
                %v178 = vld [vmem:[%s164 + $0xb0] sm:$0xff]
                %179 = vst [vmem:[%s165 + $0x30] sm:$0xff] %v178
                %v180 = vld [vmem:[%s164 + $0xb8] sm:$0xff]
                %181 = vst [vmem:[%s165 + $0x38] sm:$0xff] %v180
              $region37: #{_lambda_.15} parent=31 // loop_footer
                %s163 = sadd.s32 1, %s159
              $region38: #{_lambda_.15} parent=31 // loop_footer_branch
                %158 = sbr.rel target = $region34
              $region39: #{_lambda_.15} parent=31 // loop_exit
                _
            $region32: #{_lambda_.15} parent=27 // pred_fallthru
              _
            // Predicated region
            $region40: #{_lambda_.15} parent=27 // pred_check
              _
            $region41: #{_lambda_.15} parent=27 // pred_check_branch
              %183 = sbr.rel target = $region43
            $region42: #{_lambda_.15} parent=27 // pred_region
              _
            $region43: #{_lambda_.15} parent=27 // pred_fallthru
              _
          $region28: #{_lambda_.15} parent=23 // pred_fallthru
            _
          %184 = vnop
        $region24: #{_lambda_.15} parent=19 // pred_fallthru
          _
        // Predicated region
        $region44: #{_lambda_.15} parent=19 // pred_check
          %p185 = pneg %p69
        $region45: #{_lambda_.15} parent=19 // pred_check_branch
          %187 = sbr.rel (%p185) target = $region47
        $region46: #{_lambda_.15} parent=19 // pred_region
          %s188 = smul.u32 128, %s17
          %p189 = scmp.lt.s32.totalorder %s188, 639
          %s190 = scalar_select %p189, %s188, 639
          %p191 = scmp.lt.s32.totalorder %s16, 0
          %s192 = scalar_select %p191, %s16, 0
          %s193 = sadd.s32 %s192, %s190
          %s194 = smul.addr %s193, 4
          %s195 = scalar_lea.vmem %s1, %s194
          %s196 = smul.u32 128, %s17
        $region47: #{_lambda_.15} parent=19 // pred_fallthru
          _
      $region20: #{_lambda_.15} parent=5 // pred_fallthru
        _
      %p197 = scmp.le.s32.totalorder 1, %s9
      %p198 = scmp.lt.s32.totalorder %s9, 6
      %p199 = pnand %p197, %p198
      %p200 = pneg %p199
      // Predicated region
      $region48: #{_lambda_.15} parent=5 // pred_check
        _
      $region49: #{_lambda_.15} parent=5 // pred_check_branch
        %202 = sbr.rel (%p199) target = $region51
      $region50: #{_lambda_.15} parent=5 // pred_region
        %s203 = ssub.s32 %s9, 1
        %s204 = sand.u32 %s34, 1
        %s205 = sand.u32 %s34, 1
        %s206 = smul.addr %s205, 64
        %s207 = scalar_lea.vmem [#allocation3], %s206
        // Predicated region
        $region52: #{_lambda_.15} parent=50 // pred_check
          %p208 = pneg %p47
        $region53: #{_lambda_.15} parent=50 // pred_check_branch
          %210 = sbr.rel (%p208) target = $region55
        $region54: #{_lambda_.15} parent=50 // pred_region
          _
        $region55: #{_lambda_.15} parent=50 // pred_fallthru
          _
        %s211 = sand.u32 %s34, 1
        %s212 = sand.u32 %s34, 1
        %s213 = smul.addr %s212, 64
        %s214 = scalar_lea.vmem [#allocation3], %s213
        %p215 = pneg %p47
        %p216 = pneg %p44
        %s217 = smul.u32 128, %s19
        %p218 = scmp.lt.s32.totalorder %s217, 639
        %s219 = scalar_select %p218, %s217, 639
        %p220 = scmp.lt.s32.totalorder %s18, 0
        %s221 = scalar_select %p220, %s18, 0
        %s222 = sadd.s32 %s221, %s219
        %s223 = smul.addr %s222, 4
        %s224 = scalar_lea.vmem %s1, %s223
        %p225 = pneg %p75
        %p226 = pneg %p72
        %p227 = pneg %p96
        %p228 = pneg %p93
        %p229 = pneg %p122
        %p230 = pneg %p119
        %p231 = scmp.lt.s32.totalorder %s18, 0
        %s232 = scalar_select %p231, %s18, 0
        %s233 = smul.addr %s232, 8
        %s234 = scalar_lea.vmem %s3, %s233
        %s235 = smul.u32 8, %s19
        %s236 = smul.u32 128, %s19
        %p237 = scmp.lt.s32.totalorder %s236, 639
        %s238 = scalar_select %p237, %s236, 639
        %p239 = scmp.lt.s32.totalorder %s18, 0
        %s240 = scalar_select %p239, %s18, 0
        %s241 = sadd.s32 %s240, %s238
        %s242 = smul.addr %s241, 4
        %s243 = scalar_lea.vmem %s1, %s242
        %s244 = smul.u32 128, %s19
        %p245 = scmp.lt.s32.totalorder %s18, 0
        %s246 = scalar_select %p245, %s18, 0
        %s247 = smul.addr %s246, 8
        %s248 = scalar_lea.vmem %s3, %s247
        %p250 = scmp.eq.s32.totalorder %s19, 0
        // Predicated region
        $region56: #{_lambda_.15} parent=50 // pred_check
          %p251 = pneg %p250
        $region57: #{_lambda_.15} parent=50 // pred_check_branch
          %253 = sbr.rel (%p251) target = $region59
        $region58: #{_lambda_.15} parent=50 // pred_region
          %254 = vst [vmem:[#allocation2] sm:$0xff] 0.0
          %255 = vst [vmem:[#allocation2 + $0x8] sm:$0xff] 0.0
        $region59: #{_lambda_.15} parent=50 // pred_fallthru
          _
        %v256 = vld [vmem:[#allocation2] sm:$0xff]
        %v257 = vld [vmem:[#allocation2 + $0x8] sm:$0xff]
        %v258 = vld [vmem:[%s207] sm:$0xff]
        %v259 = vld [vmem:[%s207 + $0x8] sm:$0xff]
        %v260 = vld [vmem:[%s207 + $0x10] sm:$0xff]
        %v261 = vld [vmem:[%s207 + $0x18] sm:$0xff]
        %v262 = vld [vmem:[%s207 + $0x20] sm:$0xff]
        %v263 = vld [vmem:[%s207 + $0x28] sm:$0xff]
        %v264 = vld [vmem:[%s207 + $0x30] sm:$0xff]
        %v265 = vld [vmem:[%s207 + $0x38] sm:$0xff]
        %v266 = vld [vmem:[%s243] sm:$0xf]
        %v267 = vld [vmem:[%s243 + $0x4] sm:$0xf]
        %v268 = vld [vmem:[%s243 + $0x8] sm:$0xf]
        %v269 = vld [vmem:[%s243 + $0xc] sm:$0xf]
        %v270 = vld [vmem:[%s243 + $0x10] sm:$0xf]
        %v271 = vld [vmem:[%s243 + $0x14] sm:$0xf]
        %v272 = vld [vmem:[%s243 + $0x18] sm:$0xf]
        %v273 = vld [vmem:[%s243 + $0x1c] sm:$0xf]
        %v274 = vld [vmem:[%s243 + $0x20] sm:$0xf]
        %v275 = vld [vmem:[%s243 + $0x24] sm:$0xf]
        %v276 = vld [vmem:[%s243 + $0x28] sm:$0xf]
        %v277 = vld [vmem:[%s243 + $0x2c] sm:$0xf]
        %v278 = vld [vmem:[%s243 + $0x30] sm:$0xf]
        %v279 = vld [vmem:[%s243 + $0x34] sm:$0xf]
        %v280 = vld [vmem:[%s243 + $0x38] sm:$0xf]
        %v281 = vld [vmem:[%s243 + $0x3c] sm:$0xf]
        %v282 = vld [vmem:[%s243 + $0x40] sm:$0xf]
        %v283 = vld [vmem:[%s243 + $0x44] sm:$0xf]
        %v284 = vld [vmem:[%s243 + $0x48] sm:$0xf]
        %v285 = vld [vmem:[%s243 + $0x4c] sm:$0xf]
        %v286 = vld [vmem:[%s243 + $0x50] sm:$0xf]
        %v287 = vld [vmem:[%s243 + $0x54] sm:$0xf]
        %v288 = vld [vmem:[%s243 + $0x58] sm:$0xf]
        %v289 = vld [vmem:[%s243 + $0x5c] sm:$0xf]
        %v290 = vld [vmem:[%s243 + $0x60] sm:$0xf]
        %v291 = vld [vmem:[%s243 + $0x64] sm:$0xf]
        %v292 = vld [vmem:[%s243 + $0x68] sm:$0xf]
        %v293 = vld [vmem:[%s243 + $0x6c] sm:$0xf]
        %v294 = vld [vmem:[%s243 + $0x70] sm:$0xf]
        %v295 = vld [vmem:[%s243 + $0x74] sm:$0xf]
        %v296 = vld [vmem:[%s243 + $0x78] sm:$0xf]
        %v297 = vld [vmem:[%s243 + $0x7c] sm:$0xf]
        %v298 = vld [vmem:[%s243 + $0x80] sm:$0xf]
        %v299 = vld [vmem:[%s243 + $0x84] sm:$0xf]
        %v300 = vld [vmem:[%s243 + $0x88] sm:$0xf]
        %v301 = vld [vmem:[%s243 + $0x8c] sm:$0xf]
        %v302 = vld [vmem:[%s243 + $0x90] sm:$0xf]
        %v303 = vld [vmem:[%s243 + $0x94] sm:$0xf]
        %v304 = vld [vmem:[%s243 + $0x98] sm:$0xf]
        %v305 = vld [vmem:[%s243 + $0x9c] sm:$0xf]
        %v306 = vld [vmem:[%s243 + $0xa0] sm:$0xf]
        %v307 = vld [vmem:[%s243 + $0xa4] sm:$0xf]
        %v308 = vld [vmem:[%s243 + $0xa8] sm:$0xf]
        %v309 = vld [vmem:[%s243 + $0xac] sm:$0xf]
        %v310 = vld [vmem:[%s243 + $0xb0] sm:$0xf]
        %v311 = vld [vmem:[%s243 + $0xb4] sm:$0xf]
        %v312 = vld [vmem:[%s243 + $0xb8] sm:$0xf]
        %v313 = vld [vmem:[%s243 + $0xbc] sm:$0xf]
        %v314 = vld [vmem:[%s243 + $0xc0] sm:$0xf]
        %v315 = vld [vmem:[%s243 + $0xc4] sm:$0xf]
        %v316 = vld [vmem:[%s243 + $0xc8] sm:$0xf]
        %v317 = vld [vmem:[%s243 + $0xcc] sm:$0xf]
        %v318 = vld [vmem:[%s243 + $0xd0] sm:$0xf]
        %v319 = vld [vmem:[%s243 + $0xd4] sm:$0xf]
        %v320 = vld [vmem:[%s243 + $0xd8] sm:$0xf]
        %v321 = vld [vmem:[%s243 + $0xdc] sm:$0xf]
        %v322 = vld [vmem:[%s243 + $0xe0] sm:$0xf]
        %v323 = vld [vmem:[%s243 + $0xe4] sm:$0xf]
        %v324 = vld [vmem:[%s243 + $0xe8] sm:$0xf]
        %v325 = vld [vmem:[%s243 + $0xec] sm:$0xf]
        %v326 = vld [vmem:[%s243 + $0xf0] sm:$0xf]
        %v327 = vld [vmem:[%s243 + $0xf4] sm:$0xf]
        %v328 = vld [vmem:[%s243 + $0xf8] sm:$0xf]
        %v329 = vld [vmem:[%s243 + $0xfc] sm:$0xf]
        %v330 = vld [vmem:[%s243 + $0x100] sm:$0xf]
        %v331 = vld [vmem:[%s243 + $0x104] sm:$0xf]
        %v332 = vld [vmem:[%s243 + $0x108] sm:$0xf]
        %v333 = vld [vmem:[%s243 + $0x10c] sm:$0xf]
        %v334 = vld [vmem:[%s243 + $0x110] sm:$0xf]
        %v335 = vld [vmem:[%s243 + $0x114] sm:$0xf]
        %v336 = vld [vmem:[%s243 + $0x118] sm:$0xf]
        %v337 = vld [vmem:[%s243 + $0x11c] sm:$0xf]
        %v338 = vld [vmem:[%s243 + $0x120] sm:$0xf]
        %v339 = vld [vmem:[%s243 + $0x124] sm:$0xf]
        %v340 = vld [vmem:[%s243 + $0x128] sm:$0xf]
        %v341 = vld [vmem:[%s243 + $0x12c] sm:$0xf]
        %v342 = vld [vmem:[%s243 + $0x130] sm:$0xf]
        %v343 = vld [vmem:[%s243 + $0x134] sm:$0xf]
        %v344 = vld [vmem:[%s243 + $0x138] sm:$0xf]
        %v345 = vld [vmem:[%s243 + $0x13c] sm:$0xf]
        %v346 = vld [vmem:[%s243 + $0x140] sm:$0xf]
        %v347 = vld [vmem:[%s243 + $0x144] sm:$0xf]
        %v348 = vld [vmem:[%s243 + $0x148] sm:$0xf]
        %v349 = vld [vmem:[%s243 + $0x14c] sm:$0xf]
        %v350 = vld [vmem:[%s243 + $0x150] sm:$0xf]
        %v351 = vld [vmem:[%s243 + $0x154] sm:$0xf]
        %v352 = vld [vmem:[%s243 + $0x158] sm:$0xf]
        %v353 = vld [vmem:[%s243 + $0x15c] sm:$0xf]
        %v354 = vld [vmem:[%s243 + $0x160] sm:$0xf]
        %v355 = vld [vmem:[%s243 + $0x164] sm:$0xf]
        %v356 = vld [vmem:[%s243 + $0x168] sm:$0xf]
        %v357 = vld [vmem:[%s243 + $0x16c] sm:$0xf]
        %v358 = vld [vmem:[%s243 + $0x170] sm:$0xf]
        %v359 = vld [vmem:[%s243 + $0x174] sm:$0xf]
        %v360 = vld [vmem:[%s243 + $0x178] sm:$0xf]
        %v361 = vld [vmem:[%s243 + $0x17c] sm:$0xf]
        %v362 = vld [vmem:[%s243 + $0x180] sm:$0xf]
        %v363 = vld [vmem:[%s243 + $0x184] sm:$0xf]
        %v364 = vld [vmem:[%s243 + $0x188] sm:$0xf]
        %v365 = vld [vmem:[%s243 + $0x18c] sm:$0xf]
        %v366 = vld [vmem:[%s243 + $0x190] sm:$0xf]
        %v367 = vld [vmem:[%s243 + $0x194] sm:$0xf]
        %v368 = vld [vmem:[%s243 + $0x198] sm:$0xf]
        %v369 = vld [vmem:[%s243 + $0x19c] sm:$0xf]
        %v370 = vld [vmem:[%s243 + $0x1a0] sm:$0xf]
        %v371 = vld [vmem:[%s243 + $0x1a4] sm:$0xf]
        %v372 = vld [vmem:[%s243 + $0x1a8] sm:$0xf]
        %v373 = vld [vmem:[%s243 + $0x1ac] sm:$0xf]
        %v374 = vld [vmem:[%s243 + $0x1b0] sm:$0xf]
        %v375 = vld [vmem:[%s243 + $0x1b4] sm:$0xf]
        %v376 = vld [vmem:[%s243 + $0x1b8] sm:$0xf]
        %v377 = vld [vmem:[%s243 + $0x1bc] sm:$0xf]
        %v378 = vld [vmem:[%s243 + $0x1c0] sm:$0xf]
        %v379 = vld [vmem:[%s243 + $0x1c4] sm:$0xf]
        %v380 = vld [vmem:[%s243 + $0x1c8] sm:$0xf]
        %v381 = vld [vmem:[%s243 + $0x1cc] sm:$0xf]
        %v382 = vld [vmem:[%s243 + $0x1d0] sm:$0xf]
        %v383 = vld [vmem:[%s243 + $0x1d4] sm:$0xf]
        %v384 = vld [vmem:[%s243 + $0x1d8] sm:$0xf]
        %v385 = vld [vmem:[%s243 + $0x1dc] sm:$0xf]
        %v386 = vld [vmem:[%s243 + $0x1e0] sm:$0xf]
        %v387 = vld [vmem:[%s243 + $0x1e4] sm:$0xf]
        %v388 = vld [vmem:[%s243 + $0x1e8] sm:$0xf]
        %v389 = vld [vmem:[%s243 + $0x1ec] sm:$0xf]
        %v390 = vld [vmem:[%s243 + $0x1f0] sm:$0xf]
        %v391 = vld [vmem:[%s243 + $0x1f4] sm:$0xf]
        %v392 = vld [vmem:[%s243 + $0x1f8] sm:$0xf]
        %v393 = vld [vmem:[%s243 + $0x1fc] sm:$0xf]
        %v402 = vunpack.c.l.b16 %v258
        %v403 = vunpack.c.h.b16 %v258
        %v404 = vunpack.c.l.b16 %v259
        %v405 = vunpack.c.h.b16 %v259
        %v406 = vunpack.c.l.b16 %v260
        %v407 = vunpack.c.h.b16 %v260
        %v408 = vunpack.c.l.b16 %v261
        %v409 = vunpack.c.h.b16 %v261
        %v410 = vunpack.c.l.b16 %v262
        %v411 = vunpack.c.h.b16 %v262
        %v412 = vunpack.c.l.b16 %v263
        %v413 = vunpack.c.h.b16 %v263
        %v414 = vunpack.c.l.b16 %v264
        %v415 = vunpack.c.h.b16 %v264
        %v416 = vunpack.c.l.b16 %v265
        %v417 = vunpack.c.h.b16 %v265
        %v418 = vpack.c.b16 %v410, %v402
        %v419 = vpack.c.b16 %v411, %v403
        %v420 = vpack.c.b16 %v412, %v404
        %v421 = vpack.c.b16 %v413, %v405
        %v422 = vpack.c.b16 %v414, %v406
        %v423 = vpack.c.b16 %v415, %v407
        %v424 = vpack.c.b16 %v416, %v408
        %v425 = vpack.c.b16 %v417, %v409
        %v562 = vunpack.c.l.b16 %v266
        %v563 = vunpack.c.l.b16 %v267
        %v564 = vunpack.c.l.b16 %v268
        %v565 = vunpack.c.l.b16 %v269
        %v566 = vunpack.c.l.b16 %v270
        %v567 = vunpack.c.l.b16 %v271
        %v568 = vunpack.c.l.b16 %v272
        %v569 = vunpack.c.l.b16 %v273
        %v570 = vunpack.c.l.b16 %v274
        %v571 = vunpack.c.l.b16 %v275
        %v572 = vunpack.c.l.b16 %v276
        %v573 = vunpack.c.l.b16 %v277
        %v574 = vunpack.c.l.b16 %v278
        %v575 = vunpack.c.l.b16 %v279
        %v576 = vunpack.c.l.b16 %v280
        %v577 = vunpack.c.l.b16 %v281
        %v578 = vunpack.c.l.b16 %v282
        %v579 = vunpack.c.l.b16 %v283
        %v580 = vunpack.c.l.b16 %v284
        %v581 = vunpack.c.l.b16 %v285
        %v582 = vunpack.c.l.b16 %v286
        %v583 = vunpack.c.l.b16 %v287
        %v584 = vunpack.c.l.b16 %v288
        %v585 = vunpack.c.l.b16 %v289
        %v586 = vunpack.c.l.b16 %v290
        %v587 = vunpack.c.l.b16 %v291
        %v588 = vunpack.c.l.b16 %v292
        %v589 = vunpack.c.l.b16 %v293
        %v590 = vunpack.c.l.b16 %v294
        %v591 = vunpack.c.l.b16 %v295
        %v592 = vunpack.c.l.b16 %v296
        %v593 = vunpack.c.l.b16 %v297
        %v594 = vunpack.c.l.b16 %v298
        %v595 = vunpack.c.l.b16 %v299
        %v596 = vunpack.c.l.b16 %v300
        %v597 = vunpack.c.l.b16 %v301
        %v598 = vunpack.c.l.b16 %v302
        %v599 = vunpack.c.l.b16 %v303
        %v600 = vunpack.c.l.b16 %v304
        %v601 = vunpack.c.l.b16 %v305
        %v602 = vunpack.c.l.b16 %v306
        %v603 = vunpack.c.l.b16 %v307
        %v604 = vunpack.c.l.b16 %v308
        %v605 = vunpack.c.l.b16 %v309
        %v606 = vunpack.c.l.b16 %v310
        %v607 = vunpack.c.l.b16 %v311
        %v608 = vunpack.c.l.b16 %v312
        %v609 = vunpack.c.l.b16 %v313
        %v610 = vunpack.c.l.b16 %v314
        %v611 = vunpack.c.l.b16 %v315
        %v612 = vunpack.c.l.b16 %v316
        %v613 = vunpack.c.l.b16 %v317
        %v614 = vunpack.c.l.b16 %v318
        %v615 = vunpack.c.l.b16 %v319
        %v616 = vunpack.c.l.b16 %v320
        %v617 = vunpack.c.l.b16 %v321
        %v618 = vunpack.c.l.b16 %v322
        %v619 = vunpack.c.l.b16 %v323
        %v620 = vunpack.c.l.b16 %v324
        %v621 = vunpack.c.l.b16 %v325
        %v622 = vunpack.c.l.b16 %v326
        %v623 = vunpack.c.l.b16 %v327
        %v624 = vunpack.c.l.b16 %v328
        %v625 = vunpack.c.l.b16 %v329
        %v626 = vunpack.c.l.b16 %v330
        %v627 = vunpack.c.l.b16 %v331
        %v628 = vunpack.c.l.b16 %v332
        %v629 = vunpack.c.l.b16 %v333
        %v630 = vunpack.c.l.b16 %v334
        %v631 = vunpack.c.l.b16 %v335
        %v632 = vunpack.c.l.b16 %v336
        %v633 = vunpack.c.l.b16 %v337
        %v634 = vunpack.c.l.b16 %v338
        %v635 = vunpack.c.l.b16 %v339
        %v636 = vunpack.c.l.b16 %v340
        %v637 = vunpack.c.l.b16 %v341
        %v638 = vunpack.c.l.b16 %v342
        %v639 = vunpack.c.l.b16 %v343
        %v640 = vunpack.c.l.b16 %v344
        %v641 = vunpack.c.l.b16 %v345
        %v642 = vunpack.c.l.b16 %v346
        %v643 = vunpack.c.l.b16 %v347
        %v644 = vunpack.c.l.b16 %v348
        %v645 = vunpack.c.l.b16 %v349
        %v646 = vunpack.c.l.b16 %v350
        %v647 = vunpack.c.l.b16 %v351
        %v648 = vunpack.c.l.b16 %v352
        %v649 = vunpack.c.l.b16 %v353
        %v650 = vunpack.c.l.b16 %v354
        %v651 = vunpack.c.l.b16 %v355
        %v652 = vunpack.c.l.b16 %v356
        %v653 = vunpack.c.l.b16 %v357
        %v654 = vunpack.c.l.b16 %v358
        %v655 = vunpack.c.l.b16 %v359
        %v656 = vunpack.c.l.b16 %v360
        %v657 = vunpack.c.l.b16 %v361
        %v658 = vunpack.c.l.b16 %v362
        %v659 = vunpack.c.l.b16 %v363
        %v660 = vunpack.c.l.b16 %v364
        %v661 = vunpack.c.l.b16 %v365
        %v662 = vunpack.c.l.b16 %v366
        %v663 = vunpack.c.l.b16 %v367
        %v664 = vunpack.c.l.b16 %v368
        %v665 = vunpack.c.l.b16 %v369
        %v666 = vunpack.c.l.b16 %v370
        %v667 = vunpack.c.l.b16 %v371
        %v668 = vunpack.c.l.b16 %v372
        %v669 = vunpack.c.l.b16 %v373
        %v670 = vunpack.c.l.b16 %v374
        %v671 = vunpack.c.l.b16 %v375
        %v672 = vunpack.c.l.b16 %v376
        %v673 = vunpack.c.l.b16 %v377
        %v674 = vunpack.c.l.b16 %v378
        %v675 = vunpack.c.l.b16 %v379
        %v676 = vunpack.c.l.b16 %v380
        %v677 = vunpack.c.l.b16 %v381
        %v678 = vunpack.c.l.b16 %v382
        %v679 = vunpack.c.l.b16 %v383
        %v680 = vunpack.c.l.b16 %v384
        %v681 = vunpack.c.l.b16 %v385
        %v682 = vunpack.c.l.b16 %v386
        %v683 = vunpack.c.l.b16 %v387
        %v684 = vunpack.c.l.b16 %v388
        %v685 = vunpack.c.l.b16 %v389
        %v686 = vunpack.c.l.b16 %v390
        %v687 = vunpack.c.l.b16 %v391
        %v688 = vunpack.c.l.b16 %v392
        %v689 = vunpack.c.l.b16 %v393
        %v690 = vpack.c.b16 %v563, %v562
        %v691 = vpack.c.b16 %v565, %v564
        %v692 = vpack.c.b16 %v567, %v566
        %v693 = vpack.c.b16 %v569, %v568
        %v694 = vpack.c.b16 %v571, %v570
        %v695 = vpack.c.b16 %v573, %v572
        %v696 = vpack.c.b16 %v575, %v574
        %v697 = vpack.c.b16 %v577, %v576
        %v698 = vpack.c.b16 %v579, %v578
        %v699 = vpack.c.b16 %v581, %v580
        %v700 = vpack.c.b16 %v583, %v582
        %v701 = vpack.c.b16 %v585, %v584
        %v702 = vpack.c.b16 %v587, %v586
        %v703 = vpack.c.b16 %v589, %v588
        %v704 = vpack.c.b16 %v591, %v590
        %v705 = vpack.c.b16 %v593, %v592
        %v706 = vpack.c.b16 %v595, %v594
        %v707 = vpack.c.b16 %v597, %v596
        %v708 = vpack.c.b16 %v599, %v598
        %v709 = vpack.c.b16 %v601, %v600
        %v710 = vpack.c.b16 %v603, %v602
        %v711 = vpack.c.b16 %v605, %v604
        %v712 = vpack.c.b16 %v607, %v606
        %v713 = vpack.c.b16 %v609, %v608
        %v714 = vpack.c.b16 %v611, %v610
        %v715 = vpack.c.b16 %v613, %v612
        %v716 = vpack.c.b16 %v615, %v614
        %v717 = vpack.c.b16 %v617, %v616
        %v718 = vpack.c.b16 %v619, %v618
        %v719 = vpack.c.b16 %v621, %v620
        %v720 = vpack.c.b16 %v623, %v622
        %v721 = vpack.c.b16 %v625, %v624
        %v722 = vpack.c.b16 %v627, %v626
        %v723 = vpack.c.b16 %v629, %v628
        %v724 = vpack.c.b16 %v631, %v630
        %v725 = vpack.c.b16 %v633, %v632
        %v726 = vpack.c.b16 %v635, %v634
        %v727 = vpack.c.b16 %v637, %v636
        %v728 = vpack.c.b16 %v639, %v638
        %v729 = vpack.c.b16 %v641, %v640
        %v730 = vpack.c.b16 %v643, %v642
        %v731 = vpack.c.b16 %v645, %v644
        %v732 = vpack.c.b16 %v647, %v646
        %v733 = vpack.c.b16 %v649, %v648
        %v734 = vpack.c.b16 %v651, %v650
        %v735 = vpack.c.b16 %v653, %v652
        %v736 = vpack.c.b16 %v655, %v654
        %v737 = vpack.c.b16 %v657, %v656
        %v738 = vpack.c.b16 %v659, %v658
        %v739 = vpack.c.b16 %v661, %v660
        %v740 = vpack.c.b16 %v663, %v662
        %v741 = vpack.c.b16 %v665, %v664
        %v742 = vpack.c.b16 %v667, %v666
        %v743 = vpack.c.b16 %v669, %v668
        %v744 = vpack.c.b16 %v671, %v670
        %v745 = vpack.c.b16 %v673, %v672
        %v746 = vpack.c.b16 %v675, %v674
        %v747 = vpack.c.b16 %v677, %v676
        %v748 = vpack.c.b16 %v679, %v678
        %v749 = vpack.c.b16 %v681, %v680
        %v750 = vpack.c.b16 %v683, %v682
        %v751 = vpack.c.b16 %v685, %v684
        %v752 = vpack.c.b16 %v687, %v686
        %v753 = vpack.c.b16 %v689, %v688
        %818 = vmatprep.subr.bf16.mxu0 0
        %819 = vmatpush1.bf16.msra.mxu0 %v690
        %820 = vmatprep.subr.bf16.mxu0 0
        %821 = vmatpush1.bf16.msra.mxu0 %v691
        %822 = vmatprep.subr.bf16.mxu0 0
        %823 = vmatpush1.bf16.msra.mxu0 %v692
        %824 = vmatprep.subr.bf16.mxu0 0
        %825 = vmatpush1.bf16.msra.mxu0 %v693
        %826 = vmatprep.subr.bf16.mxu0 0
        %827 = vmatpush1.bf16.msra.mxu0 %v694
        %828 = vmatprep.subr.bf16.mxu0 0
        %829 = vmatpush1.bf16.msra.mxu0 %v695
        %830 = vmatprep.subr.bf16.mxu0 0
        %831 = vmatpush1.bf16.msra.mxu0 %v696
        %832 = vmatprep.subr.bf16.mxu0 0
        %833 = vmatpush1.bf16.msra.mxu0 %v697
        %834 = vmatprep.subr.bf16.mxu0 0
        %835 = vmatpush1.bf16.msra.mxu0 %v698
        %836 = vmatprep.subr.bf16.mxu0 0
        %837 = vmatpush1.bf16.msra.mxu0 %v699
        %838 = vmatprep.subr.bf16.mxu0 0
        %839 = vmatpush1.bf16.msra.mxu0 %v700
        %840 = vmatprep.subr.bf16.mxu0 0
        %841 = vmatpush1.bf16.msra.mxu0 %v701
        %842 = vmatprep.subr.bf16.mxu0 0
        %843 = vmatpush1.bf16.msra.mxu0 %v702
        %844 = vmatprep.subr.bf16.mxu0 0
        %845 = vmatpush1.bf16.msra.mxu0 %v703
        %846 = vmatprep.subr.bf16.mxu0 0
        %847 = vmatpush1.bf16.msra.mxu0 %v704
        %848 = vmatprep.subr.bf16.mxu0 0
        %849 = vmatpush1.bf16.msra.mxu0 %v705
        %850 = vmatprep.mubr.bf16.mxu0 %v419
        %851 = vmatmul.mubr.bf16.gmra.mrb[0].mxu0 %v418
        %v852 = vpop.f32.mrb[0].mxu0
        %v853 = vadd.f32 0.0, %v852
        %v854 = vpop.f32.mrb[0].mxu0
        %v855 = vpop.f32.mrb[0].mxu0
        %v856 = vadd.f32 0.0, %v855
        %v857 = vpop.f32.mrb[0].mxu0
        %858 = vdwg.mxu0
        %859 = vmatprep.subr.bf16.mxu0 0
        %860 = vmatpush1.bf16.msra.mxu0 %v706
        %861 = vmatprep.subr.bf16.mxu0 0
        %862 = vmatpush1.bf16.msra.mxu0 %v707
        %863 = vmatprep.subr.bf16.mxu0 0
        %864 = vmatpush1.bf16.msra.mxu0 %v708
        %865 = vmatprep.subr.bf16.mxu0 0
        %866 = vmatpush1.bf16.msra.mxu0 %v709
        %867 = vmatprep.subr.bf16.mxu0 0
        %868 = vmatpush1.bf16.msra.mxu0 %v710
        %869 = vmatprep.subr.bf16.mxu0 0
        %870 = vmatpush1.bf16.msra.mxu0 %v711
        %871 = vmatprep.subr.bf16.mxu0 0
        %872 = vmatpush1.bf16.msra.mxu0 %v712
        %873 = vmatprep.subr.bf16.mxu0 0
        %874 = vmatpush1.bf16.msra.mxu0 %v713
        %875 = vmatprep.subr.bf16.mxu0 0
        %876 = vmatpush1.bf16.msra.mxu0 %v714
        %877 = vmatprep.subr.bf16.mxu0 0
        %878 = vmatpush1.bf16.msra.mxu0 %v715
        %879 = vmatprep.subr.bf16.mxu0 0
        %880 = vmatpush1.bf16.msra.mxu0 %v716
        %881 = vmatprep.subr.bf16.mxu0 0
        %882 = vmatpush1.bf16.msra.mxu0 %v717
        %883 = vmatprep.subr.bf16.mxu0 0
        %884 = vmatpush1.bf16.msra.mxu0 %v718
        %885 = vmatprep.subr.bf16.mxu0 0
        %886 = vmatpush1.bf16.msra.mxu0 %v719
        %887 = vmatprep.subr.bf16.mxu0 0
        %888 = vmatpush1.bf16.msra.mxu0 %v720
        %889 = vmatprep.subr.bf16.mxu0 0
        %890 = vmatpush1.bf16.msra.mxu0 %v721
        %891 = vmatprep.mubr.bf16.mxu0 %v421
        %892 = vmatmul.mubr.bf16.gmra.mrb[0].mxu0 %v420
        %v893 = vpop.f32.mrb[0].mxu0
        %v894 = vadd.f32 %v853, %v893
        %v895 = vpop.f32.mrb[0].mxu0
        %v896 = vpop.f32.mrb[0].mxu0
        %v897 = vadd.f32 %v856, %v896
        %v898 = vpop.f32.mrb[0].mxu0
        %899 = vdwg.mxu0
        %900 = vmatprep.subr.bf16.mxu0 0
        %901 = vmatpush1.bf16.msra.mxu0 %v722
        %902 = vmatprep.subr.bf16.mxu0 0
        %903 = vmatpush1.bf16.msra.mxu0 %v723
        %904 = vmatprep.subr.bf16.mxu0 0
        %905 = vmatpush1.bf16.msra.mxu0 %v724
        %906 = vmatprep.subr.bf16.mxu0 0
        %907 = vmatpush1.bf16.msra.mxu0 %v725
        %908 = vmatprep.subr.bf16.mxu0 0
        %909 = vmatpush1.bf16.msra.mxu0 %v726
        %910 = vmatprep.subr.bf16.mxu0 0
        %911 = vmatpush1.bf16.msra.mxu0 %v727
        %912 = vmatprep.subr.bf16.mxu0 0
        %913 = vmatpush1.bf16.msra.mxu0 %v728
        %914 = vmatprep.subr.bf16.mxu0 0
        %915 = vmatpush1.bf16.msra.mxu0 %v729
        %916 = vmatprep.subr.bf16.mxu0 0
        %917 = vmatpush1.bf16.msra.mxu0 %v730
        %918 = vmatprep.subr.bf16.mxu0 0
        %919 = vmatpush1.bf16.msra.mxu0 %v731
        %920 = vmatprep.subr.bf16.mxu0 0
        %921 = vmatpush1.bf16.msra.mxu0 %v732
        %922 = vmatprep.subr.bf16.mxu0 0
        %923 = vmatpush1.bf16.msra.mxu0 %v733
        %924 = vmatprep.subr.bf16.mxu0 0
        %925 = vmatpush1.bf16.msra.mxu0 %v734
        %926 = vmatprep.subr.bf16.mxu0 0
        %927 = vmatpush1.bf16.msra.mxu0 %v735
        %928 = vmatprep.subr.bf16.mxu0 0
        %929 = vmatpush1.bf16.msra.mxu0 %v736
        %930 = vmatprep.subr.bf16.mxu0 0
        %931 = vmatpush1.bf16.msra.mxu0 %v737
        %932 = vmatprep.mubr.bf16.mxu0 %v423
        %933 = vmatmul.mubr.bf16.gmra.mrb[0].mxu0 %v422
        %v934 = vpop.f32.mrb[0].mxu0
        %v935 = vadd.f32 %v894, %v934
        %v936 = vpop.f32.mrb[0].mxu0
        %v937 = vpop.f32.mrb[0].mxu0
        %v938 = vadd.f32 %v897, %v937
        %v939 = vpop.f32.mrb[0].mxu0
        %940 = vdwg.mxu0
        %941 = vmatprep.subr.bf16.mxu0 0
        %942 = vmatpush1.bf16.msra.mxu0 %v738
        %943 = vmatprep.subr.bf16.mxu0 0
        %944 = vmatpush1.bf16.msra.mxu0 %v739
        %945 = vmatprep.subr.bf16.mxu0 0
        %946 = vmatpush1.bf16.msra.mxu0 %v740
        %947 = vmatprep.subr.bf16.mxu0 0
        %948 = vmatpush1.bf16.msra.mxu0 %v741
        %949 = vmatprep.subr.bf16.mxu0 0
        %950 = vmatpush1.bf16.msra.mxu0 %v742
        %951 = vmatprep.subr.bf16.mxu0 0
        %952 = vmatpush1.bf16.msra.mxu0 %v743
        %953 = vmatprep.subr.bf16.mxu0 0
        %954 = vmatpush1.bf16.msra.mxu0 %v744
        %955 = vmatprep.subr.bf16.mxu0 0
        %956 = vmatpush1.bf16.msra.mxu0 %v745
        %957 = vmatprep.subr.bf16.mxu0 0
        %958 = vmatpush1.bf16.msra.mxu0 %v746
        %959 = vmatprep.subr.bf16.mxu0 0
        %960 = vmatpush1.bf16.msra.mxu0 %v747
        %961 = vmatprep.subr.bf16.mxu0 0
        %962 = vmatpush1.bf16.msra.mxu0 %v748
        %963 = vmatprep.subr.bf16.mxu0 0
        %964 = vmatpush1.bf16.msra.mxu0 %v749
        %965 = vmatprep.subr.bf16.mxu0 0
        %966 = vmatpush1.bf16.msra.mxu0 %v750
        %967 = vmatprep.subr.bf16.mxu0 0
        %968 = vmatpush1.bf16.msra.mxu0 %v751
        %969 = vmatprep.subr.bf16.mxu0 0
        %970 = vmatpush1.bf16.msra.mxu0 %v752
        %971 = vmatprep.subr.bf16.mxu0 0
        %972 = vmatpush1.bf16.msra.mxu0 %v753
        %973 = vmatprep.mubr.bf16.mxu0 %v425
        %974 = vmatmul.mubr.bf16.gmra.mrb[0].mxu0 %v424
        %v975 = vpop.f32.mrb[0].mxu0
        %v976 = vadd.f32 %v935, %v975
        %v977 = vpop.f32.mrb[0].mxu0
        %v978 = vpop.f32.mrb[0].mxu0
        %v979 = vadd.f32 %v938, %v978
        %v980 = vpop.f32.mrb[0].mxu0
        %981 = vdwg.mxu0
        %v982 = vadd.f32 %v256, %v976
        %v983 = vadd.f32 %v257, %v979
        %984 = vst [vmem:[#allocation2] sm:$0xff] %v982
        %985 = vst [vmem:[#allocation2 + $0x8] sm:$0xff] %v983
        %p986 = scmp.eq.s32.totalorder %s19, 4
        // Predicated region
        $region60: #{_lambda_.15} parent=50 // pred_check
          %p987 = pneg %p986
        $region61: #{_lambda_.15} parent=50 // pred_check_branch
          %989 = sbr.rel (%p987) target = $region63
        $region62: #{_lambda_.15} parent=50 // pred_region
          %v990 = vld [vmem:[#allocation2] sm:$0xff]
          %v991 = vld [vmem:[#allocation2 + $0x8] sm:$0xff]
          %v992 = vld [vmem:[%s2] sm:$0xff]
          %v993 = vld [vmem:[%s2 + $0x8] sm:$0xff]
          %995 = vset.pattern.permute.xlu0 0
          %996 = vperm.xlu0 %995, %v992
          %v997 = vpop.permute.xlu0 %996
          %1000 = vset.pattern.permute.xlu0 0
          %1001 = vperm.xlu0 %1000, %v993
          %v1002 = vpop.permute.xlu0 %1001
          %v1004 = vadd.f32 %v990, %v997
          %v1005 = vadd.f32 %v991, %v1002
          %v1006 = vsub.f32 0.0, %v1004
          %v1007 = vsub.f32 0.0, %v1005
          %v1008 = vmul.f32 %v1006, 1.442695
          %v1009 = vpow.pop %v1008
          %v1010 = vmul.f32 %v1007, 1.442695
          %v1011 = vpow.pop %v1010
          %v1012 = vadd.f32 %v1009, 1.0
          %v1013 = vadd.f32 %v1011, 1.0
          %v1014 = vrcp.pop %v1012
          %v1015 = vmul.f32 1.0, %v1014
          %v1016 = vrcp.pop %v1013
          %v1017 = vmul.f32 1.0, %v1016
          %1018 = vst [vmem:[%s248] sm:$0xff] %v1015
          %1019 = vst [vmem:[%s248 + $0x8] sm:$0xff] %v1017
        $region63: #{_lambda_.15} parent=50 // pred_fallthru
          _
        %p1020 = scmp.lt.s32.totalorder %s18, 0
        %s1021 = scalar_select %p1020, %s18, 0
        %s1022 = smul.addr %s1021, 8
        %s1023 = scalar_lea.vmem %s3, %s1022
        // Predicated region
        $region64: #{_lambda_.15} parent=50 // pred_check
          %p1024 = pneg %p119
        $region65: #{_lambda_.15} parent=50 // pred_check_branch
          %1026 = sbr.rel (%p1024) target = $region67
        $region66: #{_lambda_.15} parent=50 // pred_region
          _
        $region67: #{_lambda_.15} parent=50 // pred_fallthru
          _
        // Predicated region
        $region68: #{_lambda_.15} parent=50 // pred_check
          %p1027 = pneg %p119
        $region69: #{_lambda_.15} parent=50 // pred_check_branch
          %1029 = sbr.rel (%p1027) target = $region71
        $region70: #{_lambda_.15} parent=50 // pred_region
          %p1030 = scmp.lt.s32.totalorder %s18, 0
          %s1031 = scalar_select %p1030, %s18, 0
          %s1032 = smul.addr %s1031, 8
          %s1033 = scalar_lea.vmem %s3, %s1032
        $region71: #{_lambda_.15} parent=50 // pred_fallthru
          _
      $region51: #{_lambda_.15} parent=5 // pred_fallthru
        _
      %p1034 = scmp.le.s32.totalorder 2, %s9
      // Predicated region
      $region72: #{_lambda_.15} parent=5 // pred_check
        %p1035 = pneg %p1034
      $region73: #{_lambda_.15} parent=5 // pred_check_branch
        %1037 = sbr.rel (%p1035) target = $region75
      $region74: #{_lambda_.15} parent=5 // pred_region
        %s1038 = ssub.s32 %s9, 2
      $region75: #{_lambda_.15} parent=5 // pred_fallthru
        _
    $region6: #{_lambda_.15} parent=1 // loop_footer
      %s13 = sadd.s32 1, %s9
    $region7: #{_lambda_.15} parent=1 // loop_footer_branch
      %8 = sbr.rel target = $region3
    $region8: #{_lambda_.15} parent=1 // loop_exit
      _

// kernel: _lambda_.13
$region0: #{_lambda_.13}
  #allocation0 [shape = 'u32[]', space=smem, size = 0x4, offset = 0x4, fixed_abs, tag = 'smem constant byte address 0x4 - core index']
  #allocation1 [shape = 'u32[144,128]{1,0:T(1,128)}', space=vmem, size = 0x12000, scoped, tag = 'internal scratch']
  #allocation2 [shape = 'f32[16,256]{1,0:T(8,128)}', space=vmem, size = 0x4000, scoped, tag = 'scratch operand']
  %s0 = inlined_call_operand.vmem [shape: bf16[16,8192], index: 0, kind: input, shape index: {}]
  %s1 = inlined_call_operand.vmem [shape: bf16[8192,512], index: 1, kind: input, shape index: {}]
  %s2 = inlined_call_operand.vmem [shape: f32[16,1], index: 2, kind: input, shape index: {}]
  %s3 = inlined_call_operand.vmem [shape: f32[16,512], index: 3, kind: output, shape index: {}]
  %s4 = sld [smem:[#allocation0]]
  $region133: #{_lambda_.13} parent=0
    _
  %s6 = ssub.s32 1, %s4
  %s7 = scalar_select 0, %s6, %s4
  $region1: #{_lambda_.13} parent=0
    #allocation3 [shape = 'u8[65536]{0}', space=vmem, size = 0x10000, scoped, tag = 'input window, operand 0']
    #allocation4 [shape = 'u8[1048576]{0}', space=vmem, size = 0x100000, scoped, tag = 'input window, operand 1']
    #allocation5 [shape = 'u8[32768]{0}', space=vmem, size = 0x8000, scoped, tag = 'output window, operand 0']
    loop: start=0, step=1, limit=18
    $region2: #{_lambda_.13} parent=1 // loop_pre_header
      _
    $region3: #{_lambda_.13} parent=1 // loop_header
      %s9 = sphi 0, %s13
      %p10 = scmp.ge.s32.totalorder %s9, 18
      %s16 = sphi 0, %s28
      %s17 = sphi 0, %s24
      %s18 = sphi 0, %s16
      %s19 = sphi 0, %s17
      %s20 = sphi 0, %s18
      %s21 = sphi 0, %s19
      %s31 = sphi 0, %s33
      %s34 = sphi 0, %s31
      %s35 = sphi 0, %s34
      %s51 = sphi 0, %s35
      %s59 = sphi 0, %s61
      %s62 = sphi 0, %s59
      %s63 = sphi 0, %s62
      %s79 = sphi 0, %s63
      %s83 = sphi 0, %s83
      %s85 = sphi 0, %s83
      %s86 = sphi 0, %s85
      %s100 = sphi 0, %s86
      %s106 = sphi 0, %s108
      %s109 = sphi 0, %s106
      %s110 = sphi 0, %s109
      %s126 = sphi 0, %s110
    $region4: #{_lambda_.13} parent=1 // loop_header_branch
      %12 = sbr.rel (%p10) target = $region8
    $region5: #{_lambda_.13} parent=1 // loop_body
      %s14 = ssub.s32 %s9, 1
      %s15 = ssub.s32 %s9, 2
      %s22 = sadd.s32 1, %s17
      %p23 = scmp.ge.s32.totalorder %s22, 8
      %s24 = scalar_select %p23, 0, %s22
      %s25 = sadd.s32 1, %s16
      %s26 = scalar_select %p23, %s25, %s16
      %p27 = scmp.ge.s32.totalorder %s26, 2
      %s28 = scalar_select %p27, 0, %s26
      %s29 = ssub.s32 %s17, %s24
      %p30 = scmp.eq.s32.totalorder %s29, 0
      %s32 = sadd.s32 %s31, 1
      %s33 = scalar_select %p30, %s31, %s32
      %p36 = pneg %p30
      %p37 = scmp.eq.s32.totalorder %s9, 15
      %p38 = por %p36, %p37
      %p39 = scmp.ne.s32.totalorder %s31, %s34
      %p40 = scmp.eq.s32.totalorder %s9, 0
      %p41 = por %p39, %p40
      %p42 = scmp.ne.s32.totalorder %s31, %s34
      %p43 = scmp.eq.s32.totalorder %s14, 15
      %p44 = por %p42, %p43
      %p45 = scmp.ne.s32.totalorder %s34, %s35
      %p46 = scmp.eq.s32.totalorder %s14, 0
      %p47 = por %p45, %p46
      %p48 = scmp.ne.s32.totalorder %s34, %s35
      %p49 = scmp.eq.s32.totalorder %s15, 15
      %p50 = por %p48, %p49
      %p52 = scmp.ne.s32.totalorder %s35, %s51
      %p53 = scmp.eq.s32.totalorder %s15, 0
      %p54 = por %p52, %p53
      %s55 = ssub.s32 %s17, %s24
      %s56 = ssub.s32 %s16, %s28
      %s57 = sor.u32 %s55, %s56
      %p58 = scmp.eq.s32.totalorder %s57, 0
      %s60 = sadd.s32 %s59, 1
      %s61 = scalar_select %p58, %s59, %s60
      %p64 = pneg %p58
      %p65 = scmp.eq.s32.totalorder %s9, 15
      %p66 = por %p64, %p65
      %p67 = scmp.ne.s32.totalorder %s59, %s62
      %p68 = scmp.eq.s32.totalorder %s9, 0
      %p69 = por %p67, %p68
      %p70 = scmp.ne.s32.totalorder %s59, %s62
      %p71 = scmp.eq.s32.totalorder %s14, 15
      %p72 = por %p70, %p71
      %p73 = scmp.ne.s32.totalorder %s62, %s63
      %p74 = scmp.eq.s32.totalorder %s14, 0
      %p75 = por %p73, %p74
      %p76 = scmp.ne.s32.totalorder %s62, %s63
      %p77 = scmp.eq.s32.totalorder %s15, 15
      %p78 = por %p76, %p77
      %p80 = scmp.ne.s32.totalorder %s63, %s79
      %p81 = scmp.eq.s32.totalorder %s15, 0
      %p82 = por %p80, %p81
      %s84 = sadd.s32 %s83, 1
      %p87 = scmp.eq.s32.totalorder %s9, 15
      %p88 = scmp.ne.s32.totalorder %s83, %s85
      %p89 = scmp.eq.s32.totalorder %s9, 0
      %p90 = por %p88, %p89
      %p91 = scmp.ne.s32.totalorder %s83, %s85
      %p92 = scmp.eq.s32.totalorder %s14, 15
      %p93 = por %p91, %p92
      %p94 = scmp.ne.s32.totalorder %s85, %s86
      %p95 = scmp.eq.s32.totalorder %s14, 0
      %p96 = por %p94, %p95
      %p97 = scmp.ne.s32.totalorder %s85, %s86
      %p98 = scmp.eq.s32.totalorder %s15, 15
      %p99 = por %p97, %p98
      %p101 = scmp.ne.s32.totalorder %s86, %s100
      %p102 = scmp.eq.s32.totalorder %s15, 0
      %p103 = por %p101, %p102
      %s104 = ssub.s32 %s16, %s28
      %p105 = scmp.eq.s32.totalorder %s104, 0
      %s107 = sadd.s32 %s106, 1
      %s108 = scalar_select %p105, %s106, %s107
      %p111 = pneg %p105
      %p112 = scmp.eq.s32.totalorder %s9, 15
      %p113 = por %p111, %p112
      %p114 = scmp.ne.s32.totalorder %s106, %s109
      %p115 = scmp.eq.s32.totalorder %s9, 0
      %p116 = por %p114, %p115
      %p117 = scmp.ne.s32.totalorder %s106, %s109
      %p118 = scmp.eq.s32.totalorder %s14, 15
      %p119 = por %p117, %p118
      %p120 = scmp.ne.s32.totalorder %s109, %s110
      %p121 = scmp.eq.s32.totalorder %s14, 0
      %p122 = por %p120, %p121
      %p123 = scmp.ne.s32.totalorder %s109, %s110
      %p124 = scmp.eq.s32.totalorder %s15, 15
      %p125 = por %p123, %p124
      %p127 = scmp.ne.s32.totalorder %s110, %s126
      %p128 = scmp.eq.s32.totalorder %s15, 0
      %p129 = por %p127, %p128
      %p130 = scmp.le.s32.totalorder 1, %s9
      %p131 = scmp.lt.s32.totalorder %s9, 17
      %p132 = pnand %p130, %p131
      %p133 = pneg %p132
      // Predicated region
      $region9: #{_lambda_.13} parent=5 // pred_check
        _
      $region10: #{_lambda_.13} parent=5 // pred_check_branch
        %135 = sbr.rel (%p132) target = $region12
      $region11: #{_lambda_.13} parent=5 // pred_region
        %s136 = ssub.s32 %s9, 1
        // Predicated region
        $region13: #{_lambda_.13} parent=11 // pred_check
          %p137 = pneg %p96
        $region14: #{_lambda_.13} parent=11 // pred_check_branch
          %139 = sbr.rel (%p137) target = $region16
        $region15: #{_lambda_.13} parent=11 // pred_region
          _
        $region16: #{_lambda_.13} parent=11 // pred_fallthru
          _
      $region12: #{_lambda_.13} parent=5 // pred_fallthru
        _
      %p140 = scmp.lt.s32.totalorder %s9, 16
      // Predicated region
      $region17: #{_lambda_.13} parent=5 // pred_check
        %p141 = pneg %p140
      $region18: #{_lambda_.13} parent=5 // pred_check_branch
        %143 = sbr.rel (%p141) target = $region20
      $region19: #{_lambda_.13} parent=5 // pred_region
        // Predicated region
        $region21: #{_lambda_.13} parent=19 // pred_check
          %p144 = pneg %p41
        $region22: #{_lambda_.13} parent=19 // pred_check_branch
          %146 = sbr.rel (%p144) target = $region24
        $region23: #{_lambda_.13} parent=19 // pred_region
          %s147 = sand.u32 %s31, 1
          %s148 = sand.u32 %s31, 1
          %s149 = smul.addr %s148, 64
          %s150 = scalar_lea.vmem [#allocation3], %s149
          %s151 = smul.u32 8, %s17
          %s152 = smul.addr %s151, 4
          %s153 = scalar_lea.vmem %s0, %s152
          // Predicated region
          $region25: #{_lambda_.13} parent=23 // pred_check
            _
          $region26: #{_lambda_.13} parent=23 // pred_check_branch
            %155 = sbr.rel (0) target = $region28
          $region27: #{_lambda_.13} parent=23 // pred_region
            // Predicated region
            $region29: #{_lambda_.13} parent=27 // pred_check
              _
            $region30: #{_lambda_.13} parent=27 // pred_check_branch
              %157 = sbr.rel (0) target = $region32
            $region31: #{_lambda_.13} parent=27 // pred_region
              loop: start=0, step=1, limit=1
              $region33: #{_lambda_.13} parent=31 // loop_pre_header
                _
              $region34: #{_lambda_.13} parent=31 // loop_header
                %s159 = sphi 0, %s163
                %p160 = scmp.ge.s32.totalorder %s159, 1
                %s164 = sphi %s153, %s153
                %s165 = sphi %s150, %s150
              $region35: #{_lambda_.13} parent=31 // loop_header_branch
                %162 = sbr.rel (%p160) target = $region39
              $region36: #{_lambda_.13} parent=31 // loop_body
                %v166 = vld [vmem:[%s164] sm:$0xff]
                %167 = vst [vmem:[%s165] sm:$0xff] %v166
                %v168 = vld [vmem:[%s164 + $0x8] sm:$0xff]
                %169 = vst [vmem:[%s165 + $0x8] sm:$0xff] %v168
                %v170 = vld [vmem:[%s164 + $0x10] sm:$0xff]
                %171 = vst [vmem:[%s165 + $0x10] sm:$0xff] %v170
                %v172 = vld [vmem:[%s164 + $0x18] sm:$0xff]
                %173 = vst [vmem:[%s165 + $0x18] sm:$0xff] %v172
                %v174 = vld [vmem:[%s164 + $0x100] sm:$0xff]
                %175 = vst [vmem:[%s165 + $0x20] sm:$0xff] %v174
                %v176 = vld [vmem:[%s164 + $0x108] sm:$0xff]
                %177 = vst [vmem:[%s165 + $0x28] sm:$0xff] %v176
                %v178 = vld [vmem:[%s164 + $0x110] sm:$0xff]
                %179 = vst [vmem:[%s165 + $0x30] sm:$0xff] %v178
                %v180 = vld [vmem:[%s164 + $0x118] sm:$0xff]
                %181 = vst [vmem:[%s165 + $0x38] sm:$0xff] %v180
              $region37: #{_lambda_.13} parent=31 // loop_footer
                %s163 = sadd.s32 1, %s159
              $region38: #{_lambda_.13} parent=31 // loop_footer_branch
                %158 = sbr.rel target = $region34
              $region39: #{_lambda_.13} parent=31 // loop_exit
                _
            $region32: #{_lambda_.13} parent=27 // pred_fallthru
              _
            // Predicated region
            $region40: #{_lambda_.13} parent=27 // pred_check
              _
            $region41: #{_lambda_.13} parent=27 // pred_check_branch
              %183 = sbr.rel target = $region43
            $region42: #{_lambda_.13} parent=27 // pred_region
              _
            $region43: #{_lambda_.13} parent=27 // pred_fallthru
              _
          $region28: #{_lambda_.13} parent=23 // pred_fallthru
            _
          %184 = vnop
        $region24: #{_lambda_.13} parent=19 // pred_fallthru
          _
        // Predicated region
        $region44: #{_lambda_.13} parent=19 // pred_check
          %p185 = pneg %p69
        $region45: #{_lambda_.13} parent=19 // pred_check_branch
          %187 = sbr.rel (%p185) target = $region47
        $region46: #{_lambda_.13} parent=19 // pred_region
          %s188 = sand.u32 %s59, 1
          %s189 = sand.u32 %s59, 1
          %s190 = smul.addr %s189, 1024
          %s191 = scalar_lea.vmem [#allocation4], %s190
          %s192 = smul.u32 128, %s17
          %s193 = smul.u32 2, %s16
          %s194 = smul.addr %s192, 4
          %s195 = sadd.s32 %s193, %s194
          %s196 = smul.addr %s195, 4
          %s197 = scalar_lea.vmem %s1, %s196
          // Predicated region
          $region48: #{_lambda_.13} parent=46 // pred_check
            _
          $region49: #{_lambda_.13} parent=46 // pred_check_branch
            %199 = sbr.rel (0) target = $region51
          $region50: #{_lambda_.13} parent=46 // pred_region
            // Predicated region
            $region52: #{_lambda_.13} parent=50 // pred_check
              _
            $region53: #{_lambda_.13} parent=50 // pred_check_branch
              %201 = sbr.rel (0) target = $region55
            $region54: #{_lambda_.13} parent=50 // pred_region
              // Predicated region
              $region67: #{_lambda_.13} parent=54 // pred_check
                _
              $region68: #{_lambda_.13} parent=54 // pred_check_branch
                %470 = sbr.rel (0) target = $region70
              $region69: #{_lambda_.13} parent=54 // pred_region
                loop: start=0, step=1, limit=1
                $region71: #{_lambda_.13} parent=69 // loop_pre_header
                  _
                $region72: #{_lambda_.13} parent=69 // loop_header
                  %s472 = sphi 0, %s476
                  %p473 = scmp.ge.s32.totalorder %s472, 1
                  %s477 = sphi %s197, %s197
                  %s478 = sphi %s191, %s191
                $region73: #{_lambda_.13} parent=69 // loop_header_branch
                  %475 = sbr.rel (%p473) target = $region77
                $region74: #{_lambda_.13} parent=69 // loop_body
                  %v479 = vld [vmem:[%s477] sm:$0xff]
                  %480 = vst [vmem:[%s478] sm:$0xff] %v479
                  %v481 = vld [vmem:[%s477 + $0x10] sm:$0xff]
                  %482 = vst [vmem:[%s478 + $0x8] sm:$0xff] %v481
                  %v483 = vld [vmem:[%s477 + $0x20] sm:$0xff]
                  %484 = vst [vmem:[%s478 + $0x10] sm:$0xff] %v483
                  %v485 = vld [vmem:[%s477 + $0x30] sm:$0xff]
                  %486 = vst [vmem:[%s478 + $0x18] sm:$0xff] %v485
                  %v487 = vld [vmem:[%s477 + $0x40] sm:$0xff]
                  %488 = vst [vmem:[%s478 + $0x20] sm:$0xff] %v487
                  %v489 = vld [vmem:[%s477 + $0x50] sm:$0xff]
                  %490 = vst [vmem:[%s478 + $0x28] sm:$0xff] %v489
                  %v491 = vld [vmem:[%s477 + $0x60] sm:$0xff]
                  %492 = vst [vmem:[%s478 + $0x30] sm:$0xff] %v491
                  %v493 = vld [vmem:[%s477 + $0x70] sm:$0xff]
                  %494 = vst [vmem:[%s478 + $0x38] sm:$0xff] %v493
                  %v495 = vld [vmem:[%s477 + $0x80] sm:$0xff]
                  %496 = vst [vmem:[%s478 + $0x40] sm:$0xff] %v495
                  %v497 = vld [vmem:[%s477 + $0x90] sm:$0xff]
                  %498 = vst [vmem:[%s478 + $0x48] sm:$0xff] %v497
                  %v499 = vld [vmem:[%s477 + $0xa0] sm:$0xff]
                  %500 = vst [vmem:[%s478 + $0x50] sm:$0xff] %v499
                  %v501 = vld [vmem:[%s477 + $0xb0] sm:$0xff]
                  %502 = vst [vmem:[%s478 + $0x58] sm:$0xff] %v501
                  %v503 = vld [vmem:[%s477 + $0xc0] sm:$0xff]
                  %504 = vst [vmem:[%s478 + $0x60] sm:$0xff] %v503
                  %v505 = vld [vmem:[%s477 + $0xd0] sm:$0xff]
                  %506 = vst [vmem:[%s478 + $0x68] sm:$0xff] %v505
                  %v507 = vld [vmem:[%s477 + $0xe0] sm:$0xff]
                  %508 = vst [vmem:[%s478 + $0x70] sm:$0xff] %v507
                  %v509 = vld [vmem:[%s477 + $0xf0] sm:$0xff]
                  %510 = vst [vmem:[%s478 + $0x78] sm:$0xff] %v509
                  %v511 = vld [vmem:[%s477 + $0x100] sm:$0xff]
                  %512 = vst [vmem:[%s478 + $0x80] sm:$0xff] %v511
                  %v513 = vld [vmem:[%s477 + $0x110] sm:$0xff]
                  %514 = vst [vmem:[%s478 + $0x88] sm:$0xff] %v513
                  %v515 = vld [vmem:[%s477 + $0x120] sm:$0xff]
                  %516 = vst [vmem:[%s478 + $0x90] sm:$0xff] %v515
                  %v517 = vld [vmem:[%s477 + $0x130] sm:$0xff]
                  %518 = vst [vmem:[%s478 + $0x98] sm:$0xff] %v517
                  %v519 = vld [vmem:[%s477 + $0x140] sm:$0xff]
                  %520 = vst [vmem:[%s478 + $0xa0] sm:$0xff] %v519
                  %v521 = vld [vmem:[%s477 + $0x150] sm:$0xff]
                  %522 = vst [vmem:[%s478 + $0xa8] sm:$0xff] %v521
                  %v523 = vld [vmem:[%s477 + $0x160] sm:$0xff]
                  %524 = vst [vmem:[%s478 + $0xb0] sm:$0xff] %v523
                  %v525 = vld [vmem:[%s477 + $0x170] sm:$0xff]
                  %526 = vst [vmem:[%s478 + $0xb8] sm:$0xff] %v525
                  %v527 = vld [vmem:[%s477 + $0x180] sm:$0xff]
                  %528 = vst [vmem:[%s478 + $0xc0] sm:$0xff] %v527
                  %v529 = vld [vmem:[%s477 + $0x190] sm:$0xff]
                  %530 = vst [vmem:[%s478 + $0xc8] sm:$0xff] %v529
                  %v531 = vld [vmem:[%s477 + $0x1a0] sm:$0xff]
                  %532 = vst [vmem:[%s478 + $0xd0] sm:$0xff] %v531
                  %v533 = vld [vmem:[%s477 + $0x1b0] sm:$0xff]
                  %534 = vst [vmem:[%s478 + $0xd8] sm:$0xff] %v533
                  %v535 = vld [vmem:[%s477 + $0x1c0] sm:$0xff]
                  %536 = vst [vmem:[%s478 + $0xe0] sm:$0xff] %v535
                  %v537 = vld [vmem:[%s477 + $0x1d0] sm:$0xff]
                  %538 = vst [vmem:[%s478 + $0xe8] sm:$0xff] %v537
                  %v539 = vld [vmem:[%s477 + $0x1e0] sm:$0xff]
                  %540 = vst [vmem:[%s478 + $0xf0] sm:$0xff] %v539
                  %v541 = vld [vmem:[%s477 + $0x1f0] sm:$0xff]
                  %542 = vst [vmem:[%s478 + $0xf8] sm:$0xff] %v541
                  %v543 = vld [vmem:[%s477 + $0x200] sm:$0xff]
                  %544 = vst [vmem:[%s478 + $0x100] sm:$0xff] %v543
                  %v545 = vld [vmem:[%s477 + $0x210] sm:$0xff]
                  %546 = vst [vmem:[%s478 + $0x108] sm:$0xff] %v545
                  %v547 = vld [vmem:[%s477 + $0x220] sm:$0xff]
                  %548 = vst [vmem:[%s478 + $0x110] sm:$0xff] %v547
                  %v549 = vld [vmem:[%s477 + $0x230] sm:$0xff]
                  %550 = vst [vmem:[%s478 + $0x118] sm:$0xff] %v549
                  %v551 = vld [vmem:[%s477 + $0x240] sm:$0xff]
                  %552 = vst [vmem:[%s478 + $0x120] sm:$0xff] %v551
                  %v553 = vld [vmem:[%s477 + $0x250] sm:$0xff]
                  %554 = vst [vmem:[%s478 + $0x128] sm:$0xff] %v553
                  %v555 = vld [vmem:[%s477 + $0x260] sm:$0xff]
                  %556 = vst [vmem:[%s478 + $0x130] sm:$0xff] %v555
                  %v557 = vld [vmem:[%s477 + $0x270] sm:$0xff]
                  %558 = vst [vmem:[%s478 + $0x138] sm:$0xff] %v557
                  %v559 = vld [vmem:[%s477 + $0x280] sm:$0xff]
                  %560 = vst [vmem:[%s478 + $0x140] sm:$0xff] %v559
                  %v561 = vld [vmem:[%s477 + $0x290] sm:$0xff]
                  %562 = vst [vmem:[%s478 + $0x148] sm:$0xff] %v561
                  %v563 = vld [vmem:[%s477 + $0x2a0] sm:$0xff]
                  %564 = vst [vmem:[%s478 + $0x150] sm:$0xff] %v563
                  %v565 = vld [vmem:[%s477 + $0x2b0] sm:$0xff]
                  %566 = vst [vmem:[%s478 + $0x158] sm:$0xff] %v565
                  %v567 = vld [vmem:[%s477 + $0x2c0] sm:$0xff]
                  %568 = vst [vmem:[%s478 + $0x160] sm:$0xff] %v567
                  %v569 = vld [vmem:[%s477 + $0x2d0] sm:$0xff]
                  %570 = vst [vmem:[%s478 + $0x168] sm:$0xff] %v569
                  %v571 = vld [vmem:[%s477 + $0x2e0] sm:$0xff]
                  %572 = vst [vmem:[%s478 + $0x170] sm:$0xff] %v571
                  %v573 = vld [vmem:[%s477 + $0x2f0] sm:$0xff]
                  %574 = vst [vmem:[%s478 + $0x178] sm:$0xff] %v573
                  %v575 = vld [vmem:[%s477 + $0x300] sm:$0xff]
                  %576 = vst [vmem:[%s478 + $0x180] sm:$0xff] %v575
                  %v577 = vld [vmem:[%s477 + $0x310] sm:$0xff]
                  %578 = vst [vmem:[%s478 + $0x188] sm:$0xff] %v577
                  %v579 = vld [vmem:[%s477 + $0x320] sm:$0xff]
                  %580 = vst [vmem:[%s478 + $0x190] sm:$0xff] %v579
                  %v581 = vld [vmem:[%s477 + $0x330] sm:$0xff]
                  %582 = vst [vmem:[%s478 + $0x198] sm:$0xff] %v581
                  %v583 = vld [vmem:[%s477 + $0x340] sm:$0xff]
                  %584 = vst [vmem:[%s478 + $0x1a0] sm:$0xff] %v583
                  %v585 = vld [vmem:[%s477 + $0x350] sm:$0xff]
                  %586 = vst [vmem:[%s478 + $0x1a8] sm:$0xff] %v585
                  %v587 = vld [vmem:[%s477 + $0x360] sm:$0xff]
                  %588 = vst [vmem:[%s478 + $0x1b0] sm:$0xff] %v587
                  %v589 = vld [vmem:[%s477 + $0x370] sm:$0xff]
                  %590 = vst [vmem:[%s478 + $0x1b8] sm:$0xff] %v589
                  %v591 = vld [vmem:[%s477 + $0x380] sm:$0xff]
                  %592 = vst [vmem:[%s478 + $0x1c0] sm:$0xff] %v591
                  %v593 = vld [vmem:[%s477 + $0x390] sm:$0xff]
                  %594 = vst [vmem:[%s478 + $0x1c8] sm:$0xff] %v593
                  %v595 = vld [vmem:[%s477 + $0x3a0] sm:$0xff]
                  %596 = vst [vmem:[%s478 + $0x1d0] sm:$0xff] %v595
                  %v597 = vld [vmem:[%s477 + $0x3b0] sm:$0xff]
                  %598 = vst [vmem:[%s478 + $0x1d8] sm:$0xff] %v597
                  %v599 = vld [vmem:[%s477 + $0x3c0] sm:$0xff]
                  %600 = vst [vmem:[%s478 + $0x1e0] sm:$0xff] %v599
                  %v601 = vld [vmem:[%s477 + $0x3d0] sm:$0xff]
                  %602 = vst [vmem:[%s478 + $0x1e8] sm:$0xff] %v601
                  %v603 = vld [vmem:[%s477 + $0x3e0] sm:$0xff]
                  %604 = vst [vmem:[%s478 + $0x1f0] sm:$0xff] %v603
                  %v605 = vld [vmem:[%s477 + $0x3f0] sm:$0xff]
                  %606 = vst [vmem:[%s478 + $0x1f8] sm:$0xff] %v605
                  %v607 = vld [vmem:[%s477 + $0x400] sm:$0xff]
                  %608 = vst [vmem:[%s478 + $0x200] sm:$0xff] %v607
                  %v609 = vld [vmem:[%s477 + $0x410] sm:$0xff]
                  %610 = vst [vmem:[%s478 + $0x208] sm:$0xff] %v609
                  %v611 = vld [vmem:[%s477 + $0x420] sm:$0xff]
                  %612 = vst [vmem:[%s478 + $0x210] sm:$0xff] %v611
                  %v613 = vld [vmem:[%s477 + $0x430] sm:$0xff]
                  %614 = vst [vmem:[%s478 + $0x218] sm:$0xff] %v613
                  %v615 = vld [vmem:[%s477 + $0x440] sm:$0xff]
                  %616 = vst [vmem:[%s478 + $0x220] sm:$0xff] %v615
                  %v617 = vld [vmem:[%s477 + $0x450] sm:$0xff]
                  %618 = vst [vmem:[%s478 + $0x228] sm:$0xff] %v617
                  %v619 = vld [vmem:[%s477 + $0x460] sm:$0xff]
                  %620 = vst [vmem:[%s478 + $0x230] sm:$0xff] %v619
                  %v621 = vld [vmem:[%s477 + $0x470] sm:$0xff]
                  %622 = vst [vmem:[%s478 + $0x238] sm:$0xff] %v621
                  %v623 = vld [vmem:[%s477 + $0x480] sm:$0xff]
                  %624 = vst [vmem:[%s478 + $0x240] sm:$0xff] %v623
                  %v625 = vld [vmem:[%s477 + $0x490] sm:$0xff]
                  %626 = vst [vmem:[%s478 + $0x248] sm:$0xff] %v625
                  %v627 = vld [vmem:[%s477 + $0x4a0] sm:$0xff]
                  %628 = vst [vmem:[%s478 + $0x250] sm:$0xff] %v627
                  %v629 = vld [vmem:[%s477 + $0x4b0] sm:$0xff]
                  %630 = vst [vmem:[%s478 + $0x258] sm:$0xff] %v629
                  %v631 = vld [vmem:[%s477 + $0x4c0] sm:$0xff]
                  %632 = vst [vmem:[%s478 + $0x260] sm:$0xff] %v631
                  %v633 = vld [vmem:[%s477 + $0x4d0] sm:$0xff]
                  %634 = vst [vmem:[%s478 + $0x268] sm:$0xff] %v633
                  %v635 = vld [vmem:[%s477 + $0x4e0] sm:$0xff]
                  %636 = vst [vmem:[%s478 + $0x270] sm:$0xff] %v635
                  %v637 = vld [vmem:[%s477 + $0x4f0] sm:$0xff]
                  %638 = vst [vmem:[%s478 + $0x278] sm:$0xff] %v637
                  %v639 = vld [vmem:[%s477 + $0x500] sm:$0xff]
                  %640 = vst [vmem:[%s478 + $0x280] sm:$0xff] %v639
                  %v641 = vld [vmem:[%s477 + $0x510] sm:$0xff]
                  %642 = vst [vmem:[%s478 + $0x288] sm:$0xff] %v641
                  %v643 = vld [vmem:[%s477 + $0x520] sm:$0xff]
                  %644 = vst [vmem:[%s478 + $0x290] sm:$0xff] %v643
                  %v645 = vld [vmem:[%s477 + $0x530] sm:$0xff]
                  %646 = vst [vmem:[%s478 + $0x298] sm:$0xff] %v645
                  %v647 = vld [vmem:[%s477 + $0x540] sm:$0xff]
                  %648 = vst [vmem:[%s478 + $0x2a0] sm:$0xff] %v647
                  %v649 = vld [vmem:[%s477 + $0x550] sm:$0xff]
                  %650 = vst [vmem:[%s478 + $0x2a8] sm:$0xff] %v649
                  %v651 = vld [vmem:[%s477 + $0x560] sm:$0xff]
                  %652 = vst [vmem:[%s478 + $0x2b0] sm:$0xff] %v651
                  %v653 = vld [vmem:[%s477 + $0x570] sm:$0xff]
                  %654 = vst [vmem:[%s478 + $0x2b8] sm:$0xff] %v653
                  %v655 = vld [vmem:[%s477 + $0x580] sm:$0xff]
                  %656 = vst [vmem:[%s478 + $0x2c0] sm:$0xff] %v655
                  %v657 = vld [vmem:[%s477 + $0x590] sm:$0xff]
                  %658 = vst [vmem:[%s478 + $0x2c8] sm:$0xff] %v657
                  %v659 = vld [vmem:[%s477 + $0x5a0] sm:$0xff]
                  %660 = vst [vmem:[%s478 + $0x2d0] sm:$0xff] %v659
                  %v661 = vld [vmem:[%s477 + $0x5b0] sm:$0xff]
                  %662 = vst [vmem:[%s478 + $0x2d8] sm:$0xff] %v661
                  %v663 = vld [vmem:[%s477 + $0x5c0] sm:$0xff]
                  %664 = vst [vmem:[%s478 + $0x2e0] sm:$0xff] %v663
                  %v665 = vld [vmem:[%s477 + $0x5d0] sm:$0xff]
                  %666 = vst [vmem:[%s478 + $0x2e8] sm:$0xff] %v665
                  %v667 = vld [vmem:[%s477 + $0x5e0] sm:$0xff]
                  %668 = vst [vmem:[%s478 + $0x2f0] sm:$0xff] %v667
                  %v669 = vld [vmem:[%s477 + $0x5f0] sm:$0xff]
                  %670 = vst [vmem:[%s478 + $0x2f8] sm:$0xff] %v669
                  %v671 = vld [vmem:[%s477 + $0x600] sm:$0xff]
                  %672 = vst [vmem:[%s478 + $0x300] sm:$0xff] %v671
                  %v673 = vld [vmem:[%s477 + $0x610] sm:$0xff]
                  %674 = vst [vmem:[%s478 + $0x308] sm:$0xff] %v673
                  %v675 = vld [vmem:[%s477 + $0x620] sm:$0xff]
                  %676 = vst [vmem:[%s478 + $0x310] sm:$0xff] %v675
                  %v677 = vld [vmem:[%s477 + $0x630] sm:$0xff]
                  %678 = vst [vmem:[%s478 + $0x318] sm:$0xff] %v677
                  %v679 = vld [vmem:[%s477 + $0x640] sm:$0xff]
                  %680 = vst [vmem:[%s478 + $0x320] sm:$0xff] %v679
                  %v681 = vld [vmem:[%s477 + $0x650] sm:$0xff]
                  %682 = vst [vmem:[%s478 + $0x328] sm:$0xff] %v681
                  %v683 = vld [vmem:[%s477 + $0x660] sm:$0xff]
                  %684 = vst [vmem:[%s478 + $0x330] sm:$0xff] %v683
                  %v685 = vld [vmem:[%s477 + $0x670] sm:$0xff]
                  %686 = vst [vmem:[%s478 + $0x338] sm:$0xff] %v685
                  %v687 = vld [vmem:[%s477 + $0x680] sm:$0xff]
                  %688 = vst [vmem:[%s478 + $0x340] sm:$0xff] %v687
                  %v689 = vld [vmem:[%s477 + $0x690] sm:$0xff]
                  %690 = vst [vmem:[%s478 + $0x348] sm:$0xff] %v689
                  %v691 = vld [vmem:[%s477 + $0x6a0] sm:$0xff]
                  %692 = vst [vmem:[%s478 + $0x350] sm:$0xff] %v691
                  %v693 = vld [vmem:[%s477 + $0x6b0] sm:$0xff]
                  %694 = vst [vmem:[%s478 + $0x358] sm:$0xff] %v693
                  %v695 = vld [vmem:[%s477 + $0x6c0] sm:$0xff]
                  %696 = vst [vmem:[%s478 + $0x360] sm:$0xff] %v695
                  %v697 = vld [vmem:[%s477 + $0x6d0] sm:$0xff]
                  %698 = vst [vmem:[%s478 + $0x368] sm:$0xff] %v697
                  %v699 = vld [vmem:[%s477 + $0x6e0] sm:$0xff]
                  %700 = vst [vmem:[%s478 + $0x370] sm:$0xff] %v699
                  %v701 = vld [vmem:[%s477 + $0x6f0] sm:$0xff]
                  %702 = vst [vmem:[%s478 + $0x378] sm:$0xff] %v701
                  %v703 = vld [vmem:[%s477 + $0x700] sm:$0xff]
                  %704 = vst [vmem:[%s478 + $0x380] sm:$0xff] %v703
                  %v705 = vld [vmem:[%s477 + $0x710] sm:$0xff]
                  %706 = vst [vmem:[%s478 + $0x388] sm:$0xff] %v705
                  %v707 = vld [vmem:[%s477 + $0x720] sm:$0xff]
                  %708 = vst [vmem:[%s478 + $0x390] sm:$0xff] %v707
                  %v709 = vld [vmem:[%s477 + $0x730] sm:$0xff]
                  %710 = vst [vmem:[%s478 + $0x398] sm:$0xff] %v709
                  %v711 = vld [vmem:[%s477 + $0x740] sm:$0xff]
                  %712 = vst [vmem:[%s478 + $0x3a0] sm:$0xff] %v711
                  %v713 = vld [vmem:[%s477 + $0x750] sm:$0xff]
                  %714 = vst [vmem:[%s478 + $0x3a8] sm:$0xff] %v713
                  %v715 = vld [vmem:[%s477 + $0x760] sm:$0xff]
                  %716 = vst [vmem:[%s478 + $0x3b0] sm:$0xff] %v715
                  %v717 = vld [vmem:[%s477 + $0x770] sm:$0xff]
                  %718 = vst [vmem:[%s478 + $0x3b8] sm:$0xff] %v717
                  %v719 = vld [vmem:[%s477 + $0x780] sm:$0xff]
                  %720 = vst [vmem:[%s478 + $0x3c0] sm:$0xff] %v719
                  %v721 = vld [vmem:[%s477 + $0x790] sm:$0xff]
                  %722 = vst [vmem:[%s478 + $0x3c8] sm:$0xff] %v721
                  %v723 = vld [vmem:[%s477 + $0x7a0] sm:$0xff]
                  %724 = vst [vmem:[%s478 + $0x3d0] sm:$0xff] %v723
                  %v725 = vld [vmem:[%s477 + $0x7b0] sm:$0xff]
                  %726 = vst [vmem:[%s478 + $0x3d8] sm:$0xff] %v725
                  %v727 = vld [vmem:[%s477 + $0x7c0] sm:$0xff]
                  %728 = vst [vmem:[%s478 + $0x3e0] sm:$0xff] %v727
                  %v729 = vld [vmem:[%s477 + $0x7d0] sm:$0xff]
                  %730 = vst [vmem:[%s478 + $0x3e8] sm:$0xff] %v729
                  %v731 = vld [vmem:[%s477 + $0x7e0] sm:$0xff]
                  %732 = vst [vmem:[%s478 + $0x3f0] sm:$0xff] %v731
                  %v733 = vld [vmem:[%s477 + $0x7f0] sm:$0xff]
                  %734 = vst [vmem:[%s478 + $0x3f8] sm:$0xff] %v733
                $region75: #{_lambda_.13} parent=69 // loop_footer
                  %s476 = sadd.s32 1, %s472
                $region76: #{_lambda_.13} parent=69 // loop_footer_branch
                  %471 = sbr.rel target = $region72
                $region77: #{_lambda_.13} parent=69 // loop_exit
                  _
              $region70: #{_lambda_.13} parent=54 // pred_fallthru
                _
              // Predicated region
              $region78: #{_lambda_.13} parent=54 // pred_check
                _
              $region79: #{_lambda_.13} parent=54 // pred_check_branch
                %736 = sbr.rel target = $region81
              $region80: #{_lambda_.13} parent=54 // pred_region
                _
              $region81: #{_lambda_.13} parent=54 // pred_fallthru
                _
            $region55: #{_lambda_.13} parent=50 // pred_fallthru
              _
            // Predicated region
            $region56: #{_lambda_.13} parent=50 // pred_check
              _
            $region57: #{_lambda_.13} parent=50 // pred_check_branch
              %203 = sbr.rel target = $region59
            $region58: #{_lambda_.13} parent=50 // pred_region
              loop: start=0, step=1, limit=1
              $region60: #{_lambda_.13} parent=58 // loop_pre_header
                _
              $region61: #{_lambda_.13} parent=58 // loop_header
                %s206 = sphi 0, %s210
                %p207 = scmp.ge.s32.totalorder %s206, 1
                %s211 = sphi %s197, %s197
                %s212 = sphi %s191, %s191
              $region62: #{_lambda_.13} parent=58 // loop_header_branch
                %209 = sbr.rel (%p207) target = $region66
              $region63: #{_lambda_.13} parent=58 // loop_body
                %v213 = vld [vmem:[%s211] sm:$0xff]
                %214 = vst [vmem:[%s212] sm:$0xff] %v213
                %v215 = vld [vmem:[%s211 + $0x10] sm:$0xff]
                %216 = vst [vmem:[%s212 + $0x8] sm:$0xff] %v215
                %v217 = vld [vmem:[%s211 + $0x20] sm:$0xff]
                %218 = vst [vmem:[%s212 + $0x10] sm:$0xff] %v217
                %v219 = vld [vmem:[%s211 + $0x30] sm:$0xff]
                %220 = vst [vmem:[%s212 + $0x18] sm:$0xff] %v219
                %v221 = vld [vmem:[%s211 + $0x40] sm:$0xff]
                %222 = vst [vmem:[%s212 + $0x20] sm:$0xff] %v221
                %v223 = vld [vmem:[%s211 + $0x50] sm:$0xff]
                %224 = vst [vmem:[%s212 + $0x28] sm:$0xff] %v223
                %v225 = vld [vmem:[%s211 + $0x60] sm:$0xff]
                %226 = vst [vmem:[%s212 + $0x30] sm:$0xff] %v225
                %v227 = vld [vmem:[%s211 + $0x70] sm:$0xff]
                %228 = vst [vmem:[%s212 + $0x38] sm:$0xff] %v227
                %v229 = vld [vmem:[%s211 + $0x80] sm:$0xff]
                %230 = vst [vmem:[%s212 + $0x40] sm:$0xff] %v229
                %v231 = vld [vmem:[%s211 + $0x90] sm:$0xff]
                %232 = vst [vmem:[%s212 + $0x48] sm:$0xff] %v231
                %v233 = vld [vmem:[%s211 + $0xa0] sm:$0xff]
                %234 = vst [vmem:[%s212 + $0x50] sm:$0xff] %v233
                %v235 = vld [vmem:[%s211 + $0xb0] sm:$0xff]
                %236 = vst [vmem:[%s212 + $0x58] sm:$0xff] %v235
                %v237 = vld [vmem:[%s211 + $0xc0] sm:$0xff]
                %238 = vst [vmem:[%s212 + $0x60] sm:$0xff] %v237
                %v239 = vld [vmem:[%s211 + $0xd0] sm:$0xff]
                %240 = vst [vmem:[%s212 + $0x68] sm:$0xff] %v239
                %v241 = vld [vmem:[%s211 + $0xe0] sm:$0xff]
                %242 = vst [vmem:[%s212 + $0x70] sm:$0xff] %v241
                %v243 = vld [vmem:[%s211 + $0xf0] sm:$0xff]
                %244 = vst [vmem:[%s212 + $0x78] sm:$0xff] %v243
                %v245 = vld [vmem:[%s211 + $0x100] sm:$0xff]
                %246 = vst [vmem:[%s212 + $0x80] sm:$0xff] %v245
                %v247 = vld [vmem:[%s211 + $0x110] sm:$0xff]
                %248 = vst [vmem:[%s212 + $0x88] sm:$0xff] %v247
                %v249 = vld [vmem:[%s211 + $0x120] sm:$0xff]
                %250 = vst [vmem:[%s212 + $0x90] sm:$0xff] %v249
                %v251 = vld [vmem:[%s211 + $0x130] sm:$0xff]
                %252 = vst [vmem:[%s212 + $0x98] sm:$0xff] %v251
                %v253 = vld [vmem:[%s211 + $0x140] sm:$0xff]
                %254 = vst [vmem:[%s212 + $0xa0] sm:$0xff] %v253
                %v255 = vld [vmem:[%s211 + $0x150] sm:$0xff]
                %256 = vst [vmem:[%s212 + $0xa8] sm:$0xff] %v255
                %v257 = vld [vmem:[%s211 + $0x160] sm:$0xff]
                %258 = vst [vmem:[%s212 + $0xb0] sm:$0xff] %v257
                %v259 = vld [vmem:[%s211 + $0x170] sm:$0xff]
                %260 = vst [vmem:[%s212 + $0xb8] sm:$0xff] %v259
                %v261 = vld [vmem:[%s211 + $0x180] sm:$0xff]
                %262 = vst [vmem:[%s212 + $0xc0] sm:$0xff] %v261
                %v263 = vld [vmem:[%s211 + $0x190] sm:$0xff]
                %264 = vst [vmem:[%s212 + $0xc8] sm:$0xff] %v263
                %v265 = vld [vmem:[%s211 + $0x1a0] sm:$0xff]
                %266 = vst [vmem:[%s212 + $0xd0] sm:$0xff] %v265
                %v267 = vld [vmem:[%s211 + $0x1b0] sm:$0xff]
                %268 = vst [vmem:[%s212 + $0xd8] sm:$0xff] %v267
                %v269 = vld [vmem:[%s211 + $0x1c0] sm:$0xff]
                %270 = vst [vmem:[%s212 + $0xe0] sm:$0xff] %v269
                %v271 = vld [vmem:[%s211 + $0x1d0] sm:$0xff]
                %272 = vst [vmem:[%s212 + $0xe8] sm:$0xff] %v271
                %v273 = vld [vmem:[%s211 + $0x1e0] sm:$0xff]
                %274 = vst [vmem:[%s212 + $0xf0] sm:$0xff] %v273
                %v275 = vld [vmem:[%s211 + $0x1f0] sm:$0xff]
                %276 = vst [vmem:[%s212 + $0xf8] sm:$0xff] %v275
                %v277 = vld [vmem:[%s211 + $0x200] sm:$0xff]
                %278 = vst [vmem:[%s212 + $0x100] sm:$0xff] %v277
                %v279 = vld [vmem:[%s211 + $0x210] sm:$0xff]
                %280 = vst [vmem:[%s212 + $0x108] sm:$0xff] %v279
                %v281 = vld [vmem:[%s211 + $0x220] sm:$0xff]
                %282 = vst [vmem:[%s212 + $0x110] sm:$0xff] %v281
                %v283 = vld [vmem:[%s211 + $0x230] sm:$0xff]
                %284 = vst [vmem:[%s212 + $0x118] sm:$0xff] %v283
                %v285 = vld [vmem:[%s211 + $0x240] sm:$0xff]
                %286 = vst [vmem:[%s212 + $0x120] sm:$0xff] %v285
                %v287 = vld [vmem:[%s211 + $0x250] sm:$0xff]
                %288 = vst [vmem:[%s212 + $0x128] sm:$0xff] %v287
                %v289 = vld [vmem:[%s211 + $0x260] sm:$0xff]
                %290 = vst [vmem:[%s212 + $0x130] sm:$0xff] %v289
                %v291 = vld [vmem:[%s211 + $0x270] sm:$0xff]
                %292 = vst [vmem:[%s212 + $0x138] sm:$0xff] %v291
                %v293 = vld [vmem:[%s211 + $0x280] sm:$0xff]
                %294 = vst [vmem:[%s212 + $0x140] sm:$0xff] %v293
                %v295 = vld [vmem:[%s211 + $0x290] sm:$0xff]
                %296 = vst [vmem:[%s212 + $0x148] sm:$0xff] %v295
                %v297 = vld [vmem:[%s211 + $0x2a0] sm:$0xff]
                %298 = vst [vmem:[%s212 + $0x150] sm:$0xff] %v297
                %v299 = vld [vmem:[%s211 + $0x2b0] sm:$0xff]
                %300 = vst [vmem:[%s212 + $0x158] sm:$0xff] %v299
                %v301 = vld [vmem:[%s211 + $0x2c0] sm:$0xff]
                %302 = vst [vmem:[%s212 + $0x160] sm:$0xff] %v301
                %v303 = vld [vmem:[%s211 + $0x2d0] sm:$0xff]
                %304 = vst [vmem:[%s212 + $0x168] sm:$0xff] %v303
                %v305 = vld [vmem:[%s211 + $0x2e0] sm:$0xff]
                %306 = vst [vmem:[%s212 + $0x170] sm:$0xff] %v305
                %v307 = vld [vmem:[%s211 + $0x2f0] sm:$0xff]
                %308 = vst [vmem:[%s212 + $0x178] sm:$0xff] %v307
                %v309 = vld [vmem:[%s211 + $0x300] sm:$0xff]
                %310 = vst [vmem:[%s212 + $0x180] sm:$0xff] %v309
                %v311 = vld [vmem:[%s211 + $0x310] sm:$0xff]
                %312 = vst [vmem:[%s212 + $0x188] sm:$0xff] %v311
                %v313 = vld [vmem:[%s211 + $0x320] sm:$0xff]
                %314 = vst [vmem:[%s212 + $0x190] sm:$0xff] %v313
                %v315 = vld [vmem:[%s211 + $0x330] sm:$0xff]
                %316 = vst [vmem:[%s212 + $0x198] sm:$0xff] %v315
                %v317 = vld [vmem:[%s211 + $0x340] sm:$0xff]
                %318 = vst [vmem:[%s212 + $0x1a0] sm:$0xff] %v317
                %v319 = vld [vmem:[%s211 + $0x350] sm:$0xff]
                %320 = vst [vmem:[%s212 + $0x1a8] sm:$0xff] %v319
                %v321 = vld [vmem:[%s211 + $0x360] sm:$0xff]
                %322 = vst [vmem:[%s212 + $0x1b0] sm:$0xff] %v321
                %v323 = vld [vmem:[%s211 + $0x370] sm:$0xff]
                %324 = vst [vmem:[%s212 + $0x1b8] sm:$0xff] %v323
                %v325 = vld [vmem:[%s211 + $0x380] sm:$0xff]
                %326 = vst [vmem:[%s212 + $0x1c0] sm:$0xff] %v325
                %v327 = vld [vmem:[%s211 + $0x390] sm:$0xff]
                %328 = vst [vmem:[%s212 + $0x1c8] sm:$0xff] %v327
                %v329 = vld [vmem:[%s211 + $0x3a0] sm:$0xff]
                %330 = vst [vmem:[%s212 + $0x1d0] sm:$0xff] %v329
                %v331 = vld [vmem:[%s211 + $0x3b0] sm:$0xff]
                %332 = vst [vmem:[%s212 + $0x1d8] sm:$0xff] %v331
                %v333 = vld [vmem:[%s211 + $0x3c0] sm:$0xff]
                %334 = vst [vmem:[%s212 + $0x1e0] sm:$0xff] %v333
                %v335 = vld [vmem:[%s211 + $0x3d0] sm:$0xff]
                %336 = vst [vmem:[%s212 + $0x1e8] sm:$0xff] %v335
                %v337 = vld [vmem:[%s211 + $0x3e0] sm:$0xff]
                %338 = vst [vmem:[%s212 + $0x1f0] sm:$0xff] %v337
                %v339 = vld [vmem:[%s211 + $0x3f0] sm:$0xff]
                %340 = vst [vmem:[%s212 + $0x1f8] sm:$0xff] %v339
                %v341 = vld [vmem:[%s211 + $0x400] sm:$0xff]
                %342 = vst [vmem:[%s212 + $0x200] sm:$0xff] %v341
                %v343 = vld [vmem:[%s211 + $0x410] sm:$0xff]
                %344 = vst [vmem:[%s212 + $0x208] sm:$0xff] %v343
                %v345 = vld [vmem:[%s211 + $0x420] sm:$0xff]
                %346 = vst [vmem:[%s212 + $0x210] sm:$0xff] %v345
                %v347 = vld [vmem:[%s211 + $0x430] sm:$0xff]
                %348 = vst [vmem:[%s212 + $0x218] sm:$0xff] %v347
                %v349 = vld [vmem:[%s211 + $0x440] sm:$0xff]
                %350 = vst [vmem:[%s212 + $0x220] sm:$0xff] %v349
                %v351 = vld [vmem:[%s211 + $0x450] sm:$0xff]
                %352 = vst [vmem:[%s212 + $0x228] sm:$0xff] %v351
                %v353 = vld [vmem:[%s211 + $0x460] sm:$0xff]
                %354 = vst [vmem:[%s212 + $0x230] sm:$0xff] %v353
                %v355 = vld [vmem:[%s211 + $0x470] sm:$0xff]
                %356 = vst [vmem:[%s212 + $0x238] sm:$0xff] %v355
                %v357 = vld [vmem:[%s211 + $0x480] sm:$0xff]
                %358 = vst [vmem:[%s212 + $0x240] sm:$0xff] %v357
                %v359 = vld [vmem:[%s211 + $0x490] sm:$0xff]
                %360 = vst [vmem:[%s212 + $0x248] sm:$0xff] %v359
                %v361 = vld [vmem:[%s211 + $0x4a0] sm:$0xff]
                %362 = vst [vmem:[%s212 + $0x250] sm:$0xff] %v361
                %v363 = vld [vmem:[%s211 + $0x4b0] sm:$0xff]
                %364 = vst [vmem:[%s212 + $0x258] sm:$0xff] %v363
                %v365 = vld [vmem:[%s211 + $0x4c0] sm:$0xff]
                %366 = vst [vmem:[%s212 + $0x260] sm:$0xff] %v365
                %v367 = vld [vmem:[%s211 + $0x4d0] sm:$0xff]
                %368 = vst [vmem:[%s212 + $0x268] sm:$0xff] %v367
                %v369 = vld [vmem:[%s211 + $0x4e0] sm:$0xff]
                %370 = vst [vmem:[%s212 + $0x270] sm:$0xff] %v369
                %v371 = vld [vmem:[%s211 + $0x4f0] sm:$0xff]
                %372 = vst [vmem:[%s212 + $0x278] sm:$0xff] %v371
                %v373 = vld [vmem:[%s211 + $0x500] sm:$0xff]
                %374 = vst [vmem:[%s212 + $0x280] sm:$0xff] %v373
                %v375 = vld [vmem:[%s211 + $0x510] sm:$0xff]
                %376 = vst [vmem:[%s212 + $0x288] sm:$0xff] %v375
                %v377 = vld [vmem:[%s211 + $0x520] sm:$0xff]
                %378 = vst [vmem:[%s212 + $0x290] sm:$0xff] %v377
                %v379 = vld [vmem:[%s211 + $0x530] sm:$0xff]
                %380 = vst [vmem:[%s212 + $0x298] sm:$0xff] %v379
                %v381 = vld [vmem:[%s211 + $0x540] sm:$0xff]
                %382 = vst [vmem:[%s212 + $0x2a0] sm:$0xff] %v381
                %v383 = vld [vmem:[%s211 + $0x550] sm:$0xff]
                %384 = vst [vmem:[%s212 + $0x2a8] sm:$0xff] %v383
                %v385 = vld [vmem:[%s211 + $0x560] sm:$0xff]
                %386 = vst [vmem:[%s212 + $0x2b0] sm:$0xff] %v385
                %v387 = vld [vmem:[%s211 + $0x570] sm:$0xff]
                %388 = vst [vmem:[%s212 + $0x2b8] sm:$0xff] %v387
                %v389 = vld [vmem:[%s211 + $0x580] sm:$0xff]
                %390 = vst [vmem:[%s212 + $0x2c0] sm:$0xff] %v389
                %v391 = vld [vmem:[%s211 + $0x590] sm:$0xff]
                %392 = vst [vmem:[%s212 + $0x2c8] sm:$0xff] %v391
                %v393 = vld [vmem:[%s211 + $0x5a0] sm:$0xff]
                %394 = vst [vmem:[%s212 + $0x2d0] sm:$0xff] %v393
                %v395 = vld [vmem:[%s211 + $0x5b0] sm:$0xff]
                %396 = vst [vmem:[%s212 + $0x2d8] sm:$0xff] %v395
                %v397 = vld [vmem:[%s211 + $0x5c0] sm:$0xff]
                %398 = vst [vmem:[%s212 + $0x2e0] sm:$0xff] %v397
                %v399 = vld [vmem:[%s211 + $0x5d0] sm:$0xff]
                %400 = vst [vmem:[%s212 + $0x2e8] sm:$0xff] %v399
                %v401 = vld [vmem:[%s211 + $0x5e0] sm:$0xff]
                %402 = vst [vmem:[%s212 + $0x2f0] sm:$0xff] %v401
                %v403 = vld [vmem:[%s211 + $0x5f0] sm:$0xff]
                %404 = vst [vmem:[%s212 + $0x2f8] sm:$0xff] %v403
                %v405 = vld [vmem:[%s211 + $0x600] sm:$0xff]
                %406 = vst [vmem:[%s212 + $0x300] sm:$0xff] %v405
                %v407 = vld [vmem:[%s211 + $0x610] sm:$0xff]
                %408 = vst [vmem:[%s212 + $0x308] sm:$0xff] %v407
                %v409 = vld [vmem:[%s211 + $0x620] sm:$0xff]
                %410 = vst [vmem:[%s212 + $0x310] sm:$0xff] %v409
                %v411 = vld [vmem:[%s211 + $0x630] sm:$0xff]
                %412 = vst [vmem:[%s212 + $0x318] sm:$0xff] %v411
                %v413 = vld [vmem:[%s211 + $0x640] sm:$0xff]
                %414 = vst [vmem:[%s212 + $0x320] sm:$0xff] %v413
                %v415 = vld [vmem:[%s211 + $0x650] sm:$0xff]
                %416 = vst [vmem:[%s212 + $0x328] sm:$0xff] %v415
                %v417 = vld [vmem:[%s211 + $0x660] sm:$0xff]
                %418 = vst [vmem:[%s212 + $0x330] sm:$0xff] %v417
                %v419 = vld [vmem:[%s211 + $0x670] sm:$0xff]
                %420 = vst [vmem:[%s212 + $0x338] sm:$0xff] %v419
                %v421 = vld [vmem:[%s211 + $0x680] sm:$0xff]
                %422 = vst [vmem:[%s212 + $0x340] sm:$0xff] %v421
                %v423 = vld [vmem:[%s211 + $0x690] sm:$0xff]
                %424 = vst [vmem:[%s212 + $0x348] sm:$0xff] %v423
                %v425 = vld [vmem:[%s211 + $0x6a0] sm:$0xff]
                %426 = vst [vmem:[%s212 + $0x350] sm:$0xff] %v425
                %v427 = vld [vmem:[%s211 + $0x6b0] sm:$0xff]
                %428 = vst [vmem:[%s212 + $0x358] sm:$0xff] %v427
                %v429 = vld [vmem:[%s211 + $0x6c0] sm:$0xff]
                %430 = vst [vmem:[%s212 + $0x360] sm:$0xff] %v429
                %v431 = vld [vmem:[%s211 + $0x6d0] sm:$0xff]
                %432 = vst [vmem:[%s212 + $0x368] sm:$0xff] %v431
                %v433 = vld [vmem:[%s211 + $0x6e0] sm:$0xff]
                %434 = vst [vmem:[%s212 + $0x370] sm:$0xff] %v433
                %v435 = vld [vmem:[%s211 + $0x6f0] sm:$0xff]
                %436 = vst [vmem:[%s212 + $0x378] sm:$0xff] %v435
                %v437 = vld [vmem:[%s211 + $0x700] sm:$0xff]
                %438 = vst [vmem:[%s212 + $0x380] sm:$0xff] %v437
                %v439 = vld [vmem:[%s211 + $0x710] sm:$0xff]
                %440 = vst [vmem:[%s212 + $0x388] sm:$0xff] %v439
                %v441 = vld [vmem:[%s211 + $0x720] sm:$0xff]
                %442 = vst [vmem:[%s212 + $0x390] sm:$0xff] %v441
                %v443 = vld [vmem:[%s211 + $0x730] sm:$0xff]
                %444 = vst [vmem:[%s212 + $0x398] sm:$0xff] %v443
                %v445 = vld [vmem:[%s211 + $0x740] sm:$0xff]
                %446 = vst [vmem:[%s212 + $0x3a0] sm:$0xff] %v445
                %v447 = vld [vmem:[%s211 + $0x750] sm:$0xff]
                %448 = vst [vmem:[%s212 + $0x3a8] sm:$0xff] %v447
                %v449 = vld [vmem:[%s211 + $0x760] sm:$0xff]
                %450 = vst [vmem:[%s212 + $0x3b0] sm:$0xff] %v449
                %v451 = vld [vmem:[%s211 + $0x770] sm:$0xff]
                %452 = vst [vmem:[%s212 + $0x3b8] sm:$0xff] %v451
                %v453 = vld [vmem:[%s211 + $0x780] sm:$0xff]
                %454 = vst [vmem:[%s212 + $0x3c0] sm:$0xff] %v453
                %v455 = vld [vmem:[%s211 + $0x790] sm:$0xff]
                %456 = vst [vmem:[%s212 + $0x3c8] sm:$0xff] %v455
                %v457 = vld [vmem:[%s211 + $0x7a0] sm:$0xff]
                %458 = vst [vmem:[%s212 + $0x3d0] sm:$0xff] %v457
                %v459 = vld [vmem:[%s211 + $0x7b0] sm:$0xff]
                %460 = vst [vmem:[%s212 + $0x3d8] sm:$0xff] %v459
                %v461 = vld [vmem:[%s211 + $0x7c0] sm:$0xff]
                %462 = vst [vmem:[%s212 + $0x3e0] sm:$0xff] %v461
                %v463 = vld [vmem:[%s211 + $0x7d0] sm:$0xff]
                %464 = vst [vmem:[%s212 + $0x3e8] sm:$0xff] %v463
                %v465 = vld [vmem:[%s211 + $0x7e0] sm:$0xff]
                %466 = vst [vmem:[%s212 + $0x3f0] sm:$0xff] %v465
                %v467 = vld [vmem:[%s211 + $0x7f0] sm:$0xff]
                %468 = vst [vmem:[%s212 + $0x3f8] sm:$0xff] %v467
              $region64: #{_lambda_.13} parent=58 // loop_footer
                %s210 = sadd.s32 1, %s206
              $region65: #{_lambda_.13} parent=58 // loop_footer_branch
                %205 = sbr.rel target = $region61
              $region66: #{_lambda_.13} parent=58 // loop_exit
                _
            $region59: #{_lambda_.13} parent=50 // pred_fallthru
              _
          $region51: #{_lambda_.13} parent=46 // pred_fallthru
            _
          %737 = vnop
        $region47: #{_lambda_.13} parent=19 // pred_fallthru
          _
      $region20: #{_lambda_.13} parent=5 // pred_fallthru
        _
      %p738 = scmp.le.s32.totalorder 1, %s9
      %p739 = scmp.lt.s32.totalorder %s9, 17
      %p740 = pnand %p738, %p739
      %p741 = pneg %p740
      // Predicated region
      $region82: #{_lambda_.13} parent=5 // pred_check
        _
      $region83: #{_lambda_.13} parent=5 // pred_check_branch
        %743 = sbr.rel (%p740) target = $region85
      $region84: #{_lambda_.13} parent=5 // pred_region
        %s744 = ssub.s32 %s9, 1
        %s745 = sand.u32 %s34, 1
        %s746 = sand.u32 %s34, 1
        %s747 = smul.addr %s746, 64
        %s748 = scalar_lea.vmem [#allocation3], %s747
        // Predicated region
        $region86: #{_lambda_.13} parent=84 // pred_check
          %p749 = pneg %p47
        $region87: #{_lambda_.13} parent=84 // pred_check_branch
          %751 = sbr.rel (%p749) target = $region89
        $region88: #{_lambda_.13} parent=84 // pred_region
          _
        $region89: #{_lambda_.13} parent=84 // pred_fallthru
          _
        %s752 = sand.u32 %s62, 1
        %s753 = sand.u32 %s62, 1
        %s754 = smul.addr %s753, 1024
        %s755 = scalar_lea.vmem [#allocation4], %s754
        // Predicated region
        $region90: #{_lambda_.13} parent=84 // pred_check
          %p756 = pneg %p75
        $region91: #{_lambda_.13} parent=84 // pred_check_branch
          %758 = sbr.rel (%p756) target = $region93
        $region92: #{_lambda_.13} parent=84 // pred_region
          _
        $region93: #{_lambda_.13} parent=84 // pred_fallthru
          _
        %s759 = sand.u32 %s34, 1
        %s760 = sand.u32 %s34, 1
        %s761 = smul.addr %s760, 64
        %s762 = scalar_lea.vmem [#allocation3], %s761
        %p763 = pneg %p47
        %p764 = pneg %p44
        %s765 = sand.u32 %s62, 1
        %s766 = sand.u32 %s62, 1
        %s767 = smul.addr %s766, 1024
        %s768 = scalar_lea.vmem [#allocation4], %s767
        %p769 = pneg %p75
        %p770 = pneg %p72
        %p771 = pneg %p96
        %p772 = pneg %p93
        %p773 = pneg %p122
        %p774 = pneg %p119
        %s775 = sand.u32 %s109, 1
        %s776 = sand.u32 %s109, 1
        %s777 = smul.addr %s776, 32
        %s778 = scalar_lea.vmem [#allocation5], %s777
        %s779 = smul.u32 8, %s19
        %s780 = smul.u32 128, %s19
        %s781 = smul.u32 2, %s18
        %s782 = smul.u32 2, %s18
        %p783 = scmp.eq.s32.totalorder %s19, 0
        // Predicated region
        $region94: #{_lambda_.13} parent=84 // pred_check
          %p784 = pneg %p783
        $region95: #{_lambda_.13} parent=84 // pred_check_branch
          %786 = sbr.rel (%p784) target = $region97
        $region96: #{_lambda_.13} parent=84 // pred_region
          %787 = vst [vmem:[#allocation2] sm:$0xff] 0.0
          %788 = vst [vmem:[#allocation2 + $0x8] sm:$0xff] 0.0
          %789 = vst [vmem:[#allocation2 + $0x10] sm:$0xff] 0.0
          %790 = vst [vmem:[#allocation2 + $0x18] sm:$0xff] 0.0
        $region97: #{_lambda_.13} parent=84 // pred_fallthru
          _
        %v791 = vld [vmem:[#allocation2] sm:$0xff]
        %v792 = vld [vmem:[#allocation2 + $0x8] sm:$0xff]
        %v793 = vld [vmem:[#allocation2 + $0x10] sm:$0xff]
        %v794 = vld [vmem:[#allocation2 + $0x18] sm:$0xff]
        %v795 = vld [vmem:[%s748] sm:$0xff]
        %v796 = vld [vmem:[%s748 + $0x8] sm:$0xff]
        %v797 = vld [vmem:[%s748 + $0x10] sm:$0xff]
        %v798 = vld [vmem:[%s748 + $0x18] sm:$0xff]
        %v799 = vld [vmem:[%s748 + $0x20] sm:$0xff]
        %v800 = vld [vmem:[%s748 + $0x28] sm:$0xff]
        %v801 = vld [vmem:[%s748 + $0x30] sm:$0xff]
        %v802 = vld [vmem:[%s748 + $0x38] sm:$0xff]
        %v803 = vld [vmem:[%s755] sm:$0xff]
        %v804 = vld [vmem:[%s755 + $0x8] sm:$0xff]
        %v805 = vld [vmem:[%s755 + $0x10] sm:$0xff]
        %v806 = vld [vmem:[%s755 + $0x18] sm:$0xff]
        %v807 = vld [vmem:[%s755 + $0x20] sm:$0xff]
        %v808 = vld [vmem:[%s755 + $0x28] sm:$0xff]
        %v809 = vld [vmem:[%s755 + $0x30] sm:$0xff]
        %v810 = vld [vmem:[%s755 + $0x38] sm:$0xff]
        %v811 = vld [vmem:[%s755 + $0x40] sm:$0xff]
        %v812 = vld [vmem:[%s755 + $0x48] sm:$0xff]
        %v813 = vld [vmem:[%s755 + $0x50] sm:$0xff]
        %v814 = vld [vmem:[%s755 + $0x58] sm:$0xff]
        %v815 = vld [vmem:[%s755 + $0x60] sm:$0xff]
        %v816 = vld [vmem:[%s755 + $0x68] sm:$0xff]
        %v817 = vld [vmem:[%s755 + $0x70] sm:$0xff]
        %v818 = vld [vmem:[%s755 + $0x78] sm:$0xff]
        %v819 = vld [vmem:[%s755 + $0x80] sm:$0xff]
        %v820 = vld [vmem:[%s755 + $0x88] sm:$0xff]
        %v821 = vld [vmem:[%s755 + $0x90] sm:$0xff]
        %v822 = vld [vmem:[%s755 + $0x98] sm:$0xff]
        %v823 = vld [vmem:[%s755 + $0xa0] sm:$0xff]
        %v824 = vld [vmem:[%s755 + $0xa8] sm:$0xff]
        %v825 = vld [vmem:[%s755 + $0xb0] sm:$0xff]
        %v826 = vld [vmem:[%s755 + $0xb8] sm:$0xff]
        %v827 = vld [vmem:[%s755 + $0xc0] sm:$0xff]
        %v828 = vld [vmem:[%s755 + $0xc8] sm:$0xff]
        %v829 = vld [vmem:[%s755 + $0xd0] sm:$0xff]
        %v830 = vld [vmem:[%s755 + $0xd8] sm:$0xff]
        %v831 = vld [vmem:[%s755 + $0xe0] sm:$0xff]
        %v832 = vld [vmem:[%s755 + $0xe8] sm:$0xff]
        %v833 = vld [vmem:[%s755 + $0xf0] sm:$0xff]
        %v834 = vld [vmem:[%s755 + $0xf8] sm:$0xff]
        %v835 = vld [vmem:[%s755 + $0x100] sm:$0xff]
        %v836 = vld [vmem:[%s755 + $0x108] sm:$0xff]
        %v837 = vld [vmem:[%s755 + $0x110] sm:$0xff]
        %v838 = vld [vmem:[%s755 + $0x118] sm:$0xff]
        %v839 = vld [vmem:[%s755 + $0x120] sm:$0xff]
        %v840 = vld [vmem:[%s755 + $0x128] sm:$0xff]
        %v841 = vld [vmem:[%s755 + $0x130] sm:$0xff]
        %v842 = vld [vmem:[%s755 + $0x138] sm:$0xff]
        %v843 = vld [vmem:[%s755 + $0x140] sm:$0xff]
        %v844 = vld [vmem:[%s755 + $0x148] sm:$0xff]
        %v845 = vld [vmem:[%s755 + $0x150] sm:$0xff]
        %v846 = vld [vmem:[%s755 + $0x158] sm:$0xff]
        %v847 = vld [vmem:[%s755 + $0x160] sm:$0xff]
        %v848 = vld [vmem:[%s755 + $0x168] sm:$0xff]
        %v849 = vld [vmem:[%s755 + $0x170] sm:$0xff]
        %v850 = vld [vmem:[%s755 + $0x178] sm:$0xff]
        %v851 = vld [vmem:[%s755 + $0x180] sm:$0xff]
        %v852 = vld [vmem:[%s755 + $0x188] sm:$0xff]
        %v853 = vld [vmem:[%s755 + $0x190] sm:$0xff]
        %v854 = vld [vmem:[%s755 + $0x198] sm:$0xff]
        %v855 = vld [vmem:[%s755 + $0x1a0] sm:$0xff]
        %v856 = vld [vmem:[%s755 + $0x1a8] sm:$0xff]
        %v857 = vld [vmem:[%s755 + $0x1b0] sm:$0xff]
        %v858 = vld [vmem:[%s755 + $0x1b8] sm:$0xff]
        %v859 = vld [vmem:[%s755 + $0x1c0] sm:$0xff]
        %v860 = vld [vmem:[%s755 + $0x1c8] sm:$0xff]
        %v861 = vld [vmem:[%s755 + $0x1d0] sm:$0xff]
        %v862 = vld [vmem:[%s755 + $0x1d8] sm:$0xff]
        %v863 = vld [vmem:[%s755 + $0x1e0] sm:$0xff]
        %v864 = vld [vmem:[%s755 + $0x1e8] sm:$0xff]
        %v865 = vld [vmem:[%s755 + $0x1f0] sm:$0xff]
        %v866 = vld [vmem:[%s755 + $0x1f8] sm:$0xff]
        %v867 = vld [vmem:[%s755 + $0x200] sm:$0xff]
        %v868 = vld [vmem:[%s755 + $0x208] sm:$0xff]
        %v869 = vld [vmem:[%s755 + $0x210] sm:$0xff]
        %v870 = vld [vmem:[%s755 + $0x218] sm:$0xff]
        %v871 = vld [vmem:[%s755 + $0x220] sm:$0xff]
        %v872 = vld [vmem:[%s755 + $0x228] sm:$0xff]
        %v873 = vld [vmem:[%s755 + $0x230] sm:$0xff]
        %v874 = vld [vmem:[%s755 + $0x238] sm:$0xff]
        %v875 = vld [vmem:[%s755 + $0x240] sm:$0xff]
        %v876 = vld [vmem:[%s755 + $0x248] sm:$0xff]
        %v877 = vld [vmem:[%s755 + $0x250] sm:$0xff]
        %v878 = vld [vmem:[%s755 + $0x258] sm:$0xff]
        %v879 = vld [vmem:[%s755 + $0x260] sm:$0xff]
        %v880 = vld [vmem:[%s755 + $0x268] sm:$0xff]
        %v881 = vld [vmem:[%s755 + $0x270] sm:$0xff]
        %v882 = vld [vmem:[%s755 + $0x278] sm:$0xff]
        %v883 = vld [vmem:[%s755 + $0x280] sm:$0xff]
        %v884 = vld [vmem:[%s755 + $0x288] sm:$0xff]
        %v885 = vld [vmem:[%s755 + $0x290] sm:$0xff]
        %v886 = vld [vmem:[%s755 + $0x298] sm:$0xff]
        %v887 = vld [vmem:[%s755 + $0x2a0] sm:$0xff]
        %v888 = vld [vmem:[%s755 + $0x2a8] sm:$0xff]
        %v889 = vld [vmem:[%s755 + $0x2b0] sm:$0xff]
        %v890 = vld [vmem:[%s755 + $0x2b8] sm:$0xff]
        %v891 = vld [vmem:[%s755 + $0x2c0] sm:$0xff]
        %v892 = vld [vmem:[%s755 + $0x2c8] sm:$0xff]
        %v893 = vld [vmem:[%s755 + $0x2d0] sm:$0xff]
        %v894 = vld [vmem:[%s755 + $0x2d8] sm:$0xff]
        %v895 = vld [vmem:[%s755 + $0x2e0] sm:$0xff]
        %v896 = vld [vmem:[%s755 + $0x2e8] sm:$0xff]
        %v897 = vld [vmem:[%s755 + $0x2f0] sm:$0xff]
        %v898 = vld [vmem:[%s755 + $0x2f8] sm:$0xff]
        %v899 = vld [vmem:[%s755 + $0x300] sm:$0xff]
        %v900 = vld [vmem:[%s755 + $0x308] sm:$0xff]
        %v901 = vld [vmem:[%s755 + $0x310] sm:$0xff]
        %v902 = vld [vmem:[%s755 + $0x318] sm:$0xff]
        %v903 = vld [vmem:[%s755 + $0x320] sm:$0xff]
        %v904 = vld [vmem:[%s755 + $0x328] sm:$0xff]
        %v905 = vld [vmem:[%s755 + $0x330] sm:$0xff]
        %v906 = vld [vmem:[%s755 + $0x338] sm:$0xff]
        %v907 = vld [vmem:[%s755 + $0x340] sm:$0xff]
        %v908 = vld [vmem:[%s755 + $0x348] sm:$0xff]
        %v909 = vld [vmem:[%s755 + $0x350] sm:$0xff]
        %v910 = vld [vmem:[%s755 + $0x358] sm:$0xff]
        %v911 = vld [vmem:[%s755 + $0x360] sm:$0xff]
        %v912 = vld [vmem:[%s755 + $0x368] sm:$0xff]
        %v913 = vld [vmem:[%s755 + $0x370] sm:$0xff]
        %v914 = vld [vmem:[%s755 + $0x378] sm:$0xff]
        %v915 = vld [vmem:[%s755 + $0x380] sm:$0xff]
        %v916 = vld [vmem:[%s755 + $0x388] sm:$0xff]
        %v917 = vld [vmem:[%s755 + $0x390] sm:$0xff]
        %v918 = vld [vmem:[%s755 + $0x398] sm:$0xff]
        %v919 = vld [vmem:[%s755 + $0x3a0] sm:$0xff]
        %v920 = vld [vmem:[%s755 + $0x3a8] sm:$0xff]
        %v921 = vld [vmem:[%s755 + $0x3b0] sm:$0xff]
        %v922 = vld [vmem:[%s755 + $0x3b8] sm:$0xff]
        %v923 = vld [vmem:[%s755 + $0x3c0] sm:$0xff]
        %v924 = vld [vmem:[%s755 + $0x3c8] sm:$0xff]
        %v925 = vld [vmem:[%s755 + $0x3d0] sm:$0xff]
        %v926 = vld [vmem:[%s755 + $0x3d8] sm:$0xff]
        %v927 = vld [vmem:[%s755 + $0x3e0] sm:$0xff]
        %v928 = vld [vmem:[%s755 + $0x3e8] sm:$0xff]
        %v929 = vld [vmem:[%s755 + $0x3f0] sm:$0xff]
        %v930 = vld [vmem:[%s755 + $0x3f8] sm:$0xff]
        %v939 = vunpack.c.l.b16 %v795
        %v940 = vunpack.c.h.b16 %v795
        %v941 = vunpack.c.l.b16 %v796
        %v942 = vunpack.c.h.b16 %v796
        %v943 = vunpack.c.l.b16 %v797
        %v944 = vunpack.c.h.b16 %v797
        %v945 = vunpack.c.l.b16 %v798
        %v946 = vunpack.c.h.b16 %v798
        %v947 = vunpack.c.l.b16 %v799
        %v948 = vunpack.c.h.b16 %v799
        %v949 = vunpack.c.l.b16 %v800
        %v950 = vunpack.c.h.b16 %v800
        %v951 = vunpack.c.l.b16 %v801
        %v952 = vunpack.c.h.b16 %v801
        %v953 = vunpack.c.l.b16 %v802
        %v954 = vunpack.c.h.b16 %v802
        %v955 = vpack.c.b16 %v947, %v939
        %v956 = vpack.c.b16 %v948, %v940
        %v957 = vpack.c.b16 %v949, %v941
        %v958 = vpack.c.b16 %v950, %v942
        %v959 = vpack.c.b16 %v951, %v943
        %v960 = vpack.c.b16 %v952, %v944
        %v961 = vpack.c.b16 %v953, %v945
        %v962 = vpack.c.b16 %v954, %v946
        %v1099 = vunpack.c.l.b16 %v803
        %v1100 = vunpack.c.h.b16 %v803
        %v1101 = vunpack.c.l.b16 %v804
        %v1102 = vunpack.c.h.b16 %v804
        %v1103 = vunpack.c.l.b16 %v805
        %v1104 = vunpack.c.h.b16 %v805
        %v1105 = vunpack.c.l.b16 %v806
        %v1106 = vunpack.c.h.b16 %v806
        %v1107 = vunpack.c.l.b16 %v807
        %v1108 = vunpack.c.h.b16 %v807
        %v1109 = vunpack.c.l.b16 %v808
        %v1110 = vunpack.c.h.b16 %v808
        %v1111 = vunpack.c.l.b16 %v809
        %v1112 = vunpack.c.h.b16 %v809
        %v1113 = vunpack.c.l.b16 %v810
        %v1114 = vunpack.c.h.b16 %v810
        %v1115 = vunpack.c.l.b16 %v811
        %v1116 = vunpack.c.h.b16 %v811
        %v1117 = vunpack.c.l.b16 %v812
        %v1118 = vunpack.c.h.b16 %v812
        %v1119 = vunpack.c.l.b16 %v813
        %v1120 = vunpack.c.h.b16 %v813
        %v1121 = vunpack.c.l.b16 %v814
        %v1122 = vunpack.c.h.b16 %v814
        %v1123 = vunpack.c.l.b16 %v815
        %v1124 = vunpack.c.h.b16 %v815
        %v1125 = vunpack.c.l.b16 %v816
        %v1126 = vunpack.c.h.b16 %v816
        %v1127 = vunpack.c.l.b16 %v817
        %v1128 = vunpack.c.h.b16 %v817
        %v1129 = vunpack.c.l.b16 %v818
        %v1130 = vunpack.c.h.b16 %v818
        %v1131 = vunpack.c.l.b16 %v819
        %v1132 = vunpack.c.h.b16 %v819
        %v1133 = vunpack.c.l.b16 %v820
        %v1134 = vunpack.c.h.b16 %v820
        %v1135 = vunpack.c.l.b16 %v821
        %v1136 = vunpack.c.h.b16 %v821
        %v1137 = vunpack.c.l.b16 %v822
        %v1138 = vunpack.c.h.b16 %v822
        %v1139 = vunpack.c.l.b16 %v823
        %v1140 = vunpack.c.h.b16 %v823
        %v1141 = vunpack.c.l.b16 %v824
        %v1142 = vunpack.c.h.b16 %v824
        %v1143 = vunpack.c.l.b16 %v825
        %v1144 = vunpack.c.h.b16 %v825
        %v1145 = vunpack.c.l.b16 %v826
        %v1146 = vunpack.c.h.b16 %v826
        %v1147 = vunpack.c.l.b16 %v827
        %v1148 = vunpack.c.h.b16 %v827
        %v1149 = vunpack.c.l.b16 %v828
        %v1150 = vunpack.c.h.b16 %v828
        %v1151 = vunpack.c.l.b16 %v829
        %v1152 = vunpack.c.h.b16 %v829
        %v1153 = vunpack.c.l.b16 %v830
        %v1154 = vunpack.c.h.b16 %v830
        %v1155 = vunpack.c.l.b16 %v831
        %v1156 = vunpack.c.h.b16 %v831
        %v1157 = vunpack.c.l.b16 %v832
        %v1158 = vunpack.c.h.b16 %v832
        %v1159 = vunpack.c.l.b16 %v833
        %v1160 = vunpack.c.h.b16 %v833
        %v1161 = vunpack.c.l.b16 %v834
        %v1162 = vunpack.c.h.b16 %v834
        %v1163 = vunpack.c.l.b16 %v835
        %v1164 = vunpack.c.h.b16 %v835
        %v1165 = vunpack.c.l.b16 %v836
        %v1166 = vunpack.c.h.b16 %v836
        %v1167 = vunpack.c.l.b16 %v837
        %v1168 = vunpack.c.h.b16 %v837
        %v1169 = vunpack.c.l.b16 %v838
        %v1170 = vunpack.c.h.b16 %v838
        %v1171 = vunpack.c.l.b16 %v839
        %v1172 = vunpack.c.h.b16 %v839
        %v1173 = vunpack.c.l.b16 %v840
        %v1174 = vunpack.c.h.b16 %v840
        %v1175 = vunpack.c.l.b16 %v841
        %v1176 = vunpack.c.h.b16 %v841
        %v1177 = vunpack.c.l.b16 %v842
        %v1178 = vunpack.c.h.b16 %v842
        %v1179 = vunpack.c.l.b16 %v843
        %v1180 = vunpack.c.h.b16 %v843
        %v1181 = vunpack.c.l.b16 %v844
        %v1182 = vunpack.c.h.b16 %v844
        %v1183 = vunpack.c.l.b16 %v845
        %v1184 = vunpack.c.h.b16 %v845
        %v1185 = vunpack.c.l.b16 %v846
        %v1186 = vunpack.c.h.b16 %v846
        %v1187 = vunpack.c.l.b16 %v847
        %v1188 = vunpack.c.h.b16 %v847
        %v1189 = vunpack.c.l.b16 %v848
        %v1190 = vunpack.c.h.b16 %v848
        %v1191 = vunpack.c.l.b16 %v849
        %v1192 = vunpack.c.h.b16 %v849
        %v1193 = vunpack.c.l.b16 %v850
        %v1194 = vunpack.c.h.b16 %v850
        %v1195 = vunpack.c.l.b16 %v851
        %v1196 = vunpack.c.h.b16 %v851
        %v1197 = vunpack.c.l.b16 %v852
        %v1198 = vunpack.c.h.b16 %v852
        %v1199 = vunpack.c.l.b16 %v853
        %v1200 = vunpack.c.h.b16 %v853
        %v1201 = vunpack.c.l.b16 %v854
        %v1202 = vunpack.c.h.b16 %v854
        %v1203 = vunpack.c.l.b16 %v855
        %v1204 = vunpack.c.h.b16 %v855
        %v1205 = vunpack.c.l.b16 %v856
        %v1206 = vunpack.c.h.b16 %v856
        %v1207 = vunpack.c.l.b16 %v857
        %v1208 = vunpack.c.h.b16 %v857
        %v1209 = vunpack.c.l.b16 %v858
        %v1210 = vunpack.c.h.b16 %v858
        %v1211 = vunpack.c.l.b16 %v859
        %v1212 = vunpack.c.h.b16 %v859
        %v1213 = vunpack.c.l.b16 %v860
        %v1214 = vunpack.c.h.b16 %v860
        %v1215 = vunpack.c.l.b16 %v861
        %v1216 = vunpack.c.h.b16 %v861
        %v1217 = vunpack.c.l.b16 %v862
        %v1218 = vunpack.c.h.b16 %v862
        %v1219 = vunpack.c.l.b16 %v863
        %v1220 = vunpack.c.h.b16 %v863
        %v1221 = vunpack.c.l.b16 %v864
        %v1222 = vunpack.c.h.b16 %v864
        %v1223 = vunpack.c.l.b16 %v865
        %v1224 = vunpack.c.h.b16 %v865
        %v1225 = vunpack.c.l.b16 %v866
        %v1226 = vunpack.c.h.b16 %v866
        %v1227 = vunpack.c.l.b16 %v867
        %v1228 = vunpack.c.h.b16 %v867
        %v1229 = vunpack.c.l.b16 %v868
        %v1230 = vunpack.c.h.b16 %v868
        %v1231 = vunpack.c.l.b16 %v869
        %v1232 = vunpack.c.h.b16 %v869
        %v1233 = vunpack.c.l.b16 %v870
        %v1234 = vunpack.c.h.b16 %v870
        %v1235 = vunpack.c.l.b16 %v871
        %v1236 = vunpack.c.h.b16 %v871
        %v1237 = vunpack.c.l.b16 %v872
        %v1238 = vunpack.c.h.b16 %v872
        %v1239 = vunpack.c.l.b16 %v873
        %v1240 = vunpack.c.h.b16 %v873
        %v1241 = vunpack.c.l.b16 %v874
        %v1242 = vunpack.c.h.b16 %v874
        %v1243 = vunpack.c.l.b16 %v875
        %v1244 = vunpack.c.h.b16 %v875
        %v1245 = vunpack.c.l.b16 %v876
        %v1246 = vunpack.c.h.b16 %v876
        %v1247 = vunpack.c.l.b16 %v877
        %v1248 = vunpack.c.h.b16 %v877
        %v1249 = vunpack.c.l.b16 %v878
        %v1250 = vunpack.c.h.b16 %v878
        %v1251 = vunpack.c.l.b16 %v879
        %v1252 = vunpack.c.h.b16 %v879
        %v1253 = vunpack.c.l.b16 %v880
        %v1254 = vunpack.c.h.b16 %v880
        %v1255 = vunpack.c.l.b16 %v881
        %v1256 = vunpack.c.h.b16 %v881
        %v1257 = vunpack.c.l.b16 %v882
        %v1258 = vunpack.c.h.b16 %v882
        %v1259 = vunpack.c.l.b16 %v883
        %v1260 = vunpack.c.h.b16 %v883
        %v1261 = vunpack.c.l.b16 %v884
        %v1262 = vunpack.c.h.b16 %v884
        %v1263 = vunpack.c.l.b16 %v885
        %v1264 = vunpack.c.h.b16 %v885
        %v1265 = vunpack.c.l.b16 %v886
        %v1266 = vunpack.c.h.b16 %v886
        %v1267 = vunpack.c.l.b16 %v887
        %v1268 = vunpack.c.h.b16 %v887
        %v1269 = vunpack.c.l.b16 %v888
        %v1270 = vunpack.c.h.b16 %v888
        %v1271 = vunpack.c.l.b16 %v889
        %v1272 = vunpack.c.h.b16 %v889
        %v1273 = vunpack.c.l.b16 %v890
        %v1274 = vunpack.c.h.b16 %v890
        %v1275 = vunpack.c.l.b16 %v891
        %v1276 = vunpack.c.h.b16 %v891
        %v1277 = vunpack.c.l.b16 %v892
        %v1278 = vunpack.c.h.b16 %v892
        %v1279 = vunpack.c.l.b16 %v893
        %v1280 = vunpack.c.h.b16 %v893
        %v1281 = vunpack.c.l.b16 %v894
        %v1282 = vunpack.c.h.b16 %v894
        %v1283 = vunpack.c.l.b16 %v895
        %v1284 = vunpack.c.h.b16 %v895
        %v1285 = vunpack.c.l.b16 %v896
        %v1286 = vunpack.c.h.b16 %v896
        %v1287 = vunpack.c.l.b16 %v897
        %v1288 = vunpack.c.h.b16 %v897
        %v1289 = vunpack.c.l.b16 %v898
        %v1290 = vunpack.c.h.b16 %v898
        %v1291 = vunpack.c.l.b16 %v899
        %v1292 = vunpack.c.h.b16 %v899
        %v1293 = vunpack.c.l.b16 %v900
        %v1294 = vunpack.c.h.b16 %v900
        %v1295 = vunpack.c.l.b16 %v901
        %v1296 = vunpack.c.h.b16 %v901
        %v1297 = vunpack.c.l.b16 %v902
        %v1298 = vunpack.c.h.b16 %v902
        %v1299 = vunpack.c.l.b16 %v903
        %v1300 = vunpack.c.h.b16 %v903
        %v1301 = vunpack.c.l.b16 %v904
        %v1302 = vunpack.c.h.b16 %v904
        %v1303 = vunpack.c.l.b16 %v905
        %v1304 = vunpack.c.h.b16 %v905
        %v1305 = vunpack.c.l.b16 %v906
        %v1306 = vunpack.c.h.b16 %v906
        %v1307 = vunpack.c.l.b16 %v907
        %v1308 = vunpack.c.h.b16 %v907
        %v1309 = vunpack.c.l.b16 %v908
        %v1310 = vunpack.c.h.b16 %v908
        %v1311 = vunpack.c.l.b16 %v909
        %v1312 = vunpack.c.h.b16 %v909
        %v1313 = vunpack.c.l.b16 %v910
        %v1314 = vunpack.c.h.b16 %v910
        %v1315 = vunpack.c.l.b16 %v911
        %v1316 = vunpack.c.h.b16 %v911
        %v1317 = vunpack.c.l.b16 %v912
        %v1318 = vunpack.c.h.b16 %v912
        %v1319 = vunpack.c.l.b16 %v913
        %v1320 = vunpack.c.h.b16 %v913
        %v1321 = vunpack.c.l.b16 %v914
        %v1322 = vunpack.c.h.b16 %v914
        %v1323 = vunpack.c.l.b16 %v915
        %v1324 = vunpack.c.h.b16 %v915
        %v1325 = vunpack.c.l.b16 %v916
        %v1326 = vunpack.c.h.b16 %v916
        %v1327 = vunpack.c.l.b16 %v917
        %v1328 = vunpack.c.h.b16 %v917
        %v1329 = vunpack.c.l.b16 %v918
        %v1330 = vunpack.c.h.b16 %v918
        %v1331 = vunpack.c.l.b16 %v919
        %v1332 = vunpack.c.h.b16 %v919
        %v1333 = vunpack.c.l.b16 %v920
        %v1334 = vunpack.c.h.b16 %v920
        %v1335 = vunpack.c.l.b16 %v921
        %v1336 = vunpack.c.h.b16 %v921
        %v1337 = vunpack.c.l.b16 %v922
        %v1338 = vunpack.c.h.b16 %v922
        %v1339 = vunpack.c.l.b16 %v923
        %v1340 = vunpack.c.h.b16 %v923
        %v1341 = vunpack.c.l.b16 %v924
        %v1342 = vunpack.c.h.b16 %v924
        %v1343 = vunpack.c.l.b16 %v925
        %v1344 = vunpack.c.h.b16 %v925
        %v1345 = vunpack.c.l.b16 %v926
        %v1346 = vunpack.c.h.b16 %v926
        %v1347 = vunpack.c.l.b16 %v927
        %v1348 = vunpack.c.h.b16 %v927
        %v1349 = vunpack.c.l.b16 %v928
        %v1350 = vunpack.c.h.b16 %v928
        %v1351 = vunpack.c.l.b16 %v929
        %v1352 = vunpack.c.h.b16 %v929
        %v1353 = vunpack.c.l.b16 %v930
        %v1354 = vunpack.c.h.b16 %v930
        %v1355 = vpack.c.b16 %v1101, %v1099
        %v1356 = vpack.c.b16 %v1102, %v1100
        %v1357 = vpack.c.b16 %v1105, %v1103
        %v1358 = vpack.c.b16 %v1106, %v1104
        %v1359 = vpack.c.b16 %v1109, %v1107
        %v1360 = vpack.c.b16 %v1110, %v1108
        %v1361 = vpack.c.b16 %v1113, %v1111
        %v1362 = vpack.c.b16 %v1114, %v1112
        %v1363 = vpack.c.b16 %v1117, %v1115
        %v1364 = vpack.c.b16 %v1118, %v1116
        %v1365 = vpack.c.b16 %v1121, %v1119
        %v1366 = vpack.c.b16 %v1122, %v1120
        %v1367 = vpack.c.b16 %v1125, %v1123
        %v1368 = vpack.c.b16 %v1126, %v1124
        %v1369 = vpack.c.b16 %v1129, %v1127
        %v1370 = vpack.c.b16 %v1130, %v1128
        %v1371 = vpack.c.b16 %v1133, %v1131
        %v1372 = vpack.c.b16 %v1134, %v1132
        %v1373 = vpack.c.b16 %v1137, %v1135
        %v1374 = vpack.c.b16 %v1138, %v1136
        %v1375 = vpack.c.b16 %v1141, %v1139
        %v1376 = vpack.c.b16 %v1142, %v1140
        %v1377 = vpack.c.b16 %v1145, %v1143
        %v1378 = vpack.c.b16 %v1146, %v1144
        %v1379 = vpack.c.b16 %v1149, %v1147
        %v1380 = vpack.c.b16 %v1150, %v1148
        %v1381 = vpack.c.b16 %v1153, %v1151
        %v1382 = vpack.c.b16 %v1154, %v1152
        %v1383 = vpack.c.b16 %v1157, %v1155
        %v1384 = vpack.c.b16 %v1158, %v1156
        %v1385 = vpack.c.b16 %v1161, %v1159
        %v1386 = vpack.c.b16 %v1162, %v1160
        %v1387 = vpack.c.b16 %v1165, %v1163
        %v1388 = vpack.c.b16 %v1166, %v1164
        %v1389 = vpack.c.b16 %v1169, %v1167
        %v1390 = vpack.c.b16 %v1170, %v1168
        %v1391 = vpack.c.b16 %v1173, %v1171
        %v1392 = vpack.c.b16 %v1174, %v1172
        %v1393 = vpack.c.b16 %v1177, %v1175
        %v1394 = vpack.c.b16 %v1178, %v1176
        %v1395 = vpack.c.b16 %v1181, %v1179
        %v1396 = vpack.c.b16 %v1182, %v1180
        %v1397 = vpack.c.b16 %v1185, %v1183
        %v1398 = vpack.c.b16 %v1186, %v1184
        %v1399 = vpack.c.b16 %v1189, %v1187
        %v1400 = vpack.c.b16 %v1190, %v1188
        %v1401 = vpack.c.b16 %v1193, %v1191
        %v1402 = vpack.c.b16 %v1194, %v1192
        %v1403 = vpack.c.b16 %v1197, %v1195
        %v1404 = vpack.c.b16 %v1198, %v1196
        %v1405 = vpack.c.b16 %v1201, %v1199
        %v1406 = vpack.c.b16 %v1202, %v1200
        %v1407 = vpack.c.b16 %v1205, %v1203
        %v1408 = vpack.c.b16 %v1206, %v1204
        %v1409 = vpack.c.b16 %v1209, %v1207
        %v1410 = vpack.c.b16 %v1210, %v1208
        %v1411 = vpack.c.b16 %v1213, %v1211
        %v1412 = vpack.c.b16 %v1214, %v1212
        %v1413 = vpack.c.b16 %v1217, %v1215
        %v1414 = vpack.c.b16 %v1218, %v1216
        %v1415 = vpack.c.b16 %v1221, %v1219
        %v1416 = vpack.c.b16 %v1222, %v1220
        %v1417 = vpack.c.b16 %v1225, %v1223
        %v1418 = vpack.c.b16 %v1226, %v1224
        %v1419 = vpack.c.b16 %v1229, %v1227
        %v1420 = vpack.c.b16 %v1230, %v1228
        %v1421 = vpack.c.b16 %v1233, %v1231
        %v1422 = vpack.c.b16 %v1234, %v1232
        %v1423 = vpack.c.b16 %v1237, %v1235
        %v1424 = vpack.c.b16 %v1238, %v1236
        %v1425 = vpack.c.b16 %v1241, %v1239
        %v1426 = vpack.c.b16 %v1242, %v1240
        %v1427 = vpack.c.b16 %v1245, %v1243
        %v1428 = vpack.c.b16 %v1246, %v1244
        %v1429 = vpack.c.b16 %v1249, %v1247
        %v1430 = vpack.c.b16 %v1250, %v1248
        %v1431 = vpack.c.b16 %v1253, %v1251
        %v1432 = vpack.c.b16 %v1254, %v1252
        %v1433 = vpack.c.b16 %v1257, %v1255
        %v1434 = vpack.c.b16 %v1258, %v1256
        %v1435 = vpack.c.b16 %v1261, %v1259
        %v1436 = vpack.c.b16 %v1262, %v1260
        %v1437 = vpack.c.b16 %v1265, %v1263
        %v1438 = vpack.c.b16 %v1266, %v1264
        %v1439 = vpack.c.b16 %v1269, %v1267
        %v1440 = vpack.c.b16 %v1270, %v1268
        %v1441 = vpack.c.b16 %v1273, %v1271
        %v1442 = vpack.c.b16 %v1274, %v1272
        %v1443 = vpack.c.b16 %v1277, %v1275
        %v1444 = vpack.c.b16 %v1278, %v1276
        %v1445 = vpack.c.b16 %v1281, %v1279
        %v1446 = vpack.c.b16 %v1282, %v1280
        %v1447 = vpack.c.b16 %v1285, %v1283
        %v1448 = vpack.c.b16 %v1286, %v1284
        %v1449 = vpack.c.b16 %v1289, %v1287
        %v1450 = vpack.c.b16 %v1290, %v1288
        %v1451 = vpack.c.b16 %v1293, %v1291
        %v1452 = vpack.c.b16 %v1294, %v1292
        %v1453 = vpack.c.b16 %v1297, %v1295
        %v1454 = vpack.c.b16 %v1298, %v1296
        %v1455 = vpack.c.b16 %v1301, %v1299
        %v1456 = vpack.c.b16 %v1302, %v1300
        %v1457 = vpack.c.b16 %v1305, %v1303
        %v1458 = vpack.c.b16 %v1306, %v1304
        %v1459 = vpack.c.b16 %v1309, %v1307
        %v1460 = vpack.c.b16 %v1310, %v1308
        %v1461 = vpack.c.b16 %v1313, %v1311
        %v1462 = vpack.c.b16 %v1314, %v1312
        %v1463 = vpack.c.b16 %v1317, %v1315
        %v1464 = vpack.c.b16 %v1318, %v1316
        %v1465 = vpack.c.b16 %v1321, %v1319
        %v1466 = vpack.c.b16 %v1322, %v1320
        %v1467 = vpack.c.b16 %v1325, %v1323
        %v1468 = vpack.c.b16 %v1326, %v1324
        %v1469 = vpack.c.b16 %v1329, %v1327
        %v1470 = vpack.c.b16 %v1330, %v1328
        %v1471 = vpack.c.b16 %v1333, %v1331
        %v1472 = vpack.c.b16 %v1334, %v1332
        %v1473 = vpack.c.b16 %v1337, %v1335
        %v1474 = vpack.c.b16 %v1338, %v1336
        %v1475 = vpack.c.b16 %v1341, %v1339
        %v1476 = vpack.c.b16 %v1342, %v1340
        %v1477 = vpack.c.b16 %v1345, %v1343
        %v1478 = vpack.c.b16 %v1346, %v1344
        %v1479 = vpack.c.b16 %v1349, %v1347
        %v1480 = vpack.c.b16 %v1350, %v1348
        %v1481 = vpack.c.b16 %v1353, %v1351
        %v1482 = vpack.c.b16 %v1354, %v1352
        %1611 = vmatprep.subr.bf16.mxu0 %v1356
        %1612 = vmatpush1.bf16.msra.mxu0 %v1355
        %1613 = vmatprep.subr.bf16.mxu0 %v1358
        %1614 = vmatpush1.bf16.msra.mxu0 %v1357
        %1615 = vmatprep.subr.bf16.mxu0 %v1360
        %1616 = vmatpush1.bf16.msra.mxu0 %v1359
        %1617 = vmatprep.subr.bf16.mxu0 %v1362
        %1618 = vmatpush1.bf16.msra.mxu0 %v1361
        %1619 = vmatprep.subr.bf16.mxu0 %v1364
        %1620 = vmatpush1.bf16.msra.mxu0 %v1363
        %1621 = vmatprep.subr.bf16.mxu0 %v1366
        %1622 = vmatpush1.bf16.msra.mxu0 %v1365
        %1623 = vmatprep.subr.bf16.mxu0 %v1368
        %1624 = vmatpush1.bf16.msra.mxu0 %v1367
        %1625 = vmatprep.subr.bf16.mxu0 %v1370
        %1626 = vmatpush1.bf16.msra.mxu0 %v1369
        %1627 = vmatprep.subr.bf16.mxu0 %v1372
        %1628 = vmatpush1.bf16.msra.mxu0 %v1371
        %1629 = vmatprep.subr.bf16.mxu0 %v1374
        %1630 = vmatpush1.bf16.msra.mxu0 %v1373
        %1631 = vmatprep.subr.bf16.mxu0 %v1376
        %1632 = vmatpush1.bf16.msra.mxu0 %v1375
        %1633 = vmatprep.subr.bf16.mxu0 %v1378
        %1634 = vmatpush1.bf16.msra.mxu0 %v1377
        %1635 = vmatprep.subr.bf16.mxu0 %v1380
        %1636 = vmatpush1.bf16.msra.mxu0 %v1379
        %1637 = vmatprep.subr.bf16.mxu0 %v1382
        %1638 = vmatpush1.bf16.msra.mxu0 %v1381
        %1639 = vmatprep.subr.bf16.mxu0 %v1384
        %1640 = vmatpush1.bf16.msra.mxu0 %v1383
        %1641 = vmatprep.subr.bf16.mxu0 %v1386
        %1642 = vmatpush1.bf16.msra.mxu0 %v1385
        %1643 = vmatprep.mubr.bf16.mxu0 %v956
        %1644 = vmatmul.mubr.bf16.gmra.mrb[0].mxu0 %v955
        %v1645 = vpop.f32.mrb[0].mxu0
        %v1646 = vadd.f32 0.0, %v1645
        %v1647 = vpop.f32.mrb[0].mxu0
        %v1648 = vadd.f32 0.0, %v1647
        %v1649 = vpop.f32.mrb[0].mxu0
        %v1650 = vadd.f32 0.0, %v1649
        %v1651 = vpop.f32.mrb[0].mxu0
        %v1652 = vadd.f32 0.0, %v1651
        %1653 = vdwg.mxu0
        %1654 = vmatprep.subr.bf16.mxu0 %v1388
        %1655 = vmatpush1.bf16.msra.mxu0 %v1387
        %1656 = vmatprep.subr.bf16.mxu0 %v1390
        %1657 = vmatpush1.bf16.msra.mxu0 %v1389
        %1658 = vmatprep.subr.bf16.mxu0 %v1392
        %1659 = vmatpush1.bf16.msra.mxu0 %v1391
        %1660 = vmatprep.subr.bf16.mxu0 %v1394
        %1661 = vmatpush1.bf16.msra.mxu0 %v1393
        %1662 = vmatprep.subr.bf16.mxu0 %v1396
        %1663 = vmatpush1.bf16.msra.mxu0 %v1395
        %1664 = vmatprep.subr.bf16.mxu0 %v1398
        %1665 = vmatpush1.bf16.msra.mxu0 %v1397
        %1666 = vmatprep.subr.bf16.mxu0 %v1400
        %1667 = vmatpush1.bf16.msra.mxu0 %v1399
        %1668 = vmatprep.subr.bf16.mxu0 %v1402
        %1669 = vmatpush1.bf16.msra.mxu0 %v1401
        %1670 = vmatprep.subr.bf16.mxu0 %v1404
        %1671 = vmatpush1.bf16.msra.mxu0 %v1403
        %1672 = vmatprep.subr.bf16.mxu0 %v1406
        %1673 = vmatpush1.bf16.msra.mxu0 %v1405
        %1674 = vmatprep.subr.bf16.mxu0 %v1408
        %1675 = vmatpush1.bf16.msra.mxu0 %v1407
        %1676 = vmatprep.subr.bf16.mxu0 %v1410
        %1677 = vmatpush1.bf16.msra.mxu0 %v1409
        %1678 = vmatprep.subr.bf16.mxu0 %v1412
        %1679 = vmatpush1.bf16.msra.mxu0 %v1411
        %1680 = vmatprep.subr.bf16.mxu0 %v1414
        %1681 = vmatpush1.bf16.msra.mxu0 %v1413
        %1682 = vmatprep.subr.bf16.mxu0 %v1416
        %1683 = vmatpush1.bf16.msra.mxu0 %v1415
        %1684 = vmatprep.subr.bf16.mxu0 %v1418
        %1685 = vmatpush1.bf16.msra.mxu0 %v1417
        %1686 = vmatprep.mubr.bf16.mxu0 %v958
        %1687 = vmatmul.mubr.bf16.gmra.mrb[0].mxu0 %v957
        %v1688 = vpop.f32.mrb[0].mxu0
        %v1689 = vadd.f32 %v1646, %v1688
        %v1690 = vpop.f32.mrb[0].mxu0
        %v1691 = vadd.f32 %v1648, %v1690
        %v1692 = vpop.f32.mrb[0].mxu0
        %v1693 = vadd.f32 %v1650, %v1692
        %v1694 = vpop.f32.mrb[0].mxu0
        %v1695 = vadd.f32 %v1652, %v1694
        %1696 = vdwg.mxu0
        %1697 = vmatprep.subr.bf16.mxu0 %v1420
        %1698 = vmatpush1.bf16.msra.mxu0 %v1419
        %1699 = vmatprep.subr.bf16.mxu0 %v1422
        %1700 = vmatpush1.bf16.msra.mxu0 %v1421
        %1701 = vmatprep.subr.bf16.mxu0 %v1424
        %1702 = vmatpush1.bf16.msra.mxu0 %v1423
        %1703 = vmatprep.subr.bf16.mxu0 %v1426
        %1704 = vmatpush1.bf16.msra.mxu0 %v1425
        %1705 = vmatprep.subr.bf16.mxu0 %v1428
        %1706 = vmatpush1.bf16.msra.mxu0 %v1427
        %1707 = vmatprep.subr.bf16.mxu0 %v1430
        %1708 = vmatpush1.bf16.msra.mxu0 %v1429
        %1709 = vmatprep.subr.bf16.mxu0 %v1432
        %1710 = vmatpush1.bf16.msra.mxu0 %v1431
        %1711 = vmatprep.subr.bf16.mxu0 %v1434
        %1712 = vmatpush1.bf16.msra.mxu0 %v1433
        %1713 = vmatprep.subr.bf16.mxu0 %v1436
        %1714 = vmatpush1.bf16.msra.mxu0 %v1435
        %1715 = vmatprep.subr.bf16.mxu0 %v1438
        %1716 = vmatpush1.bf16.msra.mxu0 %v1437
        %1717 = vmatprep.subr.bf16.mxu0 %v1440
        %1718 = vmatpush1.bf16.msra.mxu0 %v1439
        %1719 = vmatprep.subr.bf16.mxu0 %v1442
        %1720 = vmatpush1.bf16.msra.mxu0 %v1441
        %1721 = vmatprep.subr.bf16.mxu0 %v1444
        %1722 = vmatpush1.bf16.msra.mxu0 %v1443
        %1723 = vmatprep.subr.bf16.mxu0 %v1446
        %1724 = vmatpush1.bf16.msra.mxu0 %v1445
        %1725 = vmatprep.subr.bf16.mxu0 %v1448
        %1726 = vmatpush1.bf16.msra.mxu0 %v1447
        %1727 = vmatprep.subr.bf16.mxu0 %v1450
        %1728 = vmatpush1.bf16.msra.mxu0 %v1449
        %1729 = vmatprep.mubr.bf16.mxu0 %v960
        %1730 = vmatmul.mubr.bf16.gmra.mrb[0].mxu0 %v959
        %v1731 = vpop.f32.mrb[0].mxu0
        %v1732 = vadd.f32 %v1689, %v1731
        %v1733 = vpop.f32.mrb[0].mxu0
        %v1734 = vadd.f32 %v1691, %v1733
        %v1735 = vpop.f32.mrb[0].mxu0
        %v1736 = vadd.f32 %v1693, %v1735
        %v1737 = vpop.f32.mrb[0].mxu0
        %v1738 = vadd.f32 %v1695, %v1737
        %1739 = vdwg.mxu0
        %1740 = vmatprep.subr.bf16.mxu0 %v1452
        %1741 = vmatpush1.bf16.msra.mxu0 %v1451
        %1742 = vmatprep.subr.bf16.mxu0 %v1454
        %1743 = vmatpush1.bf16.msra.mxu0 %v1453
        %1744 = vmatprep.subr.bf16.mxu0 %v1456
        %1745 = vmatpush1.bf16.msra.mxu0 %v1455
        %1746 = vmatprep.subr.bf16.mxu0 %v1458
        %1747 = vmatpush1.bf16.msra.mxu0 %v1457
        %1748 = vmatprep.subr.bf16.mxu0 %v1460
        %1749 = vmatpush1.bf16.msra.mxu0 %v1459
        %1750 = vmatprep.subr.bf16.mxu0 %v1462
        %1751 = vmatpush1.bf16.msra.mxu0 %v1461
        %1752 = vmatprep.subr.bf16.mxu0 %v1464
        %1753 = vmatpush1.bf16.msra.mxu0 %v1463
        %1754 = vmatprep.subr.bf16.mxu0 %v1466
        %1755 = vmatpush1.bf16.msra.mxu0 %v1465
        %1756 = vmatprep.subr.bf16.mxu0 %v1468
        %1757 = vmatpush1.bf16.msra.mxu0 %v1467
        %1758 = vmatprep.subr.bf16.mxu0 %v1470
        %1759 = vmatpush1.bf16.msra.mxu0 %v1469
        %1760 = vmatprep.subr.bf16.mxu0 %v1472
        %1761 = vmatpush1.bf16.msra.mxu0 %v1471
        %1762 = vmatprep.subr.bf16.mxu0 %v1474
        %1763 = vmatpush1.bf16.msra.mxu0 %v1473
        %1764 = vmatprep.subr.bf16.mxu0 %v1476
        %1765 = vmatpush1.bf16.msra.mxu0 %v1475
        %1766 = vmatprep.subr.bf16.mxu0 %v1478
        %1767 = vmatpush1.bf16.msra.mxu0 %v1477
        %1768 = vmatprep.subr.bf16.mxu0 %v1480
        %1769 = vmatpush1.bf16.msra.mxu0 %v1479
        %1770 = vmatprep.subr.bf16.mxu0 %v1482
        %1771 = vmatpush1.bf16.msra.mxu0 %v1481
        %1772 = vmatprep.mubr.bf16.mxu0 %v962
        %1773 = vmatmul.mubr.bf16.gmra.mrb[0].mxu0 %v961
        %v1774 = vpop.f32.mrb[0].mxu0
        %v1775 = vadd.f32 %v1732, %v1774
        %v1776 = vpop.f32.mrb[0].mxu0
        %v1777 = vadd.f32 %v1734, %v1776
        %v1778 = vpop.f32.mrb[0].mxu0
        %v1779 = vadd.f32 %v1736, %v1778
        %v1780 = vpop.f32.mrb[0].mxu0
        %v1781 = vadd.f32 %v1738, %v1780
        %1782 = vdwg.mxu0
        %v1783 = vadd.f32 %v791, %v1775
        %v1784 = vadd.f32 %v792, %v1777
        %v1785 = vadd.f32 %v793, %v1779
        %v1786 = vadd.f32 %v794, %v1781
        %1787 = vst [vmem:[#allocation2] sm:$0xff] %v1783
        %1788 = vst [vmem:[#allocation2 + $0x8] sm:$0xff] %v1784
        %1789 = vst [vmem:[#allocation2 + $0x10] sm:$0xff] %v1785
        %1790 = vst [vmem:[#allocation2 + $0x18] sm:$0xff] %v1786
        %p1791 = scmp.eq.s32.totalorder %s19, 7
        // Predicated region
        $region98: #{_lambda_.13} parent=84 // pred_check
          %p1792 = pneg %p1791
        $region99: #{_lambda_.13} parent=84 // pred_check_branch
          %1794 = sbr.rel (%p1792) target = $region101
        $region100: #{_lambda_.13} parent=84 // pred_region
          %v1795 = vld [vmem:[#allocation2] sm:$0xff]
          %v1796 = vld [vmem:[#allocation2 + $0x8] sm:$0xff]
          %v1797 = vld [vmem:[#allocation2 + $0x10] sm:$0xff]
          %v1798 = vld [vmem:[#allocation2 + $0x18] sm:$0xff]
          %v1799 = vld [vmem:[%s2] sm:$0xff]
          %v1800 = vld [vmem:[%s2 + $0x8] sm:$0xff]
          %1802 = vset.pattern.permute.xlu0 0
          %1803 = vperm.xlu0 %1802, %v1799
          %v1804 = vpop.permute.xlu0 %1803
          %1807 = vset.pattern.permute.xlu0 0
          %1808 = vperm.xlu0 %1807, %v1800
          %v1809 = vpop.permute.xlu0 %1808
          %v1811 = vadd.f32 %v1795, %v1804
          %v1812 = vadd.f32 %v1796, %v1804
          %v1813 = vadd.f32 %v1797, %v1809
          %v1814 = vadd.f32 %v1798, %v1809
          %1815 = vst [vmem:[%s778] sm:$0xff] %v1811
          %1816 = vst [vmem:[%s778 + $0x8] sm:$0xff] %v1812
          %1817 = vst [vmem:[%s778 + $0x10] sm:$0xff] %v1813
          %1818 = vst [vmem:[%s778 + $0x18] sm:$0xff] %v1814
        $region101: #{_lambda_.13} parent=84 // pred_fallthru
          _
        %s1819 = sand.u32 %s109, 1
        %s1820 = sand.u32 %s109, 1
        %s1821 = smul.addr %s1820, 32
        %s1822 = scalar_lea.vmem [#allocation5], %s1821
        // Predicated region
        $region102: #{_lambda_.13} parent=84 // pred_check
          %p1823 = pneg %p119
        $region103: #{_lambda_.13} parent=84 // pred_check_branch
          %1825 = sbr.rel (%p1823) target = $region105
        $region104: #{_lambda_.13} parent=84 // pred_region
          %s1826 = smul.u32 2, %s18
          %s1827 = smul.addr %s1826, 8
          %s1828 = scalar_lea.vmem %s3, %s1827
          // Predicated region
          $region106: #{_lambda_.13} parent=104 // pred_check
            _
          $region107: #{_lambda_.13} parent=104 // pred_check_branch
            %1830 = sbr.rel (0) target = $region109
          $region108: #{_lambda_.13} parent=104 // pred_region
            // Predicated region
            $region110: #{_lambda_.13} parent=108 // pred_check
              _
            $region111: #{_lambda_.13} parent=108 // pred_check_branch
              %1832 = sbr.rel (0) target = $region113
            $region112: #{_lambda_.13} parent=108 // pred_region
              loop: start=0, step=1, limit=1
              $region114: #{_lambda_.13} parent=112 // loop_pre_header
                _
              $region115: #{_lambda_.13} parent=112 // loop_header
                %s1834 = sphi 0, %s1838
                %p1835 = scmp.ge.s32.totalorder %s1834, 1
                %s1839 = sphi %s1822, %s1822
                %s1840 = sphi %s1828, %s1828
              $region116: #{_lambda_.13} parent=112 // loop_header_branch
                %1837 = sbr.rel (%p1835) target = $region120
              $region117: #{_lambda_.13} parent=112 // loop_body
                %v1841 = vld [vmem:[%s1839] sm:$0xff]
                %1842 = vst [vmem:[%s1840] sm:$0xff] %v1841
                %v1843 = vld [vmem:[%s1839 + $0x8] sm:$0xff]
                %1844 = vst [vmem:[%s1840 + $0x8] sm:$0xff] %v1843
                %v1845 = vld [vmem:[%s1839 + $0x10] sm:$0xff]
                %1846 = vst [vmem:[%s1840 + $0x20] sm:$0xff] %v1845
                %v1847 = vld [vmem:[%s1839 + $0x18] sm:$0xff]
                %1848 = vst [vmem:[%s1840 + $0x28] sm:$0xff] %v1847
              $region118: #{_lambda_.13} parent=112 // loop_footer
                %s1838 = sadd.s32 1, %s1834
              $region119: #{_lambda_.13} parent=112 // loop_footer_branch
                %1833 = sbr.rel target = $region115
              $region120: #{_lambda_.13} parent=112 // loop_exit
                _
            $region113: #{_lambda_.13} parent=108 // pred_fallthru
              _
            // Predicated region
            $region121: #{_lambda_.13} parent=108 // pred_check
              _
            $region122: #{_lambda_.13} parent=108 // pred_check_branch
              %1850 = sbr.rel target = $region124
            $region123: #{_lambda_.13} parent=108 // pred_region
              _
            $region124: #{_lambda_.13} parent=108 // pred_fallthru
              _
          $region109: #{_lambda_.13} parent=104 // pred_fallthru
            _
          %1851 = vnop
        $region105: #{_lambda_.13} parent=84 // pred_fallthru
          _
      $region85: #{_lambda_.13} parent=5 // pred_fallthru
        _
      %p1852 = scmp.le.s32.totalorder 2, %s9
      // Predicated region
      $region125: #{_lambda_.13} parent=5 // pred_check
        %p1853 = pneg %p1852
      $region126: #{_lambda_.13} parent=5 // pred_check_branch
        %1855 = sbr.rel (%p1853) target = $region128
      $region127: #{_lambda_.13} parent=5 // pred_region
        %s1856 = ssub.s32 %s9, 2
        // Predicated region
        $region129: #{_lambda_.13} parent=127 // pred_check
          %p1857 = pneg %p125
        $region130: #{_lambda_.13} parent=127 // pred_check_branch
          %1859 = sbr.rel (%p1857) target = $region132
        $region131: #{_lambda_.13} parent=127 // pred_region
          %s1860 = sand.u32 %s110, 1
          %s1861 = sand.u32 %s110, 1
          %s1862 = smul.addr %s1861, 32
          %s1863 = scalar_lea.vmem [#allocation5], %s1862
        $region132: #{_lambda_.13} parent=127 // pred_fallthru
          _
      $region128: #{_lambda_.13} parent=5 // pred_fallthru
        _
    $region6: #{_lambda_.13} parent=1 // loop_footer
      %s13 = sadd.s32 1, %s9
    $region7: #{_lambda_.13} parent=1 // loop_footer_branch
      %8 = sbr.rel target = $region3
    $region8: #{_lambda_.13} parent=1 // loop_exit
      _

// kernel: _lambda_.14
$region0: #{_lambda_.14}
  #allocation0 [shape = 'u32[]', space=smem, size = 0x4, offset = 0x4, fixed_abs, tag = 'smem constant byte address 0x4 - core index']
  #allocation1 [shape = 'u32[144,128]{1,0:T(1,128)}', space=vmem, size = 0x12000, scoped, tag = 'internal scratch']
  %s0 = inlined_call_operand.vmem [shape: f32[5,512], index: 0, kind: input, shape index: {}]
  %s1 = inlined_call_operand.vmem [shape: f32[3,256], index: 1, kind: input, shape index: {}]
  %s2 = inlined_call_operand.vmem [shape: f32[2,3,4], index: 2, kind: input, shape index: {}]
  %s3 = inlined_call_operand.vmem [shape: f32[2,5,256], index: 3, kind: output, shape index: {0}]
  %s4 = inlined_call_operand.vmem [shape: f32[2,3,256], index: 4, kind: output, shape index: {1}]
  %5 = xla_tuple %s3, %s4
  %s6 = sld [smem:[#allocation0]]
  $region53: #{_lambda_.14} parent=0
    _
  %s8 = ssub.s32 1, %s6
  %s9 = scalar_select 0, %s8, %s6
  loop: start=0, step=1, limit=4
  $region2: #{_lambda_.14} parent=0 // loop_pre_header
    _
  $region3: #{_lambda_.14} parent=0 // loop_header
    %s11 = sphi 0, %s15
    %p12 = scmp.ge.s32.totalorder %s11, 4
    %s18 = sphi 0, %s30
    %s19 = sphi 0, %s26
    %s20 = sphi 0, %s18
    %s21 = sphi 0, %s19
    %s22 = sphi 0, %s20
    %s23 = sphi 0, %s21
    %s35 = sphi 0, %s37
    %s38 = sphi 0, %s35
    %s39 = sphi 0, %s38
    %s55 = sphi 0, %s39
    %s61 = sphi 0, %s63
    %s64 = sphi 0, %s61
    %s65 = sphi 0, %s64
    %s81 = sphi 0, %s65
    %s87 = sphi 0, %s89
    %s90 = sphi 0, %s87
    %s91 = sphi 0, %s90
    %s107 = sphi 0, %s91
    %s115 = sphi 0, %s117
    %s118 = sphi 0, %s115
    %s119 = sphi 0, %s118
    %s135 = sphi 0, %s119
    %s143 = sphi 0, %s145
    %s146 = sphi 0, %s143
    %s147 = sphi 0, %s146
    %s163 = sphi 0, %s147
  $region4: #{_lambda_.14} parent=0 // loop_header_branch
    %14 = sbr.rel (%p12) target = $region8
  $region5: #{_lambda_.14} parent=0 // loop_body
    %s16 = ssub.s32 %s11, 1
    %s17 = ssub.s32 %s11, 2
    %s24 = sadd.s32 1, %s19
    %p25 = scmp.ge.s32.totalorder %s24, 1
    %s26 = scalar_select %p25, 0, %s24
    %s27 = sadd.s32 1, %s18
    %s28 = scalar_select %p25, %s27, %s18
    %p29 = scmp.ge.s32.totalorder %s28, 2
    %s30 = scalar_select %p29, 0, %s28
    %s31 = sadd.s32 %s18, %s19
    %s32 = sadd.s32 %s30, %s26
    %s33 = ssub.s32 %s31, %s32
    %p34 = scmp.eq.s32.totalorder %s33, 0
    %s36 = sadd.s32 %s35, 1
    %s37 = scalar_select %p34, %s35, %s36
    %p40 = pneg %p34
    %p41 = scmp.eq.s32.totalorder %s11, 1
    %p42 = por %p40, %p41
    %p43 = scmp.ne.s32.totalorder %s35, %s38
    %p44 = scmp.eq.s32.totalorder %s11, 0
    %p45 = por %p43, %p44
    %p46 = scmp.ne.s32.totalorder %s35, %s38
    %p47 = scmp.eq.s32.totalorder %s16, 1
    %p48 = por %p46, %p47
    %p49 = scmp.ne.s32.totalorder %s38, %s39
    %p50 = scmp.eq.s32.totalorder %s16, 0
    %p51 = por %p49, %p50
    %p52 = scmp.ne.s32.totalorder %s38, %s39
    %p53 = scmp.eq.s32.totalorder %s17, 1
    %p54 = por %p52, %p53
    %p56 = scmp.ne.s32.totalorder %s39, %s55
    %p57 = scmp.eq.s32.totalorder %s17, 0
    %p58 = por %p56, %p57
    %s59 = ssub.s32 %s19, %s26
    %p60 = scmp.eq.s32.totalorder %s59, 0
    %s62 = sadd.s32 %s61, 1
    %s63 = scalar_select %p60, %s61, %s62
    %p66 = pneg %p60
    %p67 = scmp.eq.s32.totalorder %s11, 1
    %p68 = por %p66, %p67
    %p69 = scmp.ne.s32.totalorder %s61, %s64
    %p70 = scmp.eq.s32.totalorder %s11, 0
    %p71 = por %p69, %p70
    %p72 = scmp.ne.s32.totalorder %s61, %s64
    %p73 = scmp.eq.s32.totalorder %s16, 1
    %p74 = por %p72, %p73
    %p75 = scmp.ne.s32.totalorder %s64, %s65
    %p76 = scmp.eq.s32.totalorder %s16, 0
    %p77 = por %p75, %p76
    %p78 = scmp.ne.s32.totalorder %s64, %s65
    %p79 = scmp.eq.s32.totalorder %s17, 1
    %p80 = por %p78, %p79
    %p82 = scmp.ne.s32.totalorder %s65, %s81
    %p83 = scmp.eq.s32.totalorder %s17, 0
    %p84 = por %p82, %p83
    %s85 = ssub.s32 %s18, %s30
    %p86 = scmp.eq.s32.totalorder %s85, 0
    %s88 = sadd.s32 %s87, 1
    %s89 = scalar_select %p86, %s87, %s88
    %p92 = pneg %p86
    %p93 = scmp.eq.s32.totalorder %s11, 1
    %p94 = por %p92, %p93
    %p95 = scmp.ne.s32.totalorder %s87, %s90
    %p96 = scmp.eq.s32.totalorder %s11, 0
    %p97 = por %p95, %p96
    %p98 = scmp.ne.s32.totalorder %s87, %s90
    %p99 = scmp.eq.s32.totalorder %s16, 1
    %p100 = por %p98, %p99
    %p101 = scmp.ne.s32.totalorder %s90, %s91
    %p102 = scmp.eq.s32.totalorder %s16, 0
    %p103 = por %p101, %p102
    %p104 = scmp.ne.s32.totalorder %s90, %s91
    %p105 = scmp.eq.s32.totalorder %s17, 1
    %p106 = por %p104, %p105
    %p108 = scmp.ne.s32.totalorder %s91, %s107
    %p109 = scmp.eq.s32.totalorder %s17, 0
    %p110 = por %p108, %p109
    %s111 = ssub.s32 %s18, %s30
    %s112 = ssub.s32 %s19, %s26
    %s113 = sor.u32 %s111, %s112
    %p114 = scmp.eq.s32.totalorder %s113, 0
    %s116 = sadd.s32 %s115, 1
    %s117 = scalar_select %p114, %s115, %s116
    %p120 = pneg %p114
    %p121 = scmp.eq.s32.totalorder %s11, 1
    %p122 = por %p120, %p121
    %p123 = scmp.ne.s32.totalorder %s115, %s118
    %p124 = scmp.eq.s32.totalorder %s11, 0
    %p125 = por %p123, %p124
    %p126 = scmp.ne.s32.totalorder %s115, %s118
    %p127 = scmp.eq.s32.totalorder %s16, 1
    %p128 = por %p126, %p127
    %p129 = scmp.ne.s32.totalorder %s118, %s119
    %p130 = scmp.eq.s32.totalorder %s16, 0
    %p131 = por %p129, %p130
    %p132 = scmp.ne.s32.totalorder %s118, %s119
    %p133 = scmp.eq.s32.totalorder %s17, 1
    %p134 = por %p132, %p133
    %p136 = scmp.ne.s32.totalorder %s119, %s135
    %p137 = scmp.eq.s32.totalorder %s17, 0
    %p138 = por %p136, %p137
    %s139 = ssub.s32 %s18, %s30
    %s140 = ssub.s32 %s19, %s26
    %s141 = sor.u32 %s139, %s140
    %p142 = scmp.eq.s32.totalorder %s141, 0
    %s144 = sadd.s32 %s143, 1
    %s145 = scalar_select %p142, %s143, %s144
    %p148 = pneg %p142
    %p149 = scmp.eq.s32.totalorder %s11, 1
    %p150 = por %p148, %p149
    %p151 = scmp.ne.s32.totalorder %s143, %s146
    %p152 = scmp.eq.s32.totalorder %s11, 0
    %p153 = por %p151, %p152
    %p154 = scmp.ne.s32.totalorder %s143, %s146
    %p155 = scmp.eq.s32.totalorder %s16, 1
    %p156 = por %p154, %p155
    %p157 = scmp.ne.s32.totalorder %s146, %s147
    %p158 = scmp.eq.s32.totalorder %s16, 0
    %p159 = por %p157, %p158
    %p160 = scmp.ne.s32.totalorder %s146, %s147
    %p161 = scmp.eq.s32.totalorder %s17, 1
    %p162 = por %p160, %p161
    %p164 = scmp.ne.s32.totalorder %s147, %s163
    %p165 = scmp.eq.s32.totalorder %s17, 0
    %p166 = por %p164, %p165
    %p167 = scmp.le.s32.totalorder 1, %s11
    %p168 = scmp.lt.s32.totalorder %s11, 3
    %p169 = pnand %p167, %p168
    %p170 = pneg %p169
    // Predicated region
    $region9: #{_lambda_.14} parent=5 // pred_check
      _
    $region10: #{_lambda_.14} parent=5 // pred_check_branch
      %172 = sbr.rel (%p169) target = $region12
    $region11: #{_lambda_.14} parent=5 // pred_region
      %s173 = ssub.s32 %s11, 1
      // Predicated region
      $region13: #{_lambda_.14} parent=11 // pred_check
        %p174 = pneg %p77
      $region14: #{_lambda_.14} parent=11 // pred_check_branch
        %176 = sbr.rel (%p174) target = $region16
      $region15: #{_lambda_.14} parent=11 // pred_region
        %s177 = smul.u32 2, %s21
        %p178 = scmp.lt.s32.totalorder %s177, 1
        %s179 = scalar_select %p178, %s177, 1
        %s180 = smul.addr %s179, 4
        %s181 = scalar_lea.vmem %s1, %s180
        %s182 = smul.u32 2, %s21
      $region16: #{_lambda_.14} parent=11 // pred_fallthru
        _
    $region12: #{_lambda_.14} parent=5 // pred_fallthru
      _
    %p183 = scmp.lt.s32.totalorder %s11, 2
    // Predicated region
    $region17: #{_lambda_.14} parent=5 // pred_check
      %p184 = pneg %p183
    $region18: #{_lambda_.14} parent=5 // pred_check_branch
      %186 = sbr.rel (%p184) target = $region20
    $region19: #{_lambda_.14} parent=5 // pred_region
      // Predicated region
      $region21: #{_lambda_.14} parent=19 // pred_check
        %p187 = pneg %p45
      $region22: #{_lambda_.14} parent=19 // pred_check_branch
        %189 = sbr.rel (%p187) target = $region24
      $region23: #{_lambda_.14} parent=19 // pred_region
        %s190 = sadd.s32 %s18, %s19
        %s191 = smul.u32 2, %s190
        %p192 = scmp.lt.s32.totalorder %s191, 3
        %s193 = scalar_select %p192, %s191, 3
        %s194 = smul.addr %s193, 8
        %s195 = scalar_lea.vmem %s0, %s194
        %s196 = sadd.s32 %s18, %s19
        %s197 = smul.u32 2, %s196
      $region24: #{_lambda_.14} parent=19 // pred_fallthru
        _
      // Predicated region
      $region25: #{_lambda_.14} parent=19 // pred_check
        %p198 = pneg %p97
      $region26: #{_lambda_.14} parent=19 // pred_check_branch
        %200 = sbr.rel (%p198) target = $region28
      $region27: #{_lambda_.14} parent=19 // pred_region
        %p201 = scmp.lt.s32.totalorder %s18, 1
        %s202 = scalar_select %p201, %s18, 1
        %s203 = smul.addr %s202, 4
        %s204 = scalar_lea.vmem %s2, %s203
      $region28: #{_lambda_.14} parent=19 // pred_fallthru
        _
    $region20: #{_lambda_.14} parent=5 // pred_fallthru
      _
    %p205 = scmp.le.s32.totalorder 1, %s11
    %p206 = scmp.lt.s32.totalorder %s11, 3
    %p207 = pnand %p205, %p206
    %p208 = pneg %p207
    // Predicated region
    $region29: #{_lambda_.14} parent=5 // pred_check
      _
    $region30: #{_lambda_.14} parent=5 // pred_check_branch
      %210 = sbr.rel (%p207) target = $region32
    $region31: #{_lambda_.14} parent=5 // pred_region
      %s211 = ssub.s32 %s11, 1
      %s212 = sadd.s32 %s20, %s21
      %s213 = smul.u32 2, %s212
      %p214 = scmp.lt.s32.totalorder %s213, 3
      %s215 = scalar_select %p214, %s213, 3
      %s216 = smul.addr %s215, 8
      %s217 = scalar_lea.vmem %s0, %s216
      %p218 = pneg %p51
      %p219 = pneg %p48
      %s220 = smul.u32 2, %s21
      %p221 = scmp.lt.s32.totalorder %s220, 1
      %s222 = scalar_select %p221, %s220, 1
      %s223 = smul.addr %s222, 4
      %s224 = scalar_lea.vmem %s1, %s223
      %p225 = pneg %p77
      %p226 = pneg %p74
      %p227 = scmp.lt.s32.totalorder %s20, 1
      %s228 = scalar_select %p227, %s20, 1
      %s229 = smul.addr %s228, 4
      %s230 = scalar_lea.vmem %s2, %s229
      %p231 = pneg %p103
      %p232 = pneg %p100
      %p233 = pneg %p131
      %p234 = pneg %p128
      %s235 = smul.u32 2, %s21
      %p236 = scmp.lt.s32.totalorder %s20, 1
      %s237 = scalar_select %p236, %s20, 1
      %p238 = scmp.lt.s32.totalorder %s235, 1
      %s239 = scalar_select %p238, %s235, 1
      %s240 = smul.addr %s237, 2
      %s241 = sadd.s32 %s239, %s240
      %s242 = smul.addr %s241, 8
      %s243 = scalar_lea.vmem %s3, %s242
      %p244 = pneg %p159
      %p245 = pneg %p156
      %s246 = smul.u32 2, %s21
      %p247 = scmp.lt.s32.totalorder %s20, 1
      %s248 = scalar_select %p247, %s20, 1
      %p249 = scmp.lt.s32.totalorder %s246, 1
      %s250 = scalar_select %p249, %s246, 1
      %s251 = smul.addr %s248, 2
      %s252 = sadd.s32 %s250, %s251
      %s253 = smul.addr %s252, 4
      %s254 = scalar_lea.vmem %s4, %s253
      %s255 = sadd.s32 %s20, %s21
      %s256 = smul.u32 2, %s255
      %p257 = scmp.lt.s32.totalorder %s256, 3
      %s258 = scalar_select %p257, %s256, 3
      %s259 = smul.addr %s258, 8
      %s260 = scalar_lea.vmem %s0, %s259
      %s261 = sadd.s32 %s20, %s21
      %s262 = smul.u32 2, %s261
      %s263 = smul.u32 2, %s21
      %p264 = scmp.lt.s32.totalorder %s263, 1
      %s265 = scalar_select %p264, %s263, 1
      %s266 = smul.addr %s265, 4
      %s267 = scalar_lea.vmem %s1, %s266
      %s268 = smul.u32 2, %s21
      %p269 = scmp.lt.s32.totalorder %s20, 1
      %s270 = scalar_select %p269, %s20, 1
      %s271 = smul.addr %s270, 4
      %s272 = scalar_lea.vmem %s2, %s271
      %s273 = smul.u32 2, %s21
      %p274 = scmp.lt.s32.totalorder %s20, 1
      %s275 = scalar_select %p274, %s20, 1
      %p276 = scmp.lt.s32.totalorder %s273, 1
      %s277 = scalar_select %p276, %s273, 1
      %s278 = smul.addr %s275, 2
      %s279 = sadd.s32 %s277, %s278
      %s280 = smul.addr %s279, 8
      %s281 = scalar_lea.vmem %s3, %s280
      %s282 = smul.u32 2, %s21
      %s283 = smul.u32 2, %s21
      %p284 = scmp.lt.s32.totalorder %s20, 1
      %s285 = scalar_select %p284, %s20, 1
      %p286 = scmp.lt.s32.totalorder %s283, 1
      %s287 = scalar_select %p286, %s283, 1
      %s288 = smul.addr %s285, 2
      %s289 = sadd.s32 %s287, %s288
      %s290 = smul.addr %s289, 4
      %s291 = scalar_lea.vmem %s4, %s290
      %s292 = smul.u32 2, %s21
      %v293 = vld [vmem:[%s260] sm:$0x1f]
      %v294 = vld [vmem:[%s260 + $0x8] sm:$0x1f]
      %vm295 = vcmask 1044480
      %v296 = vsel %vm295, %v293, -inf
      %v297 = vrot.slane %v296, 4
      %v298 = vmax.f32 %v296, %v297
      %v299 = vrot.slane %v298, 2
      %v300 = vmax.f32 %v298, %v299
      %v301 = vrot.slane %v300, 1
      %v302 = vmax.f32 %v300, %v301
      %v303 = vsel %vm295, %v294, -inf
      %v304 = vrot.slane %v303, 4
      %v305 = vmax.f32 %v303, %v304
      %v306 = vrot.slane %v305, 2
      %v307 = vmax.f32 %v305, %v306
      %v308 = vrot.slane %v307, 1
      %v309 = vmax.f32 %v307, %v308
      %v310 = vsub.f32 %v293, %v302
      %v311 = vsub.f32 %v294, %v309
      %v312 = vmul.f32 %v310, 1.442695
      %v313 = vpow.pop %v312
      %v314 = vmul.f32 %v311, 1.442695
      %v315 = vpow.pop %v314
      %v316 = vsel %vm295, %v313, 0.0
      %v317 = vrot.slane %v316, 4
      %v318 = vadd.f32 %v316, %v317
      %v319 = vrot.slane %v318, 2
      %v320 = vadd.f32 %v318, %v319
      %v321 = vrot.slane %v320, 1
      %v322 = vadd.f32 %v320, %v321
      %v323 = vsel %vm295, %v315, 0.0
      %v324 = vrot.slane %v323, 4
      %v325 = vadd.f32 %v323, %v324
      %v326 = vrot.slane %v325, 2
      %v327 = vadd.f32 %v325, %v326
      %v328 = vrot.slane %v327, 1
      %v329 = vadd.f32 %v327, %v328
      %v330 = vrcp.pop %v322
      %v331 = vmul.f32 %v313, %v330
      %v332 = vrcp.pop %v329
      %v333 = vmul.f32 %v315, %v332
      %334 = vst [vmem:[%s281] sm:$0x1f] %v331
      %335 = vst [vmem:[%s281 + $0x8] sm:$0x1f] %v333
      %vm336 = vcmp.lt.f32.partialorder %v331, 0.001
      %vm337 = vcmp.lt.f32.partialorder %v333, 0.001
      %v338 = vsel %vm336, 0.0, %v331
      %v339 = vsel %vm337, 0.0, %v333
      %v340 = vld [vmem:[%s267] sm:$0x77]
      %v341 = vsel %vm295, %v338, 0.0
      %v342 = vrot.slane %v341, 4
      %v343 = vadd.f32 %v341, %v342
      %v344 = vrot.slane %v343, 2
      %v345 = vadd.f32 %v343, %v344
      %v346 = vrot.slane %v345, 1
      %v347 = vadd.f32 %v345, %v346
      %v348 = vsel %vm295, %v339, 0.0
      %v349 = vrot.slane %v348, 4
      %v350 = vadd.f32 %v348, %v349
      %v351 = vrot.slane %v350, 2
      %v352 = vadd.f32 %v350, %v351
      %v353 = vrot.slane %v352, 1
      %v354 = vadd.f32 %v352, %v353
      %v357 = vcombine.low %v347, %v354
      %v359 = vmul.f32 %v340, %v357
      %v360 = vld [vmem:[%s272] sm:$0x7]
      %v361 = vlaneseq
      %v362 = vshrl.u32 %v361, 7
      %v363 = vsub.s32 1, %v362
      %v364 = vrot.slane %v338, %v363
      %v365 = vlaneseq
      %v366 = vshrl.u32 %v365, 7
      %v367 = vsub.s32 1, %v366
      %v368 = vrot.slane %v339, %v367
      %370 = vset.pattern.permute.xlu0 0
      %371 = vperm.xlu0 %370, %v360
      %v372 = vpop.permute.xlu0 %371
      %v374 = vmul.f32 %v364, %v372
      %v375 = vmul.f32 %v368, %v372
      %v378 = vcombine.low %v374, %v375
      %v380 = vadd.f32 %v359, %v378
      %v381 = vld [vmem:[%s272] sm:$0x7]
      %v382 = vlaneseq
      %v383 = vshrl.u32 %v382, 7
      %v384 = vsub.s32 2, %v383
      %v385 = vrot.slane %v338, %v384
      %v386 = vlaneseq
      %v387 = vshrl.u32 %v386, 7
      %v388 = vsub.s32 2, %v387
      %v389 = vrot.slane %v339, %v388
      %391 = vset.pattern.permute.xlu0 1
      %392 = vperm.xlu0 %391, %v381
      %v393 = vpop.permute.xlu0 %392
      %v395 = vmul.f32 %v385, %v393
      %v396 = vmul.f32 %v389, %v393
      %v399 = vcombine.low %v395, %v396
      %v401 = vadd.f32 %v380, %v399
      %v402 = vld [vmem:[%s272] sm:$0x7]
      %v403 = vlaneseq
      %v404 = vshrl.u32 %v403, 7
      %v405 = vsub.s32 3, %v404
      %v406 = vrot.slane %v338, %v405
      %v407 = vlaneseq
      %v408 = vshrl.u32 %v407, 7
      %v409 = vsub.s32 3, %v408
      %v410 = vrot.slane %v339, %v409
      %412 = vset.pattern.permute.xlu0 2
      %413 = vperm.xlu0 %412, %v402
      %v414 = vpop.permute.xlu0 %413
      %v416 = vmul.f32 %v406, %v414
      %v417 = vmul.f32 %v410, %v414
      %v420 = vcombine.low %v416, %v417
      %v422 = vadd.f32 %v401, %v420
      %v423 = vld [vmem:[%s272] sm:$0x7]
      %v424 = vlaneseq
      %v425 = vshrl.u32 %v424, 7
      %v426 = vsub.s32 4, %v425
      %v427 = vrot.slane %v338, %v426
      %v428 = vlaneseq
      %v429 = vshrl.u32 %v428, 7
      %v430 = vsub.s32 4, %v429
      %v431 = vrot.slane %v339, %v430
      %433 = vset.pattern.permute.xlu0 3
      %434 = vperm.xlu0 %433, %v423
      %v435 = vpop.permute.xlu0 %434
      %v437 = vmul.f32 %v427, %v435
      %v438 = vmul.f32 %v431, %v435
      %v441 = vcombine.low %v437, %v438
      %v443 = vadd.f32 %v422, %v441
      %444 = vst [vmem:[%s291] sm:$0x77] %v443
      %s445 = smul.u32 2, %s21
      %p446 = scmp.lt.s32.totalorder %s20, 1
      %s447 = scalar_select %p446, %s20, 1
      %p448 = scmp.lt.s32.totalorder %s445, 1
      %s449 = scalar_select %p448, %s445, 1
      %s450 = smul.addr %s447, 2
      %s451 = sadd.s32 %s449, %s450
      %s452 = smul.addr %s451, 8
      %s453 = scalar_lea.vmem %s3, %s452
      %s454 = smul.u32 2, %s21
      %p455 = scmp.lt.s32.totalorder %s20, 1
      %s456 = scalar_select %p455, %s20, 1
      %p457 = scmp.lt.s32.totalorder %s454, 1
      %s458 = scalar_select %p457, %s454, 1
      %s459 = smul.addr %s456, 2
      %s460 = sadd.s32 %s458, %s459
      %s461 = smul.addr %s460, 4
      %s462 = scalar_lea.vmem %s4, %s461
      // Predicated region
      $region33: #{_lambda_.14} parent=31 // pred_check
        %p463 = pneg %p128
      $region34: #{_lambda_.14} parent=31 // pred_check_branch
        %465 = sbr.rel (%p463) target = $region36
      $region35: #{_lambda_.14} parent=31 // pred_region
        %s466 = smul.u32 2, %s21
      $region36: #{_lambda_.14} parent=31 // pred_fallthru
        _
      // Predicated region
      $region37: #{_lambda_.14} parent=31 // pred_check
        %p467 = pneg %p156
      $region38: #{_lambda_.14} parent=31 // pred_check_branch
        %469 = sbr.rel (%p467) target = $region40
      $region39: #{_lambda_.14} parent=31 // pred_region
        %s470 = smul.u32 2, %s21
      $region40: #{_lambda_.14} parent=31 // pred_fallthru
        _
    $region32: #{_lambda_.14} parent=5 // pred_fallthru
      _
    %p471 = scmp.le.s32.totalorder 2, %s11
    // Predicated region
    $region41: #{_lambda_.14} parent=5 // pred_check
      %p472 = pneg %p471
    $region42: #{_lambda_.14} parent=5 // pred_check_branch
      %474 = sbr.rel (%p472) target = $region44
    $region43: #{_lambda_.14} parent=5 // pred_region
      %s475 = ssub.s32 %s11, 2
      // Predicated region
      $region45: #{_lambda_.14} parent=43 // pred_check
        %p476 = pneg %p134
      $region46: #{_lambda_.14} parent=43 // pred_check_branch
        %478 = sbr.rel (%p476) target = $region48
      $region47: #{_lambda_.14} parent=43 // pred_region
        %s479 = smul.u32 2, %s23
        %p480 = scmp.lt.s32.totalorder %s22, 1
        %s481 = scalar_select %p480, %s22, 1
        %p482 = scmp.lt.s32.totalorder %s479, 1
        %s483 = scalar_select %p482, %s479, 1
        %s484 = smul.addr %s481, 2
        %s485 = sadd.s32 %s483, %s484
        %s486 = smul.addr %s485, 8
        %s487 = scalar_lea.vmem %s3, %s486
      $region48: #{_lambda_.14} parent=43 // pred_fallthru
        _
      // Predicated region
      $region49: #{_lambda_.14} parent=43 // pred_check
        %p488 = pneg %p162
      $region50: #{_lambda_.14} parent=43 // pred_check_branch
        %490 = sbr.rel (%p488) target = $region52
      $region51: #{_lambda_.14} parent=43 // pred_region
        %s491 = smul.u32 2, %s23
        %p492 = scmp.lt.s32.totalorder %s22, 1
        %s493 = scalar_select %p492, %s22, 1
        %p494 = scmp.lt.s32.totalorder %s491, 1
        %s495 = scalar_select %p494, %s491, 1
        %s496 = smul.addr %s493, 2
        %s497 = sadd.s32 %s495, %s496
        %s498 = smul.addr %s497, 4
        %s499 = scalar_lea.vmem %s4, %s498
      $region52: #{_lambda_.14} parent=43 // pred_fallthru
        _
    $region44: #{_lambda_.14} parent=5 // pred_fallthru
      _
  $region6: #{_lambda_.14} parent=0 // loop_footer
    %s15 = sadd.s32 1, %s11
  $region7: #{_lambda_.14} parent=0 // loop_footer_branch
    %10 = sbr.rel target = $region3
  $region8: #{_lambda_.14} parent=0 // loop_exit
    _

</llo_original>
